<compile_context>
chip_gen: v6e
topology: v6e:2x2x1
jax: 0.10.0
libtpu: 0.0.40
codegen_flags: <defaults>
</compile_context>

<pallas_src>
import functools
import math

import jax
import jax.numpy as jnp
from jax.experimental import pallas as pl
from jax.experimental.pallas import tpu as pltpu

_LANES = 128
_TILE_BYTES_DEFAULT = 6 * 1024 * 1024   # ~6 MiB output tile per grid step
_VMEM_LIMIT_BYTES = 32 * 1024 * 1024    # raise v5e's 16 MiB scoped default


# --------------------------------------------------------------------------
# Kernel
# --------------------------------------------------------------------------
def _packed_kernel(dist_ref, sel_ref, off_ref, out_ref, *, coeff):
    # dist_ref: (tm, R)   R dist rows folded into one lane-dense output row
    # sel_ref : (R, L)    0/1 selection matrix (bf16) -> repeats each dist G times
    # off_ref : (1, L)    offsets tiled R times (L = R*G, multiple of 128)
    # out_ref : (tm, L)   lane-dense view of (tm*R, G) output rows
    sel = sel_ref[...].astype(jnp.float32)
    d = jnp.dot(dist_ref[...], sel,
                preferred_element_type=jnp.float32,
                precision=jax.lax.Precision.HIGHEST)   # exact repeat via MXU
    diff = d - off_ref[...]
    out_ref[...] = jnp.exp(coeff * diff * diff).astype(out_ref.dtype)


# --------------------------------------------------------------------------
# Wrappers
# --------------------------------------------------------------------------
def _make_packed_constants(offset):
    """Per-offset constants for the packed kernel (cache across calls)."""
    g = int(offset.shape[0])
    r = _LANES // math.gcd(g, _LANES)     # dist rows folded per packed output row
    l = r * g                             # packed lane width, multiple of 128
    off_tiled = jnp.tile(offset.astype(jnp.float32), r).reshape(1, l)
    # 0/1 values are exact in bf16; halves the constant's VMEM/DMA footprint.
    sel = (jnp.arange(l, dtype=jnp.int32) // g
           == jnp.arange(r, dtype=jnp.int32)[:, None]).astype(jnp.bfloat16)
    return r, l, off_tiled, sel


def _smearing_packed(dist_flat, off_tiled, sel, coeff, out_dtype, r, l, g,
                     tile_bytes):
    n = dist_flat.shape[0]                # multiple of r by construction
    m = n // r
    dist2d = dist_flat.reshape(m, r)

    itemsize = jnp.dtype(out_dtype).itemsize
    tm_target = max(8, (tile_bytes // (l * itemsize)) // 8 * 8)
    tm = m if m <= tm_target else tm_target   # single block when it fits
    grid = (pl.cdiv(m, tm),)

    out = pl.pallas_call(
        functools.partial(_packed_kernel, coeff=coeff),
        out_shape=jax.ShapeDtypeStruct((m, l), out_dtype),
        grid_spec=pltpu.PrefetchScalarGridSpec(
            num_scalar_prefetch=0,
            grid=grid,
            in_specs=[
                pl.BlockSpec((tm, r), lambda i: (i, 0)),   # dist tile
                pl.BlockSpec((r, l), lambda i: (0, 0)),    # selection matrix
                pl.BlockSpec((1, l), lambda i: (0, 0)),    # tiled offsets
            ],
            out_specs=pl.BlockSpec((tm, l), lambda i: (i, 0)),
        ),
        compiler_params=pltpu.CompilerParams(
            dimension_semantics=("parallel",),
            vmem_limit_bytes=_VMEM_LIMIT_BYTES),
    )(dist2d, sel, off_tiled)

    # (m, l) and (n, g) are the same row-major bytes -> free reshape.
    return out.reshape(n, g)


def gaussian_smearing(dist, offset, coeff, *, out_dtype=jnp.float32,
                      use_pallas=None, min_pallas_rows=16384,
                      tile_bytes=_TILE_BYTES_DEFAULT, packed_consts=None):
    """exp(coeff * (dist.reshape(-1,1) - offset.reshape(1,-1))**2)."""
    offset = jnp.asarray(offset, jnp.float32)
    g = offset.shape[0]
    dist_flat = jnp.reshape(dist, (-1,)).astype(jnp.float32)
    n = dist_flat.shape[0]
    coeff = float(coeff)

    if use_pallas is None:
        use_pallas = n >= min_pallas_rows
    if (not use_pallas) or n == 0:
        # Small problems: launch + pipeline warm-up dominates; fused XLA wins.
        d = dist_flat[:, None] - offset[None, :]
        return jnp.exp(coeff * d * d).astype(out_dtype)

    if packed_consts is None:
        packed_consts = _make_packed_constants(offset)
    r, l, off_tiled, sel = packed_consts

    n_main = (n // r) * r                 # lane-dense packed portion
    n_tail = n - n_main                   # < r (<=127) leftover rows

    parts = []
    if n_main > 0:
        parts.append(_smearing_packed(dist_flat[:n_main], off_tiled, sel,
                                      coeff, out_dtype, r, l, g, tile_bytes))
    if n_tail > 0:
        # Tiny tail: plain jnp (exactly matches the reference math).
        d = dist_flat[n_main:, None] - offset[None, :]
        parts.append(jnp.exp(coeff * d * d).astype(out_dtype))
    if len(parts) == 1:
        return parts[0]
    return jnp.concatenate(parts, axis=0)


class GaussianSmearingJax:
    """Deterministic re-implementation of the torch module."""

    def __init__(self, start=0.0, stop=10.0, num_gaussians=50):
        assert num_gaussians >= 2, "torch module indexes offset[1]"
        self.offset = jnp.linspace(start, stop, num_gaussians, dtype=jnp.float32)
        step = float(self.offset[1] - self.offset[0])
        self.coeff = -0.5 / step ** 2
        # Build packed-path constants once (not per call).
        self._packed_consts = _make_packed_constants(self.offset)

    def __call__(self, dist, **kwargs):
        return gaussian_smearing(dist, self.offset, self.coeff,
                                 packed_consts=self._packed_consts, **kwargs)


if __name__ == "__main__":
    key = jax.random.PRNGKey(0)
    k1, k2 = jax.random.split(key)

    module = GaussianSmearingJax(start=0.0, stop=10.0, num_gaussians=50)

    def reference(d):
        dd = d.reshape(-1, 1) - module.offset.reshape(1, -1)
        return jnp.exp(module.coeff * dd * dd)

    # Case 1: N = 8*24 = 192 (multiple of r=64) -> pure lane-dense packed kernel.
    dist_a = jax.random.uniform(k1, (8, 24), dtype=jnp.float32) * 10.0
    out_a = module(dist_a, use_pallas=True)
    out_a = jax.block_until_ready(out_a)
    assert out_a.shape == (192, 50), out_a.shape
    assert jnp.allclose(out_a, reference(dist_a), atol=1e-6, rtol=1e-5)

    # Case 2: N = 7*31 = 217 (ragged) -> packed kernel on first 192 rows,
    # 25-row jnp tail, single concat.
    dist_b = jax.random.uniform(k2, (7, 31), dtype=jnp.float32) * 10.0
    out_b = module(dist_b, use_pallas=True)
    out_b = jax.block_until_ready(out_b)
    assert out_b.shape == (217, 50), out_b.shape
    assert jnp.allclose(out_b, reference(dist_b), atol=1e-6, rtol=1e-5)

    print("KERNEL_OK")
</pallas_src>

<mosaic_0001>
module attributes {stable_mosaic.version = 11 : i64} {
  func.func @_packed_kernel(%arg0: i32, %arg1: memref<3x64xf32, #tpu.memory_space<vmem>>, %arg2: memref<64x3200xbf16, #tpu.memory_space<vmem>>, %arg3: memref<1x3200xf32, #tpu.memory_space<vmem>>, %arg4: memref<3x3200xf32, #tpu.memory_space<vmem>>) attributes {dimension_semantics = [#tpu.dimension_semantics<parallel>], iteration_bounds = array<i64: 1>, scalar_prefetch = 0 : i64, scratch_operands = 0 : i64, tpu.core_type = #tpu.core_type<tc>, window_params = [{transform_indices = @transform_0, window_bounds = array<i64: 3, 64>}, {pipeline_mode = #tpu.pipeline_mode<synchronous>, transform_indices = @transform_1, window_bounds = array<i64: 64, 3200>}, {pipeline_mode = #tpu.pipeline_mode<synchronous>, transform_indices = @transform_2, window_bounds = array<i64: 1, 3200>}, {transform_indices = @transform_3, window_bounds = array<i64: 3, 3200>}]} {
    %c0 = arith.constant 0 : index
    %c0_0 = arith.constant 0 : index
    %0 = vector.load %arg2[%c0, %c0_0] : memref<64x3200xbf16, #tpu.memory_space<vmem>>, vector<64x3200xbf16>
    %1 = arith.extf %0 : vector<64x3200xbf16> to vector<64x3200xf32>
    %c0_1 = arith.constant 0 : index
    %c0_2 = arith.constant 0 : index
    %2 = vector.load %arg1[%c0_1, %c0_2] : memref<3x64xf32, #tpu.memory_space<vmem>>, vector<3x64xf32>
    %cst = arith.constant dense<0.000000e+00> : vector<3x3200xf32>
    %3 = tpu.matmul %2, %1, %cst {dimension_numbers = #tpu.dot_dimension_numbers<[1], [0], [0], [1], [0, 0, 1, 1], [], []>, precision = #tpu.contract_precision<fp32>} : vector<3x64xf32>, vector<64x3200xf32>, vector<3x3200xf32> -> vector<3x3200xf32>
    %c0_3 = arith.constant 0 : index
    %c0_4 = arith.constant 0 : index
    %4 = vector.load %arg3[%c0_3, %c0_4] : memref<1x3200xf32, #tpu.memory_space<vmem>>, vector<1x3200xf32>
    %5 = vector.broadcast %4 : vector<1x3200xf32> to vector<3x3200xf32>
    %6 = arith.subf %3, %5 : vector<3x3200xf32>
    %cst_5 = arith.constant -12.0050011 : f32
    %7 = vector.broadcast %cst_5 : f32 to vector<3x3200xf32>
    %8 = arith.mulf %7, %6 : vector<3x3200xf32>
    %9 = arith.mulf %8, %6 : vector<3x3200xf32>
    %10 = math.exp %9 : vector<3x3200xf32>
    %c0_6 = arith.constant 0 : index
    %c0_7 = arith.constant 0 : index
    %11 = vector.load %arg4[%c0_6, %c0_7] : memref<3x3200xf32, #tpu.memory_space<vmem>>, vector<3x3200xf32>
    tpu.vector_store %arg4[%c0_6, %c0_7], %10 {strides = array<i32>} : memref<3x3200xf32, #tpu.memory_space<vmem>>, vector<3x3200xf32>,
    return
  }
  func.func @transform_0(%arg0: i32) -> (i32, i32) {
    %c0_i32 = arith.constant 0 : i32
    %c0_i32_0 = arith.constant 0 : i32
    return %arg0, %c0_i32 : i32, i32
  }
  func.func @transform_1(%arg0: i32) -> (i32, i32) {
    %c0_i32 = arith.constant 0 : i32
    %c0_i32_0 = arith.constant 0 : i32
    %c0_i32_1 = arith.constant 0 : i32
    return %c0_i32, %c0_i32_0 : i32, i32
  }
  func.func @transform_2(%arg0: i32) -> (i32, i32) {
    %c0_i32 = arith.constant 0 : i32
    %c0_i32_0 = arith.constant 0 : i32
    %c0_i32_1 = arith.constant 0 : i32
    return %c0_i32, %c0_i32_0 : i32, i32
  }
  func.func @transform_3(%arg0: i32) -> (i32, i32) {
    %c0_i32 = arith.constant 0 : i32
    %c0_i32_0 = arith.constant 0 : i32
    return %arg0, %c0_i32 : i32, i32
  }
}

</mosaic_0001>

<llo_original>
// kernel: tpu_custom_call.1
$region0: #{tpu_custom_call.1}
  #allocation0 [shape = 'u32[]', space=smem, size = 0x4, offset = 0x4, fixed_abs, tag = 'smem constant byte address 0x4 - core index']
  #allocation1 [shape = 'u32[144,128]{1,0:T(1,128)}', space=vmem, size = 0x12000, scoped, tag = 'internal scratch']
  %s0 = inlined_call_operand.hbm [shape: f32[3,64], index: 0, kind: input, shape index: {}]
  %s1 = inlined_call_operand.hbm [shape: bf16[64,3200], index: 1, kind: input, shape index: {}]
  %s2 = inlined_call_operand.hbm [shape: f32[1,3200], index: 2, kind: input, shape index: {}]
  %s3 = inlined_call_operand.hbm [shape: f32[3,3200], index: 3, kind: output, shape index: {}]
  %s4 = sld [smem:[#allocation0]]
  $region34: #{tpu_custom_call.1} parent=0
    _
  %s6 = ssub.s32 1, %s4
  %s7 = scalar_select 0, %s6, %s4
  $region1: #{tpu_custom_call.1} parent=0
    #allocation2 [shape = 'u8[2048]{0}', space=vmem, size = 0x800, scoped, tag = 'input window, operand 0, single buffered']
    #allocation3 [shape = 's32[1]{0}', space=sflag, size = 0x4, scoped, tag = 'scoped memory for tpu_custom_call.1']
    #allocation4 [shape = 's32[1]{0}', space=sflag, size = 0x4, scoped, tag = 'scoped memory for tpu_custom_call.1']
    #allocation5 [shape = 'u8[409600]{0}', space=vmem, size = 0x64000, scoped, tag = 'input window, operand 1, single buffered']
    #allocation6 [shape = 's32[1]{0}', space=sflag, size = 0x4, scoped, tag = 'scoped memory for tpu_custom_call.1']
    #allocation7 [shape = 'u8[12800]{0}', space=vmem, size = 0x3400, scoped, tag = 'input window, operand 2, single buffered']
    #allocation8 [shape = 'u8[51200]{0}', space=vmem, size = 0xc800, scoped, tag = 'output window, operand 0, single buffered']
    %8 = vsyncpa [#allocation3], 0
    %9 = vsyncpa [#allocation6], 0
    %10 = vsyncpa [#allocation4], 0
    // Predicated region
    $region2: #{tpu_custom_call.1} parent=1 // pred_check
      _
    $region3: #{tpu_custom_call.1} parent=1 // pred_check_branch
      %12 = sbr.rel (0) target = $region5
    $region4: #{tpu_custom_call.1} parent=1 // pred_region
      %s14 = ssub.s32 64, 64
      %15 = vsyncadd [#allocation3], %s14
      %s17 = sshll.u32 [#allocation2], 4
      %s18 = int_to_ptr.vmem [resolvable:$true] %s17
      %20 = dma.hbm_to_vmem [thread:$0]  %s0, 64, %s18, [#allocation3]
    $region5: #{tpu_custom_call.1} parent=1 // pred_fallthru
      _
    // Predicated region
    $region6: #{tpu_custom_call.1} parent=1 // pred_check
      _
    $region7: #{tpu_custom_call.1} parent=1 // pred_check_branch
      %22 = sbr.rel (0) target = $region9
    $region8: #{tpu_custom_call.1} parent=1 // pred_region
      %s24 = ssub.s32 12800, 12800
      %25 = vsyncadd [#allocation6], %s24
      %s26 = sshll.u32 [#allocation5], 4
      %s27 = int_to_ptr.vmem [resolvable:$true] %s26
      %32 = dma.hbm_to_vmem [thread:$0]  %s1, 12800, %s27, [#allocation6], 1600, 1600, 100
    $region9: #{tpu_custom_call.1} parent=1 // pred_fallthru
      _
    // Predicated region
    $region10: #{tpu_custom_call.1} parent=1 // pred_check
      _
    $region11: #{tpu_custom_call.1} parent=1 // pred_check_branch
      %34 = sbr.rel (0) target = $region13
    $region12: #{tpu_custom_call.1} parent=1 // pred_region
      %s36 = ssub.s32 400, 400
      %37 = vsyncadd [#allocation6], %s36
      %s39 = sshll.u32 [#allocation7], 4
      %s40 = int_to_ptr.vmem [resolvable:$true] %s39
      %42 = dma.hbm_to_vmem [thread:$0]  %s2, 400, %s40, [#allocation6]
    $region13: #{tpu_custom_call.1} parent=1 // pred_fallthru
      _
    // Predicated region
    $region14: #{tpu_custom_call.1} parent=1 // pred_check
      _
    $region15: #{tpu_custom_call.1} parent=1 // pred_check_branch
      %44 = sbr.rel (0) target = $region17
    $region16: #{tpu_custom_call.1} parent=1 // pred_region
      %45 = dma.done [#allocation3], 64
    $region17: #{tpu_custom_call.1} parent=1 // pred_fallthru
      _
    // Predicated region
    $region18: #{tpu_custom_call.1} parent=1 // pred_check
      _
    $region19: #{tpu_custom_call.1} parent=1 // pred_check_branch
      %47 = sbr.rel (0) target = $region21
    $region20: #{tpu_custom_call.1} parent=1 // pred_region
      %48 = dma.done [#allocation6], 12800
    $region21: #{tpu_custom_call.1} parent=1 // pred_fallthru
      _
    // Predicated region
    $region22: #{tpu_custom_call.1} parent=1 // pred_check
      _
    $region23: #{tpu_custom_call.1} parent=1 // pred_check_branch
      %50 = sbr.rel (0) target = $region25
    $region24: #{tpu_custom_call.1} parent=1 // pred_region
      %51 = dma.done [#allocation6], 400
    $region25: #{tpu_custom_call.1} parent=1 // pred_fallthru
      _
    %v52 = vld [vmem:[#allocation5] sm:$0xff]
    %v53 = vld [vmem:[#allocation5 + $0x8] sm:$0xff]
    %v54 = vld [vmem:[#allocation5 + $0x10] sm:$0xff]
    %v55 = vld [vmem:[#allocation5 + $0x18] sm:$0xff]
    %v56 = vld [vmem:[#allocation5 + $0x20] sm:$0xff]
    %v57 = vld [vmem:[#allocation5 + $0x28] sm:$0xff]
    %v58 = vld [vmem:[#allocation5 + $0x30] sm:$0xff]
    %v59 = vld [vmem:[#allocation5 + $0x38] sm:$0xff]
    %v60 = vld [vmem:[#allocation5 + $0x40] sm:$0xff]
    %v61 = vld [vmem:[#allocation5 + $0x48] sm:$0xff]
    %v62 = vld [vmem:[#allocation5 + $0x50] sm:$0xff]
    %v63 = vld [vmem:[#allocation5 + $0x58] sm:$0xff]
    %v64 = vld [vmem:[#allocation5 + $0x60] sm:$0xf]
    %v65 = vld [vmem:[#allocation5 + $0x64] sm:$0xff]
    %v66 = vld [vmem:[#allocation5 + $0x6c] sm:$0xff]
    %v67 = vld [vmem:[#allocation5 + $0x74] sm:$0xff]
    %v68 = vld [vmem:[#allocation5 + $0x7c] sm:$0xff]
    %v69 = vld [vmem:[#allocation5 + $0x84] sm:$0xff]
    %v70 = vld [vmem:[#allocation5 + $0x8c] sm:$0xff]
    %v71 = vld [vmem:[#allocation5 + $0x94] sm:$0xff]
    %v72 = vld [vmem:[#allocation5 + $0x9c] sm:$0xff]
    %v73 = vld [vmem:[#allocation5 + $0xa4] sm:$0xff]
    %v74 = vld [vmem:[#allocation5 + $0xac] sm:$0xff]
    %v75 = vld [vmem:[#allocation5 + $0xb4] sm:$0xff]
    %v76 = vld [vmem:[#allocation5 + $0xbc] sm:$0xff]
    %v77 = vld [vmem:[#allocation5 + $0xc4] sm:$0xf]
    %v78 = vld [vmem:[#allocation5 + $0xc8] sm:$0xff]
    %v79 = vld [vmem:[#allocation5 + $0xd0] sm:$0xff]
    %v80 = vld [vmem:[#allocation5 + $0xd8] sm:$0xff]
    %v81 = vld [vmem:[#allocation5 + $0xe0] sm:$0xff]
    %v82 = vld [vmem:[#allocation5 + $0xe8] sm:$0xff]
    %v83 = vld [vmem:[#allocation5 + $0xf0] sm:$0xff]
    %v84 = vld [vmem:[#allocation5 + $0xf8] sm:$0xff]
    %v85 = vld [vmem:[#allocation5 + $0x100] sm:$0xff]
    %v86 = vld [vmem:[#allocation5 + $0x108] sm:$0xff]
    %v87 = vld [vmem:[#allocation5 + $0x110] sm:$0xff]
    %v88 = vld [vmem:[#allocation5 + $0x118] sm:$0xff]
    %v89 = vld [vmem:[#allocation5 + $0x120] sm:$0xff]
    %v90 = vld [vmem:[#allocation5 + $0x128] sm:$0xf]
    %v91 = vld [vmem:[#allocation5 + $0x12c] sm:$0xff]
    %v92 = vld [vmem:[#allocation5 + $0x134] sm:$0xff]
    %v93 = vld [vmem:[#allocation5 + $0x13c] sm:$0xff]
    %v94 = vld [vmem:[#allocation5 + $0x144] sm:$0xff]
    %v95 = vld [vmem:[#allocation5 + $0x14c] sm:$0xff]
    %v96 = vld [vmem:[#allocation5 + $0x154] sm:$0xff]
    %v97 = vld [vmem:[#allocation5 + $0x15c] sm:$0xff]
    %v98 = vld [vmem:[#allocation5 + $0x164] sm:$0xff]
    %v99 = vld [vmem:[#allocation5 + $0x16c] sm:$0xff]
    %v100 = vld [vmem:[#allocation5 + $0x174] sm:$0xff]
    %v101 = vld [vmem:[#allocation5 + $0x17c] sm:$0xff]
    %v102 = vld [vmem:[#allocation5 + $0x184] sm:$0xff]
    %v103 = vld [vmem:[#allocation5 + $0x18c] sm:$0xf]
    %v104 = vld [vmem:[#allocation5 + $0x190] sm:$0xff]
    %v105 = vld [vmem:[#allocation5 + $0x198] sm:$0xff]
    %v106 = vld [vmem:[#allocation5 + $0x1a0] sm:$0xff]
    %v107 = vld [vmem:[#allocation5 + $0x1a8] sm:$0xff]
    %v108 = vld [vmem:[#allocation5 + $0x1b0] sm:$0xff]
    %v109 = vld [vmem:[#allocation5 + $0x1b8] sm:$0xff]
    %v110 = vld [vmem:[#allocation5 + $0x1c0] sm:$0xff]
    %v111 = vld [vmem:[#allocation5 + $0x1c8] sm:$0xff]
    %v112 = vld [vmem:[#allocation5 + $0x1d0] sm:$0xff]
    %v113 = vld [vmem:[#allocation5 + $0x1d8] sm:$0xff]
    %v114 = vld [vmem:[#allocation5 + $0x1e0] sm:$0xff]
    %v115 = vld [vmem:[#allocation5 + $0x1e8] sm:$0xff]
    %v116 = vld [vmem:[#allocation5 + $0x1f0] sm:$0xf]
    %v117 = vld [vmem:[#allocation5 + $0x1f4] sm:$0xff]
    %v118 = vld [vmem:[#allocation5 + $0x1fc] sm:$0xff]
    %v119 = vld [vmem:[#allocation5 + $0x204] sm:$0xff]
    %v120 = vld [vmem:[#allocation5 + $0x20c] sm:$0xff]
    %v121 = vld [vmem:[#allocation5 + $0x214] sm:$0xff]
    %v122 = vld [vmem:[#allocation5 + $0x21c] sm:$0xff]
    %v123 = vld [vmem:[#allocation5 + $0x224] sm:$0xff]
    %v124 = vld [vmem:[#allocation5 + $0x22c] sm:$0xff]
    %v125 = vld [vmem:[#allocation5 + $0x234] sm:$0xff]
    %v126 = vld [vmem:[#allocation5 + $0x23c] sm:$0xff]
    %v127 = vld [vmem:[#allocation5 + $0x244] sm:$0xff]
    %v128 = vld [vmem:[#allocation5 + $0x24c] sm:$0xff]
    %v129 = vld [vmem:[#allocation5 + $0x254] sm:$0xf]
    %v130 = vld [vmem:[#allocation5 + $0x258] sm:$0xff]
    %v131 = vld [vmem:[#allocation5 + $0x260] sm:$0xff]
    %v132 = vld [vmem:[#allocation5 + $0x268] sm:$0xff]
    %v133 = vld [vmem:[#allocation5 + $0x270] sm:$0xff]
    %v134 = vld [vmem:[#allocation5 + $0x278] sm:$0xff]
    %v135 = vld [vmem:[#allocation5 + $0x280] sm:$0xff]
    %v136 = vld [vmem:[#allocation5 + $0x288] sm:$0xff]
    %v137 = vld [vmem:[#allocation5 + $0x290] sm:$0xff]
    %v138 = vld [vmem:[#allocation5 + $0x298] sm:$0xff]
    %v139 = vld [vmem:[#allocation5 + $0x2a0] sm:$0xff]
    %v140 = vld [vmem:[#allocation5 + $0x2a8] sm:$0xff]
    %v141 = vld [vmem:[#allocation5 + $0x2b0] sm:$0xff]
    %v142 = vld [vmem:[#allocation5 + $0x2b8] sm:$0xf]
    %v143 = vld [vmem:[#allocation5 + $0x2bc] sm:$0xff]
    %v144 = vld [vmem:[#allocation5 + $0x2c4] sm:$0xff]
    %v145 = vld [vmem:[#allocation5 + $0x2cc] sm:$0xff]
    %v146 = vld [vmem:[#allocation5 + $0x2d4] sm:$0xff]
    %v147 = vld [vmem:[#allocation5 + $0x2dc] sm:$0xff]
    %v148 = vld [vmem:[#allocation5 + $0x2e4] sm:$0xff]
    %v149 = vld [vmem:[#allocation5 + $0x2ec] sm:$0xff]
    %v150 = vld [vmem:[#allocation5 + $0x2f4] sm:$0xff]
    %v151 = vld [vmem:[#allocation5 + $0x2fc] sm:$0xff]
    %v152 = vld [vmem:[#allocation5 + $0x304] sm:$0xff]
    %v153 = vld [vmem:[#allocation5 + $0x30c] sm:$0xff]
    %v154 = vld [vmem:[#allocation5 + $0x314] sm:$0xff]
    %v155 = vld [vmem:[#allocation5 + $0x31c] sm:$0xf]
    %v156 = vunpack.c.l.bf16 %v52
    %v157 = vunpack.c.h.bf16 %v52
    %v158 = vunpack.c.l.bf16 %v53
    %v159 = vunpack.c.h.bf16 %v53
    %v160 = vunpack.c.l.bf16 %v54
    %v161 = vunpack.c.h.bf16 %v54
    %v162 = vunpack.c.l.bf16 %v55
    %v163 = vunpack.c.h.bf16 %v55
    %v164 = vunpack.c.l.bf16 %v56
    %v165 = vunpack.c.h.bf16 %v56
    %v166 = vunpack.c.l.bf16 %v57
    %v167 = vunpack.c.h.bf16 %v57
    %v168 = vunpack.c.l.bf16 %v58
    %v169 = vunpack.c.h.bf16 %v58
    %v170 = vunpack.c.l.bf16 %v59
    %v171 = vunpack.c.h.bf16 %v59
    %v172 = vunpack.c.l.bf16 %v60
    %v173 = vunpack.c.h.bf16 %v60
    %v174 = vunpack.c.l.bf16 %v61
    %v175 = vunpack.c.h.bf16 %v61
    %v176 = vunpack.c.l.bf16 %v62
    %v177 = vunpack.c.h.bf16 %v62
    %v178 = vunpack.c.l.bf16 %v63
    %v179 = vunpack.c.h.bf16 %v63
    %v180 = vunpack.c.l.bf16 %v64
    %v181 = vunpack.c.l.bf16 %v65
    %v182 = vunpack.c.h.bf16 %v65
    %v183 = vunpack.c.l.bf16 %v66
    %v184 = vunpack.c.h.bf16 %v66
    %v185 = vunpack.c.l.bf16 %v67
    %v186 = vunpack.c.h.bf16 %v67
    %v187 = vunpack.c.l.bf16 %v68
    %v188 = vunpack.c.h.bf16 %v68
    %v189 = vunpack.c.l.bf16 %v69
    %v190 = vunpack.c.h.bf16 %v69
    %v191 = vunpack.c.l.bf16 %v70
    %v192 = vunpack.c.h.bf16 %v70
    %v193 = vunpack.c.l.bf16 %v71
    %v194 = vunpack.c.h.bf16 %v71
    %v195 = vunpack.c.l.bf16 %v72
    %v196 = vunpack.c.h.bf16 %v72
    %v197 = vunpack.c.l.bf16 %v73
    %v198 = vunpack.c.h.bf16 %v73
    %v199 = vunpack.c.l.bf16 %v74
    %v200 = vunpack.c.h.bf16 %v74
    %v201 = vunpack.c.l.bf16 %v75
    %v202 = vunpack.c.h.bf16 %v75
    %v203 = vunpack.c.l.bf16 %v76
    %v204 = vunpack.c.h.bf16 %v76
    %v205 = vunpack.c.l.bf16 %v77
    %v206 = vunpack.c.l.bf16 %v78
    %v207 = vunpack.c.h.bf16 %v78
    %v208 = vunpack.c.l.bf16 %v79
    %v209 = vunpack.c.h.bf16 %v79
    %v210 = vunpack.c.l.bf16 %v80
    %v211 = vunpack.c.h.bf16 %v80
    %v212 = vunpack.c.l.bf16 %v81
    %v213 = vunpack.c.h.bf16 %v81
    %v214 = vunpack.c.l.bf16 %v82
    %v215 = vunpack.c.h.bf16 %v82
    %v216 = vunpack.c.l.bf16 %v83
    %v217 = vunpack.c.h.bf16 %v83
    %v218 = vunpack.c.l.bf16 %v84
    %v219 = vunpack.c.h.bf16 %v84
    %v220 = vunpack.c.l.bf16 %v85
    %v221 = vunpack.c.h.bf16 %v85
    %v222 = vunpack.c.l.bf16 %v86
    %v223 = vunpack.c.h.bf16 %v86
    %v224 = vunpack.c.l.bf16 %v87
    %v225 = vunpack.c.h.bf16 %v87
    %v226 = vunpack.c.l.bf16 %v88
    %v227 = vunpack.c.h.bf16 %v88
    %v228 = vunpack.c.l.bf16 %v89
    %v229 = vunpack.c.h.bf16 %v89
    %v230 = vunpack.c.l.bf16 %v90
    %v231 = vunpack.c.l.bf16 %v91
    %v232 = vunpack.c.h.bf16 %v91
    %v233 = vunpack.c.l.bf16 %v92
    %v234 = vunpack.c.h.bf16 %v92
    %v235 = vunpack.c.l.bf16 %v93
    %v236 = vunpack.c.h.bf16 %v93
    %v237 = vunpack.c.l.bf16 %v94
    %v238 = vunpack.c.h.bf16 %v94
    %v239 = vunpack.c.l.bf16 %v95
    %v240 = vunpack.c.h.bf16 %v95
    %v241 = vunpack.c.l.bf16 %v96
    %v242 = vunpack.c.h.bf16 %v96
    %v243 = vunpack.c.l.bf16 %v97
    %v244 = vunpack.c.h.bf16 %v97
    %v245 = vunpack.c.l.bf16 %v98
    %v246 = vunpack.c.h.bf16 %v98
    %v247 = vunpack.c.l.bf16 %v99
    %v248 = vunpack.c.h.bf16 %v99
    %v249 = vunpack.c.l.bf16 %v100
    %v250 = vunpack.c.h.bf16 %v100
    %v251 = vunpack.c.l.bf16 %v101
    %v252 = vunpack.c.h.bf16 %v101
    %v253 = vunpack.c.l.bf16 %v102
    %v254 = vunpack.c.h.bf16 %v102
    %v255 = vunpack.c.l.bf16 %v103
    %v256 = vunpack.c.l.bf16 %v104
    %v257 = vunpack.c.h.bf16 %v104
    %v258 = vunpack.c.l.bf16 %v105
    %v259 = vunpack.c.h.bf16 %v105
    %v260 = vunpack.c.l.bf16 %v106
    %v261 = vunpack.c.h.bf16 %v106
    %v262 = vunpack.c.l.bf16 %v107
    %v263 = vunpack.c.h.bf16 %v107
    %v264 = vunpack.c.l.bf16 %v108
    %v265 = vunpack.c.h.bf16 %v108
    %v266 = vunpack.c.l.bf16 %v109
    %v267 = vunpack.c.h.bf16 %v109
    %v268 = vunpack.c.l.bf16 %v110
    %v269 = vunpack.c.h.bf16 %v110
    %v270 = vunpack.c.l.bf16 %v111
    %v271 = vunpack.c.h.bf16 %v111
    %v272 = vunpack.c.l.bf16 %v112
    %v273 = vunpack.c.h.bf16 %v112
    %v274 = vunpack.c.l.bf16 %v113
    %v275 = vunpack.c.h.bf16 %v113
    %v276 = vunpack.c.l.bf16 %v114
    %v277 = vunpack.c.h.bf16 %v114
    %v278 = vunpack.c.l.bf16 %v115
    %v279 = vunpack.c.h.bf16 %v115
    %v280 = vunpack.c.l.bf16 %v116
    %v281 = vunpack.c.l.bf16 %v117
    %v282 = vunpack.c.h.bf16 %v117
    %v283 = vunpack.c.l.bf16 %v118
    %v284 = vunpack.c.h.bf16 %v118
    %v285 = vunpack.c.l.bf16 %v119
    %v286 = vunpack.c.h.bf16 %v119
    %v287 = vunpack.c.l.bf16 %v120
    %v288 = vunpack.c.h.bf16 %v120
    %v289 = vunpack.c.l.bf16 %v121
    %v290 = vunpack.c.h.bf16 %v121
    %v291 = vunpack.c.l.bf16 %v122
    %v292 = vunpack.c.h.bf16 %v122
    %v293 = vunpack.c.l.bf16 %v123
    %v294 = vunpack.c.h.bf16 %v123
    %v295 = vunpack.c.l.bf16 %v124
    %v296 = vunpack.c.h.bf16 %v124
    %v297 = vunpack.c.l.bf16 %v125
    %v298 = vunpack.c.h.bf16 %v125
    %v299 = vunpack.c.l.bf16 %v126
    %v300 = vunpack.c.h.bf16 %v126
    %v301 = vunpack.c.l.bf16 %v127
    %v302 = vunpack.c.h.bf16 %v127
    %v303 = vunpack.c.l.bf16 %v128
    %v304 = vunpack.c.h.bf16 %v128
    %v305 = vunpack.c.l.bf16 %v129
    %v306 = vunpack.c.l.bf16 %v130
    %v307 = vunpack.c.h.bf16 %v130
    %v308 = vunpack.c.l.bf16 %v131
    %v309 = vunpack.c.h.bf16 %v131
    %v310 = vunpack.c.l.bf16 %v132
    %v311 = vunpack.c.h.bf16 %v132
    %v312 = vunpack.c.l.bf16 %v133
    %v313 = vunpack.c.h.bf16 %v133
    %v314 = vunpack.c.l.bf16 %v134
    %v315 = vunpack.c.h.bf16 %v134
    %v316 = vunpack.c.l.bf16 %v135
    %v317 = vunpack.c.h.bf16 %v135
    %v318 = vunpack.c.l.bf16 %v136
    %v319 = vunpack.c.h.bf16 %v136
    %v320 = vunpack.c.l.bf16 %v137
    %v321 = vunpack.c.h.bf16 %v137
    %v322 = vunpack.c.l.bf16 %v138
    %v323 = vunpack.c.h.bf16 %v138
    %v324 = vunpack.c.l.bf16 %v139
    %v325 = vunpack.c.h.bf16 %v139
    %v326 = vunpack.c.l.bf16 %v140
    %v327 = vunpack.c.h.bf16 %v140
    %v328 = vunpack.c.l.bf16 %v141
    %v329 = vunpack.c.h.bf16 %v141
    %v330 = vunpack.c.l.bf16 %v142
    %v331 = vunpack.c.l.bf16 %v143
    %v332 = vunpack.c.h.bf16 %v143
    %v333 = vunpack.c.l.bf16 %v144
    %v334 = vunpack.c.h.bf16 %v144
    %v335 = vunpack.c.l.bf16 %v145
    %v336 = vunpack.c.h.bf16 %v145
    %v337 = vunpack.c.l.bf16 %v146
    %v338 = vunpack.c.h.bf16 %v146
    %v339 = vunpack.c.l.bf16 %v147
    %v340 = vunpack.c.h.bf16 %v147
    %v341 = vunpack.c.l.bf16 %v148
    %v342 = vunpack.c.h.bf16 %v148
    %v343 = vunpack.c.l.bf16 %v149
    %v344 = vunpack.c.h.bf16 %v149
    %v345 = vunpack.c.l.bf16 %v150
    %v346 = vunpack.c.h.bf16 %v150
    %v347 = vunpack.c.l.bf16 %v151
    %v348 = vunpack.c.h.bf16 %v151
    %v349 = vunpack.c.l.bf16 %v152
    %v350 = vunpack.c.h.bf16 %v152
    %v351 = vunpack.c.l.bf16 %v153
    %v352 = vunpack.c.h.bf16 %v153
    %v353 = vunpack.c.l.bf16 %v154
    %v354 = vunpack.c.h.bf16 %v154
    %v355 = vunpack.c.l.bf16 %v155
    %v356 = vld [vmem:[#allocation2] sm:$0x7]
    %vm357 = vcmask 523264
    %v359 = vsel %vm357, %v356, 0
    %361 = vmatprep.subr.mxu0 0.0
    %362 = vmatpush1.msra.mxu0 0.0
    %363 = vmatprep.subr.mxu0 0.0
    %364 = vmatpush1.msra.mxu0 0.0
    %365 = vmatprep.subr.mxu0 0.0
    %366 = vmatpush1.msra.mxu0 0.0
    %367 = vmatprep.subr.mxu0 0.0
    %368 = vmatpush1.msra.mxu0 0.0
    %369 = vmatprep.subr.mxu0 0.0
    %370 = vmatpush1.msra.mxu0 0.0
    %371 = vmatprep.subr.mxu0 0.0
    %372 = vmatpush1.msra.mxu0 0.0
    %373 = vmatprep.subr.mxu0 0.0
    %374 = vmatpush1.msra.mxu0 0.0
    %375 = vmatprep.subr.mxu0 0.0
    %376 = vmatpush1.msra.mxu0 0.0
    %377 = vmatprep.subr.mxu0 %v332
    %378 = vmatpush1.msra.mxu0 %v331
    %379 = vmatprep.subr.mxu0 %v307
    %380 = vmatpush1.msra.mxu0 %v306
    %381 = vmatprep.subr.mxu0 %v282
    %382 = vmatpush1.msra.mxu0 %v281
    %383 = vmatprep.subr.mxu0 %v257
    %384 = vmatpush1.msra.mxu0 %v256
    %385 = vmatprep.subr.mxu0 %v232
    %386 = vmatpush1.msra.mxu0 %v231
    %387 = vmatprep.subr.mxu0 %v207
    %388 = vmatpush1.msra.mxu0 %v206
    %389 = vmatprep.subr.mxu0 %v182
    %390 = vmatpush1.msra.mxu0 %v181
    %391 = vmatprep.subr.mxu0 %v157
    %392 = vmatpush1.msra.mxu0 %v156
    %393 = vmatprep.subr.mxu0 0.0
    %394 = vmatpush2.msra.mxu0 0.0
    %395 = vmatprep.subr.mxu0 0.0
    %396 = vmatpush2.msra.mxu0 0.0
    %397 = vmatprep.subr.mxu0 0.0
    %398 = vmatpush2.msra.mxu0 0.0
    %399 = vmatprep.subr.mxu0 0.0
    %400 = vmatpush2.msra.mxu0 0.0
    %401 = vmatprep.subr.mxu0 0.0
    %402 = vmatpush2.msra.mxu0 0.0
    %403 = vmatprep.subr.mxu0 0.0
    %404 = vmatpush2.msra.mxu0 0.0
    %405 = vmatprep.subr.mxu0 0.0
    %406 = vmatpush2.msra.mxu0 0.0
    %407 = vmatprep.subr.mxu0 0.0
    %408 = vmatpush2.msra.mxu0 0.0
    %409 = vmatprep.subr.mxu0 0.0
    %410 = vmatpush2.msra.mxu0 0.0
    %411 = vmatprep.subr.mxu0 0.0
    %412 = vmatpush2.msra.mxu0 0.0
    %413 = vmatprep.subr.mxu0 0.0
    %414 = vmatpush2.msra.mxu0 0.0
    %415 = vmatprep.subr.mxu0 0.0
    %416 = vmatpush2.msra.mxu0 0.0
    %417 = vmatprep.subr.mxu0 0.0
    %418 = vmatpush2.msra.mxu0 0.0
    %419 = vmatprep.subr.mxu0 0.0
    %420 = vmatpush2.msra.mxu0 0.0
    %421 = vmatprep.subr.mxu0 0.0
    %422 = vmatpush2.msra.mxu0 0.0
    %423 = vmatprep.subr.mxu0 0.0
    %424 = vmatpush2.msra.mxu0 0.0
    %425 = vmatprep.mubr.f32.mxu0 0.0
    %v426 = vand.u32 %v359, 4294901760
    %v427 = vsub.f32 %v359, %v426
    %v428 = vand.u32 %v427, 4294901760
    %v429 = vsub.f32 %v427, %v428
    %v430 = vand.u32 %v429, 4294901760
    %431 = vmatmul.mubr.f32.gmra.mxu0 %v430
    %v432 = vpop.f32.mrf.mxu0
    %v433 = vadd.f32 0.0, %v432
    %v434 = vpop.f32.mrf.mxu0
    %v435 = vadd.f32 0.0, %v434
    %436 = vdwg.mxu0
    %437 = vmatprep.subr.mxu0 0.0
    %438 = vmatpush1.msra.mxu0 0.0
    %439 = vmatprep.subr.mxu0 0.0
    %440 = vmatpush1.msra.mxu0 0.0
    %441 = vmatprep.subr.mxu0 0.0
    %442 = vmatpush1.msra.mxu0 0.0
    %443 = vmatprep.subr.mxu0 0.0
    %444 = vmatpush1.msra.mxu0 0.0
    %445 = vmatprep.subr.mxu0 0.0
    %446 = vmatpush1.msra.mxu0 0.0
    %447 = vmatprep.subr.mxu0 0.0
    %448 = vmatpush1.msra.mxu0 0.0
    %449 = vmatprep.subr.mxu0 0.0
    %450 = vmatpush1.msra.mxu0 0.0
    %451 = vmatprep.subr.mxu0 0.0
    %452 = vmatpush1.msra.mxu0 0.0
    %v453 = vsub.f32 %v332, %v332
    %v454 = vand.u32 %v453, 4294901760
    %v455 = vsub.f32 %v453, %v454
    %v456 = vand.u32 %v455, 4294901760
    %457 = vmatprep.subr.mxu0 %v456
    %v458 = vsub.f32 %v331, %v331
    %v459 = vand.u32 %v458, 4294901760
    %v460 = vsub.f32 %v458, %v459
    %v461 = vand.u32 %v460, 4294901760
    %462 = vmatpush1.msra.mxu0 %v461
    %v463 = vsub.f32 %v307, %v307
    %v464 = vand.u32 %v463, 4294901760
    %v465 = vsub.f32 %v463, %v464
    %v466 = vand.u32 %v465, 4294901760
    %467 = vmatprep.subr.mxu0 %v466
    %v468 = vsub.f32 %v306, %v306
    %v469 = vand.u32 %v468, 4294901760
    %v470 = vsub.f32 %v468, %v469
    %v471 = vand.u32 %v470, 4294901760
    %472 = vmatpush1.msra.mxu0 %v471
    %v473 = vsub.f32 %v282, %v282
    %v474 = vand.u32 %v473, 4294901760
    %v475 = vsub.f32 %v473, %v474
    %v476 = vand.u32 %v475, 4294901760
    %477 = vmatprep.subr.mxu0 %v476
    %v478 = vsub.f32 %v281, %v281
    %v479 = vand.u32 %v478, 4294901760
    %v480 = vsub.f32 %v478, %v479
    %v481 = vand.u32 %v480, 4294901760
    %482 = vmatpush1.msra.mxu0 %v481
    %v483 = vsub.f32 %v257, %v257
    %v484 = vand.u32 %v483, 4294901760
    %v485 = vsub.f32 %v483, %v484
    %v486 = vand.u32 %v485, 4294901760
    %487 = vmatprep.subr.mxu0 %v486
    %v488 = vsub.f32 %v256, %v256
    %v489 = vand.u32 %v488, 4294901760
    %v490 = vsub.f32 %v488, %v489
    %v491 = vand.u32 %v490, 4294901760
    %492 = vmatpush1.msra.mxu0 %v491
    %v493 = vsub.f32 %v232, %v232
    %v494 = vand.u32 %v493, 4294901760
    %v495 = vsub.f32 %v493, %v494
    %v496 = vand.u32 %v495, 4294901760
    %497 = vmatprep.subr.mxu0 %v496
    %v498 = vsub.f32 %v231, %v231
    %v499 = vand.u32 %v498, 4294901760
    %v500 = vsub.f32 %v498, %v499
    %v501 = vand.u32 %v500, 4294901760
    %502 = vmatpush1.msra.mxu0 %v501
    %v503 = vsub.f32 %v207, %v207
    %v504 = vand.u32 %v503, 4294901760
    %v505 = vsub.f32 %v503, %v504
    %v506 = vand.u32 %v505, 4294901760
    %507 = vmatprep.subr.mxu0 %v506
    %v508 = vsub.f32 %v206, %v206
    %v509 = vand.u32 %v508, 4294901760
    %v510 = vsub.f32 %v508, %v509
    %v511 = vand.u32 %v510, 4294901760
    %512 = vmatpush1.msra.mxu0 %v511
    %v513 = vsub.f32 %v182, %v182
    %v514 = vand.u32 %v513, 4294901760
    %v515 = vsub.f32 %v513, %v514
    %v516 = vand.u32 %v515, 4294901760
    %517 = vmatprep.subr.mxu0 %v516
    %v518 = vsub.f32 %v181, %v181
    %v519 = vand.u32 %v518, 4294901760
    %v520 = vsub.f32 %v518, %v519
    %v521 = vand.u32 %v520, 4294901760
    %522 = vmatpush1.msra.mxu0 %v521
    %v523 = vsub.f32 %v157, %v157
    %v524 = vand.u32 %v523, 4294901760
    %v525 = vsub.f32 %v523, %v524
    %v526 = vand.u32 %v525, 4294901760
    %527 = vmatprep.subr.mxu0 %v526
    %v528 = vsub.f32 %v156, %v156
    %v529 = vand.u32 %v528, 4294901760
    %v530 = vsub.f32 %v528, %v529
    %v531 = vand.u32 %v530, 4294901760
    %532 = vmatpush1.msra.mxu0 %v531
    %533 = vmatprep.subr.mxu0 0.0
    %534 = vmatpush2.msra.mxu0 0.0
    %535 = vmatprep.subr.mxu0 0.0
    %536 = vmatpush2.msra.mxu0 0.0
    %537 = vmatprep.subr.mxu0 0.0
    %538 = vmatpush2.msra.mxu0 0.0
    %539 = vmatprep.subr.mxu0 0.0
    %540 = vmatpush2.msra.mxu0 0.0
    %541 = vmatprep.subr.mxu0 0.0
    %542 = vmatpush2.msra.mxu0 0.0
    %543 = vmatprep.subr.mxu0 0.0
    %544 = vmatpush2.msra.mxu0 0.0
    %545 = vmatprep.subr.mxu0 0.0
    %546 = vmatpush2.msra.mxu0 0.0
    %547 = vmatprep.subr.mxu0 0.0
    %548 = vmatpush2.msra.mxu0 0.0
    %549 = vmatprep.subr.mxu0 0.0
    %550 = vmatpush2.msra.mxu0 0.0
    %551 = vmatprep.subr.mxu0 0.0
    %552 = vmatpush2.msra.mxu0 0.0
    %553 = vmatprep.subr.mxu0 0.0
    %554 = vmatpush2.msra.mxu0 0.0
    %555 = vmatprep.subr.mxu0 0.0
    %556 = vmatpush2.msra.mxu0 0.0
    %557 = vmatprep.subr.mxu0 0.0
    %558 = vmatpush2.msra.mxu0 0.0
    %559 = vmatprep.subr.mxu0 0.0
    %560 = vmatpush2.msra.mxu0 0.0
    %561 = vmatprep.subr.mxu0 0.0
    %562 = vmatpush2.msra.mxu0 0.0
    %563 = vmatprep.subr.mxu0 0.0
    %564 = vmatpush2.msra.mxu0 0.0
    %565 = vmatprep.mubr.f32.mxu0 0.0
    %v566 = vand.u32 %v359, 4294901760
    %567 = vmatmul.mubr.f32.gmra.mxu0 %v566
    %v568 = vpop.f32.mrf.mxu0
    %v569 = vadd.f32 %v433, %v568
    %v570 = vpop.f32.mrf.mxu0
    %v571 = vadd.f32 %v435, %v570
    %572 = vdwg.mxu0
    %573 = vmatprep.subr.mxu0 0.0
    %574 = vmatpush1.msra.mxu0 0.0
    %575 = vmatprep.subr.mxu0 0.0
    %576 = vmatpush1.msra.mxu0 0.0
    %577 = vmatprep.subr.mxu0 0.0
    %578 = vmatpush1.msra.mxu0 0.0
    %579 = vmatprep.subr.mxu0 0.0
    %580 = vmatpush1.msra.mxu0 0.0
    %581 = vmatprep.subr.mxu0 0.0
    %582 = vmatpush1.msra.mxu0 0.0
    %583 = vmatprep.subr.mxu0 0.0
    %584 = vmatpush1.msra.mxu0 0.0
    %585 = vmatprep.subr.mxu0 0.0
    %586 = vmatpush1.msra.mxu0 0.0
    %587 = vmatprep.subr.mxu0 0.0
    %588 = vmatpush1.msra.mxu0 0.0
    %v589 = vsub.f32 %v332, %v332
    %590 = vmatprep.subr.mxu0 %v589
    %v591 = vsub.f32 %v331, %v331
    %592 = vmatpush1.msra.mxu0 %v591
    %v593 = vsub.f32 %v307, %v307
    %594 = vmatprep.subr.mxu0 %v593
    %v595 = vsub.f32 %v306, %v306
    %596 = vmatpush1.msra.mxu0 %v595
    %v597 = vsub.f32 %v282, %v282
    %598 = vmatprep.subr.mxu0 %v597
    %v599 = vsub.f32 %v281, %v281
    %600 = vmatpush1.msra.mxu0 %v599
    %v601 = vsub.f32 %v257, %v257
    %602 = vmatprep.subr.mxu0 %v601
    %v603 = vsub.f32 %v256, %v256
    %604 = vmatpush1.msra.mxu0 %v603
    %v605 = vsub.f32 %v232, %v232
    %606 = vmatprep.subr.mxu0 %v605
    %v607 = vsub.f32 %v231, %v231
    %608 = vmatpush1.msra.mxu0 %v607
    %v609 = vsub.f32 %v207, %v207
    %610 = vmatprep.subr.mxu0 %v609
    %v611 = vsub.f32 %v206, %v206
    %612 = vmatpush1.msra.mxu0 %v611
    %v613 = vsub.f32 %v182, %v182
    %614 = vmatprep.subr.mxu0 %v613
    %v615 = vsub.f32 %v181, %v181
    %616 = vmatpush1.msra.mxu0 %v615
    %v617 = vsub.f32 %v157, %v157
    %618 = vmatprep.subr.mxu0 %v617
    %v619 = vsub.f32 %v156, %v156
    %620 = vmatpush1.msra.mxu0 %v619
    %621 = vmatprep.subr.mxu0 0.0
    %622 = vmatpush2.msra.mxu0 0.0
    %623 = vmatprep.subr.mxu0 0.0
    %624 = vmatpush2.msra.mxu0 0.0
    %625 = vmatprep.subr.mxu0 0.0
    %626 = vmatpush2.msra.mxu0 0.0
    %627 = vmatprep.subr.mxu0 0.0
    %628 = vmatpush2.msra.mxu0 0.0
    %629 = vmatprep.subr.mxu0 0.0
    %630 = vmatpush2.msra.mxu0 0.0
    %631 = vmatprep.subr.mxu0 0.0
    %632 = vmatpush2.msra.mxu0 0.0
    %633 = vmatprep.subr.mxu0 0.0
    %634 = vmatpush2.msra.mxu0 0.0
    %635 = vmatprep.subr.mxu0 0.0
    %636 = vmatpush2.msra.mxu0 0.0
    %637 = vmatprep.subr.mxu0 0.0
    %638 = vmatpush2.msra.mxu0 0.0
    %639 = vmatprep.subr.mxu0 0.0
    %640 = vmatpush2.msra.mxu0 0.0
    %641 = vmatprep.subr.mxu0 0.0
    %642 = vmatpush2.msra.mxu0 0.0
    %643 = vmatprep.subr.mxu0 0.0
    %644 = vmatpush2.msra.mxu0 0.0
    %645 = vmatprep.subr.mxu0 0.0
    %646 = vmatpush2.msra.mxu0 0.0
    %647 = vmatprep.subr.mxu0 0.0
    %648 = vmatpush2.msra.mxu0 0.0
    %649 = vmatprep.subr.mxu0 0.0
    %650 = vmatpush2.msra.mxu0 0.0
    %651 = vmatprep.subr.mxu0 0.0
    %652 = vmatpush2.msra.mxu0 0.0
    %653 = vmatprep.mubr.f32.mxu0 0.0
    %v654 = vand.u32 %v359, 4294901760
    %v655 = vsub.f32 %v359, %v654
    %656 = vmatmul.mubr.f32.gmra.mxu0 %v655
    %v657 = vpop.f32.mrf.mxu0
    %v658 = vadd.f32 %v569, %v657
    %v659 = vpop.f32.mrf.mxu0
    %v660 = vadd.f32 %v571, %v659
    %661 = vdwg.mxu0
    %662 = vmatprep.subr.mxu0 0.0
    %663 = vmatpush1.msra.mxu0 0.0
    %664 = vmatprep.subr.mxu0 0.0
    %665 = vmatpush1.msra.mxu0 0.0
    %666 = vmatprep.subr.mxu0 0.0
    %667 = vmatpush1.msra.mxu0 0.0
    %668 = vmatprep.subr.mxu0 0.0
    %669 = vmatpush1.msra.mxu0 0.0
    %670 = vmatprep.subr.mxu0 0.0
    %671 = vmatpush1.msra.mxu0 0.0
    %672 = vmatprep.subr.mxu0 0.0
    %673 = vmatpush1.msra.mxu0 0.0
    %674 = vmatprep.subr.mxu0 0.0
    %675 = vmatpush1.msra.mxu0 0.0
    %676 = vmatprep.subr.mxu0 0.0
    %677 = vmatpush1.msra.mxu0 0.0
    %678 = vmatprep.subr.mxu0 %v332
    %679 = vmatpush1.msra.mxu0 %v331
    %680 = vmatprep.subr.mxu0 %v307
    %681 = vmatpush1.msra.mxu0 %v306
    %682 = vmatprep.subr.mxu0 %v282
    %683 = vmatpush1.msra.mxu0 %v281
    %684 = vmatprep.subr.mxu0 %v257
    %685 = vmatpush1.msra.mxu0 %v256
    %686 = vmatprep.subr.mxu0 %v232
    %687 = vmatpush1.msra.mxu0 %v231
    %688 = vmatprep.subr.mxu0 %v207
    %689 = vmatpush1.msra.mxu0 %v206
    %690 = vmatprep.subr.mxu0 %v182
    %691 = vmatpush1.msra.mxu0 %v181
    %692 = vmatprep.subr.mxu0 %v157
    %693 = vmatpush1.msra.mxu0 %v156
    %694 = vmatprep.subr.mxu0 0.0
    %695 = vmatpush2.msra.mxu0 0.0
    %696 = vmatprep.subr.mxu0 0.0
    %697 = vmatpush2.msra.mxu0 0.0
    %698 = vmatprep.subr.mxu0 0.0
    %699 = vmatpush2.msra.mxu0 0.0
    %700 = vmatprep.subr.mxu0 0.0
    %701 = vmatpush2.msra.mxu0 0.0
    %702 = vmatprep.subr.mxu0 0.0
    %703 = vmatpush2.msra.mxu0 0.0
    %704 = vmatprep.subr.mxu0 0.0
    %705 = vmatpush2.msra.mxu0 0.0
    %706 = vmatprep.subr.mxu0 0.0
    %707 = vmatpush2.msra.mxu0 0.0
    %708 = vmatprep.subr.mxu0 0.0
    %709 = vmatpush2.msra.mxu0 0.0
    %710 = vmatprep.subr.mxu0 0.0
    %711 = vmatpush2.msra.mxu0 0.0
    %712 = vmatprep.subr.mxu0 0.0
    %713 = vmatpush2.msra.mxu0 0.0
    %714 = vmatprep.subr.mxu0 0.0
    %715 = vmatpush2.msra.mxu0 0.0
    %716 = vmatprep.subr.mxu0 0.0
    %717 = vmatpush2.msra.mxu0 0.0
    %718 = vmatprep.subr.mxu0 0.0
    %719 = vmatpush2.msra.mxu0 0.0
    %720 = vmatprep.subr.mxu0 0.0
    %721 = vmatpush2.msra.mxu0 0.0
    %722 = vmatprep.subr.mxu0 0.0
    %723 = vmatpush2.msra.mxu0 0.0
    %724 = vmatprep.subr.mxu0 0.0
    %725 = vmatpush2.msra.mxu0 0.0
    %726 = vmatprep.mubr.f32.mxu0 0.0
    %v727 = vand.u32 %v359, 4294901760
    %v728 = vsub.f32 %v359, %v727
    %v729 = vand.u32 %v728, 4294901760
    %730 = vmatmul.mubr.f32.gmra.mxu0 %v729
    %v731 = vpop.f32.mrf.mxu0
    %v732 = vadd.f32 %v658, %v731
    %v733 = vpop.f32.mrf.mxu0
    %v734 = vadd.f32 %v660, %v733
    %735 = vdwg.mxu0
    %736 = vmatprep.subr.mxu0 0.0
    %737 = vmatpush1.msra.mxu0 0.0
    %738 = vmatprep.subr.mxu0 0.0
    %739 = vmatpush1.msra.mxu0 0.0
    %740 = vmatprep.subr.mxu0 0.0
    %741 = vmatpush1.msra.mxu0 0.0
    %742 = vmatprep.subr.mxu0 0.0
    %743 = vmatpush1.msra.mxu0 0.0
    %744 = vmatprep.subr.mxu0 0.0
    %745 = vmatpush1.msra.mxu0 0.0
    %746 = vmatprep.subr.mxu0 0.0
    %747 = vmatpush1.msra.mxu0 0.0
    %748 = vmatprep.subr.mxu0 0.0
    %749 = vmatpush1.msra.mxu0 0.0
    %750 = vmatprep.subr.mxu0 0.0
    %751 = vmatpush1.msra.mxu0 0.0
    %v752 = vsub.f32 %v332, %v332
    %v753 = vand.u32 %v752, 4294901760
    %754 = vmatprep.subr.mxu0 %v753
    %v755 = vsub.f32 %v331, %v331
    %v756 = vand.u32 %v755, 4294901760
    %757 = vmatpush1.msra.mxu0 %v756
    %v758 = vsub.f32 %v307, %v307
    %v759 = vand.u32 %v758, 4294901760
    %760 = vmatprep.subr.mxu0 %v759
    %v761 = vsub.f32 %v306, %v306
    %v762 = vand.u32 %v761, 4294901760
    %763 = vmatpush1.msra.mxu0 %v762
    %v764 = vsub.f32 %v282, %v282
    %v765 = vand.u32 %v764, 4294901760
    %766 = vmatprep.subr.mxu0 %v765
    %v767 = vsub.f32 %v281, %v281
    %v768 = vand.u32 %v767, 4294901760
    %769 = vmatpush1.msra.mxu0 %v768
    %v770 = vsub.f32 %v257, %v257
    %v771 = vand.u32 %v770, 4294901760
    %772 = vmatprep.subr.mxu0 %v771
    %v773 = vsub.f32 %v256, %v256
    %v774 = vand.u32 %v773, 4294901760
    %775 = vmatpush1.msra.mxu0 %v774
    %v776 = vsub.f32 %v232, %v232
    %v777 = vand.u32 %v776, 4294901760
    %778 = vmatprep.subr.mxu0 %v777
    %v779 = vsub.f32 %v231, %v231
    %v780 = vand.u32 %v779, 4294901760
    %781 = vmatpush1.msra.mxu0 %v780
    %v782 = vsub.f32 %v207, %v207
    %v783 = vand.u32 %v782, 4294901760
    %784 = vmatprep.subr.mxu0 %v783
    %v785 = vsub.f32 %v206, %v206
    %v786 = vand.u32 %v785, 4294901760
    %787 = vmatpush1.msra.mxu0 %v786
    %v788 = vsub.f32 %v182, %v182
    %v789 = vand.u32 %v788, 4294901760
    %790 = vmatprep.subr.mxu0 %v789
    %v791 = vsub.f32 %v181, %v181
    %v792 = vand.u32 %v791, 4294901760
    %793 = vmatpush1.msra.mxu0 %v792
    %v794 = vsub.f32 %v157, %v157
    %v795 = vand.u32 %v794, 4294901760
    %796 = vmatprep.subr.mxu0 %v795
    %v797 = vsub.f32 %v156, %v156
    %v798 = vand.u32 %v797, 4294901760
    %799 = vmatpush1.msra.mxu0 %v798
    %800 = vmatprep.subr.mxu0 0.0
    %801 = vmatpush2.msra.mxu0 0.0
    %802 = vmatprep.subr.mxu0 0.0
    %803 = vmatpush2.msra.mxu0 0.0
    %804 = vmatprep.subr.mxu0 0.0
    %805 = vmatpush2.msra.mxu0 0.0
    %806 = vmatprep.subr.mxu0 0.0
    %807 = vmatpush2.msra.mxu0 0.0
    %808 = vmatprep.subr.mxu0 0.0
    %809 = vmatpush2.msra.mxu0 0.0
    %810 = vmatprep.subr.mxu0 0.0
    %811 = vmatpush2.msra.mxu0 0.0
    %812 = vmatprep.subr.mxu0 0.0
    %813 = vmatpush2.msra.mxu0 0.0
    %814 = vmatprep.subr.mxu0 0.0
    %815 = vmatpush2.msra.mxu0 0.0
    %816 = vmatprep.subr.mxu0 0.0
    %817 = vmatpush2.msra.mxu0 0.0
    %818 = vmatprep.subr.mxu0 0.0
    %819 = vmatpush2.msra.mxu0 0.0
    %820 = vmatprep.subr.mxu0 0.0
    %821 = vmatpush2.msra.mxu0 0.0
    %822 = vmatprep.subr.mxu0 0.0
    %823 = vmatpush2.msra.mxu0 0.0
    %824 = vmatprep.subr.mxu0 0.0
    %825 = vmatpush2.msra.mxu0 0.0
    %826 = vmatprep.subr.mxu0 0.0
    %827 = vmatpush2.msra.mxu0 0.0
    %828 = vmatprep.subr.mxu0 0.0
    %829 = vmatpush2.msra.mxu0 0.0
    %830 = vmatprep.subr.mxu0 0.0
    %831 = vmatpush2.msra.mxu0 0.0
    %832 = vmatprep.mubr.f32.mxu0 0.0
    %v833 = vand.u32 %v359, 4294901760
    %834 = vmatmul.mubr.f32.gmra.mxu0 %v833
    %v835 = vpop.f32.mrf.mxu0
    %v836 = vadd.f32 %v732, %v835
    %v837 = vpop.f32.mrf.mxu0
    %v838 = vadd.f32 %v734, %v837
    %839 = vdwg.mxu0
    %840 = vmatprep.subr.mxu0 0.0
    %841 = vmatpush1.msra.mxu0 0.0
    %842 = vmatprep.subr.mxu0 0.0
    %843 = vmatpush1.msra.mxu0 0.0
    %844 = vmatprep.subr.mxu0 0.0
    %845 = vmatpush1.msra.mxu0 0.0
    %846 = vmatprep.subr.mxu0 0.0
    %847 = vmatpush1.msra.mxu0 0.0
    %848 = vmatprep.subr.mxu0 0.0
    %849 = vmatpush1.msra.mxu0 0.0
    %850 = vmatprep.subr.mxu0 0.0
    %851 = vmatpush1.msra.mxu0 0.0
    %852 = vmatprep.subr.mxu0 0.0
    %853 = vmatpush1.msra.mxu0 0.0
    %854 = vmatprep.subr.mxu0 0.0
    %855 = vmatpush1.msra.mxu0 0.0
    %856 = vmatprep.subr.mxu0 %v332
    %857 = vmatpush1.msra.mxu0 %v331
    %858 = vmatprep.subr.mxu0 %v307
    %859 = vmatpush1.msra.mxu0 %v306
    %860 = vmatprep.subr.mxu0 %v282
    %861 = vmatpush1.msra.mxu0 %v281
    %862 = vmatprep.subr.mxu0 %v257
    %863 = vmatpush1.msra.mxu0 %v256
    %864 = vmatprep.subr.mxu0 %v232
    %865 = vmatpush1.msra.mxu0 %v231
    %866 = vmatprep.subr.mxu0 %v207
    %867 = vmatpush1.msra.mxu0 %v206
    %868 = vmatprep.subr.mxu0 %v182
    %869 = vmatpush1.msra.mxu0 %v181
    %870 = vmatprep.subr.mxu0 %v157
    %871 = vmatpush1.msra.mxu0 %v156
    %872 = vmatprep.subr.mxu0 0.0
    %873 = vmatpush2.msra.mxu0 0.0
    %874 = vmatprep.subr.mxu0 0.0
    %875 = vmatpush2.msra.mxu0 0.0
    %876 = vmatprep.subr.mxu0 0.0
    %877 = vmatpush2.msra.mxu0 0.0
    %878 = vmatprep.subr.mxu0 0.0
    %879 = vmatpush2.msra.mxu0 0.0
    %880 = vmatprep.subr.mxu0 0.0
    %881 = vmatpush2.msra.mxu0 0.0
    %882 = vmatprep.subr.mxu0 0.0
    %883 = vmatpush2.msra.mxu0 0.0
    %884 = vmatprep.subr.mxu0 0.0
    %885 = vmatpush2.msra.mxu0 0.0
    %886 = vmatprep.subr.mxu0 0.0
    %887 = vmatpush2.msra.mxu0 0.0
    %888 = vmatprep.subr.mxu0 0.0
    %889 = vmatpush2.msra.mxu0 0.0
    %890 = vmatprep.subr.mxu0 0.0
    %891 = vmatpush2.msra.mxu0 0.0
    %892 = vmatprep.subr.mxu0 0.0
    %893 = vmatpush2.msra.mxu0 0.0
    %894 = vmatprep.subr.mxu0 0.0
    %895 = vmatpush2.msra.mxu0 0.0
    %896 = vmatprep.subr.mxu0 0.0
    %897 = vmatpush2.msra.mxu0 0.0
    %898 = vmatprep.subr.mxu0 0.0
    %899 = vmatpush2.msra.mxu0 0.0
    %900 = vmatprep.subr.mxu0 0.0
    %901 = vmatpush2.msra.mxu0 0.0
    %902 = vmatprep.subr.mxu0 0.0
    %903 = vmatpush2.msra.mxu0 0.0
    %904 = vmatprep.mubr.f32.mxu0 0.0
    %v905 = vand.u32 %v359, 4294901760
    %906 = vmatmul.mubr.f32.gmra.mxu0 %v905
    %v907 = vpop.f32.mrf.mxu0
    %v908 = vadd.f32 %v836, %v907
    %v909 = vpop.f32.mrf.mxu0
    %v910 = vadd.f32 %v838, %v909
    %911 = vdwg.mxu0
    %912 = vmatprep.subr.mxu0 0.0
    %913 = vmatpush1.msra.mxu0 0.0
    %914 = vmatprep.subr.mxu0 0.0
    %915 = vmatpush1.msra.mxu0 0.0
    %916 = vmatprep.subr.mxu0 0.0
    %917 = vmatpush1.msra.mxu0 0.0
    %918 = vmatprep.subr.mxu0 0.0
    %919 = vmatpush1.msra.mxu0 0.0
    %920 = vmatprep.subr.mxu0 0.0
    %921 = vmatpush1.msra.mxu0 0.0
    %922 = vmatprep.subr.mxu0 0.0
    %923 = vmatpush1.msra.mxu0 0.0
    %924 = vmatprep.subr.mxu0 0.0
    %925 = vmatpush1.msra.mxu0 0.0
    %926 = vmatprep.subr.mxu0 0.0
    %927 = vmatpush1.msra.mxu0 0.0
    %928 = vmatprep.subr.mxu0 %v334
    %929 = vmatpush1.msra.mxu0 %v333
    %930 = vmatprep.subr.mxu0 %v309
    %931 = vmatpush1.msra.mxu0 %v308
    %932 = vmatprep.subr.mxu0 %v284
    %933 = vmatpush1.msra.mxu0 %v283
    %934 = vmatprep.subr.mxu0 %v259
    %935 = vmatpush1.msra.mxu0 %v258
    %936 = vmatprep.subr.mxu0 %v234
    %937 = vmatpush1.msra.mxu0 %v233
    %938 = vmatprep.subr.mxu0 %v209
    %939 = vmatpush1.msra.mxu0 %v208
    %940 = vmatprep.subr.mxu0 %v184
    %941 = vmatpush1.msra.mxu0 %v183
    %942 = vmatprep.subr.mxu0 %v159
    %943 = vmatpush1.msra.mxu0 %v158
    %944 = vmatprep.subr.mxu0 0.0
    %945 = vmatpush2.msra.mxu0 0.0
    %946 = vmatprep.subr.mxu0 0.0
    %947 = vmatpush2.msra.mxu0 0.0
    %948 = vmatprep.subr.mxu0 0.0
    %949 = vmatpush2.msra.mxu0 0.0
    %950 = vmatprep.subr.mxu0 0.0
    %951 = vmatpush2.msra.mxu0 0.0
    %952 = vmatprep.subr.mxu0 0.0
    %953 = vmatpush2.msra.mxu0 0.0
    %954 = vmatprep.subr.mxu0 0.0
    %955 = vmatpush2.msra.mxu0 0.0
    %956 = vmatprep.subr.mxu0 0.0
    %957 = vmatpush2.msra.mxu0 0.0
    %958 = vmatprep.subr.mxu0 0.0
    %959 = vmatpush2.msra.mxu0 0.0
    %960 = vmatprep.subr.mxu0 0.0
    %961 = vmatpush2.msra.mxu0 0.0
    %962 = vmatprep.subr.mxu0 0.0
    %963 = vmatpush2.msra.mxu0 0.0
    %964 = vmatprep.subr.mxu0 0.0
    %965 = vmatpush2.msra.mxu0 0.0
    %966 = vmatprep.subr.mxu0 0.0
    %967 = vmatpush2.msra.mxu0 0.0
    %968 = vmatprep.subr.mxu0 0.0
    %969 = vmatpush2.msra.mxu0 0.0
    %970 = vmatprep.subr.mxu0 0.0
    %971 = vmatpush2.msra.mxu0 0.0
    %972 = vmatprep.subr.mxu0 0.0
    %973 = vmatpush2.msra.mxu0 0.0
    %974 = vmatprep.subr.mxu0 0.0
    %975 = vmatpush2.msra.mxu0 0.0
    %976 = vmatprep.mubr.f32.mxu0 0.0
    %v977 = vand.u32 %v359, 4294901760
    %v978 = vsub.f32 %v359, %v977
    %v979 = vand.u32 %v978, 4294901760
    %v980 = vsub.f32 %v978, %v979
    %v981 = vand.u32 %v980, 4294901760
    %982 = vmatmul.mubr.f32.gmra.mxu0 %v981
    %v983 = vpop.f32.mrf.mxu0
    %v984 = vadd.f32 0.0, %v983
    %v985 = vpop.f32.mrf.mxu0
    %v986 = vadd.f32 0.0, %v985
    %987 = vdwg.mxu0
    %988 = vmatprep.subr.mxu0 0.0
    %989 = vmatpush1.msra.mxu0 0.0
    %990 = vmatprep.subr.mxu0 0.0
    %991 = vmatpush1.msra.mxu0 0.0
    %992 = vmatprep.subr.mxu0 0.0
    %993 = vmatpush1.msra.mxu0 0.0
    %994 = vmatprep.subr.mxu0 0.0
    %995 = vmatpush1.msra.mxu0 0.0
    %996 = vmatprep.subr.mxu0 0.0
    %997 = vmatpush1.msra.mxu0 0.0
    %998 = vmatprep.subr.mxu0 0.0
    %999 = vmatpush1.msra.mxu0 0.0
    %1000 = vmatprep.subr.mxu0 0.0
    %1001 = vmatpush1.msra.mxu0 0.0
    %1002 = vmatprep.subr.mxu0 0.0
    %1003 = vmatpush1.msra.mxu0 0.0
    %v1004 = vsub.f32 %v334, %v334
    %v1005 = vand.u32 %v1004, 4294901760
    %v1006 = vsub.f32 %v1004, %v1005
    %v1007 = vand.u32 %v1006, 4294901760
    %1008 = vmatprep.subr.mxu0 %v1007
    %v1009 = vsub.f32 %v333, %v333
    %v1010 = vand.u32 %v1009, 4294901760
    %v1011 = vsub.f32 %v1009, %v1010
    %v1012 = vand.u32 %v1011, 4294901760
    %1013 = vmatpush1.msra.mxu0 %v1012
    %v1014 = vsub.f32 %v309, %v309
    %v1015 = vand.u32 %v1014, 4294901760
    %v1016 = vsub.f32 %v1014, %v1015
    %v1017 = vand.u32 %v1016, 4294901760
    %1018 = vmatprep.subr.mxu0 %v1017
    %v1019 = vsub.f32 %v308, %v308
    %v1020 = vand.u32 %v1019, 4294901760
    %v1021 = vsub.f32 %v1019, %v1020
    %v1022 = vand.u32 %v1021, 4294901760
    %1023 = vmatpush1.msra.mxu0 %v1022
    %v1024 = vsub.f32 %v284, %v284
    %v1025 = vand.u32 %v1024, 4294901760
    %v1026 = vsub.f32 %v1024, %v1025
    %v1027 = vand.u32 %v1026, 4294901760
    %1028 = vmatprep.subr.mxu0 %v1027
    %v1029 = vsub.f32 %v283, %v283
    %v1030 = vand.u32 %v1029, 4294901760
    %v1031 = vsub.f32 %v1029, %v1030
    %v1032 = vand.u32 %v1031, 4294901760
    %1033 = vmatpush1.msra.mxu0 %v1032
    %v1034 = vsub.f32 %v259, %v259
    %v1035 = vand.u32 %v1034, 4294901760
    %v1036 = vsub.f32 %v1034, %v1035
    %v1037 = vand.u32 %v1036, 4294901760
    %1038 = vmatprep.subr.mxu0 %v1037
    %v1039 = vsub.f32 %v258, %v258
    %v1040 = vand.u32 %v1039, 4294901760
    %v1041 = vsub.f32 %v1039, %v1040
    %v1042 = vand.u32 %v1041, 4294901760
    %1043 = vmatpush1.msra.mxu0 %v1042
    %v1044 = vsub.f32 %v234, %v234
    %v1045 = vand.u32 %v1044, 4294901760
    %v1046 = vsub.f32 %v1044, %v1045
    %v1047 = vand.u32 %v1046, 4294901760
    %1048 = vmatprep.subr.mxu0 %v1047
    %v1049 = vsub.f32 %v233, %v233
    %v1050 = vand.u32 %v1049, 4294901760
    %v1051 = vsub.f32 %v1049, %v1050
    %v1052 = vand.u32 %v1051, 4294901760
    %1053 = vmatpush1.msra.mxu0 %v1052
    %v1054 = vsub.f32 %v209, %v209
    %v1055 = vand.u32 %v1054, 4294901760
    %v1056 = vsub.f32 %v1054, %v1055
    %v1057 = vand.u32 %v1056, 4294901760
    %1058 = vmatprep.subr.mxu0 %v1057
    %v1059 = vsub.f32 %v208, %v208
    %v1060 = vand.u32 %v1059, 4294901760
    %v1061 = vsub.f32 %v1059, %v1060
    %v1062 = vand.u32 %v1061, 4294901760
    %1063 = vmatpush1.msra.mxu0 %v1062
    %v1064 = vsub.f32 %v184, %v184
    %v1065 = vand.u32 %v1064, 4294901760
    %v1066 = vsub.f32 %v1064, %v1065
    %v1067 = vand.u32 %v1066, 4294901760
    %1068 = vmatprep.subr.mxu0 %v1067
    %v1069 = vsub.f32 %v183, %v183
    %v1070 = vand.u32 %v1069, 4294901760
    %v1071 = vsub.f32 %v1069, %v1070
    %v1072 = vand.u32 %v1071, 4294901760
    %1073 = vmatpush1.msra.mxu0 %v1072
    %v1074 = vsub.f32 %v159, %v159
    %v1075 = vand.u32 %v1074, 4294901760
    %v1076 = vsub.f32 %v1074, %v1075
    %v1077 = vand.u32 %v1076, 4294901760
    %1078 = vmatprep.subr.mxu0 %v1077
    %v1079 = vsub.f32 %v158, %v158
    %v1080 = vand.u32 %v1079, 4294901760
    %v1081 = vsub.f32 %v1079, %v1080
    %v1082 = vand.u32 %v1081, 4294901760
    %1083 = vmatpush1.msra.mxu0 %v1082
    %1084 = vmatprep.subr.mxu0 0.0
    %1085 = vmatpush2.msra.mxu0 0.0
    %1086 = vmatprep.subr.mxu0 0.0
    %1087 = vmatpush2.msra.mxu0 0.0
    %1088 = vmatprep.subr.mxu0 0.0
    %1089 = vmatpush2.msra.mxu0 0.0
    %1090 = vmatprep.subr.mxu0 0.0
    %1091 = vmatpush2.msra.mxu0 0.0
    %1092 = vmatprep.subr.mxu0 0.0
    %1093 = vmatpush2.msra.mxu0 0.0
    %1094 = vmatprep.subr.mxu0 0.0
    %1095 = vmatpush2.msra.mxu0 0.0
    %1096 = vmatprep.subr.mxu0 0.0
    %1097 = vmatpush2.msra.mxu0 0.0
    %1098 = vmatprep.subr.mxu0 0.0
    %1099 = vmatpush2.msra.mxu0 0.0
    %1100 = vmatprep.subr.mxu0 0.0
    %1101 = vmatpush2.msra.mxu0 0.0
    %1102 = vmatprep.subr.mxu0 0.0
    %1103 = vmatpush2.msra.mxu0 0.0
    %1104 = vmatprep.subr.mxu0 0.0
    %1105 = vmatpush2.msra.mxu0 0.0
    %1106 = vmatprep.subr.mxu0 0.0
    %1107 = vmatpush2.msra.mxu0 0.0
    %1108 = vmatprep.subr.mxu0 0.0
    %1109 = vmatpush2.msra.mxu0 0.0
    %1110 = vmatprep.subr.mxu0 0.0
    %1111 = vmatpush2.msra.mxu0 0.0
    %1112 = vmatprep.subr.mxu0 0.0
    %1113 = vmatpush2.msra.mxu0 0.0
    %1114 = vmatprep.subr.mxu0 0.0
    %1115 = vmatpush2.msra.mxu0 0.0
    %1116 = vmatprep.mubr.f32.mxu0 0.0
    %v1117 = vand.u32 %v359, 4294901760
    %1118 = vmatmul.mubr.f32.gmra.mxu0 %v1117
    %v1119 = vpop.f32.mrf.mxu0
    %v1120 = vadd.f32 %v984, %v1119
    %v1121 = vpop.f32.mrf.mxu0
    %v1122 = vadd.f32 %v986, %v1121
    %1123 = vdwg.mxu0
    %1124 = vmatprep.subr.mxu0 0.0
    %1125 = vmatpush1.msra.mxu0 0.0
    %1126 = vmatprep.subr.mxu0 0.0
    %1127 = vmatpush1.msra.mxu0 0.0
    %1128 = vmatprep.subr.mxu0 0.0
    %1129 = vmatpush1.msra.mxu0 0.0
    %1130 = vmatprep.subr.mxu0 0.0
    %1131 = vmatpush1.msra.mxu0 0.0
    %1132 = vmatprep.subr.mxu0 0.0
    %1133 = vmatpush1.msra.mxu0 0.0
    %1134 = vmatprep.subr.mxu0 0.0
    %1135 = vmatpush1.msra.mxu0 0.0
    %1136 = vmatprep.subr.mxu0 0.0
    %1137 = vmatpush1.msra.mxu0 0.0
    %1138 = vmatprep.subr.mxu0 0.0
    %1139 = vmatpush1.msra.mxu0 0.0
    %v1140 = vsub.f32 %v334, %v334
    %1141 = vmatprep.subr.mxu0 %v1140
    %v1142 = vsub.f32 %v333, %v333
    %1143 = vmatpush1.msra.mxu0 %v1142
    %v1144 = vsub.f32 %v309, %v309
    %1145 = vmatprep.subr.mxu0 %v1144
    %v1146 = vsub.f32 %v308, %v308
    %1147 = vmatpush1.msra.mxu0 %v1146
    %v1148 = vsub.f32 %v284, %v284
    %1149 = vmatprep.subr.mxu0 %v1148
    %v1150 = vsub.f32 %v283, %v283
    %1151 = vmatpush1.msra.mxu0 %v1150
    %v1152 = vsub.f32 %v259, %v259
    %1153 = vmatprep.subr.mxu0 %v1152
    %v1154 = vsub.f32 %v258, %v258
    %1155 = vmatpush1.msra.mxu0 %v1154
    %v1156 = vsub.f32 %v234, %v234
    %1157 = vmatprep.subr.mxu0 %v1156
    %v1158 = vsub.f32 %v233, %v233
    %1159 = vmatpush1.msra.mxu0 %v1158
    %v1160 = vsub.f32 %v209, %v209
    %1161 = vmatprep.subr.mxu0 %v1160
    %v1162 = vsub.f32 %v208, %v208
    %1163 = vmatpush1.msra.mxu0 %v1162
    %v1164 = vsub.f32 %v184, %v184
    %1165 = vmatprep.subr.mxu0 %v1164
    %v1166 = vsub.f32 %v183, %v183
    %1167 = vmatpush1.msra.mxu0 %v1166
    %v1168 = vsub.f32 %v159, %v159
    %1169 = vmatprep.subr.mxu0 %v1168
    %v1170 = vsub.f32 %v158, %v158
    %1171 = vmatpush1.msra.mxu0 %v1170
    %1172 = vmatprep.subr.mxu0 0.0
    %1173 = vmatpush2.msra.mxu0 0.0
    %1174 = vmatprep.subr.mxu0 0.0
    %1175 = vmatpush2.msra.mxu0 0.0
    %1176 = vmatprep.subr.mxu0 0.0
    %1177 = vmatpush2.msra.mxu0 0.0
    %1178 = vmatprep.subr.mxu0 0.0
    %1179 = vmatpush2.msra.mxu0 0.0
    %1180 = vmatprep.subr.mxu0 0.0
    %1181 = vmatpush2.msra.mxu0 0.0
    %1182 = vmatprep.subr.mxu0 0.0
    %1183 = vmatpush2.msra.mxu0 0.0
    %1184 = vmatprep.subr.mxu0 0.0
    %1185 = vmatpush2.msra.mxu0 0.0
    %1186 = vmatprep.subr.mxu0 0.0
    %1187 = vmatpush2.msra.mxu0 0.0
    %1188 = vmatprep.subr.mxu0 0.0
    %1189 = vmatpush2.msra.mxu0 0.0
    %1190 = vmatprep.subr.mxu0 0.0
    %1191 = vmatpush2.msra.mxu0 0.0
    %1192 = vmatprep.subr.mxu0 0.0
    %1193 = vmatpush2.msra.mxu0 0.0
    %1194 = vmatprep.subr.mxu0 0.0
    %1195 = vmatpush2.msra.mxu0 0.0
    %1196 = vmatprep.subr.mxu0 0.0
    %1197 = vmatpush2.msra.mxu0 0.0
    %1198 = vmatprep.subr.mxu0 0.0
    %1199 = vmatpush2.msra.mxu0 0.0
    %1200 = vmatprep.subr.mxu0 0.0
    %1201 = vmatpush2.msra.mxu0 0.0
    %1202 = vmatprep.subr.mxu0 0.0
    %1203 = vmatpush2.msra.mxu0 0.0
    %1204 = vmatprep.mubr.f32.mxu0 0.0
    %v1205 = vand.u32 %v359, 4294901760
    %v1206 = vsub.f32 %v359, %v1205
    %1207 = vmatmul.mubr.f32.gmra.mxu0 %v1206
    %v1208 = vpop.f32.mrf.mxu0
    %v1209 = vadd.f32 %v1120, %v1208
    %v1210 = vpop.f32.mrf.mxu0
    %v1211 = vadd.f32 %v1122, %v1210
    %1212 = vdwg.mxu0
    %1213 = vmatprep.subr.mxu0 0.0
    %1214 = vmatpush1.msra.mxu0 0.0
    %1215 = vmatprep.subr.mxu0 0.0
    %1216 = vmatpush1.msra.mxu0 0.0
    %1217 = vmatprep.subr.mxu0 0.0
    %1218 = vmatpush1.msra.mxu0 0.0
    %1219 = vmatprep.subr.mxu0 0.0
    %1220 = vmatpush1.msra.mxu0 0.0
    %1221 = vmatprep.subr.mxu0 0.0
    %1222 = vmatpush1.msra.mxu0 0.0
    %1223 = vmatprep.subr.mxu0 0.0
    %1224 = vmatpush1.msra.mxu0 0.0
    %1225 = vmatprep.subr.mxu0 0.0
    %1226 = vmatpush1.msra.mxu0 0.0
    %1227 = vmatprep.subr.mxu0 0.0
    %1228 = vmatpush1.msra.mxu0 0.0
    %1229 = vmatprep.subr.mxu0 %v334
    %1230 = vmatpush1.msra.mxu0 %v333
    %1231 = vmatprep.subr.mxu0 %v309
    %1232 = vmatpush1.msra.mxu0 %v308
    %1233 = vmatprep.subr.mxu0 %v284
    %1234 = vmatpush1.msra.mxu0 %v283
    %1235 = vmatprep.subr.mxu0 %v259
    %1236 = vmatpush1.msra.mxu0 %v258
    %1237 = vmatprep.subr.mxu0 %v234
    %1238 = vmatpush1.msra.mxu0 %v233
    %1239 = vmatprep.subr.mxu0 %v209
    %1240 = vmatpush1.msra.mxu0 %v208
    %1241 = vmatprep.subr.mxu0 %v184
    %1242 = vmatpush1.msra.mxu0 %v183
    %1243 = vmatprep.subr.mxu0 %v159
    %1244 = vmatpush1.msra.mxu0 %v158
    %1245 = vmatprep.subr.mxu0 0.0
    %1246 = vmatpush2.msra.mxu0 0.0
    %1247 = vmatprep.subr.mxu0 0.0
    %1248 = vmatpush2.msra.mxu0 0.0
    %1249 = vmatprep.subr.mxu0 0.0
    %1250 = vmatpush2.msra.mxu0 0.0
    %1251 = vmatprep.subr.mxu0 0.0
    %1252 = vmatpush2.msra.mxu0 0.0
    %1253 = vmatprep.subr.mxu0 0.0
    %1254 = vmatpush2.msra.mxu0 0.0
    %1255 = vmatprep.subr.mxu0 0.0
    %1256 = vmatpush2.msra.mxu0 0.0
    %1257 = vmatprep.subr.mxu0 0.0
    %1258 = vmatpush2.msra.mxu0 0.0
    %1259 = vmatprep.subr.mxu0 0.0
    %1260 = vmatpush2.msra.mxu0 0.0
    %1261 = vmatprep.subr.mxu0 0.0
    %1262 = vmatpush2.msra.mxu0 0.0
    %1263 = vmatprep.subr.mxu0 0.0
    %1264 = vmatpush2.msra.mxu0 0.0
    %1265 = vmatprep.subr.mxu0 0.0
    %1266 = vmatpush2.msra.mxu0 0.0
    %1267 = vmatprep.subr.mxu0 0.0
    %1268 = vmatpush2.msra.mxu0 0.0
    %1269 = vmatprep.subr.mxu0 0.0
    %1270 = vmatpush2.msra.mxu0 0.0
    %1271 = vmatprep.subr.mxu0 0.0
    %1272 = vmatpush2.msra.mxu0 0.0
    %1273 = vmatprep.subr.mxu0 0.0
    %1274 = vmatpush2.msra.mxu0 0.0
    %1275 = vmatprep.subr.mxu0 0.0
    %1276 = vmatpush2.msra.mxu0 0.0
    %1277 = vmatprep.mubr.f32.mxu0 0.0
    %v1278 = vand.u32 %v359, 4294901760
    %v1279 = vsub.f32 %v359, %v1278
    %v1280 = vand.u32 %v1279, 4294901760
    %1281 = vmatmul.mubr.f32.gmra.mxu0 %v1280
    %v1282 = vpop.f32.mrf.mxu0
    %v1283 = vadd.f32 %v1209, %v1282
    %v1284 = vpop.f32.mrf.mxu0
    %v1285 = vadd.f32 %v1211, %v1284
    %1286 = vdwg.mxu0
    %1287 = vmatprep.subr.mxu0 0.0
    %1288 = vmatpush1.msra.mxu0 0.0
    %1289 = vmatprep.subr.mxu0 0.0
    %1290 = vmatpush1.msra.mxu0 0.0
    %1291 = vmatprep.subr.mxu0 0.0
    %1292 = vmatpush1.msra.mxu0 0.0
    %1293 = vmatprep.subr.mxu0 0.0
    %1294 = vmatpush1.msra.mxu0 0.0
    %1295 = vmatprep.subr.mxu0 0.0
    %1296 = vmatpush1.msra.mxu0 0.0
    %1297 = vmatprep.subr.mxu0 0.0
    %1298 = vmatpush1.msra.mxu0 0.0
    %1299 = vmatprep.subr.mxu0 0.0
    %1300 = vmatpush1.msra.mxu0 0.0
    %1301 = vmatprep.subr.mxu0 0.0
    %1302 = vmatpush1.msra.mxu0 0.0
    %v1303 = vsub.f32 %v334, %v334
    %v1304 = vand.u32 %v1303, 4294901760
    %1305 = vmatprep.subr.mxu0 %v1304
    %v1306 = vsub.f32 %v333, %v333
    %v1307 = vand.u32 %v1306, 4294901760
    %1308 = vmatpush1.msra.mxu0 %v1307
    %v1309 = vsub.f32 %v309, %v309
    %v1310 = vand.u32 %v1309, 4294901760
    %1311 = vmatprep.subr.mxu0 %v1310
    %v1312 = vsub.f32 %v308, %v308
    %v1313 = vand.u32 %v1312, 4294901760
    %1314 = vmatpush1.msra.mxu0 %v1313
    %v1315 = vsub.f32 %v284, %v284
    %v1316 = vand.u32 %v1315, 4294901760
    %1317 = vmatprep.subr.mxu0 %v1316
    %v1318 = vsub.f32 %v283, %v283
    %v1319 = vand.u32 %v1318, 4294901760
    %1320 = vmatpush1.msra.mxu0 %v1319
    %v1321 = vsub.f32 %v259, %v259
    %v1322 = vand.u32 %v1321, 4294901760
    %1323 = vmatprep.subr.mxu0 %v1322
    %v1324 = vsub.f32 %v258, %v258
    %v1325 = vand.u32 %v1324, 4294901760
    %1326 = vmatpush1.msra.mxu0 %v1325
    %v1327 = vsub.f32 %v234, %v234
    %v1328 = vand.u32 %v1327, 4294901760
    %1329 = vmatprep.subr.mxu0 %v1328
    %v1330 = vsub.f32 %v233, %v233
    %v1331 = vand.u32 %v1330, 4294901760
    %1332 = vmatpush1.msra.mxu0 %v1331
    %v1333 = vsub.f32 %v209, %v209
    %v1334 = vand.u32 %v1333, 4294901760
    %1335 = vmatprep.subr.mxu0 %v1334
    %v1336 = vsub.f32 %v208, %v208
    %v1337 = vand.u32 %v1336, 4294901760
    %1338 = vmatpush1.msra.mxu0 %v1337
    %v1339 = vsub.f32 %v184, %v184
    %v1340 = vand.u32 %v1339, 4294901760
    %1341 = vmatprep.subr.mxu0 %v1340
    %v1342 = vsub.f32 %v183, %v183
    %v1343 = vand.u32 %v1342, 4294901760
    %1344 = vmatpush1.msra.mxu0 %v1343
    %v1345 = vsub.f32 %v159, %v159
    %v1346 = vand.u32 %v1345, 4294901760
    %1347 = vmatprep.subr.mxu0 %v1346
    %v1348 = vsub.f32 %v158, %v158
    %v1349 = vand.u32 %v1348, 4294901760
    %1350 = vmatpush1.msra.mxu0 %v1349
    %1351 = vmatprep.subr.mxu0 0.0
    %1352 = vmatpush2.msra.mxu0 0.0
    %1353 = vmatprep.subr.mxu0 0.0
    %1354 = vmatpush2.msra.mxu0 0.0
    %1355 = vmatprep.subr.mxu0 0.0
    %1356 = vmatpush2.msra.mxu0 0.0
    %1357 = vmatprep.subr.mxu0 0.0
    %1358 = vmatpush2.msra.mxu0 0.0
    %1359 = vmatprep.subr.mxu0 0.0
    %1360 = vmatpush2.msra.mxu0 0.0
    %1361 = vmatprep.subr.mxu0 0.0
    %1362 = vmatpush2.msra.mxu0 0.0
    %1363 = vmatprep.subr.mxu0 0.0
    %1364 = vmatpush2.msra.mxu0 0.0
    %1365 = vmatprep.subr.mxu0 0.0
    %1366 = vmatpush2.msra.mxu0 0.0
    %1367 = vmatprep.subr.mxu0 0.0
    %1368 = vmatpush2.msra.mxu0 0.0
    %1369 = vmatprep.subr.mxu0 0.0
    %1370 = vmatpush2.msra.mxu0 0.0
    %1371 = vmatprep.subr.mxu0 0.0
    %1372 = vmatpush2.msra.mxu0 0.0
    %1373 = vmatprep.subr.mxu0 0.0
    %1374 = vmatpush2.msra.mxu0 0.0
    %1375 = vmatprep.subr.mxu0 0.0
    %1376 = vmatpush2.msra.mxu0 0.0
    %1377 = vmatprep.subr.mxu0 0.0
    %1378 = vmatpush2.msra.mxu0 0.0
    %1379 = vmatprep.subr.mxu0 0.0
    %1380 = vmatpush2.msra.mxu0 0.0
    %1381 = vmatprep.subr.mxu0 0.0
    %1382 = vmatpush2.msra.mxu0 0.0
    %1383 = vmatprep.mubr.f32.mxu0 0.0
    %v1384 = vand.u32 %v359, 4294901760
    %1385 = vmatmul.mubr.f32.gmra.mxu0 %v1384
    %v1386 = vpop.f32.mrf.mxu0
    %v1387 = vadd.f32 %v1283, %v1386
    %v1388 = vpop.f32.mrf.mxu0
    %v1389 = vadd.f32 %v1285, %v1388
    %1390 = vdwg.mxu0
    %1391 = vmatprep.subr.mxu0 0.0
    %1392 = vmatpush1.msra.mxu0 0.0
    %1393 = vmatprep.subr.mxu0 0.0
    %1394 = vmatpush1.msra.mxu0 0.0
    %1395 = vmatprep.subr.mxu0 0.0
    %1396 = vmatpush1.msra.mxu0 0.0
    %1397 = vmatprep.subr.mxu0 0.0
    %1398 = vmatpush1.msra.mxu0 0.0
    %1399 = vmatprep.subr.mxu0 0.0
    %1400 = vmatpush1.msra.mxu0 0.0
    %1401 = vmatprep.subr.mxu0 0.0
    %1402 = vmatpush1.msra.mxu0 0.0
    %1403 = vmatprep.subr.mxu0 0.0
    %1404 = vmatpush1.msra.mxu0 0.0
    %1405 = vmatprep.subr.mxu0 0.0
    %1406 = vmatpush1.msra.mxu0 0.0
    %1407 = vmatprep.subr.mxu0 %v334
    %1408 = vmatpush1.msra.mxu0 %v333
    %1409 = vmatprep.subr.mxu0 %v309
    %1410 = vmatpush1.msra.mxu0 %v308
    %1411 = vmatprep.subr.mxu0 %v284
    %1412 = vmatpush1.msra.mxu0 %v283
    %1413 = vmatprep.subr.mxu0 %v259
    %1414 = vmatpush1.msra.mxu0 %v258
    %1415 = vmatprep.subr.mxu0 %v234
    %1416 = vmatpush1.msra.mxu0 %v233
    %1417 = vmatprep.subr.mxu0 %v209
    %1418 = vmatpush1.msra.mxu0 %v208
    %1419 = vmatprep.subr.mxu0 %v184
    %1420 = vmatpush1.msra.mxu0 %v183
    %1421 = vmatprep.subr.mxu0 %v159
    %1422 = vmatpush1.msra.mxu0 %v158
    %1423 = vmatprep.subr.mxu0 0.0
    %1424 = vmatpush2.msra.mxu0 0.0
    %1425 = vmatprep.subr.mxu0 0.0
    %1426 = vmatpush2.msra.mxu0 0.0
    %1427 = vmatprep.subr.mxu0 0.0
    %1428 = vmatpush2.msra.mxu0 0.0
    %1429 = vmatprep.subr.mxu0 0.0
    %1430 = vmatpush2.msra.mxu0 0.0
    %1431 = vmatprep.subr.mxu0 0.0
    %1432 = vmatpush2.msra.mxu0 0.0
    %1433 = vmatprep.subr.mxu0 0.0
    %1434 = vmatpush2.msra.mxu0 0.0
    %1435 = vmatprep.subr.mxu0 0.0
    %1436 = vmatpush2.msra.mxu0 0.0
    %1437 = vmatprep.subr.mxu0 0.0
    %1438 = vmatpush2.msra.mxu0 0.0
    %1439 = vmatprep.subr.mxu0 0.0
    %1440 = vmatpush2.msra.mxu0 0.0
    %1441 = vmatprep.subr.mxu0 0.0
    %1442 = vmatpush2.msra.mxu0 0.0
    %1443 = vmatprep.subr.mxu0 0.0
    %1444 = vmatpush2.msra.mxu0 0.0
    %1445 = vmatprep.subr.mxu0 0.0
    %1446 = vmatpush2.msra.mxu0 0.0
    %1447 = vmatprep.subr.mxu0 0.0
    %1448 = vmatpush2.msra.mxu0 0.0
    %1449 = vmatprep.subr.mxu0 0.0
    %1450 = vmatpush2.msra.mxu0 0.0
    %1451 = vmatprep.subr.mxu0 0.0
    %1452 = vmatpush2.msra.mxu0 0.0
    %1453 = vmatprep.subr.mxu0 0.0
    %1454 = vmatpush2.msra.mxu0 0.0
    %1455 = vmatprep.mubr.f32.mxu0 0.0
    %v1456 = vand.u32 %v359, 4294901760
    %1457 = vmatmul.mubr.f32.gmra.mxu0 %v1456
    %v1458 = vpop.f32.mrf.mxu0
    %v1459 = vadd.f32 %v1387, %v1458
    %v1460 = vpop.f32.mrf.mxu0
    %v1461 = vadd.f32 %v1389, %v1460
    %1462 = vdwg.mxu0
    %1463 = vmatprep.subr.mxu0 0.0
    %1464 = vmatpush1.msra.mxu0 0.0
    %1465 = vmatprep.subr.mxu0 0.0
    %1466 = vmatpush1.msra.mxu0 0.0
    %1467 = vmatprep.subr.mxu0 0.0
    %1468 = vmatpush1.msra.mxu0 0.0
    %1469 = vmatprep.subr.mxu0 0.0
    %1470 = vmatpush1.msra.mxu0 0.0
    %1471 = vmatprep.subr.mxu0 0.0
    %1472 = vmatpush1.msra.mxu0 0.0
    %1473 = vmatprep.subr.mxu0 0.0
    %1474 = vmatpush1.msra.mxu0 0.0
    %1475 = vmatprep.subr.mxu0 0.0
    %1476 = vmatpush1.msra.mxu0 0.0
    %1477 = vmatprep.subr.mxu0 0.0
    %1478 = vmatpush1.msra.mxu0 0.0
    %1479 = vmatprep.subr.mxu0 %v336
    %1480 = vmatpush1.msra.mxu0 %v335
    %1481 = vmatprep.subr.mxu0 %v311
    %1482 = vmatpush1.msra.mxu0 %v310
    %1483 = vmatprep.subr.mxu0 %v286
    %1484 = vmatpush1.msra.mxu0 %v285
    %1485 = vmatprep.subr.mxu0 %v261
    %1486 = vmatpush1.msra.mxu0 %v260
    %1487 = vmatprep.subr.mxu0 %v236
    %1488 = vmatpush1.msra.mxu0 %v235
    %1489 = vmatprep.subr.mxu0 %v211
    %1490 = vmatpush1.msra.mxu0 %v210
    %1491 = vmatprep.subr.mxu0 %v186
    %1492 = vmatpush1.msra.mxu0 %v185
    %1493 = vmatprep.subr.mxu0 %v161
    %1494 = vmatpush1.msra.mxu0 %v160
    %1495 = vmatprep.subr.mxu0 0.0
    %1496 = vmatpush2.msra.mxu0 0.0
    %1497 = vmatprep.subr.mxu0 0.0
    %1498 = vmatpush2.msra.mxu0 0.0
    %1499 = vmatprep.subr.mxu0 0.0
    %1500 = vmatpush2.msra.mxu0 0.0
    %1501 = vmatprep.subr.mxu0 0.0
    %1502 = vmatpush2.msra.mxu0 0.0
    %1503 = vmatprep.subr.mxu0 0.0
    %1504 = vmatpush2.msra.mxu0 0.0
    %1505 = vmatprep.subr.mxu0 0.0
    %1506 = vmatpush2.msra.mxu0 0.0
    %1507 = vmatprep.subr.mxu0 0.0
    %1508 = vmatpush2.msra.mxu0 0.0
    %1509 = vmatprep.subr.mxu0 0.0
    %1510 = vmatpush2.msra.mxu0 0.0
    %1511 = vmatprep.subr.mxu0 0.0
    %1512 = vmatpush2.msra.mxu0 0.0
    %1513 = vmatprep.subr.mxu0 0.0
    %1514 = vmatpush2.msra.mxu0 0.0
    %1515 = vmatprep.subr.mxu0 0.0
    %1516 = vmatpush2.msra.mxu0 0.0
    %1517 = vmatprep.subr.mxu0 0.0
    %1518 = vmatpush2.msra.mxu0 0.0
    %1519 = vmatprep.subr.mxu0 0.0
    %1520 = vmatpush2.msra.mxu0 0.0
    %1521 = vmatprep.subr.mxu0 0.0
    %1522 = vmatpush2.msra.mxu0 0.0
    %1523 = vmatprep.subr.mxu0 0.0
    %1524 = vmatpush2.msra.mxu0 0.0
    %1525 = vmatprep.subr.mxu0 0.0
    %1526 = vmatpush2.msra.mxu0 0.0
    %1527 = vmatprep.mubr.f32.mxu0 0.0
    %v1528 = vand.u32 %v359, 4294901760
    %v1529 = vsub.f32 %v359, %v1528
    %v1530 = vand.u32 %v1529, 4294901760
    %v1531 = vsub.f32 %v1529, %v1530
    %v1532 = vand.u32 %v1531, 4294901760
    %1533 = vmatmul.mubr.f32.gmra.mxu0 %v1532
    %v1534 = vpop.f32.mrf.mxu0
    %v1535 = vadd.f32 0.0, %v1534
    %v1536 = vpop.f32.mrf.mxu0
    %v1537 = vadd.f32 0.0, %v1536
    %1538 = vdwg.mxu0
    %1539 = vmatprep.subr.mxu0 0.0
    %1540 = vmatpush1.msra.mxu0 0.0
    %1541 = vmatprep.subr.mxu0 0.0
    %1542 = vmatpush1.msra.mxu0 0.0
    %1543 = vmatprep.subr.mxu0 0.0
    %1544 = vmatpush1.msra.mxu0 0.0
    %1545 = vmatprep.subr.mxu0 0.0
    %1546 = vmatpush1.msra.mxu0 0.0
    %1547 = vmatprep.subr.mxu0 0.0
    %1548 = vmatpush1.msra.mxu0 0.0
    %1549 = vmatprep.subr.mxu0 0.0
    %1550 = vmatpush1.msra.mxu0 0.0
    %1551 = vmatprep.subr.mxu0 0.0
    %1552 = vmatpush1.msra.mxu0 0.0
    %1553 = vmatprep.subr.mxu0 0.0
    %1554 = vmatpush1.msra.mxu0 0.0
    %v1555 = vsub.f32 %v336, %v336
    %v1556 = vand.u32 %v1555, 4294901760
    %v1557 = vsub.f32 %v1555, %v1556
    %v1558 = vand.u32 %v1557, 4294901760
    %1559 = vmatprep.subr.mxu0 %v1558
    %v1560 = vsub.f32 %v335, %v335
    %v1561 = vand.u32 %v1560, 4294901760
    %v1562 = vsub.f32 %v1560, %v1561
    %v1563 = vand.u32 %v1562, 4294901760
    %1564 = vmatpush1.msra.mxu0 %v1563
    %v1565 = vsub.f32 %v311, %v311
    %v1566 = vand.u32 %v1565, 4294901760
    %v1567 = vsub.f32 %v1565, %v1566
    %v1568 = vand.u32 %v1567, 4294901760
    %1569 = vmatprep.subr.mxu0 %v1568
    %v1570 = vsub.f32 %v310, %v310
    %v1571 = vand.u32 %v1570, 4294901760
    %v1572 = vsub.f32 %v1570, %v1571
    %v1573 = vand.u32 %v1572, 4294901760
    %1574 = vmatpush1.msra.mxu0 %v1573
    %v1575 = vsub.f32 %v286, %v286
    %v1576 = vand.u32 %v1575, 4294901760
    %v1577 = vsub.f32 %v1575, %v1576
    %v1578 = vand.u32 %v1577, 4294901760
    %1579 = vmatprep.subr.mxu0 %v1578
    %v1580 = vsub.f32 %v285, %v285
    %v1581 = vand.u32 %v1580, 4294901760
    %v1582 = vsub.f32 %v1580, %v1581
    %v1583 = vand.u32 %v1582, 4294901760
    %1584 = vmatpush1.msra.mxu0 %v1583
    %v1585 = vsub.f32 %v261, %v261
    %v1586 = vand.u32 %v1585, 4294901760
    %v1587 = vsub.f32 %v1585, %v1586
    %v1588 = vand.u32 %v1587, 4294901760
    %1589 = vmatprep.subr.mxu0 %v1588
    %v1590 = vsub.f32 %v260, %v260
    %v1591 = vand.u32 %v1590, 4294901760
    %v1592 = vsub.f32 %v1590, %v1591
    %v1593 = vand.u32 %v1592, 4294901760
    %1594 = vmatpush1.msra.mxu0 %v1593
    %v1595 = vsub.f32 %v236, %v236
    %v1596 = vand.u32 %v1595, 4294901760
    %v1597 = vsub.f32 %v1595, %v1596
    %v1598 = vand.u32 %v1597, 4294901760
    %1599 = vmatprep.subr.mxu0 %v1598
    %v1600 = vsub.f32 %v235, %v235
    %v1601 = vand.u32 %v1600, 4294901760
    %v1602 = vsub.f32 %v1600, %v1601
    %v1603 = vand.u32 %v1602, 4294901760
    %1604 = vmatpush1.msra.mxu0 %v1603
    %v1605 = vsub.f32 %v211, %v211
    %v1606 = vand.u32 %v1605, 4294901760
    %v1607 = vsub.f32 %v1605, %v1606
    %v1608 = vand.u32 %v1607, 4294901760
    %1609 = vmatprep.subr.mxu0 %v1608
    %v1610 = vsub.f32 %v210, %v210
    %v1611 = vand.u32 %v1610, 4294901760
    %v1612 = vsub.f32 %v1610, %v1611
    %v1613 = vand.u32 %v1612, 4294901760
    %1614 = vmatpush1.msra.mxu0 %v1613
    %v1615 = vsub.f32 %v186, %v186
    %v1616 = vand.u32 %v1615, 4294901760
    %v1617 = vsub.f32 %v1615, %v1616
    %v1618 = vand.u32 %v1617, 4294901760
    %1619 = vmatprep.subr.mxu0 %v1618
    %v1620 = vsub.f32 %v185, %v185
    %v1621 = vand.u32 %v1620, 4294901760
    %v1622 = vsub.f32 %v1620, %v1621
    %v1623 = vand.u32 %v1622, 4294901760
    %1624 = vmatpush1.msra.mxu0 %v1623
    %v1625 = vsub.f32 %v161, %v161
    %v1626 = vand.u32 %v1625, 4294901760
    %v1627 = vsub.f32 %v1625, %v1626
    %v1628 = vand.u32 %v1627, 4294901760
    %1629 = vmatprep.subr.mxu0 %v1628
    %v1630 = vsub.f32 %v160, %v160
    %v1631 = vand.u32 %v1630, 4294901760
    %v1632 = vsub.f32 %v1630, %v1631
    %v1633 = vand.u32 %v1632, 4294901760
    %1634 = vmatpush1.msra.mxu0 %v1633
    %1635 = vmatprep.subr.mxu0 0.0
    %1636 = vmatpush2.msra.mxu0 0.0
    %1637 = vmatprep.subr.mxu0 0.0
    %1638 = vmatpush2.msra.mxu0 0.0
    %1639 = vmatprep.subr.mxu0 0.0
    %1640 = vmatpush2.msra.mxu0 0.0
    %1641 = vmatprep.subr.mxu0 0.0
    %1642 = vmatpush2.msra.mxu0 0.0
    %1643 = vmatprep.subr.mxu0 0.0
    %1644 = vmatpush2.msra.mxu0 0.0
    %1645 = vmatprep.subr.mxu0 0.0
    %1646 = vmatpush2.msra.mxu0 0.0
    %1647 = vmatprep.subr.mxu0 0.0
    %1648 = vmatpush2.msra.mxu0 0.0
    %1649 = vmatprep.subr.mxu0 0.0
    %1650 = vmatpush2.msra.mxu0 0.0
    %1651 = vmatprep.subr.mxu0 0.0
    %1652 = vmatpush2.msra.mxu0 0.0
    %1653 = vmatprep.subr.mxu0 0.0
    %1654 = vmatpush2.msra.mxu0 0.0
    %1655 = vmatprep.subr.mxu0 0.0
    %1656 = vmatpush2.msra.mxu0 0.0
    %1657 = vmatprep.subr.mxu0 0.0
    %1658 = vmatpush2.msra.mxu0 0.0
    %1659 = vmatprep.subr.mxu0 0.0
    %1660 = vmatpush2.msra.mxu0 0.0
    %1661 = vmatprep.subr.mxu0 0.0
    %1662 = vmatpush2.msra.mxu0 0.0
    %1663 = vmatprep.subr.mxu0 0.0
    %1664 = vmatpush2.msra.mxu0 0.0
    %1665 = vmatprep.subr.mxu0 0.0
    %1666 = vmatpush2.msra.mxu0 0.0
    %1667 = vmatprep.mubr.f32.mxu0 0.0
    %v1668 = vand.u32 %v359, 4294901760
    %1669 = vmatmul.mubr.f32.gmra.mxu0 %v1668
    %v1670 = vpop.f32.mrf.mxu0
    %v1671 = vadd.f32 %v1535, %v1670
    %v1672 = vpop.f32.mrf.mxu0
    %v1673 = vadd.f32 %v1537, %v1672
    %1674 = vdwg.mxu0
    %1675 = vmatprep.subr.mxu0 0.0
    %1676 = vmatpush1.msra.mxu0 0.0
    %1677 = vmatprep.subr.mxu0 0.0
    %1678 = vmatpush1.msra.mxu0 0.0
    %1679 = vmatprep.subr.mxu0 0.0
    %1680 = vmatpush1.msra.mxu0 0.0
    %1681 = vmatprep.subr.mxu0 0.0
    %1682 = vmatpush1.msra.mxu0 0.0
    %1683 = vmatprep.subr.mxu0 0.0
    %1684 = vmatpush1.msra.mxu0 0.0
    %1685 = vmatprep.subr.mxu0 0.0
    %1686 = vmatpush1.msra.mxu0 0.0
    %1687 = vmatprep.subr.mxu0 0.0
    %1688 = vmatpush1.msra.mxu0 0.0
    %1689 = vmatprep.subr.mxu0 0.0
    %1690 = vmatpush1.msra.mxu0 0.0
    %v1691 = vsub.f32 %v336, %v336
    %1692 = vmatprep.subr.mxu0 %v1691
    %v1693 = vsub.f32 %v335, %v335
    %1694 = vmatpush1.msra.mxu0 %v1693
    %v1695 = vsub.f32 %v311, %v311
    %1696 = vmatprep.subr.mxu0 %v1695
    %v1697 = vsub.f32 %v310, %v310
    %1698 = vmatpush1.msra.mxu0 %v1697
    %v1699 = vsub.f32 %v286, %v286
    %1700 = vmatprep.subr.mxu0 %v1699
    %v1701 = vsub.f32 %v285, %v285
    %1702 = vmatpush1.msra.mxu0 %v1701
    %v1703 = vsub.f32 %v261, %v261
    %1704 = vmatprep.subr.mxu0 %v1703
    %v1705 = vsub.f32 %v260, %v260
    %1706 = vmatpush1.msra.mxu0 %v1705
    %v1707 = vsub.f32 %v236, %v236
    %1708 = vmatprep.subr.mxu0 %v1707
    %v1709 = vsub.f32 %v235, %v235
    %1710 = vmatpush1.msra.mxu0 %v1709
    %v1711 = vsub.f32 %v211, %v211
    %1712 = vmatprep.subr.mxu0 %v1711
    %v1713 = vsub.f32 %v210, %v210
    %1714 = vmatpush1.msra.mxu0 %v1713
    %v1715 = vsub.f32 %v186, %v186
    %1716 = vmatprep.subr.mxu0 %v1715
    %v1717 = vsub.f32 %v185, %v185
    %1718 = vmatpush1.msra.mxu0 %v1717
    %v1719 = vsub.f32 %v161, %v161
    %1720 = vmatprep.subr.mxu0 %v1719
    %v1721 = vsub.f32 %v160, %v160
    %1722 = vmatpush1.msra.mxu0 %v1721
    %1723 = vmatprep.subr.mxu0 0.0
    %1724 = vmatpush2.msra.mxu0 0.0
    %1725 = vmatprep.subr.mxu0 0.0
    %1726 = vmatpush2.msra.mxu0 0.0
    %1727 = vmatprep.subr.mxu0 0.0
    %1728 = vmatpush2.msra.mxu0 0.0
    %1729 = vmatprep.subr.mxu0 0.0
    %1730 = vmatpush2.msra.mxu0 0.0
    %1731 = vmatprep.subr.mxu0 0.0
    %1732 = vmatpush2.msra.mxu0 0.0
    %1733 = vmatprep.subr.mxu0 0.0
    %1734 = vmatpush2.msra.mxu0 0.0
    %1735 = vmatprep.subr.mxu0 0.0
    %1736 = vmatpush2.msra.mxu0 0.0
    %1737 = vmatprep.subr.mxu0 0.0
    %1738 = vmatpush2.msra.mxu0 0.0
    %1739 = vmatprep.subr.mxu0 0.0
    %1740 = vmatpush2.msra.mxu0 0.0
    %1741 = vmatprep.subr.mxu0 0.0
    %1742 = vmatpush2.msra.mxu0 0.0
    %1743 = vmatprep.subr.mxu0 0.0
    %1744 = vmatpush2.msra.mxu0 0.0
    %1745 = vmatprep.subr.mxu0 0.0
    %1746 = vmatpush2.msra.mxu0 0.0
    %1747 = vmatprep.subr.mxu0 0.0
    %1748 = vmatpush2.msra.mxu0 0.0
    %1749 = vmatprep.subr.mxu0 0.0
    %1750 = vmatpush2.msra.mxu0 0.0
    %1751 = vmatprep.subr.mxu0 0.0
    %1752 = vmatpush2.msra.mxu0 0.0
    %1753 = vmatprep.subr.mxu0 0.0
    %1754 = vmatpush2.msra.mxu0 0.0
    %1755 = vmatprep.mubr.f32.mxu0 0.0
    %v1756 = vand.u32 %v359, 4294901760
    %v1757 = vsub.f32 %v359, %v1756
    %1758 = vmatmul.mubr.f32.gmra.mxu0 %v1757
    %v1759 = vpop.f32.mrf.mxu0
    %v1760 = vadd.f32 %v1671, %v1759
    %v1761 = vpop.f32.mrf.mxu0
    %v1762 = vadd.f32 %v1673, %v1761
    %1763 = vdwg.mxu0
    %1764 = vmatprep.subr.mxu0 0.0
    %1765 = vmatpush1.msra.mxu0 0.0
    %1766 = vmatprep.subr.mxu0 0.0
    %1767 = vmatpush1.msra.mxu0 0.0
    %1768 = vmatprep.subr.mxu0 0.0
    %1769 = vmatpush1.msra.mxu0 0.0
    %1770 = vmatprep.subr.mxu0 0.0
    %1771 = vmatpush1.msra.mxu0 0.0
    %1772 = vmatprep.subr.mxu0 0.0
    %1773 = vmatpush1.msra.mxu0 0.0
    %1774 = vmatprep.subr.mxu0 0.0
    %1775 = vmatpush1.msra.mxu0 0.0
    %1776 = vmatprep.subr.mxu0 0.0
    %1777 = vmatpush1.msra.mxu0 0.0
    %1778 = vmatprep.subr.mxu0 0.0
    %1779 = vmatpush1.msra.mxu0 0.0
    %1780 = vmatprep.subr.mxu0 %v336
    %1781 = vmatpush1.msra.mxu0 %v335
    %1782 = vmatprep.subr.mxu0 %v311
    %1783 = vmatpush1.msra.mxu0 %v310
    %1784 = vmatprep.subr.mxu0 %v286
    %1785 = vmatpush1.msra.mxu0 %v285
    %1786 = vmatprep.subr.mxu0 %v261
    %1787 = vmatpush1.msra.mxu0 %v260
    %1788 = vmatprep.subr.mxu0 %v236
    %1789 = vmatpush1.msra.mxu0 %v235
    %1790 = vmatprep.subr.mxu0 %v211
    %1791 = vmatpush1.msra.mxu0 %v210
    %1792 = vmatprep.subr.mxu0 %v186
    %1793 = vmatpush1.msra.mxu0 %v185
    %1794 = vmatprep.subr.mxu0 %v161
    %1795 = vmatpush1.msra.mxu0 %v160
    %1796 = vmatprep.subr.mxu0 0.0
    %1797 = vmatpush2.msra.mxu0 0.0
    %1798 = vmatprep.subr.mxu0 0.0
    %1799 = vmatpush2.msra.mxu0 0.0
    %1800 = vmatprep.subr.mxu0 0.0
    %1801 = vmatpush2.msra.mxu0 0.0
    %1802 = vmatprep.subr.mxu0 0.0
    %1803 = vmatpush2.msra.mxu0 0.0
    %1804 = vmatprep.subr.mxu0 0.0
    %1805 = vmatpush2.msra.mxu0 0.0
    %1806 = vmatprep.subr.mxu0 0.0
    %1807 = vmatpush2.msra.mxu0 0.0
    %1808 = vmatprep.subr.mxu0 0.0
    %1809 = vmatpush2.msra.mxu0 0.0
    %1810 = vmatprep.subr.mxu0 0.0
    %1811 = vmatpush2.msra.mxu0 0.0
    %1812 = vmatprep.subr.mxu0 0.0
    %1813 = vmatpush2.msra.mxu0 0.0
    %1814 = vmatprep.subr.mxu0 0.0
    %1815 = vmatpush2.msra.mxu0 0.0
    %1816 = vmatprep.subr.mxu0 0.0
    %1817 = vmatpush2.msra.mxu0 0.0
    %1818 = vmatprep.subr.mxu0 0.0
    %1819 = vmatpush2.msra.mxu0 0.0
    %1820 = vmatprep.subr.mxu0 0.0
    %1821 = vmatpush2.msra.mxu0 0.0
    %1822 = vmatprep.subr.mxu0 0.0
    %1823 = vmatpush2.msra.mxu0 0.0
    %1824 = vmatprep.subr.mxu0 0.0
    %1825 = vmatpush2.msra.mxu0 0.0
    %1826 = vmatprep.subr.mxu0 0.0
    %1827 = vmatpush2.msra.mxu0 0.0
    %1828 = vmatprep.mubr.f32.mxu0 0.0
    %v1829 = vand.u32 %v359, 4294901760
    %v1830 = vsub.f32 %v359, %v1829
    %v1831 = vand.u32 %v1830, 4294901760
    %1832 = vmatmul.mubr.f32.gmra.mxu0 %v1831
    %v1833 = vpop.f32.mrf.mxu0
    %v1834 = vadd.f32 %v1760, %v1833
    %v1835 = vpop.f32.mrf.mxu0
    %v1836 = vadd.f32 %v1762, %v1835
    %1837 = vdwg.mxu0
    %1838 = vmatprep.subr.mxu0 0.0
    %1839 = vmatpush1.msra.mxu0 0.0
    %1840 = vmatprep.subr.mxu0 0.0
    %1841 = vmatpush1.msra.mxu0 0.0
    %1842 = vmatprep.subr.mxu0 0.0
    %1843 = vmatpush1.msra.mxu0 0.0
    %1844 = vmatprep.subr.mxu0 0.0
    %1845 = vmatpush1.msra.mxu0 0.0
    %1846 = vmatprep.subr.mxu0 0.0
    %1847 = vmatpush1.msra.mxu0 0.0
    %1848 = vmatprep.subr.mxu0 0.0
    %1849 = vmatpush1.msra.mxu0 0.0
    %1850 = vmatprep.subr.mxu0 0.0
    %1851 = vmatpush1.msra.mxu0 0.0
    %1852 = vmatprep.subr.mxu0 0.0
    %1853 = vmatpush1.msra.mxu0 0.0
    %v1854 = vsub.f32 %v336, %v336
    %v1855 = vand.u32 %v1854, 4294901760
    %1856 = vmatprep.subr.mxu0 %v1855
    %v1857 = vsub.f32 %v335, %v335
    %v1858 = vand.u32 %v1857, 4294901760
    %1859 = vmatpush1.msra.mxu0 %v1858
    %v1860 = vsub.f32 %v311, %v311
    %v1861 = vand.u32 %v1860, 4294901760
    %1862 = vmatprep.subr.mxu0 %v1861
    %v1863 = vsub.f32 %v310, %v310
    %v1864 = vand.u32 %v1863, 4294901760
    %1865 = vmatpush1.msra.mxu0 %v1864
    %v1866 = vsub.f32 %v286, %v286
    %v1867 = vand.u32 %v1866, 4294901760
    %1868 = vmatprep.subr.mxu0 %v1867
    %v1869 = vsub.f32 %v285, %v285
    %v1870 = vand.u32 %v1869, 4294901760
    %1871 = vmatpush1.msra.mxu0 %v1870
    %v1872 = vsub.f32 %v261, %v261
    %v1873 = vand.u32 %v1872, 4294901760
    %1874 = vmatprep.subr.mxu0 %v1873
    %v1875 = vsub.f32 %v260, %v260
    %v1876 = vand.u32 %v1875, 4294901760
    %1877 = vmatpush1.msra.mxu0 %v1876
    %v1878 = vsub.f32 %v236, %v236
    %v1879 = vand.u32 %v1878, 4294901760
    %1880 = vmatprep.subr.mxu0 %v1879
    %v1881 = vsub.f32 %v235, %v235
    %v1882 = vand.u32 %v1881, 4294901760
    %1883 = vmatpush1.msra.mxu0 %v1882
    %v1884 = vsub.f32 %v211, %v211
    %v1885 = vand.u32 %v1884, 4294901760
    %1886 = vmatprep.subr.mxu0 %v1885
    %v1887 = vsub.f32 %v210, %v210
    %v1888 = vand.u32 %v1887, 4294901760
    %1889 = vmatpush1.msra.mxu0 %v1888
    %v1890 = vsub.f32 %v186, %v186
    %v1891 = vand.u32 %v1890, 4294901760
    %1892 = vmatprep.subr.mxu0 %v1891
    %v1893 = vsub.f32 %v185, %v185
    %v1894 = vand.u32 %v1893, 4294901760
    %1895 = vmatpush1.msra.mxu0 %v1894
    %v1896 = vsub.f32 %v161, %v161
    %v1897 = vand.u32 %v1896, 4294901760
    %1898 = vmatprep.subr.mxu0 %v1897
    %v1899 = vsub.f32 %v160, %v160
    %v1900 = vand.u32 %v1899, 4294901760
    %1901 = vmatpush1.msra.mxu0 %v1900
    %1902 = vmatprep.subr.mxu0 0.0
    %1903 = vmatpush2.msra.mxu0 0.0
    %1904 = vmatprep.subr.mxu0 0.0
    %1905 = vmatpush2.msra.mxu0 0.0
    %1906 = vmatprep.subr.mxu0 0.0
    %1907 = vmatpush2.msra.mxu0 0.0
    %1908 = vmatprep.subr.mxu0 0.0
    %1909 = vmatpush2.msra.mxu0 0.0
    %1910 = vmatprep.subr.mxu0 0.0
    %1911 = vmatpush2.msra.mxu0 0.0
    %1912 = vmatprep.subr.mxu0 0.0
    %1913 = vmatpush2.msra.mxu0 0.0
    %1914 = vmatprep.subr.mxu0 0.0
    %1915 = vmatpush2.msra.mxu0 0.0
    %1916 = vmatprep.subr.mxu0 0.0
    %1917 = vmatpush2.msra.mxu0 0.0
    %1918 = vmatprep.subr.mxu0 0.0
    %1919 = vmatpush2.msra.mxu0 0.0
    %1920 = vmatprep.subr.mxu0 0.0
    %1921 = vmatpush2.msra.mxu0 0.0
    %1922 = vmatprep.subr.mxu0 0.0
    %1923 = vmatpush2.msra.mxu0 0.0
    %1924 = vmatprep.subr.mxu0 0.0
    %1925 = vmatpush2.msra.mxu0 0.0
    %1926 = vmatprep.subr.mxu0 0.0
    %1927 = vmatpush2.msra.mxu0 0.0
    %1928 = vmatprep.subr.mxu0 0.0
    %1929 = vmatpush2.msra.mxu0 0.0
    %1930 = vmatprep.subr.mxu0 0.0
    %1931 = vmatpush2.msra.mxu0 0.0
    %1932 = vmatprep.subr.mxu0 0.0
    %1933 = vmatpush2.msra.mxu0 0.0
    %1934 = vmatprep.mubr.f32.mxu0 0.0
    %v1935 = vand.u32 %v359, 4294901760
    %1936 = vmatmul.mubr.f32.gmra.mxu0 %v1935
    %v1937 = vpop.f32.mrf.mxu0
    %v1938 = vadd.f32 %v1834, %v1937
    %v1939 = vpop.f32.mrf.mxu0
    %v1940 = vadd.f32 %v1836, %v1939
    %1941 = vdwg.mxu0
    %1942 = vmatprep.subr.mxu0 0.0
    %1943 = vmatpush1.msra.mxu0 0.0
    %1944 = vmatprep.subr.mxu0 0.0
    %1945 = vmatpush1.msra.mxu0 0.0
    %1946 = vmatprep.subr.mxu0 0.0
    %1947 = vmatpush1.msra.mxu0 0.0
    %1948 = vmatprep.subr.mxu0 0.0
    %1949 = vmatpush1.msra.mxu0 0.0
    %1950 = vmatprep.subr.mxu0 0.0
    %1951 = vmatpush1.msra.mxu0 0.0
    %1952 = vmatprep.subr.mxu0 0.0
    %1953 = vmatpush1.msra.mxu0 0.0
    %1954 = vmatprep.subr.mxu0 0.0
    %1955 = vmatpush1.msra.mxu0 0.0
    %1956 = vmatprep.subr.mxu0 0.0
    %1957 = vmatpush1.msra.mxu0 0.0
    %1958 = vmatprep.subr.mxu0 %v336
    %1959 = vmatpush1.msra.mxu0 %v335
    %1960 = vmatprep.subr.mxu0 %v311
    %1961 = vmatpush1.msra.mxu0 %v310
    %1962 = vmatprep.subr.mxu0 %v286
    %1963 = vmatpush1.msra.mxu0 %v285
    %1964 = vmatprep.subr.mxu0 %v261
    %1965 = vmatpush1.msra.mxu0 %v260
    %1966 = vmatprep.subr.mxu0 %v236
    %1967 = vmatpush1.msra.mxu0 %v235
    %1968 = vmatprep.subr.mxu0 %v211
    %1969 = vmatpush1.msra.mxu0 %v210
    %1970 = vmatprep.subr.mxu0 %v186
    %1971 = vmatpush1.msra.mxu0 %v185
    %1972 = vmatprep.subr.mxu0 %v161
    %1973 = vmatpush1.msra.mxu0 %v160
    %1974 = vmatprep.subr.mxu0 0.0
    %1975 = vmatpush2.msra.mxu0 0.0
    %1976 = vmatprep.subr.mxu0 0.0
    %1977 = vmatpush2.msra.mxu0 0.0
    %1978 = vmatprep.subr.mxu0 0.0
    %1979 = vmatpush2.msra.mxu0 0.0
    %1980 = vmatprep.subr.mxu0 0.0
    %1981 = vmatpush2.msra.mxu0 0.0
    %1982 = vmatprep.subr.mxu0 0.0
    %1983 = vmatpush2.msra.mxu0 0.0
    %1984 = vmatprep.subr.mxu0 0.0
    %1985 = vmatpush2.msra.mxu0 0.0
    %1986 = vmatprep.subr.mxu0 0.0
    %1987 = vmatpush2.msra.mxu0 0.0
    %1988 = vmatprep.subr.mxu0 0.0
    %1989 = vmatpush2.msra.mxu0 0.0
    %1990 = vmatprep.subr.mxu0 0.0
    %1991 = vmatpush2.msra.mxu0 0.0
    %1992 = vmatprep.subr.mxu0 0.0
    %1993 = vmatpush2.msra.mxu0 0.0
    %1994 = vmatprep.subr.mxu0 0.0
    %1995 = vmatpush2.msra.mxu0 0.0
    %1996 = vmatprep.subr.mxu0 0.0
    %1997 = vmatpush2.msra.mxu0 0.0
    %1998 = vmatprep.subr.mxu0 0.0
    %1999 = vmatpush2.msra.mxu0 0.0
    %2000 = vmatprep.subr.mxu0 0.0
    %2001 = vmatpush2.msra.mxu0 0.0
    %2002 = vmatprep.subr.mxu0 0.0
    %2003 = vmatpush2.msra.mxu0 0.0
    %2004 = vmatprep.subr.mxu0 0.0
    %2005 = vmatpush2.msra.mxu0 0.0
    %2006 = vmatprep.mubr.f32.mxu0 0.0
    %v2007 = vand.u32 %v359, 4294901760
    %2008 = vmatmul.mubr.f32.gmra.mxu0 %v2007
    %v2009 = vpop.f32.mrf.mxu0
    %v2010 = vadd.f32 %v1938, %v2009
    %v2011 = vpop.f32.mrf.mxu0
    %v2012 = vadd.f32 %v1940, %v2011
    %2013 = vdwg.mxu0
    %2014 = vmatprep.subr.mxu0 0.0
    %2015 = vmatpush1.msra.mxu0 0.0
    %2016 = vmatprep.subr.mxu0 0.0
    %2017 = vmatpush1.msra.mxu0 0.0
    %2018 = vmatprep.subr.mxu0 0.0
    %2019 = vmatpush1.msra.mxu0 0.0
    %2020 = vmatprep.subr.mxu0 0.0
    %2021 = vmatpush1.msra.mxu0 0.0
    %2022 = vmatprep.subr.mxu0 0.0
    %2023 = vmatpush1.msra.mxu0 0.0
    %2024 = vmatprep.subr.mxu0 0.0
    %2025 = vmatpush1.msra.mxu0 0.0
    %2026 = vmatprep.subr.mxu0 0.0
    %2027 = vmatpush1.msra.mxu0 0.0
    %2028 = vmatprep.subr.mxu0 0.0
    %2029 = vmatpush1.msra.mxu0 0.0
    %2030 = vmatprep.subr.mxu0 %v338
    %2031 = vmatpush1.msra.mxu0 %v337
    %2032 = vmatprep.subr.mxu0 %v313
    %2033 = vmatpush1.msra.mxu0 %v312
    %2034 = vmatprep.subr.mxu0 %v288
    %2035 = vmatpush1.msra.mxu0 %v287
    %2036 = vmatprep.subr.mxu0 %v263
    %2037 = vmatpush1.msra.mxu0 %v262
    %2038 = vmatprep.subr.mxu0 %v238
    %2039 = vmatpush1.msra.mxu0 %v237
    %2040 = vmatprep.subr.mxu0 %v213
    %2041 = vmatpush1.msra.mxu0 %v212
    %2042 = vmatprep.subr.mxu0 %v188
    %2043 = vmatpush1.msra.mxu0 %v187
    %2044 = vmatprep.subr.mxu0 %v163
    %2045 = vmatpush1.msra.mxu0 %v162
    %2046 = vmatprep.subr.mxu0 0.0
    %2047 = vmatpush2.msra.mxu0 0.0
    %2048 = vmatprep.subr.mxu0 0.0
    %2049 = vmatpush2.msra.mxu0 0.0
    %2050 = vmatprep.subr.mxu0 0.0
    %2051 = vmatpush2.msra.mxu0 0.0
    %2052 = vmatprep.subr.mxu0 0.0
    %2053 = vmatpush2.msra.mxu0 0.0
    %2054 = vmatprep.subr.mxu0 0.0
    %2055 = vmatpush2.msra.mxu0 0.0
    %2056 = vmatprep.subr.mxu0 0.0
    %2057 = vmatpush2.msra.mxu0 0.0
    %2058 = vmatprep.subr.mxu0 0.0
    %2059 = vmatpush2.msra.mxu0 0.0
    %2060 = vmatprep.subr.mxu0 0.0
    %2061 = vmatpush2.msra.mxu0 0.0
    %2062 = vmatprep.subr.mxu0 0.0
    %2063 = vmatpush2.msra.mxu0 0.0
    %2064 = vmatprep.subr.mxu0 0.0
    %2065 = vmatpush2.msra.mxu0 0.0
    %2066 = vmatprep.subr.mxu0 0.0
    %2067 = vmatpush2.msra.mxu0 0.0
    %2068 = vmatprep.subr.mxu0 0.0
    %2069 = vmatpush2.msra.mxu0 0.0
    %2070 = vmatprep.subr.mxu0 0.0
    %2071 = vmatpush2.msra.mxu0 0.0
    %2072 = vmatprep.subr.mxu0 0.0
    %2073 = vmatpush2.msra.mxu0 0.0
    %2074 = vmatprep.subr.mxu0 0.0
    %2075 = vmatpush2.msra.mxu0 0.0
    %2076 = vmatprep.subr.mxu0 0.0
    %2077 = vmatpush2.msra.mxu0 0.0
    %2078 = vmatprep.mubr.f32.mxu0 0.0
    %v2079 = vand.u32 %v359, 4294901760
    %v2080 = vsub.f32 %v359, %v2079
    %v2081 = vand.u32 %v2080, 4294901760
    %v2082 = vsub.f32 %v2080, %v2081
    %v2083 = vand.u32 %v2082, 4294901760
    %2084 = vmatmul.mubr.f32.gmra.mxu0 %v2083
    %v2085 = vpop.f32.mrf.mxu0
    %v2086 = vadd.f32 0.0, %v2085
    %v2087 = vpop.f32.mrf.mxu0
    %v2088 = vadd.f32 0.0, %v2087
    %2089 = vdwg.mxu0
    %2090 = vmatprep.subr.mxu0 0.0
    %2091 = vmatpush1.msra.mxu0 0.0
    %2092 = vmatprep.subr.mxu0 0.0
    %2093 = vmatpush1.msra.mxu0 0.0
    %2094 = vmatprep.subr.mxu0 0.0
    %2095 = vmatpush1.msra.mxu0 0.0
    %2096 = vmatprep.subr.mxu0 0.0
    %2097 = vmatpush1.msra.mxu0 0.0
    %2098 = vmatprep.subr.mxu0 0.0
    %2099 = vmatpush1.msra.mxu0 0.0
    %2100 = vmatprep.subr.mxu0 0.0
    %2101 = vmatpush1.msra.mxu0 0.0
    %2102 = vmatprep.subr.mxu0 0.0
    %2103 = vmatpush1.msra.mxu0 0.0
    %2104 = vmatprep.subr.mxu0 0.0
    %2105 = vmatpush1.msra.mxu0 0.0
    %v2106 = vsub.f32 %v338, %v338
    %v2107 = vand.u32 %v2106, 4294901760
    %v2108 = vsub.f32 %v2106, %v2107
    %v2109 = vand.u32 %v2108, 4294901760
    %2110 = vmatprep.subr.mxu0 %v2109
    %v2111 = vsub.f32 %v337, %v337
    %v2112 = vand.u32 %v2111, 4294901760
    %v2113 = vsub.f32 %v2111, %v2112
    %v2114 = vand.u32 %v2113, 4294901760
    %2115 = vmatpush1.msra.mxu0 %v2114
    %v2116 = vsub.f32 %v313, %v313
    %v2117 = vand.u32 %v2116, 4294901760
    %v2118 = vsub.f32 %v2116, %v2117
    %v2119 = vand.u32 %v2118, 4294901760
    %2120 = vmatprep.subr.mxu0 %v2119
    %v2121 = vsub.f32 %v312, %v312
    %v2122 = vand.u32 %v2121, 4294901760
    %v2123 = vsub.f32 %v2121, %v2122
    %v2124 = vand.u32 %v2123, 4294901760
    %2125 = vmatpush1.msra.mxu0 %v2124
    %v2126 = vsub.f32 %v288, %v288
    %v2127 = vand.u32 %v2126, 4294901760
    %v2128 = vsub.f32 %v2126, %v2127
    %v2129 = vand.u32 %v2128, 4294901760
    %2130 = vmatprep.subr.mxu0 %v2129
    %v2131 = vsub.f32 %v287, %v287
    %v2132 = vand.u32 %v2131, 4294901760
    %v2133 = vsub.f32 %v2131, %v2132
    %v2134 = vand.u32 %v2133, 4294901760
    %2135 = vmatpush1.msra.mxu0 %v2134
    %v2136 = vsub.f32 %v263, %v263
    %v2137 = vand.u32 %v2136, 4294901760
    %v2138 = vsub.f32 %v2136, %v2137
    %v2139 = vand.u32 %v2138, 4294901760
    %2140 = vmatprep.subr.mxu0 %v2139
    %v2141 = vsub.f32 %v262, %v262
    %v2142 = vand.u32 %v2141, 4294901760
    %v2143 = vsub.f32 %v2141, %v2142
    %v2144 = vand.u32 %v2143, 4294901760
    %2145 = vmatpush1.msra.mxu0 %v2144
    %v2146 = vsub.f32 %v238, %v238
    %v2147 = vand.u32 %v2146, 4294901760
    %v2148 = vsub.f32 %v2146, %v2147
    %v2149 = vand.u32 %v2148, 4294901760
    %2150 = vmatprep.subr.mxu0 %v2149
    %v2151 = vsub.f32 %v237, %v237
    %v2152 = vand.u32 %v2151, 4294901760
    %v2153 = vsub.f32 %v2151, %v2152
    %v2154 = vand.u32 %v2153, 4294901760
    %2155 = vmatpush1.msra.mxu0 %v2154
    %v2156 = vsub.f32 %v213, %v213
    %v2157 = vand.u32 %v2156, 4294901760
    %v2158 = vsub.f32 %v2156, %v2157
    %v2159 = vand.u32 %v2158, 4294901760
    %2160 = vmatprep.subr.mxu0 %v2159
    %v2161 = vsub.f32 %v212, %v212
    %v2162 = vand.u32 %v2161, 4294901760
    %v2163 = vsub.f32 %v2161, %v2162
    %v2164 = vand.u32 %v2163, 4294901760
    %2165 = vmatpush1.msra.mxu0 %v2164
    %v2166 = vsub.f32 %v188, %v188
    %v2167 = vand.u32 %v2166, 4294901760
    %v2168 = vsub.f32 %v2166, %v2167
    %v2169 = vand.u32 %v2168, 4294901760
    %2170 = vmatprep.subr.mxu0 %v2169
    %v2171 = vsub.f32 %v187, %v187
    %v2172 = vand.u32 %v2171, 4294901760
    %v2173 = vsub.f32 %v2171, %v2172
    %v2174 = vand.u32 %v2173, 4294901760
    %2175 = vmatpush1.msra.mxu0 %v2174
    %v2176 = vsub.f32 %v163, %v163
    %v2177 = vand.u32 %v2176, 4294901760
    %v2178 = vsub.f32 %v2176, %v2177
    %v2179 = vand.u32 %v2178, 4294901760
    %2180 = vmatprep.subr.mxu0 %v2179
    %v2181 = vsub.f32 %v162, %v162
    %v2182 = vand.u32 %v2181, 4294901760
    %v2183 = vsub.f32 %v2181, %v2182
    %v2184 = vand.u32 %v2183, 4294901760
    %2185 = vmatpush1.msra.mxu0 %v2184
    %2186 = vmatprep.subr.mxu0 0.0
    %2187 = vmatpush2.msra.mxu0 0.0
    %2188 = vmatprep.subr.mxu0 0.0
    %2189 = vmatpush2.msra.mxu0 0.0
    %2190 = vmatprep.subr.mxu0 0.0
    %2191 = vmatpush2.msra.mxu0 0.0
    %2192 = vmatprep.subr.mxu0 0.0
    %2193 = vmatpush2.msra.mxu0 0.0
    %2194 = vmatprep.subr.mxu0 0.0
    %2195 = vmatpush2.msra.mxu0 0.0
    %2196 = vmatprep.subr.mxu0 0.0
    %2197 = vmatpush2.msra.mxu0 0.0
    %2198 = vmatprep.subr.mxu0 0.0
    %2199 = vmatpush2.msra.mxu0 0.0
    %2200 = vmatprep.subr.mxu0 0.0
    %2201 = vmatpush2.msra.mxu0 0.0
    %2202 = vmatprep.subr.mxu0 0.0
    %2203 = vmatpush2.msra.mxu0 0.0
    %2204 = vmatprep.subr.mxu0 0.0
    %2205 = vmatpush2.msra.mxu0 0.0
    %2206 = vmatprep.subr.mxu0 0.0
    %2207 = vmatpush2.msra.mxu0 0.0
    %2208 = vmatprep.subr.mxu0 0.0
    %2209 = vmatpush2.msra.mxu0 0.0
    %2210 = vmatprep.subr.mxu0 0.0
    %2211 = vmatpush2.msra.mxu0 0.0
    %2212 = vmatprep.subr.mxu0 0.0
    %2213 = vmatpush2.msra.mxu0 0.0
    %2214 = vmatprep.subr.mxu0 0.0
    %2215 = vmatpush2.msra.mxu0 0.0
    %2216 = vmatprep.subr.mxu0 0.0
    %2217 = vmatpush2.msra.mxu0 0.0
    %2218 = vmatprep.mubr.f32.mxu0 0.0
    %v2219 = vand.u32 %v359, 4294901760
    %2220 = vmatmul.mubr.f32.gmra.mxu0 %v2219
    %v2221 = vpop.f32.mrf.mxu0
    %v2222 = vadd.f32 %v2086, %v2221
    %v2223 = vpop.f32.mrf.mxu0
    %v2224 = vadd.f32 %v2088, %v2223
    %2225 = vdwg.mxu0
    %2226 = vmatprep.subr.mxu0 0.0
    %2227 = vmatpush1.msra.mxu0 0.0
    %2228 = vmatprep.subr.mxu0 0.0
    %2229 = vmatpush1.msra.mxu0 0.0
    %2230 = vmatprep.subr.mxu0 0.0
    %2231 = vmatpush1.msra.mxu0 0.0
    %2232 = vmatprep.subr.mxu0 0.0
    %2233 = vmatpush1.msra.mxu0 0.0
    %2234 = vmatprep.subr.mxu0 0.0
    %2235 = vmatpush1.msra.mxu0 0.0
    %2236 = vmatprep.subr.mxu0 0.0
    %2237 = vmatpush1.msra.mxu0 0.0
    %2238 = vmatprep.subr.mxu0 0.0
    %2239 = vmatpush1.msra.mxu0 0.0
    %2240 = vmatprep.subr.mxu0 0.0
    %2241 = vmatpush1.msra.mxu0 0.0
    %v2242 = vsub.f32 %v338, %v338
    %2243 = vmatprep.subr.mxu0 %v2242
    %v2244 = vsub.f32 %v337, %v337
    %2245 = vmatpush1.msra.mxu0 %v2244
    %v2246 = vsub.f32 %v313, %v313
    %2247 = vmatprep.subr.mxu0 %v2246
    %v2248 = vsub.f32 %v312, %v312
    %2249 = vmatpush1.msra.mxu0 %v2248
    %v2250 = vsub.f32 %v288, %v288
    %2251 = vmatprep.subr.mxu0 %v2250
    %v2252 = vsub.f32 %v287, %v287
    %2253 = vmatpush1.msra.mxu0 %v2252
    %v2254 = vsub.f32 %v263, %v263
    %2255 = vmatprep.subr.mxu0 %v2254
    %v2256 = vsub.f32 %v262, %v262
    %2257 = vmatpush1.msra.mxu0 %v2256
    %v2258 = vsub.f32 %v238, %v238
    %2259 = vmatprep.subr.mxu0 %v2258
    %v2260 = vsub.f32 %v237, %v237
    %2261 = vmatpush1.msra.mxu0 %v2260
    %v2262 = vsub.f32 %v213, %v213
    %2263 = vmatprep.subr.mxu0 %v2262
    %v2264 = vsub.f32 %v212, %v212
    %2265 = vmatpush1.msra.mxu0 %v2264
    %v2266 = vsub.f32 %v188, %v188
    %2267 = vmatprep.subr.mxu0 %v2266
    %v2268 = vsub.f32 %v187, %v187
    %2269 = vmatpush1.msra.mxu0 %v2268
    %v2270 = vsub.f32 %v163, %v163
    %2271 = vmatprep.subr.mxu0 %v2270
    %v2272 = vsub.f32 %v162, %v162
    %2273 = vmatpush1.msra.mxu0 %v2272
    %2274 = vmatprep.subr.mxu0 0.0
    %2275 = vmatpush2.msra.mxu0 0.0
    %2276 = vmatprep.subr.mxu0 0.0
    %2277 = vmatpush2.msra.mxu0 0.0
    %2278 = vmatprep.subr.mxu0 0.0
    %2279 = vmatpush2.msra.mxu0 0.0
    %2280 = vmatprep.subr.mxu0 0.0
    %2281 = vmatpush2.msra.mxu0 0.0
    %2282 = vmatprep.subr.mxu0 0.0
    %2283 = vmatpush2.msra.mxu0 0.0
    %2284 = vmatprep.subr.mxu0 0.0
    %2285 = vmatpush2.msra.mxu0 0.0
    %2286 = vmatprep.subr.mxu0 0.0
    %2287 = vmatpush2.msra.mxu0 0.0
    %2288 = vmatprep.subr.mxu0 0.0
    %2289 = vmatpush2.msra.mxu0 0.0
    %2290 = vmatprep.subr.mxu0 0.0
    %2291 = vmatpush2.msra.mxu0 0.0
    %2292 = vmatprep.subr.mxu0 0.0
    %2293 = vmatpush2.msra.mxu0 0.0
    %2294 = vmatprep.subr.mxu0 0.0
    %2295 = vmatpush2.msra.mxu0 0.0
    %2296 = vmatprep.subr.mxu0 0.0
    %2297 = vmatpush2.msra.mxu0 0.0
    %2298 = vmatprep.subr.mxu0 0.0
    %2299 = vmatpush2.msra.mxu0 0.0
    %2300 = vmatprep.subr.mxu0 0.0
    %2301 = vmatpush2.msra.mxu0 0.0
    %2302 = vmatprep.subr.mxu0 0.0
    %2303 = vmatpush2.msra.mxu0 0.0
    %2304 = vmatprep.subr.mxu0 0.0
    %2305 = vmatpush2.msra.mxu0 0.0
    %2306 = vmatprep.mubr.f32.mxu0 0.0
    %v2307 = vand.u32 %v359, 4294901760
    %v2308 = vsub.f32 %v359, %v2307
    %2309 = vmatmul.mubr.f32.gmra.mxu0 %v2308
    %v2310 = vpop.f32.mrf.mxu0
    %v2311 = vadd.f32 %v2222, %v2310
    %v2312 = vpop.f32.mrf.mxu0
    %v2313 = vadd.f32 %v2224, %v2312
    %2314 = vdwg.mxu0
    %2315 = vmatprep.subr.mxu0 0.0
    %2316 = vmatpush1.msra.mxu0 0.0
    %2317 = vmatprep.subr.mxu0 0.0
    %2318 = vmatpush1.msra.mxu0 0.0
    %2319 = vmatprep.subr.mxu0 0.0
    %2320 = vmatpush1.msra.mxu0 0.0
    %2321 = vmatprep.subr.mxu0 0.0
    %2322 = vmatpush1.msra.mxu0 0.0
    %2323 = vmatprep.subr.mxu0 0.0
    %2324 = vmatpush1.msra.mxu0 0.0
    %2325 = vmatprep.subr.mxu0 0.0
    %2326 = vmatpush1.msra.mxu0 0.0
    %2327 = vmatprep.subr.mxu0 0.0
    %2328 = vmatpush1.msra.mxu0 0.0
    %2329 = vmatprep.subr.mxu0 0.0
    %2330 = vmatpush1.msra.mxu0 0.0
    %2331 = vmatprep.subr.mxu0 %v338
    %2332 = vmatpush1.msra.mxu0 %v337
    %2333 = vmatprep.subr.mxu0 %v313
    %2334 = vmatpush1.msra.mxu0 %v312
    %2335 = vmatprep.subr.mxu0 %v288
    %2336 = vmatpush1.msra.mxu0 %v287
    %2337 = vmatprep.subr.mxu0 %v263
    %2338 = vmatpush1.msra.mxu0 %v262
    %2339 = vmatprep.subr.mxu0 %v238
    %2340 = vmatpush1.msra.mxu0 %v237
    %2341 = vmatprep.subr.mxu0 %v213
    %2342 = vmatpush1.msra.mxu0 %v212
    %2343 = vmatprep.subr.mxu0 %v188
    %2344 = vmatpush1.msra.mxu0 %v187
    %2345 = vmatprep.subr.mxu0 %v163
    %2346 = vmatpush1.msra.mxu0 %v162
    %2347 = vmatprep.subr.mxu0 0.0
    %2348 = vmatpush2.msra.mxu0 0.0
    %2349 = vmatprep.subr.mxu0 0.0
    %2350 = vmatpush2.msra.mxu0 0.0
    %2351 = vmatprep.subr.mxu0 0.0
    %2352 = vmatpush2.msra.mxu0 0.0
    %2353 = vmatprep.subr.mxu0 0.0
    %2354 = vmatpush2.msra.mxu0 0.0
    %2355 = vmatprep.subr.mxu0 0.0
    %2356 = vmatpush2.msra.mxu0 0.0
    %2357 = vmatprep.subr.mxu0 0.0
    %2358 = vmatpush2.msra.mxu0 0.0
    %2359 = vmatprep.subr.mxu0 0.0
    %2360 = vmatpush2.msra.mxu0 0.0
    %2361 = vmatprep.subr.mxu0 0.0
    %2362 = vmatpush2.msra.mxu0 0.0
    %2363 = vmatprep.subr.mxu0 0.0
    %2364 = vmatpush2.msra.mxu0 0.0
    %2365 = vmatprep.subr.mxu0 0.0
    %2366 = vmatpush2.msra.mxu0 0.0
    %2367 = vmatprep.subr.mxu0 0.0
    %2368 = vmatpush2.msra.mxu0 0.0
    %2369 = vmatprep.subr.mxu0 0.0
    %2370 = vmatpush2.msra.mxu0 0.0
    %2371 = vmatprep.subr.mxu0 0.0
    %2372 = vmatpush2.msra.mxu0 0.0
    %2373 = vmatprep.subr.mxu0 0.0
    %2374 = vmatpush2.msra.mxu0 0.0
    %2375 = vmatprep.subr.mxu0 0.0
    %2376 = vmatpush2.msra.mxu0 0.0
    %2377 = vmatprep.subr.mxu0 0.0
    %2378 = vmatpush2.msra.mxu0 0.0
    %2379 = vmatprep.mubr.f32.mxu0 0.0
    %v2380 = vand.u32 %v359, 4294901760
    %v2381 = vsub.f32 %v359, %v2380
    %v2382 = vand.u32 %v2381, 4294901760
    %2383 = vmatmul.mubr.f32.gmra.mxu0 %v2382
    %v2384 = vpop.f32.mrf.mxu0
    %v2385 = vadd.f32 %v2311, %v2384
    %v2386 = vpop.f32.mrf.mxu0
    %v2387 = vadd.f32 %v2313, %v2386
    %2388 = vdwg.mxu0
    %2389 = vmatprep.subr.mxu0 0.0
    %2390 = vmatpush1.msra.mxu0 0.0
    %2391 = vmatprep.subr.mxu0 0.0
    %2392 = vmatpush1.msra.mxu0 0.0
    %2393 = vmatprep.subr.mxu0 0.0
    %2394 = vmatpush1.msra.mxu0 0.0
    %2395 = vmatprep.subr.mxu0 0.0
    %2396 = vmatpush1.msra.mxu0 0.0
    %2397 = vmatprep.subr.mxu0 0.0
    %2398 = vmatpush1.msra.mxu0 0.0
    %2399 = vmatprep.subr.mxu0 0.0
    %2400 = vmatpush1.msra.mxu0 0.0
    %2401 = vmatprep.subr.mxu0 0.0
    %2402 = vmatpush1.msra.mxu0 0.0
    %2403 = vmatprep.subr.mxu0 0.0
    %2404 = vmatpush1.msra.mxu0 0.0
    %v2405 = vsub.f32 %v338, %v338
    %v2406 = vand.u32 %v2405, 4294901760
    %2407 = vmatprep.subr.mxu0 %v2406
    %v2408 = vsub.f32 %v337, %v337
    %v2409 = vand.u32 %v2408, 4294901760
    %2410 = vmatpush1.msra.mxu0 %v2409
    %v2411 = vsub.f32 %v313, %v313
    %v2412 = vand.u32 %v2411, 4294901760
    %2413 = vmatprep.subr.mxu0 %v2412
    %v2414 = vsub.f32 %v312, %v312
    %v2415 = vand.u32 %v2414, 4294901760
    %2416 = vmatpush1.msra.mxu0 %v2415
    %v2417 = vsub.f32 %v288, %v288
    %v2418 = vand.u32 %v2417, 4294901760
    %2419 = vmatprep.subr.mxu0 %v2418
    %v2420 = vsub.f32 %v287, %v287
    %v2421 = vand.u32 %v2420, 4294901760
    %2422 = vmatpush1.msra.mxu0 %v2421
    %v2423 = vsub.f32 %v263, %v263
    %v2424 = vand.u32 %v2423, 4294901760
    %2425 = vmatprep.subr.mxu0 %v2424
    %v2426 = vsub.f32 %v262, %v262
    %v2427 = vand.u32 %v2426, 4294901760
    %2428 = vmatpush1.msra.mxu0 %v2427
    %v2429 = vsub.f32 %v238, %v238
    %v2430 = vand.u32 %v2429, 4294901760
    %2431 = vmatprep.subr.mxu0 %v2430
    %v2432 = vsub.f32 %v237, %v237
    %v2433 = vand.u32 %v2432, 4294901760
    %2434 = vmatpush1.msra.mxu0 %v2433
    %v2435 = vsub.f32 %v213, %v213
    %v2436 = vand.u32 %v2435, 4294901760
    %2437 = vmatprep.subr.mxu0 %v2436
    %v2438 = vsub.f32 %v212, %v212
    %v2439 = vand.u32 %v2438, 4294901760
    %2440 = vmatpush1.msra.mxu0 %v2439
    %v2441 = vsub.f32 %v188, %v188
    %v2442 = vand.u32 %v2441, 4294901760
    %2443 = vmatprep.subr.mxu0 %v2442
    %v2444 = vsub.f32 %v187, %v187
    %v2445 = vand.u32 %v2444, 4294901760
    %2446 = vmatpush1.msra.mxu0 %v2445
    %v2447 = vsub.f32 %v163, %v163
    %v2448 = vand.u32 %v2447, 4294901760
    %2449 = vmatprep.subr.mxu0 %v2448
    %v2450 = vsub.f32 %v162, %v162
    %v2451 = vand.u32 %v2450, 4294901760
    %2452 = vmatpush1.msra.mxu0 %v2451
    %2453 = vmatprep.subr.mxu0 0.0
    %2454 = vmatpush2.msra.mxu0 0.0
    %2455 = vmatprep.subr.mxu0 0.0
    %2456 = vmatpush2.msra.mxu0 0.0
    %2457 = vmatprep.subr.mxu0 0.0
    %2458 = vmatpush2.msra.mxu0 0.0
    %2459 = vmatprep.subr.mxu0 0.0
    %2460 = vmatpush2.msra.mxu0 0.0
    %2461 = vmatprep.subr.mxu0 0.0
    %2462 = vmatpush2.msra.mxu0 0.0
    %2463 = vmatprep.subr.mxu0 0.0
    %2464 = vmatpush2.msra.mxu0 0.0
    %2465 = vmatprep.subr.mxu0 0.0
    %2466 = vmatpush2.msra.mxu0 0.0
    %2467 = vmatprep.subr.mxu0 0.0
    %2468 = vmatpush2.msra.mxu0 0.0
    %2469 = vmatprep.subr.mxu0 0.0
    %2470 = vmatpush2.msra.mxu0 0.0
    %2471 = vmatprep.subr.mxu0 0.0
    %2472 = vmatpush2.msra.mxu0 0.0
    %2473 = vmatprep.subr.mxu0 0.0
    %2474 = vmatpush2.msra.mxu0 0.0
    %2475 = vmatprep.subr.mxu0 0.0
    %2476 = vmatpush2.msra.mxu0 0.0
    %2477 = vmatprep.subr.mxu0 0.0
    %2478 = vmatpush2.msra.mxu0 0.0
    %2479 = vmatprep.subr.mxu0 0.0
    %2480 = vmatpush2.msra.mxu0 0.0
    %2481 = vmatprep.subr.mxu0 0.0
    %2482 = vmatpush2.msra.mxu0 0.0
    %2483 = vmatprep.subr.mxu0 0.0
    %2484 = vmatpush2.msra.mxu0 0.0
    %2485 = vmatprep.mubr.f32.mxu0 0.0
    %v2486 = vand.u32 %v359, 4294901760
    %2487 = vmatmul.mubr.f32.gmra.mxu0 %v2486
    %v2488 = vpop.f32.mrf.mxu0
    %v2489 = vadd.f32 %v2385, %v2488
    %v2490 = vpop.f32.mrf.mxu0
    %v2491 = vadd.f32 %v2387, %v2490
    %2492 = vdwg.mxu0
    %2493 = vmatprep.subr.mxu0 0.0
    %2494 = vmatpush1.msra.mxu0 0.0
    %2495 = vmatprep.subr.mxu0 0.0
    %2496 = vmatpush1.msra.mxu0 0.0
    %2497 = vmatprep.subr.mxu0 0.0
    %2498 = vmatpush1.msra.mxu0 0.0
    %2499 = vmatprep.subr.mxu0 0.0
    %2500 = vmatpush1.msra.mxu0 0.0
    %2501 = vmatprep.subr.mxu0 0.0
    %2502 = vmatpush1.msra.mxu0 0.0
    %2503 = vmatprep.subr.mxu0 0.0
    %2504 = vmatpush1.msra.mxu0 0.0
    %2505 = vmatprep.subr.mxu0 0.0
    %2506 = vmatpush1.msra.mxu0 0.0
    %2507 = vmatprep.subr.mxu0 0.0
    %2508 = vmatpush1.msra.mxu0 0.0
    %2509 = vmatprep.subr.mxu0 %v338
    %2510 = vmatpush1.msra.mxu0 %v337
    %2511 = vmatprep.subr.mxu0 %v313
    %2512 = vmatpush1.msra.mxu0 %v312
    %2513 = vmatprep.subr.mxu0 %v288
    %2514 = vmatpush1.msra.mxu0 %v287
    %2515 = vmatprep.subr.mxu0 %v263
    %2516 = vmatpush1.msra.mxu0 %v262
    %2517 = vmatprep.subr.mxu0 %v238
    %2518 = vmatpush1.msra.mxu0 %v237
    %2519 = vmatprep.subr.mxu0 %v213
    %2520 = vmatpush1.msra.mxu0 %v212
    %2521 = vmatprep.subr.mxu0 %v188
    %2522 = vmatpush1.msra.mxu0 %v187
    %2523 = vmatprep.subr.mxu0 %v163
    %2524 = vmatpush1.msra.mxu0 %v162
    %2525 = vmatprep.subr.mxu0 0.0
    %2526 = vmatpush2.msra.mxu0 0.0
    %2527 = vmatprep.subr.mxu0 0.0
    %2528 = vmatpush2.msra.mxu0 0.0
    %2529 = vmatprep.subr.mxu0 0.0
    %2530 = vmatpush2.msra.mxu0 0.0
    %2531 = vmatprep.subr.mxu0 0.0
    %2532 = vmatpush2.msra.mxu0 0.0
    %2533 = vmatprep.subr.mxu0 0.0
    %2534 = vmatpush2.msra.mxu0 0.0
    %2535 = vmatprep.subr.mxu0 0.0
    %2536 = vmatpush2.msra.mxu0 0.0
    %2537 = vmatprep.subr.mxu0 0.0
    %2538 = vmatpush2.msra.mxu0 0.0
    %2539 = vmatprep.subr.mxu0 0.0
    %2540 = vmatpush2.msra.mxu0 0.0
    %2541 = vmatprep.subr.mxu0 0.0
    %2542 = vmatpush2.msra.mxu0 0.0
    %2543 = vmatprep.subr.mxu0 0.0
    %2544 = vmatpush2.msra.mxu0 0.0
    %2545 = vmatprep.subr.mxu0 0.0
    %2546 = vmatpush2.msra.mxu0 0.0
    %2547 = vmatprep.subr.mxu0 0.0
    %2548 = vmatpush2.msra.mxu0 0.0
    %2549 = vmatprep.subr.mxu0 0.0
    %2550 = vmatpush2.msra.mxu0 0.0
    %2551 = vmatprep.subr.mxu0 0.0
    %2552 = vmatpush2.msra.mxu0 0.0
    %2553 = vmatprep.subr.mxu0 0.0
    %2554 = vmatpush2.msra.mxu0 0.0
    %2555 = vmatprep.subr.mxu0 0.0
    %2556 = vmatpush2.msra.mxu0 0.0
    %2557 = vmatprep.mubr.f32.mxu0 0.0
    %v2558 = vand.u32 %v359, 4294901760
    %2559 = vmatmul.mubr.f32.gmra.mxu0 %v2558
    %v2560 = vpop.f32.mrf.mxu0
    %v2561 = vadd.f32 %v2489, %v2560
    %v2562 = vpop.f32.mrf.mxu0
    %v2563 = vadd.f32 %v2491, %v2562
    %2564 = vdwg.mxu0
    %2565 = vmatprep.subr.mxu0 0.0
    %2566 = vmatpush1.msra.mxu0 0.0
    %2567 = vmatprep.subr.mxu0 0.0
    %2568 = vmatpush1.msra.mxu0 0.0
    %2569 = vmatprep.subr.mxu0 0.0
    %2570 = vmatpush1.msra.mxu0 0.0
    %2571 = vmatprep.subr.mxu0 0.0
    %2572 = vmatpush1.msra.mxu0 0.0
    %2573 = vmatprep.subr.mxu0 0.0
    %2574 = vmatpush1.msra.mxu0 0.0
    %2575 = vmatprep.subr.mxu0 0.0
    %2576 = vmatpush1.msra.mxu0 0.0
    %2577 = vmatprep.subr.mxu0 0.0
    %2578 = vmatpush1.msra.mxu0 0.0
    %2579 = vmatprep.subr.mxu0 0.0
    %2580 = vmatpush1.msra.mxu0 0.0
    %2581 = vmatprep.subr.mxu0 %v340
    %2582 = vmatpush1.msra.mxu0 %v339
    %2583 = vmatprep.subr.mxu0 %v315
    %2584 = vmatpush1.msra.mxu0 %v314
    %2585 = vmatprep.subr.mxu0 %v290
    %2586 = vmatpush1.msra.mxu0 %v289
    %2587 = vmatprep.subr.mxu0 %v265
    %2588 = vmatpush1.msra.mxu0 %v264
    %2589 = vmatprep.subr.mxu0 %v240
    %2590 = vmatpush1.msra.mxu0 %v239
    %2591 = vmatprep.subr.mxu0 %v215
    %2592 = vmatpush1.msra.mxu0 %v214
    %2593 = vmatprep.subr.mxu0 %v190
    %2594 = vmatpush1.msra.mxu0 %v189
    %2595 = vmatprep.subr.mxu0 %v165
    %2596 = vmatpush1.msra.mxu0 %v164
    %2597 = vmatprep.subr.mxu0 0.0
    %2598 = vmatpush2.msra.mxu0 0.0
    %2599 = vmatprep.subr.mxu0 0.0
    %2600 = vmatpush2.msra.mxu0 0.0
    %2601 = vmatprep.subr.mxu0 0.0
    %2602 = vmatpush2.msra.mxu0 0.0
    %2603 = vmatprep.subr.mxu0 0.0
    %2604 = vmatpush2.msra.mxu0 0.0
    %2605 = vmatprep.subr.mxu0 0.0
    %2606 = vmatpush2.msra.mxu0 0.0
    %2607 = vmatprep.subr.mxu0 0.0
    %2608 = vmatpush2.msra.mxu0 0.0
    %2609 = vmatprep.subr.mxu0 0.0
    %2610 = vmatpush2.msra.mxu0 0.0
    %2611 = vmatprep.subr.mxu0 0.0
    %2612 = vmatpush2.msra.mxu0 0.0
    %2613 = vmatprep.subr.mxu0 0.0
    %2614 = vmatpush2.msra.mxu0 0.0
    %2615 = vmatprep.subr.mxu0 0.0
    %2616 = vmatpush2.msra.mxu0 0.0
    %2617 = vmatprep.subr.mxu0 0.0
    %2618 = vmatpush2.msra.mxu0 0.0
    %2619 = vmatprep.subr.mxu0 0.0
    %2620 = vmatpush2.msra.mxu0 0.0
    %2621 = vmatprep.subr.mxu0 0.0
    %2622 = vmatpush2.msra.mxu0 0.0
    %2623 = vmatprep.subr.mxu0 0.0
    %2624 = vmatpush2.msra.mxu0 0.0
    %2625 = vmatprep.subr.mxu0 0.0
    %2626 = vmatpush2.msra.mxu0 0.0
    %2627 = vmatprep.subr.mxu0 0.0
    %2628 = vmatpush2.msra.mxu0 0.0
    %2629 = vmatprep.mubr.f32.mxu0 0.0
    %v2630 = vand.u32 %v359, 4294901760
    %v2631 = vsub.f32 %v359, %v2630
    %v2632 = vand.u32 %v2631, 4294901760
    %v2633 = vsub.f32 %v2631, %v2632
    %v2634 = vand.u32 %v2633, 4294901760
    %2635 = vmatmul.mubr.f32.gmra.mxu0 %v2634
    %v2636 = vpop.f32.mrf.mxu0
    %v2637 = vadd.f32 0.0, %v2636
    %v2638 = vpop.f32.mrf.mxu0
    %v2639 = vadd.f32 0.0, %v2638
    %2640 = vdwg.mxu0
    %2641 = vmatprep.subr.mxu0 0.0
    %2642 = vmatpush1.msra.mxu0 0.0
    %2643 = vmatprep.subr.mxu0 0.0
    %2644 = vmatpush1.msra.mxu0 0.0
    %2645 = vmatprep.subr.mxu0 0.0
    %2646 = vmatpush1.msra.mxu0 0.0
    %2647 = vmatprep.subr.mxu0 0.0
    %2648 = vmatpush1.msra.mxu0 0.0
    %2649 = vmatprep.subr.mxu0 0.0
    %2650 = vmatpush1.msra.mxu0 0.0
    %2651 = vmatprep.subr.mxu0 0.0
    %2652 = vmatpush1.msra.mxu0 0.0
    %2653 = vmatprep.subr.mxu0 0.0
    %2654 = vmatpush1.msra.mxu0 0.0
    %2655 = vmatprep.subr.mxu0 0.0
    %2656 = vmatpush1.msra.mxu0 0.0
    %v2657 = vsub.f32 %v340, %v340
    %v2658 = vand.u32 %v2657, 4294901760
    %v2659 = vsub.f32 %v2657, %v2658
    %v2660 = vand.u32 %v2659, 4294901760
    %2661 = vmatprep.subr.mxu0 %v2660
    %v2662 = vsub.f32 %v339, %v339
    %v2663 = vand.u32 %v2662, 4294901760
    %v2664 = vsub.f32 %v2662, %v2663
    %v2665 = vand.u32 %v2664, 4294901760
    %2666 = vmatpush1.msra.mxu0 %v2665
    %v2667 = vsub.f32 %v315, %v315
    %v2668 = vand.u32 %v2667, 4294901760
    %v2669 = vsub.f32 %v2667, %v2668
    %v2670 = vand.u32 %v2669, 4294901760
    %2671 = vmatprep.subr.mxu0 %v2670
    %v2672 = vsub.f32 %v314, %v314
    %v2673 = vand.u32 %v2672, 4294901760
    %v2674 = vsub.f32 %v2672, %v2673
    %v2675 = vand.u32 %v2674, 4294901760
    %2676 = vmatpush1.msra.mxu0 %v2675
    %v2677 = vsub.f32 %v290, %v290
    %v2678 = vand.u32 %v2677, 4294901760
    %v2679 = vsub.f32 %v2677, %v2678
    %v2680 = vand.u32 %v2679, 4294901760
    %2681 = vmatprep.subr.mxu0 %v2680
    %v2682 = vsub.f32 %v289, %v289
    %v2683 = vand.u32 %v2682, 4294901760
    %v2684 = vsub.f32 %v2682, %v2683
    %v2685 = vand.u32 %v2684, 4294901760
    %2686 = vmatpush1.msra.mxu0 %v2685
    %v2687 = vsub.f32 %v265, %v265
    %v2688 = vand.u32 %v2687, 4294901760
    %v2689 = vsub.f32 %v2687, %v2688
    %v2690 = vand.u32 %v2689, 4294901760
    %2691 = vmatprep.subr.mxu0 %v2690
    %v2692 = vsub.f32 %v264, %v264
    %v2693 = vand.u32 %v2692, 4294901760
    %v2694 = vsub.f32 %v2692, %v2693
    %v2695 = vand.u32 %v2694, 4294901760
    %2696 = vmatpush1.msra.mxu0 %v2695
    %v2697 = vsub.f32 %v240, %v240
    %v2698 = vand.u32 %v2697, 4294901760
    %v2699 = vsub.f32 %v2697, %v2698
    %v2700 = vand.u32 %v2699, 4294901760
    %2701 = vmatprep.subr.mxu0 %v2700
    %v2702 = vsub.f32 %v239, %v239
    %v2703 = vand.u32 %v2702, 4294901760
    %v2704 = vsub.f32 %v2702, %v2703
    %v2705 = vand.u32 %v2704, 4294901760
    %2706 = vmatpush1.msra.mxu0 %v2705
    %v2707 = vsub.f32 %v215, %v215
    %v2708 = vand.u32 %v2707, 4294901760
    %v2709 = vsub.f32 %v2707, %v2708
    %v2710 = vand.u32 %v2709, 4294901760
    %2711 = vmatprep.subr.mxu0 %v2710
    %v2712 = vsub.f32 %v214, %v214
    %v2713 = vand.u32 %v2712, 4294901760
    %v2714 = vsub.f32 %v2712, %v2713
    %v2715 = vand.u32 %v2714, 4294901760
    %2716 = vmatpush1.msra.mxu0 %v2715
    %v2717 = vsub.f32 %v190, %v190
    %v2718 = vand.u32 %v2717, 4294901760
    %v2719 = vsub.f32 %v2717, %v2718
    %v2720 = vand.u32 %v2719, 4294901760
    %2721 = vmatprep.subr.mxu0 %v2720
    %v2722 = vsub.f32 %v189, %v189
    %v2723 = vand.u32 %v2722, 4294901760
    %v2724 = vsub.f32 %v2722, %v2723
    %v2725 = vand.u32 %v2724, 4294901760
    %2726 = vmatpush1.msra.mxu0 %v2725
    %v2727 = vsub.f32 %v165, %v165
    %v2728 = vand.u32 %v2727, 4294901760
    %v2729 = vsub.f32 %v2727, %v2728
    %v2730 = vand.u32 %v2729, 4294901760
    %2731 = vmatprep.subr.mxu0 %v2730
    %v2732 = vsub.f32 %v164, %v164
    %v2733 = vand.u32 %v2732, 4294901760
    %v2734 = vsub.f32 %v2732, %v2733
    %v2735 = vand.u32 %v2734, 4294901760
    %2736 = vmatpush1.msra.mxu0 %v2735
    %2737 = vmatprep.subr.mxu0 0.0
    %2738 = vmatpush2.msra.mxu0 0.0
    %2739 = vmatprep.subr.mxu0 0.0
    %2740 = vmatpush2.msra.mxu0 0.0
    %2741 = vmatprep.subr.mxu0 0.0
    %2742 = vmatpush2.msra.mxu0 0.0
    %2743 = vmatprep.subr.mxu0 0.0
    %2744 = vmatpush2.msra.mxu0 0.0
    %2745 = vmatprep.subr.mxu0 0.0
    %2746 = vmatpush2.msra.mxu0 0.0
    %2747 = vmatprep.subr.mxu0 0.0
    %2748 = vmatpush2.msra.mxu0 0.0
    %2749 = vmatprep.subr.mxu0 0.0
    %2750 = vmatpush2.msra.mxu0 0.0
    %2751 = vmatprep.subr.mxu0 0.0
    %2752 = vmatpush2.msra.mxu0 0.0
    %2753 = vmatprep.subr.mxu0 0.0
    %2754 = vmatpush2.msra.mxu0 0.0
    %2755 = vmatprep.subr.mxu0 0.0
    %2756 = vmatpush2.msra.mxu0 0.0
    %2757 = vmatprep.subr.mxu0 0.0
    %2758 = vmatpush2.msra.mxu0 0.0
    %2759 = vmatprep.subr.mxu0 0.0
    %2760 = vmatpush2.msra.mxu0 0.0
    %2761 = vmatprep.subr.mxu0 0.0
    %2762 = vmatpush2.msra.mxu0 0.0
    %2763 = vmatprep.subr.mxu0 0.0
    %2764 = vmatpush2.msra.mxu0 0.0
    %2765 = vmatprep.subr.mxu0 0.0
    %2766 = vmatpush2.msra.mxu0 0.0
    %2767 = vmatprep.subr.mxu0 0.0
    %2768 = vmatpush2.msra.mxu0 0.0
    %2769 = vmatprep.mubr.f32.mxu0 0.0
    %v2770 = vand.u32 %v359, 4294901760
    %2771 = vmatmul.mubr.f32.gmra.mxu0 %v2770
    %v2772 = vpop.f32.mrf.mxu0
    %v2773 = vadd.f32 %v2637, %v2772
    %v2774 = vpop.f32.mrf.mxu0
    %v2775 = vadd.f32 %v2639, %v2774
    %2776 = vdwg.mxu0
    %2777 = vmatprep.subr.mxu0 0.0
    %2778 = vmatpush1.msra.mxu0 0.0
    %2779 = vmatprep.subr.mxu0 0.0
    %2780 = vmatpush1.msra.mxu0 0.0
    %2781 = vmatprep.subr.mxu0 0.0
    %2782 = vmatpush1.msra.mxu0 0.0
    %2783 = vmatprep.subr.mxu0 0.0
    %2784 = vmatpush1.msra.mxu0 0.0
    %2785 = vmatprep.subr.mxu0 0.0
    %2786 = vmatpush1.msra.mxu0 0.0
    %2787 = vmatprep.subr.mxu0 0.0
    %2788 = vmatpush1.msra.mxu0 0.0
    %2789 = vmatprep.subr.mxu0 0.0
    %2790 = vmatpush1.msra.mxu0 0.0
    %2791 = vmatprep.subr.mxu0 0.0
    %2792 = vmatpush1.msra.mxu0 0.0
    %v2793 = vsub.f32 %v340, %v340
    %2794 = vmatprep.subr.mxu0 %v2793
    %v2795 = vsub.f32 %v339, %v339
    %2796 = vmatpush1.msra.mxu0 %v2795
    %v2797 = vsub.f32 %v315, %v315
    %2798 = vmatprep.subr.mxu0 %v2797
    %v2799 = vsub.f32 %v314, %v314
    %2800 = vmatpush1.msra.mxu0 %v2799
    %v2801 = vsub.f32 %v290, %v290
    %2802 = vmatprep.subr.mxu0 %v2801
    %v2803 = vsub.f32 %v289, %v289
    %2804 = vmatpush1.msra.mxu0 %v2803
    %v2805 = vsub.f32 %v265, %v265
    %2806 = vmatprep.subr.mxu0 %v2805
    %v2807 = vsub.f32 %v264, %v264
    %2808 = vmatpush1.msra.mxu0 %v2807
    %v2809 = vsub.f32 %v240, %v240
    %2810 = vmatprep.subr.mxu0 %v2809
    %v2811 = vsub.f32 %v239, %v239
    %2812 = vmatpush1.msra.mxu0 %v2811
    %v2813 = vsub.f32 %v215, %v215
    %2814 = vmatprep.subr.mxu0 %v2813
    %v2815 = vsub.f32 %v214, %v214
    %2816 = vmatpush1.msra.mxu0 %v2815
    %v2817 = vsub.f32 %v190, %v190
    %2818 = vmatprep.subr.mxu0 %v2817
    %v2819 = vsub.f32 %v189, %v189
    %2820 = vmatpush1.msra.mxu0 %v2819
    %v2821 = vsub.f32 %v165, %v165
    %2822 = vmatprep.subr.mxu0 %v2821
    %v2823 = vsub.f32 %v164, %v164
    %2824 = vmatpush1.msra.mxu0 %v2823
    %2825 = vmatprep.subr.mxu0 0.0
    %2826 = vmatpush2.msra.mxu0 0.0
    %2827 = vmatprep.subr.mxu0 0.0
    %2828 = vmatpush2.msra.mxu0 0.0
    %2829 = vmatprep.subr.mxu0 0.0
    %2830 = vmatpush2.msra.mxu0 0.0
    %2831 = vmatprep.subr.mxu0 0.0
    %2832 = vmatpush2.msra.mxu0 0.0
    %2833 = vmatprep.subr.mxu0 0.0
    %2834 = vmatpush2.msra.mxu0 0.0
    %2835 = vmatprep.subr.mxu0 0.0
    %2836 = vmatpush2.msra.mxu0 0.0
    %2837 = vmatprep.subr.mxu0 0.0
    %2838 = vmatpush2.msra.mxu0 0.0
    %2839 = vmatprep.subr.mxu0 0.0
    %2840 = vmatpush2.msra.mxu0 0.0
    %2841 = vmatprep.subr.mxu0 0.0
    %2842 = vmatpush2.msra.mxu0 0.0
    %2843 = vmatprep.subr.mxu0 0.0
    %2844 = vmatpush2.msra.mxu0 0.0
    %2845 = vmatprep.subr.mxu0 0.0
    %2846 = vmatpush2.msra.mxu0 0.0
    %2847 = vmatprep.subr.mxu0 0.0
    %2848 = vmatpush2.msra.mxu0 0.0
    %2849 = vmatprep.subr.mxu0 0.0
    %2850 = vmatpush2.msra.mxu0 0.0
    %2851 = vmatprep.subr.mxu0 0.0
    %2852 = vmatpush2.msra.mxu0 0.0
    %2853 = vmatprep.subr.mxu0 0.0
    %2854 = vmatpush2.msra.mxu0 0.0
    %2855 = vmatprep.subr.mxu0 0.0
    %2856 = vmatpush2.msra.mxu0 0.0
    %2857 = vmatprep.mubr.f32.mxu0 0.0
    %v2858 = vand.u32 %v359, 4294901760
    %v2859 = vsub.f32 %v359, %v2858
    %2860 = vmatmul.mubr.f32.gmra.mxu0 %v2859
    %v2861 = vpop.f32.mrf.mxu0
    %v2862 = vadd.f32 %v2773, %v2861
    %v2863 = vpop.f32.mrf.mxu0
    %v2864 = vadd.f32 %v2775, %v2863
    %2865 = vdwg.mxu0
    %2866 = vmatprep.subr.mxu0 0.0
    %2867 = vmatpush1.msra.mxu0 0.0
    %2868 = vmatprep.subr.mxu0 0.0
    %2869 = vmatpush1.msra.mxu0 0.0
    %2870 = vmatprep.subr.mxu0 0.0
    %2871 = vmatpush1.msra.mxu0 0.0
    %2872 = vmatprep.subr.mxu0 0.0
    %2873 = vmatpush1.msra.mxu0 0.0
    %2874 = vmatprep.subr.mxu0 0.0
    %2875 = vmatpush1.msra.mxu0 0.0
    %2876 = vmatprep.subr.mxu0 0.0
    %2877 = vmatpush1.msra.mxu0 0.0
    %2878 = vmatprep.subr.mxu0 0.0
    %2879 = vmatpush1.msra.mxu0 0.0
    %2880 = vmatprep.subr.mxu0 0.0
    %2881 = vmatpush1.msra.mxu0 0.0
    %2882 = vmatprep.subr.mxu0 %v340
    %2883 = vmatpush1.msra.mxu0 %v339
    %2884 = vmatprep.subr.mxu0 %v315
    %2885 = vmatpush1.msra.mxu0 %v314
    %2886 = vmatprep.subr.mxu0 %v290
    %2887 = vmatpush1.msra.mxu0 %v289
    %2888 = vmatprep.subr.mxu0 %v265
    %2889 = vmatpush1.msra.mxu0 %v264
    %2890 = vmatprep.subr.mxu0 %v240
    %2891 = vmatpush1.msra.mxu0 %v239
    %2892 = vmatprep.subr.mxu0 %v215
    %2893 = vmatpush1.msra.mxu0 %v214
    %2894 = vmatprep.subr.mxu0 %v190
    %2895 = vmatpush1.msra.mxu0 %v189
    %2896 = vmatprep.subr.mxu0 %v165
    %2897 = vmatpush1.msra.mxu0 %v164
    %2898 = vmatprep.subr.mxu0 0.0
    %2899 = vmatpush2.msra.mxu0 0.0
    %2900 = vmatprep.subr.mxu0 0.0
    %2901 = vmatpush2.msra.mxu0 0.0
    %2902 = vmatprep.subr.mxu0 0.0
    %2903 = vmatpush2.msra.mxu0 0.0
    %2904 = vmatprep.subr.mxu0 0.0
    %2905 = vmatpush2.msra.mxu0 0.0
    %2906 = vmatprep.subr.mxu0 0.0
    %2907 = vmatpush2.msra.mxu0 0.0
    %2908 = vmatprep.subr.mxu0 0.0
    %2909 = vmatpush2.msra.mxu0 0.0
    %2910 = vmatprep.subr.mxu0 0.0
    %2911 = vmatpush2.msra.mxu0 0.0
    %2912 = vmatprep.subr.mxu0 0.0
    %2913 = vmatpush2.msra.mxu0 0.0
    %2914 = vmatprep.subr.mxu0 0.0
    %2915 = vmatpush2.msra.mxu0 0.0
    %2916 = vmatprep.subr.mxu0 0.0
    %2917 = vmatpush2.msra.mxu0 0.0
    %2918 = vmatprep.subr.mxu0 0.0
    %2919 = vmatpush2.msra.mxu0 0.0
    %2920 = vmatprep.subr.mxu0 0.0
    %2921 = vmatpush2.msra.mxu0 0.0
    %2922 = vmatprep.subr.mxu0 0.0
    %2923 = vmatpush2.msra.mxu0 0.0
    %2924 = vmatprep.subr.mxu0 0.0
    %2925 = vmatpush2.msra.mxu0 0.0
    %2926 = vmatprep.subr.mxu0 0.0
    %2927 = vmatpush2.msra.mxu0 0.0
    %2928 = vmatprep.subr.mxu0 0.0
    %2929 = vmatpush2.msra.mxu0 0.0
    %2930 = vmatprep.mubr.f32.mxu0 0.0
    %v2931 = vand.u32 %v359, 4294901760
    %v2932 = vsub.f32 %v359, %v2931
    %v2933 = vand.u32 %v2932, 4294901760
    %2934 = vmatmul.mubr.f32.gmra.mxu0 %v2933
    %v2935 = vpop.f32.mrf.mxu0
    %v2936 = vadd.f32 %v2862, %v2935
    %v2937 = vpop.f32.mrf.mxu0
    %v2938 = vadd.f32 %v2864, %v2937
    %2939 = vdwg.mxu0
    %2940 = vmatprep.subr.mxu0 0.0
    %2941 = vmatpush1.msra.mxu0 0.0
    %2942 = vmatprep.subr.mxu0 0.0
    %2943 = vmatpush1.msra.mxu0 0.0
    %2944 = vmatprep.subr.mxu0 0.0
    %2945 = vmatpush1.msra.mxu0 0.0
    %2946 = vmatprep.subr.mxu0 0.0
    %2947 = vmatpush1.msra.mxu0 0.0
    %2948 = vmatprep.subr.mxu0 0.0
    %2949 = vmatpush1.msra.mxu0 0.0
    %2950 = vmatprep.subr.mxu0 0.0
    %2951 = vmatpush1.msra.mxu0 0.0
    %2952 = vmatprep.subr.mxu0 0.0
    %2953 = vmatpush1.msra.mxu0 0.0
    %2954 = vmatprep.subr.mxu0 0.0
    %2955 = vmatpush1.msra.mxu0 0.0
    %v2956 = vsub.f32 %v340, %v340
    %v2957 = vand.u32 %v2956, 4294901760
    %2958 = vmatprep.subr.mxu0 %v2957
    %v2959 = vsub.f32 %v339, %v339
    %v2960 = vand.u32 %v2959, 4294901760
    %2961 = vmatpush1.msra.mxu0 %v2960
    %v2962 = vsub.f32 %v315, %v315
    %v2963 = vand.u32 %v2962, 4294901760
    %2964 = vmatprep.subr.mxu0 %v2963
    %v2965 = vsub.f32 %v314, %v314
    %v2966 = vand.u32 %v2965, 4294901760
    %2967 = vmatpush1.msra.mxu0 %v2966
    %v2968 = vsub.f32 %v290, %v290
    %v2969 = vand.u32 %v2968, 4294901760
    %2970 = vmatprep.subr.mxu0 %v2969
    %v2971 = vsub.f32 %v289, %v289
    %v2972 = vand.u32 %v2971, 4294901760
    %2973 = vmatpush1.msra.mxu0 %v2972
    %v2974 = vsub.f32 %v265, %v265
    %v2975 = vand.u32 %v2974, 4294901760
    %2976 = vmatprep.subr.mxu0 %v2975
    %v2977 = vsub.f32 %v264, %v264
    %v2978 = vand.u32 %v2977, 4294901760
    %2979 = vmatpush1.msra.mxu0 %v2978
    %v2980 = vsub.f32 %v240, %v240
    %v2981 = vand.u32 %v2980, 4294901760
    %2982 = vmatprep.subr.mxu0 %v2981
    %v2983 = vsub.f32 %v239, %v239
    %v2984 = vand.u32 %v2983, 4294901760
    %2985 = vmatpush1.msra.mxu0 %v2984
    %v2986 = vsub.f32 %v215, %v215
    %v2987 = vand.u32 %v2986, 4294901760
    %2988 = vmatprep.subr.mxu0 %v2987
    %v2989 = vsub.f32 %v214, %v214
    %v2990 = vand.u32 %v2989, 4294901760
    %2991 = vmatpush1.msra.mxu0 %v2990
    %v2992 = vsub.f32 %v190, %v190
    %v2993 = vand.u32 %v2992, 4294901760
    %2994 = vmatprep.subr.mxu0 %v2993
    %v2995 = vsub.f32 %v189, %v189
    %v2996 = vand.u32 %v2995, 4294901760
    %2997 = vmatpush1.msra.mxu0 %v2996
    %v2998 = vsub.f32 %v165, %v165
    %v2999 = vand.u32 %v2998, 4294901760
    %3000 = vmatprep.subr.mxu0 %v2999
    %v3001 = vsub.f32 %v164, %v164
    %v3002 = vand.u32 %v3001, 4294901760
    %3003 = vmatpush1.msra.mxu0 %v3002
    %3004 = vmatprep.subr.mxu0 0.0
    %3005 = vmatpush2.msra.mxu0 0.0
    %3006 = vmatprep.subr.mxu0 0.0
    %3007 = vmatpush2.msra.mxu0 0.0
    %3008 = vmatprep.subr.mxu0 0.0
    %3009 = vmatpush2.msra.mxu0 0.0
    %3010 = vmatprep.subr.mxu0 0.0
    %3011 = vmatpush2.msra.mxu0 0.0
    %3012 = vmatprep.subr.mxu0 0.0
    %3013 = vmatpush2.msra.mxu0 0.0
    %3014 = vmatprep.subr.mxu0 0.0
    %3015 = vmatpush2.msra.mxu0 0.0
    %3016 = vmatprep.subr.mxu0 0.0
    %3017 = vmatpush2.msra.mxu0 0.0
    %3018 = vmatprep.subr.mxu0 0.0
    %3019 = vmatpush2.msra.mxu0 0.0
    %3020 = vmatprep.subr.mxu0 0.0
    %3021 = vmatpush2.msra.mxu0 0.0
    %3022 = vmatprep.subr.mxu0 0.0
    %3023 = vmatpush2.msra.mxu0 0.0
    %3024 = vmatprep.subr.mxu0 0.0
    %3025 = vmatpush2.msra.mxu0 0.0
    %3026 = vmatprep.subr.mxu0 0.0
    %3027 = vmatpush2.msra.mxu0 0.0
    %3028 = vmatprep.subr.mxu0 0.0
    %3029 = vmatpush2.msra.mxu0 0.0
    %3030 = vmatprep.subr.mxu0 0.0
    %3031 = vmatpush2.msra.mxu0 0.0
    %3032 = vmatprep.subr.mxu0 0.0
    %3033 = vmatpush2.msra.mxu0 0.0
    %3034 = vmatprep.subr.mxu0 0.0
    %3035 = vmatpush2.msra.mxu0 0.0
    %3036 = vmatprep.mubr.f32.mxu0 0.0
    %v3037 = vand.u32 %v359, 4294901760
    %3038 = vmatmul.mubr.f32.gmra.mxu0 %v3037
    %v3039 = vpop.f32.mrf.mxu0
    %v3040 = vadd.f32 %v2936, %v3039
    %v3041 = vpop.f32.mrf.mxu0
    %v3042 = vadd.f32 %v2938, %v3041
    %3043 = vdwg.mxu0
    %3044 = vmatprep.subr.mxu0 0.0
    %3045 = vmatpush1.msra.mxu0 0.0
    %3046 = vmatprep.subr.mxu0 0.0
    %3047 = vmatpush1.msra.mxu0 0.0
    %3048 = vmatprep.subr.mxu0 0.0
    %3049 = vmatpush1.msra.mxu0 0.0
    %3050 = vmatprep.subr.mxu0 0.0
    %3051 = vmatpush1.msra.mxu0 0.0
    %3052 = vmatprep.subr.mxu0 0.0
    %3053 = vmatpush1.msra.mxu0 0.0
    %3054 = vmatprep.subr.mxu0 0.0
    %3055 = vmatpush1.msra.mxu0 0.0
    %3056 = vmatprep.subr.mxu0 0.0
    %3057 = vmatpush1.msra.mxu0 0.0
    %3058 = vmatprep.subr.mxu0 0.0
    %3059 = vmatpush1.msra.mxu0 0.0
    %3060 = vmatprep.subr.mxu0 %v340
    %3061 = vmatpush1.msra.mxu0 %v339
    %3062 = vmatprep.subr.mxu0 %v315
    %3063 = vmatpush1.msra.mxu0 %v314
    %3064 = vmatprep.subr.mxu0 %v290
    %3065 = vmatpush1.msra.mxu0 %v289
    %3066 = vmatprep.subr.mxu0 %v265
    %3067 = vmatpush1.msra.mxu0 %v264
    %3068 = vmatprep.subr.mxu0 %v240
    %3069 = vmatpush1.msra.mxu0 %v239
    %3070 = vmatprep.subr.mxu0 %v215
    %3071 = vmatpush1.msra.mxu0 %v214
    %3072 = vmatprep.subr.mxu0 %v190
    %3073 = vmatpush1.msra.mxu0 %v189
    %3074 = vmatprep.subr.mxu0 %v165
    %3075 = vmatpush1.msra.mxu0 %v164
    %3076 = vmatprep.subr.mxu0 0.0
    %3077 = vmatpush2.msra.mxu0 0.0
    %3078 = vmatprep.subr.mxu0 0.0
    %3079 = vmatpush2.msra.mxu0 0.0
    %3080 = vmatprep.subr.mxu0 0.0
    %3081 = vmatpush2.msra.mxu0 0.0
    %3082 = vmatprep.subr.mxu0 0.0
    %3083 = vmatpush2.msra.mxu0 0.0
    %3084 = vmatprep.subr.mxu0 0.0
    %3085 = vmatpush2.msra.mxu0 0.0
    %3086 = vmatprep.subr.mxu0 0.0
    %3087 = vmatpush2.msra.mxu0 0.0
    %3088 = vmatprep.subr.mxu0 0.0
    %3089 = vmatpush2.msra.mxu0 0.0
    %3090 = vmatprep.subr.mxu0 0.0
    %3091 = vmatpush2.msra.mxu0 0.0
    %3092 = vmatprep.subr.mxu0 0.0
    %3093 = vmatpush2.msra.mxu0 0.0
    %3094 = vmatprep.subr.mxu0 0.0
    %3095 = vmatpush2.msra.mxu0 0.0
    %3096 = vmatprep.subr.mxu0 0.0
    %3097 = vmatpush2.msra.mxu0 0.0
    %3098 = vmatprep.subr.mxu0 0.0
    %3099 = vmatpush2.msra.mxu0 0.0
    %3100 = vmatprep.subr.mxu0 0.0
    %3101 = vmatpush2.msra.mxu0 0.0
    %3102 = vmatprep.subr.mxu0 0.0
    %3103 = vmatpush2.msra.mxu0 0.0
    %3104 = vmatprep.subr.mxu0 0.0
    %3105 = vmatpush2.msra.mxu0 0.0
    %3106 = vmatprep.subr.mxu0 0.0
    %3107 = vmatpush2.msra.mxu0 0.0
    %3108 = vmatprep.mubr.f32.mxu0 0.0
    %v3109 = vand.u32 %v359, 4294901760
    %3110 = vmatmul.mubr.f32.gmra.mxu0 %v3109
    %v3111 = vpop.f32.mrf.mxu0
    %v3112 = vadd.f32 %v3040, %v3111
    %v3113 = vpop.f32.mrf.mxu0
    %v3114 = vadd.f32 %v3042, %v3113
    %3115 = vdwg.mxu0
    %3116 = vmatprep.subr.mxu0 0.0
    %3117 = vmatpush1.msra.mxu0 0.0
    %3118 = vmatprep.subr.mxu0 0.0
    %3119 = vmatpush1.msra.mxu0 0.0
    %3120 = vmatprep.subr.mxu0 0.0
    %3121 = vmatpush1.msra.mxu0 0.0
    %3122 = vmatprep.subr.mxu0 0.0
    %3123 = vmatpush1.msra.mxu0 0.0
    %3124 = vmatprep.subr.mxu0 0.0
    %3125 = vmatpush1.msra.mxu0 0.0
    %3126 = vmatprep.subr.mxu0 0.0
    %3127 = vmatpush1.msra.mxu0 0.0
    %3128 = vmatprep.subr.mxu0 0.0
    %3129 = vmatpush1.msra.mxu0 0.0
    %3130 = vmatprep.subr.mxu0 0.0
    %3131 = vmatpush1.msra.mxu0 0.0
    %3132 = vmatprep.subr.mxu0 %v342
    %3133 = vmatpush1.msra.mxu0 %v341
    %3134 = vmatprep.subr.mxu0 %v317
    %3135 = vmatpush1.msra.mxu0 %v316
    %3136 = vmatprep.subr.mxu0 %v292
    %3137 = vmatpush1.msra.mxu0 %v291
    %3138 = vmatprep.subr.mxu0 %v267
    %3139 = vmatpush1.msra.mxu0 %v266
    %3140 = vmatprep.subr.mxu0 %v242
    %3141 = vmatpush1.msra.mxu0 %v241
    %3142 = vmatprep.subr.mxu0 %v217
    %3143 = vmatpush1.msra.mxu0 %v216
    %3144 = vmatprep.subr.mxu0 %v192
    %3145 = vmatpush1.msra.mxu0 %v191
    %3146 = vmatprep.subr.mxu0 %v167
    %3147 = vmatpush1.msra.mxu0 %v166
    %3148 = vmatprep.subr.mxu0 0.0
    %3149 = vmatpush2.msra.mxu0 0.0
    %3150 = vmatprep.subr.mxu0 0.0
    %3151 = vmatpush2.msra.mxu0 0.0
    %3152 = vmatprep.subr.mxu0 0.0
    %3153 = vmatpush2.msra.mxu0 0.0
    %3154 = vmatprep.subr.mxu0 0.0
    %3155 = vmatpush2.msra.mxu0 0.0
    %3156 = vmatprep.subr.mxu0 0.0
    %3157 = vmatpush2.msra.mxu0 0.0
    %3158 = vmatprep.subr.mxu0 0.0
    %3159 = vmatpush2.msra.mxu0 0.0
    %3160 = vmatprep.subr.mxu0 0.0
    %3161 = vmatpush2.msra.mxu0 0.0
    %3162 = vmatprep.subr.mxu0 0.0
    %3163 = vmatpush2.msra.mxu0 0.0
    %3164 = vmatprep.subr.mxu0 0.0
    %3165 = vmatpush2.msra.mxu0 0.0
    %3166 = vmatprep.subr.mxu0 0.0
    %3167 = vmatpush2.msra.mxu0 0.0
    %3168 = vmatprep.subr.mxu0 0.0
    %3169 = vmatpush2.msra.mxu0 0.0
    %3170 = vmatprep.subr.mxu0 0.0
    %3171 = vmatpush2.msra.mxu0 0.0
    %3172 = vmatprep.subr.mxu0 0.0
    %3173 = vmatpush2.msra.mxu0 0.0
    %3174 = vmatprep.subr.mxu0 0.0
    %3175 = vmatpush2.msra.mxu0 0.0
    %3176 = vmatprep.subr.mxu0 0.0
    %3177 = vmatpush2.msra.mxu0 0.0
    %3178 = vmatprep.subr.mxu0 0.0
    %3179 = vmatpush2.msra.mxu0 0.0
    %3180 = vmatprep.mubr.f32.mxu0 0.0
    %v3181 = vand.u32 %v359, 4294901760
    %v3182 = vsub.f32 %v359, %v3181
    %v3183 = vand.u32 %v3182, 4294901760
    %v3184 = vsub.f32 %v3182, %v3183
    %v3185 = vand.u32 %v3184, 4294901760
    %3186 = vmatmul.mubr.f32.gmra.mxu0 %v3185
    %v3187 = vpop.f32.mrf.mxu0
    %v3188 = vadd.f32 0.0, %v3187
    %v3189 = vpop.f32.mrf.mxu0
    %v3190 = vadd.f32 0.0, %v3189
    %3191 = vdwg.mxu0
    %3192 = vmatprep.subr.mxu0 0.0
    %3193 = vmatpush1.msra.mxu0 0.0
    %3194 = vmatprep.subr.mxu0 0.0
    %3195 = vmatpush1.msra.mxu0 0.0
    %3196 = vmatprep.subr.mxu0 0.0
    %3197 = vmatpush1.msra.mxu0 0.0
    %3198 = vmatprep.subr.mxu0 0.0
    %3199 = vmatpush1.msra.mxu0 0.0
    %3200 = vmatprep.subr.mxu0 0.0
    %3201 = vmatpush1.msra.mxu0 0.0
    %3202 = vmatprep.subr.mxu0 0.0
    %3203 = vmatpush1.msra.mxu0 0.0
    %3204 = vmatprep.subr.mxu0 0.0
    %3205 = vmatpush1.msra.mxu0 0.0
    %3206 = vmatprep.subr.mxu0 0.0
    %3207 = vmatpush1.msra.mxu0 0.0
    %v3208 = vsub.f32 %v342, %v342
    %v3209 = vand.u32 %v3208, 4294901760
    %v3210 = vsub.f32 %v3208, %v3209
    %v3211 = vand.u32 %v3210, 4294901760
    %3212 = vmatprep.subr.mxu0 %v3211
    %v3213 = vsub.f32 %v341, %v341
    %v3214 = vand.u32 %v3213, 4294901760
    %v3215 = vsub.f32 %v3213, %v3214
    %v3216 = vand.u32 %v3215, 4294901760
    %3217 = vmatpush1.msra.mxu0 %v3216
    %v3218 = vsub.f32 %v317, %v317
    %v3219 = vand.u32 %v3218, 4294901760
    %v3220 = vsub.f32 %v3218, %v3219
    %v3221 = vand.u32 %v3220, 4294901760
    %3222 = vmatprep.subr.mxu0 %v3221
    %v3223 = vsub.f32 %v316, %v316
    %v3224 = vand.u32 %v3223, 4294901760
    %v3225 = vsub.f32 %v3223, %v3224
    %v3226 = vand.u32 %v3225, 4294901760
    %3227 = vmatpush1.msra.mxu0 %v3226
    %v3228 = vsub.f32 %v292, %v292
    %v3229 = vand.u32 %v3228, 4294901760
    %v3230 = vsub.f32 %v3228, %v3229
    %v3231 = vand.u32 %v3230, 4294901760
    %3232 = vmatprep.subr.mxu0 %v3231
    %v3233 = vsub.f32 %v291, %v291
    %v3234 = vand.u32 %v3233, 4294901760
    %v3235 = vsub.f32 %v3233, %v3234
    %v3236 = vand.u32 %v3235, 4294901760
    %3237 = vmatpush1.msra.mxu0 %v3236
    %v3238 = vsub.f32 %v267, %v267
    %v3239 = vand.u32 %v3238, 4294901760
    %v3240 = vsub.f32 %v3238, %v3239
    %v3241 = vand.u32 %v3240, 4294901760
    %3242 = vmatprep.subr.mxu0 %v3241
    %v3243 = vsub.f32 %v266, %v266
    %v3244 = vand.u32 %v3243, 4294901760
    %v3245 = vsub.f32 %v3243, %v3244
    %v3246 = vand.u32 %v3245, 4294901760
    %3247 = vmatpush1.msra.mxu0 %v3246
    %v3248 = vsub.f32 %v242, %v242
    %v3249 = vand.u32 %v3248, 4294901760
    %v3250 = vsub.f32 %v3248, %v3249
    %v3251 = vand.u32 %v3250, 4294901760
    %3252 = vmatprep.subr.mxu0 %v3251
    %v3253 = vsub.f32 %v241, %v241
    %v3254 = vand.u32 %v3253, 4294901760
    %v3255 = vsub.f32 %v3253, %v3254
    %v3256 = vand.u32 %v3255, 4294901760
    %3257 = vmatpush1.msra.mxu0 %v3256
    %v3258 = vsub.f32 %v217, %v217
    %v3259 = vand.u32 %v3258, 4294901760
    %v3260 = vsub.f32 %v3258, %v3259
    %v3261 = vand.u32 %v3260, 4294901760
    %3262 = vmatprep.subr.mxu0 %v3261
    %v3263 = vsub.f32 %v216, %v216
    %v3264 = vand.u32 %v3263, 4294901760
    %v3265 = vsub.f32 %v3263, %v3264
    %v3266 = vand.u32 %v3265, 4294901760
    %3267 = vmatpush1.msra.mxu0 %v3266
    %v3268 = vsub.f32 %v192, %v192
    %v3269 = vand.u32 %v3268, 4294901760
    %v3270 = vsub.f32 %v3268, %v3269
    %v3271 = vand.u32 %v3270, 4294901760
    %3272 = vmatprep.subr.mxu0 %v3271
    %v3273 = vsub.f32 %v191, %v191
    %v3274 = vand.u32 %v3273, 4294901760
    %v3275 = vsub.f32 %v3273, %v3274
    %v3276 = vand.u32 %v3275, 4294901760
    %3277 = vmatpush1.msra.mxu0 %v3276
    %v3278 = vsub.f32 %v167, %v167
    %v3279 = vand.u32 %v3278, 4294901760
    %v3280 = vsub.f32 %v3278, %v3279
    %v3281 = vand.u32 %v3280, 4294901760
    %3282 = vmatprep.subr.mxu0 %v3281
    %v3283 = vsub.f32 %v166, %v166
    %v3284 = vand.u32 %v3283, 4294901760
    %v3285 = vsub.f32 %v3283, %v3284
    %v3286 = vand.u32 %v3285, 4294901760
    %3287 = vmatpush1.msra.mxu0 %v3286
    %3288 = vmatprep.subr.mxu0 0.0
    %3289 = vmatpush2.msra.mxu0 0.0
    %3290 = vmatprep.subr.mxu0 0.0
    %3291 = vmatpush2.msra.mxu0 0.0
    %3292 = vmatprep.subr.mxu0 0.0
    %3293 = vmatpush2.msra.mxu0 0.0
    %3294 = vmatprep.subr.mxu0 0.0
    %3295 = vmatpush2.msra.mxu0 0.0
    %3296 = vmatprep.subr.mxu0 0.0
    %3297 = vmatpush2.msra.mxu0 0.0
    %3298 = vmatprep.subr.mxu0 0.0
    %3299 = vmatpush2.msra.mxu0 0.0
    %3300 = vmatprep.subr.mxu0 0.0
    %3301 = vmatpush2.msra.mxu0 0.0
    %3302 = vmatprep.subr.mxu0 0.0
    %3303 = vmatpush2.msra.mxu0 0.0
    %3304 = vmatprep.subr.mxu0 0.0
    %3305 = vmatpush2.msra.mxu0 0.0
    %3306 = vmatprep.subr.mxu0 0.0
    %3307 = vmatpush2.msra.mxu0 0.0
    %3308 = vmatprep.subr.mxu0 0.0
    %3309 = vmatpush2.msra.mxu0 0.0
    %3310 = vmatprep.subr.mxu0 0.0
    %3311 = vmatpush2.msra.mxu0 0.0
    %3312 = vmatprep.subr.mxu0 0.0
    %3313 = vmatpush2.msra.mxu0 0.0
    %3314 = vmatprep.subr.mxu0 0.0
    %3315 = vmatpush2.msra.mxu0 0.0
    %3316 = vmatprep.subr.mxu0 0.0
    %3317 = vmatpush2.msra.mxu0 0.0
    %3318 = vmatprep.subr.mxu0 0.0
    %3319 = vmatpush2.msra.mxu0 0.0
    %3320 = vmatprep.mubr.f32.mxu0 0.0
    %v3321 = vand.u32 %v359, 4294901760
    %3322 = vmatmul.mubr.f32.gmra.mxu0 %v3321
    %v3323 = vpop.f32.mrf.mxu0
    %v3324 = vadd.f32 %v3188, %v3323
    %v3325 = vpop.f32.mrf.mxu0
    %v3326 = vadd.f32 %v3190, %v3325
    %3327 = vdwg.mxu0
    %3328 = vmatprep.subr.mxu0 0.0
    %3329 = vmatpush1.msra.mxu0 0.0
    %3330 = vmatprep.subr.mxu0 0.0
    %3331 = vmatpush1.msra.mxu0 0.0
    %3332 = vmatprep.subr.mxu0 0.0
    %3333 = vmatpush1.msra.mxu0 0.0
    %3334 = vmatprep.subr.mxu0 0.0
    %3335 = vmatpush1.msra.mxu0 0.0
    %3336 = vmatprep.subr.mxu0 0.0
    %3337 = vmatpush1.msra.mxu0 0.0
    %3338 = vmatprep.subr.mxu0 0.0
    %3339 = vmatpush1.msra.mxu0 0.0
    %3340 = vmatprep.subr.mxu0 0.0
    %3341 = vmatpush1.msra.mxu0 0.0
    %3342 = vmatprep.subr.mxu0 0.0
    %3343 = vmatpush1.msra.mxu0 0.0
    %v3344 = vsub.f32 %v342, %v342
    %3345 = vmatprep.subr.mxu0 %v3344
    %v3346 = vsub.f32 %v341, %v341
    %3347 = vmatpush1.msra.mxu0 %v3346
    %v3348 = vsub.f32 %v317, %v317
    %3349 = vmatprep.subr.mxu0 %v3348
    %v3350 = vsub.f32 %v316, %v316
    %3351 = vmatpush1.msra.mxu0 %v3350
    %v3352 = vsub.f32 %v292, %v292
    %3353 = vmatprep.subr.mxu0 %v3352
    %v3354 = vsub.f32 %v291, %v291
    %3355 = vmatpush1.msra.mxu0 %v3354
    %v3356 = vsub.f32 %v267, %v267
    %3357 = vmatprep.subr.mxu0 %v3356
    %v3358 = vsub.f32 %v266, %v266
    %3359 = vmatpush1.msra.mxu0 %v3358
    %v3360 = vsub.f32 %v242, %v242
    %3361 = vmatprep.subr.mxu0 %v3360
    %v3362 = vsub.f32 %v241, %v241
    %3363 = vmatpush1.msra.mxu0 %v3362
    %v3364 = vsub.f32 %v217, %v217
    %3365 = vmatprep.subr.mxu0 %v3364
    %v3366 = vsub.f32 %v216, %v216
    %3367 = vmatpush1.msra.mxu0 %v3366
    %v3368 = vsub.f32 %v192, %v192
    %3369 = vmatprep.subr.mxu0 %v3368
    %v3370 = vsub.f32 %v191, %v191
    %3371 = vmatpush1.msra.mxu0 %v3370
    %v3372 = vsub.f32 %v167, %v167
    %3373 = vmatprep.subr.mxu0 %v3372
    %v3374 = vsub.f32 %v166, %v166
    %3375 = vmatpush1.msra.mxu0 %v3374
    %3376 = vmatprep.subr.mxu0 0.0
    %3377 = vmatpush2.msra.mxu0 0.0
    %3378 = vmatprep.subr.mxu0 0.0
    %3379 = vmatpush2.msra.mxu0 0.0
    %3380 = vmatprep.subr.mxu0 0.0
    %3381 = vmatpush2.msra.mxu0 0.0
    %3382 = vmatprep.subr.mxu0 0.0
    %3383 = vmatpush2.msra.mxu0 0.0
    %3384 = vmatprep.subr.mxu0 0.0
    %3385 = vmatpush2.msra.mxu0 0.0
    %3386 = vmatprep.subr.mxu0 0.0
    %3387 = vmatpush2.msra.mxu0 0.0
    %3388 = vmatprep.subr.mxu0 0.0
    %3389 = vmatpush2.msra.mxu0 0.0
    %3390 = vmatprep.subr.mxu0 0.0
    %3391 = vmatpush2.msra.mxu0 0.0
    %3392 = vmatprep.subr.mxu0 0.0
    %3393 = vmatpush2.msra.mxu0 0.0
    %3394 = vmatprep.subr.mxu0 0.0
    %3395 = vmatpush2.msra.mxu0 0.0
    %3396 = vmatprep.subr.mxu0 0.0
    %3397 = vmatpush2.msra.mxu0 0.0
    %3398 = vmatprep.subr.mxu0 0.0
    %3399 = vmatpush2.msra.mxu0 0.0
    %3400 = vmatprep.subr.mxu0 0.0
    %3401 = vmatpush2.msra.mxu0 0.0
    %3402 = vmatprep.subr.mxu0 0.0
    %3403 = vmatpush2.msra.mxu0 0.0
    %3404 = vmatprep.subr.mxu0 0.0
    %3405 = vmatpush2.msra.mxu0 0.0
    %3406 = vmatprep.subr.mxu0 0.0
    %3407 = vmatpush2.msra.mxu0 0.0
    %3408 = vmatprep.mubr.f32.mxu0 0.0
    %v3409 = vand.u32 %v359, 4294901760
    %v3410 = vsub.f32 %v359, %v3409
    %3411 = vmatmul.mubr.f32.gmra.mxu0 %v3410
    %v3412 = vpop.f32.mrf.mxu0
    %v3413 = vadd.f32 %v3324, %v3412
    %v3414 = vpop.f32.mrf.mxu0
    %v3415 = vadd.f32 %v3326, %v3414
    %3416 = vdwg.mxu0
    %3417 = vmatprep.subr.mxu0 0.0
    %3418 = vmatpush1.msra.mxu0 0.0
    %3419 = vmatprep.subr.mxu0 0.0
    %3420 = vmatpush1.msra.mxu0 0.0
    %3421 = vmatprep.subr.mxu0 0.0
    %3422 = vmatpush1.msra.mxu0 0.0
    %3423 = vmatprep.subr.mxu0 0.0
    %3424 = vmatpush1.msra.mxu0 0.0
    %3425 = vmatprep.subr.mxu0 0.0
    %3426 = vmatpush1.msra.mxu0 0.0
    %3427 = vmatprep.subr.mxu0 0.0
    %3428 = vmatpush1.msra.mxu0 0.0
    %3429 = vmatprep.subr.mxu0 0.0
    %3430 = vmatpush1.msra.mxu0 0.0
    %3431 = vmatprep.subr.mxu0 0.0
    %3432 = vmatpush1.msra.mxu0 0.0
    %3433 = vmatprep.subr.mxu0 %v342
    %3434 = vmatpush1.msra.mxu0 %v341
    %3435 = vmatprep.subr.mxu0 %v317
    %3436 = vmatpush1.msra.mxu0 %v316
    %3437 = vmatprep.subr.mxu0 %v292
    %3438 = vmatpush1.msra.mxu0 %v291
    %3439 = vmatprep.subr.mxu0 %v267
    %3440 = vmatpush1.msra.mxu0 %v266
    %3441 = vmatprep.subr.mxu0 %v242
    %3442 = vmatpush1.msra.mxu0 %v241
    %3443 = vmatprep.subr.mxu0 %v217
    %3444 = vmatpush1.msra.mxu0 %v216
    %3445 = vmatprep.subr.mxu0 %v192
    %3446 = vmatpush1.msra.mxu0 %v191
    %3447 = vmatprep.subr.mxu0 %v167
    %3448 = vmatpush1.msra.mxu0 %v166
    %3449 = vmatprep.subr.mxu0 0.0
    %3450 = vmatpush2.msra.mxu0 0.0
    %3451 = vmatprep.subr.mxu0 0.0
    %3452 = vmatpush2.msra.mxu0 0.0
    %3453 = vmatprep.subr.mxu0 0.0
    %3454 = vmatpush2.msra.mxu0 0.0
    %3455 = vmatprep.subr.mxu0 0.0
    %3456 = vmatpush2.msra.mxu0 0.0
    %3457 = vmatprep.subr.mxu0 0.0
    %3458 = vmatpush2.msra.mxu0 0.0
    %3459 = vmatprep.subr.mxu0 0.0
    %3460 = vmatpush2.msra.mxu0 0.0
    %3461 = vmatprep.subr.mxu0 0.0
    %3462 = vmatpush2.msra.mxu0 0.0
    %3463 = vmatprep.subr.mxu0 0.0
    %3464 = vmatpush2.msra.mxu0 0.0
    %3465 = vmatprep.subr.mxu0 0.0
    %3466 = vmatpush2.msra.mxu0 0.0
    %3467 = vmatprep.subr.mxu0 0.0
    %3468 = vmatpush2.msra.mxu0 0.0
    %3469 = vmatprep.subr.mxu0 0.0
    %3470 = vmatpush2.msra.mxu0 0.0
    %3471 = vmatprep.subr.mxu0 0.0
    %3472 = vmatpush2.msra.mxu0 0.0
    %3473 = vmatprep.subr.mxu0 0.0
    %3474 = vmatpush2.msra.mxu0 0.0
    %3475 = vmatprep.subr.mxu0 0.0
    %3476 = vmatpush2.msra.mxu0 0.0
    %3477 = vmatprep.subr.mxu0 0.0
    %3478 = vmatpush2.msra.mxu0 0.0
    %3479 = vmatprep.subr.mxu0 0.0
    %3480 = vmatpush2.msra.mxu0 0.0
    %3481 = vmatprep.mubr.f32.mxu0 0.0
    %v3482 = vand.u32 %v359, 4294901760
    %v3483 = vsub.f32 %v359, %v3482
    %v3484 = vand.u32 %v3483, 4294901760
    %3485 = vmatmul.mubr.f32.gmra.mxu0 %v3484
    %v3486 = vpop.f32.mrf.mxu0
    %v3487 = vadd.f32 %v3413, %v3486
    %v3488 = vpop.f32.mrf.mxu0
    %v3489 = vadd.f32 %v3415, %v3488
    %3490 = vdwg.mxu0
    %3491 = vmatprep.subr.mxu0 0.0
    %3492 = vmatpush1.msra.mxu0 0.0
    %3493 = vmatprep.subr.mxu0 0.0
    %3494 = vmatpush1.msra.mxu0 0.0
    %3495 = vmatprep.subr.mxu0 0.0
    %3496 = vmatpush1.msra.mxu0 0.0
    %3497 = vmatprep.subr.mxu0 0.0
    %3498 = vmatpush1.msra.mxu0 0.0
    %3499 = vmatprep.subr.mxu0 0.0
    %3500 = vmatpush1.msra.mxu0 0.0
    %3501 = vmatprep.subr.mxu0 0.0
    %3502 = vmatpush1.msra.mxu0 0.0
    %3503 = vmatprep.subr.mxu0 0.0
    %3504 = vmatpush1.msra.mxu0 0.0
    %3505 = vmatprep.subr.mxu0 0.0
    %3506 = vmatpush1.msra.mxu0 0.0
    %v3507 = vsub.f32 %v342, %v342
    %v3508 = vand.u32 %v3507, 4294901760
    %3509 = vmatprep.subr.mxu0 %v3508
    %v3510 = vsub.f32 %v341, %v341
    %v3511 = vand.u32 %v3510, 4294901760
    %3512 = vmatpush1.msra.mxu0 %v3511
    %v3513 = vsub.f32 %v317, %v317
    %v3514 = vand.u32 %v3513, 4294901760
    %3515 = vmatprep.subr.mxu0 %v3514
    %v3516 = vsub.f32 %v316, %v316
    %v3517 = vand.u32 %v3516, 4294901760
    %3518 = vmatpush1.msra.mxu0 %v3517
    %v3519 = vsub.f32 %v292, %v292
    %v3520 = vand.u32 %v3519, 4294901760
    %3521 = vmatprep.subr.mxu0 %v3520
    %v3522 = vsub.f32 %v291, %v291
    %v3523 = vand.u32 %v3522, 4294901760
    %3524 = vmatpush1.msra.mxu0 %v3523
    %v3525 = vsub.f32 %v267, %v267
    %v3526 = vand.u32 %v3525, 4294901760
    %3527 = vmatprep.subr.mxu0 %v3526
    %v3528 = vsub.f32 %v266, %v266
    %v3529 = vand.u32 %v3528, 4294901760
    %3530 = vmatpush1.msra.mxu0 %v3529
    %v3531 = vsub.f32 %v242, %v242
    %v3532 = vand.u32 %v3531, 4294901760
    %3533 = vmatprep.subr.mxu0 %v3532
    %v3534 = vsub.f32 %v241, %v241
    %v3535 = vand.u32 %v3534, 4294901760
    %3536 = vmatpush1.msra.mxu0 %v3535
    %v3537 = vsub.f32 %v217, %v217
    %v3538 = vand.u32 %v3537, 4294901760
    %3539 = vmatprep.subr.mxu0 %v3538
    %v3540 = vsub.f32 %v216, %v216
    %v3541 = vand.u32 %v3540, 4294901760
    %3542 = vmatpush1.msra.mxu0 %v3541
    %v3543 = vsub.f32 %v192, %v192
    %v3544 = vand.u32 %v3543, 4294901760
    %3545 = vmatprep.subr.mxu0 %v3544
    %v3546 = vsub.f32 %v191, %v191
    %v3547 = vand.u32 %v3546, 4294901760
    %3548 = vmatpush1.msra.mxu0 %v3547
    %v3549 = vsub.f32 %v167, %v167
    %v3550 = vand.u32 %v3549, 4294901760
    %3551 = vmatprep.subr.mxu0 %v3550
    %v3552 = vsub.f32 %v166, %v166
    %v3553 = vand.u32 %v3552, 4294901760
    %3554 = vmatpush1.msra.mxu0 %v3553
    %3555 = vmatprep.subr.mxu0 0.0
    %3556 = vmatpush2.msra.mxu0 0.0
    %3557 = vmatprep.subr.mxu0 0.0
    %3558 = vmatpush2.msra.mxu0 0.0
    %3559 = vmatprep.subr.mxu0 0.0
    %3560 = vmatpush2.msra.mxu0 0.0
    %3561 = vmatprep.subr.mxu0 0.0
    %3562 = vmatpush2.msra.mxu0 0.0
    %3563 = vmatprep.subr.mxu0 0.0
    %3564 = vmatpush2.msra.mxu0 0.0
    %3565 = vmatprep.subr.mxu0 0.0
    %3566 = vmatpush2.msra.mxu0 0.0
    %3567 = vmatprep.subr.mxu0 0.0
    %3568 = vmatpush2.msra.mxu0 0.0
    %3569 = vmatprep.subr.mxu0 0.0
    %3570 = vmatpush2.msra.mxu0 0.0
    %3571 = vmatprep.subr.mxu0 0.0
    %3572 = vmatpush2.msra.mxu0 0.0
    %3573 = vmatprep.subr.mxu0 0.0
    %3574 = vmatpush2.msra.mxu0 0.0
    %3575 = vmatprep.subr.mxu0 0.0
    %3576 = vmatpush2.msra.mxu0 0.0
    %3577 = vmatprep.subr.mxu0 0.0
    %3578 = vmatpush2.msra.mxu0 0.0
    %3579 = vmatprep.subr.mxu0 0.0
    %3580 = vmatpush2.msra.mxu0 0.0
    %3581 = vmatprep.subr.mxu0 0.0
    %3582 = vmatpush2.msra.mxu0 0.0
    %3583 = vmatprep.subr.mxu0 0.0
    %3584 = vmatpush2.msra.mxu0 0.0
    %3585 = vmatprep.subr.mxu0 0.0
    %3586 = vmatpush2.msra.mxu0 0.0
    %3587 = vmatprep.mubr.f32.mxu0 0.0
    %v3588 = vand.u32 %v359, 4294901760
    %3589 = vmatmul.mubr.f32.gmra.mxu0 %v3588
    %v3590 = vpop.f32.mrf.mxu0
    %v3591 = vadd.f32 %v3487, %v3590
    %v3592 = vpop.f32.mrf.mxu0
    %v3593 = vadd.f32 %v3489, %v3592
    %3594 = vdwg.mxu0
    %3595 = vmatprep.subr.mxu0 0.0
    %3596 = vmatpush1.msra.mxu0 0.0
    %3597 = vmatprep.subr.mxu0 0.0
    %3598 = vmatpush1.msra.mxu0 0.0
    %3599 = vmatprep.subr.mxu0 0.0
    %3600 = vmatpush1.msra.mxu0 0.0
    %3601 = vmatprep.subr.mxu0 0.0
    %3602 = vmatpush1.msra.mxu0 0.0
    %3603 = vmatprep.subr.mxu0 0.0
    %3604 = vmatpush1.msra.mxu0 0.0
    %3605 = vmatprep.subr.mxu0 0.0
    %3606 = vmatpush1.msra.mxu0 0.0
    %3607 = vmatprep.subr.mxu0 0.0
    %3608 = vmatpush1.msra.mxu0 0.0
    %3609 = vmatprep.subr.mxu0 0.0
    %3610 = vmatpush1.msra.mxu0 0.0
    %3611 = vmatprep.subr.mxu0 %v342
    %3612 = vmatpush1.msra.mxu0 %v341
    %3613 = vmatprep.subr.mxu0 %v317
    %3614 = vmatpush1.msra.mxu0 %v316
    %3615 = vmatprep.subr.mxu0 %v292
    %3616 = vmatpush1.msra.mxu0 %v291
    %3617 = vmatprep.subr.mxu0 %v267
    %3618 = vmatpush1.msra.mxu0 %v266
    %3619 = vmatprep.subr.mxu0 %v242
    %3620 = vmatpush1.msra.mxu0 %v241
    %3621 = vmatprep.subr.mxu0 %v217
    %3622 = vmatpush1.msra.mxu0 %v216
    %3623 = vmatprep.subr.mxu0 %v192
    %3624 = vmatpush1.msra.mxu0 %v191
    %3625 = vmatprep.subr.mxu0 %v167
    %3626 = vmatpush1.msra.mxu0 %v166
    %3627 = vmatprep.subr.mxu0 0.0
    %3628 = vmatpush2.msra.mxu0 0.0
    %3629 = vmatprep.subr.mxu0 0.0
    %3630 = vmatpush2.msra.mxu0 0.0
    %3631 = vmatprep.subr.mxu0 0.0
    %3632 = vmatpush2.msra.mxu0 0.0
    %3633 = vmatprep.subr.mxu0 0.0
    %3634 = vmatpush2.msra.mxu0 0.0
    %3635 = vmatprep.subr.mxu0 0.0
    %3636 = vmatpush2.msra.mxu0 0.0
    %3637 = vmatprep.subr.mxu0 0.0
    %3638 = vmatpush2.msra.mxu0 0.0
    %3639 = vmatprep.subr.mxu0 0.0
    %3640 = vmatpush2.msra.mxu0 0.0
    %3641 = vmatprep.subr.mxu0 0.0
    %3642 = vmatpush2.msra.mxu0 0.0
    %3643 = vmatprep.subr.mxu0 0.0
    %3644 = vmatpush2.msra.mxu0 0.0
    %3645 = vmatprep.subr.mxu0 0.0
    %3646 = vmatpush2.msra.mxu0 0.0
    %3647 = vmatprep.subr.mxu0 0.0
    %3648 = vmatpush2.msra.mxu0 0.0
    %3649 = vmatprep.subr.mxu0 0.0
    %3650 = vmatpush2.msra.mxu0 0.0
    %3651 = vmatprep.subr.mxu0 0.0
    %3652 = vmatpush2.msra.mxu0 0.0
    %3653 = vmatprep.subr.mxu0 0.0
    %3654 = vmatpush2.msra.mxu0 0.0
    %3655 = vmatprep.subr.mxu0 0.0
    %3656 = vmatpush2.msra.mxu0 0.0
    %3657 = vmatprep.subr.mxu0 0.0
    %3658 = vmatpush2.msra.mxu0 0.0
    %3659 = vmatprep.mubr.f32.mxu0 0.0
    %v3660 = vand.u32 %v359, 4294901760
    %3661 = vmatmul.mubr.f32.gmra.mxu0 %v3660
    %v3662 = vpop.f32.mrf.mxu0
    %v3663 = vadd.f32 %v3591, %v3662
    %v3664 = vpop.f32.mrf.mxu0
    %v3665 = vadd.f32 %v3593, %v3664
    %3666 = vdwg.mxu0
    %3667 = vmatprep.subr.mxu0 0.0
    %3668 = vmatpush1.msra.mxu0 0.0
    %3669 = vmatprep.subr.mxu0 0.0
    %3670 = vmatpush1.msra.mxu0 0.0
    %3671 = vmatprep.subr.mxu0 0.0
    %3672 = vmatpush1.msra.mxu0 0.0
    %3673 = vmatprep.subr.mxu0 0.0
    %3674 = vmatpush1.msra.mxu0 0.0
    %3675 = vmatprep.subr.mxu0 0.0
    %3676 = vmatpush1.msra.mxu0 0.0
    %3677 = vmatprep.subr.mxu0 0.0
    %3678 = vmatpush1.msra.mxu0 0.0
    %3679 = vmatprep.subr.mxu0 0.0
    %3680 = vmatpush1.msra.mxu0 0.0
    %3681 = vmatprep.subr.mxu0 0.0
    %3682 = vmatpush1.msra.mxu0 0.0
    %3683 = vmatprep.subr.mxu0 %v344
    %3684 = vmatpush1.msra.mxu0 %v343
    %3685 = vmatprep.subr.mxu0 %v319
    %3686 = vmatpush1.msra.mxu0 %v318
    %3687 = vmatprep.subr.mxu0 %v294
    %3688 = vmatpush1.msra.mxu0 %v293
    %3689 = vmatprep.subr.mxu0 %v269
    %3690 = vmatpush1.msra.mxu0 %v268
    %3691 = vmatprep.subr.mxu0 %v244
    %3692 = vmatpush1.msra.mxu0 %v243
    %3693 = vmatprep.subr.mxu0 %v219
    %3694 = vmatpush1.msra.mxu0 %v218
    %3695 = vmatprep.subr.mxu0 %v194
    %3696 = vmatpush1.msra.mxu0 %v193
    %3697 = vmatprep.subr.mxu0 %v169
    %3698 = vmatpush1.msra.mxu0 %v168
    %3699 = vmatprep.subr.mxu0 0.0
    %3700 = vmatpush2.msra.mxu0 0.0
    %3701 = vmatprep.subr.mxu0 0.0
    %3702 = vmatpush2.msra.mxu0 0.0
    %3703 = vmatprep.subr.mxu0 0.0
    %3704 = vmatpush2.msra.mxu0 0.0
    %3705 = vmatprep.subr.mxu0 0.0
    %3706 = vmatpush2.msra.mxu0 0.0
    %3707 = vmatprep.subr.mxu0 0.0
    %3708 = vmatpush2.msra.mxu0 0.0
    %3709 = vmatprep.subr.mxu0 0.0
    %3710 = vmatpush2.msra.mxu0 0.0
    %3711 = vmatprep.subr.mxu0 0.0
    %3712 = vmatpush2.msra.mxu0 0.0
    %3713 = vmatprep.subr.mxu0 0.0
    %3714 = vmatpush2.msra.mxu0 0.0
    %3715 = vmatprep.subr.mxu0 0.0
    %3716 = vmatpush2.msra.mxu0 0.0
    %3717 = vmatprep.subr.mxu0 0.0
    %3718 = vmatpush2.msra.mxu0 0.0
    %3719 = vmatprep.subr.mxu0 0.0
    %3720 = vmatpush2.msra.mxu0 0.0
    %3721 = vmatprep.subr.mxu0 0.0
    %3722 = vmatpush2.msra.mxu0 0.0
    %3723 = vmatprep.subr.mxu0 0.0
    %3724 = vmatpush2.msra.mxu0 0.0
    %3725 = vmatprep.subr.mxu0 0.0
    %3726 = vmatpush2.msra.mxu0 0.0
    %3727 = vmatprep.subr.mxu0 0.0
    %3728 = vmatpush2.msra.mxu0 0.0
    %3729 = vmatprep.subr.mxu0 0.0
    %3730 = vmatpush2.msra.mxu0 0.0
    %3731 = vmatprep.mubr.f32.mxu0 0.0
    %v3732 = vand.u32 %v359, 4294901760
    %v3733 = vsub.f32 %v359, %v3732
    %v3734 = vand.u32 %v3733, 4294901760
    %v3735 = vsub.f32 %v3733, %v3734
    %v3736 = vand.u32 %v3735, 4294901760
    %3737 = vmatmul.mubr.f32.gmra.mxu0 %v3736
    %v3738 = vpop.f32.mrf.mxu0
    %v3739 = vadd.f32 0.0, %v3738
    %v3740 = vpop.f32.mrf.mxu0
    %v3741 = vadd.f32 0.0, %v3740
    %3742 = vdwg.mxu0
    %3743 = vmatprep.subr.mxu0 0.0
    %3744 = vmatpush1.msra.mxu0 0.0
    %3745 = vmatprep.subr.mxu0 0.0
    %3746 = vmatpush1.msra.mxu0 0.0
    %3747 = vmatprep.subr.mxu0 0.0
    %3748 = vmatpush1.msra.mxu0 0.0
    %3749 = vmatprep.subr.mxu0 0.0
    %3750 = vmatpush1.msra.mxu0 0.0
    %3751 = vmatprep.subr.mxu0 0.0
    %3752 = vmatpush1.msra.mxu0 0.0
    %3753 = vmatprep.subr.mxu0 0.0
    %3754 = vmatpush1.msra.mxu0 0.0
    %3755 = vmatprep.subr.mxu0 0.0
    %3756 = vmatpush1.msra.mxu0 0.0
    %3757 = vmatprep.subr.mxu0 0.0
    %3758 = vmatpush1.msra.mxu0 0.0
    %v3759 = vsub.f32 %v344, %v344
    %v3760 = vand.u32 %v3759, 4294901760
    %v3761 = vsub.f32 %v3759, %v3760
    %v3762 = vand.u32 %v3761, 4294901760
    %3763 = vmatprep.subr.mxu0 %v3762
    %v3764 = vsub.f32 %v343, %v343
    %v3765 = vand.u32 %v3764, 4294901760
    %v3766 = vsub.f32 %v3764, %v3765
    %v3767 = vand.u32 %v3766, 4294901760
    %3768 = vmatpush1.msra.mxu0 %v3767
    %v3769 = vsub.f32 %v319, %v319
    %v3770 = vand.u32 %v3769, 4294901760
    %v3771 = vsub.f32 %v3769, %v3770
    %v3772 = vand.u32 %v3771, 4294901760
    %3773 = vmatprep.subr.mxu0 %v3772
    %v3774 = vsub.f32 %v318, %v318
    %v3775 = vand.u32 %v3774, 4294901760
    %v3776 = vsub.f32 %v3774, %v3775
    %v3777 = vand.u32 %v3776, 4294901760
    %3778 = vmatpush1.msra.mxu0 %v3777
    %v3779 = vsub.f32 %v294, %v294
    %v3780 = vand.u32 %v3779, 4294901760
    %v3781 = vsub.f32 %v3779, %v3780
    %v3782 = vand.u32 %v3781, 4294901760
    %3783 = vmatprep.subr.mxu0 %v3782
    %v3784 = vsub.f32 %v293, %v293
    %v3785 = vand.u32 %v3784, 4294901760
    %v3786 = vsub.f32 %v3784, %v3785
    %v3787 = vand.u32 %v3786, 4294901760
    %3788 = vmatpush1.msra.mxu0 %v3787
    %v3789 = vsub.f32 %v269, %v269
    %v3790 = vand.u32 %v3789, 4294901760
    %v3791 = vsub.f32 %v3789, %v3790
    %v3792 = vand.u32 %v3791, 4294901760
    %3793 = vmatprep.subr.mxu0 %v3792
    %v3794 = vsub.f32 %v268, %v268
    %v3795 = vand.u32 %v3794, 4294901760
    %v3796 = vsub.f32 %v3794, %v3795
    %v3797 = vand.u32 %v3796, 4294901760
    %3798 = vmatpush1.msra.mxu0 %v3797
    %v3799 = vsub.f32 %v244, %v244
    %v3800 = vand.u32 %v3799, 4294901760
    %v3801 = vsub.f32 %v3799, %v3800
    %v3802 = vand.u32 %v3801, 4294901760
    %3803 = vmatprep.subr.mxu0 %v3802
    %v3804 = vsub.f32 %v243, %v243
    %v3805 = vand.u32 %v3804, 4294901760
    %v3806 = vsub.f32 %v3804, %v3805
    %v3807 = vand.u32 %v3806, 4294901760
    %3808 = vmatpush1.msra.mxu0 %v3807
    %v3809 = vsub.f32 %v219, %v219
    %v3810 = vand.u32 %v3809, 4294901760
    %v3811 = vsub.f32 %v3809, %v3810
    %v3812 = vand.u32 %v3811, 4294901760
    %3813 = vmatprep.subr.mxu0 %v3812
    %v3814 = vsub.f32 %v218, %v218
    %v3815 = vand.u32 %v3814, 4294901760
    %v3816 = vsub.f32 %v3814, %v3815
    %v3817 = vand.u32 %v3816, 4294901760
    %3818 = vmatpush1.msra.mxu0 %v3817
    %v3819 = vsub.f32 %v194, %v194
    %v3820 = vand.u32 %v3819, 4294901760
    %v3821 = vsub.f32 %v3819, %v3820
    %v3822 = vand.u32 %v3821, 4294901760
    %3823 = vmatprep.subr.mxu0 %v3822
    %v3824 = vsub.f32 %v193, %v193
    %v3825 = vand.u32 %v3824, 4294901760
    %v3826 = vsub.f32 %v3824, %v3825
    %v3827 = vand.u32 %v3826, 4294901760
    %3828 = vmatpush1.msra.mxu0 %v3827
    %v3829 = vsub.f32 %v169, %v169
    %v3830 = vand.u32 %v3829, 4294901760
    %v3831 = vsub.f32 %v3829, %v3830
    %v3832 = vand.u32 %v3831, 4294901760
    %3833 = vmatprep.subr.mxu0 %v3832
    %v3834 = vsub.f32 %v168, %v168
    %v3835 = vand.u32 %v3834, 4294901760
    %v3836 = vsub.f32 %v3834, %v3835
    %v3837 = vand.u32 %v3836, 4294901760
    %3838 = vmatpush1.msra.mxu0 %v3837
    %3839 = vmatprep.subr.mxu0 0.0
    %3840 = vmatpush2.msra.mxu0 0.0
    %3841 = vmatprep.subr.mxu0 0.0
    %3842 = vmatpush2.msra.mxu0 0.0
    %3843 = vmatprep.subr.mxu0 0.0
    %3844 = vmatpush2.msra.mxu0 0.0
    %3845 = vmatprep.subr.mxu0 0.0
    %3846 = vmatpush2.msra.mxu0 0.0
    %3847 = vmatprep.subr.mxu0 0.0
    %3848 = vmatpush2.msra.mxu0 0.0
    %3849 = vmatprep.subr.mxu0 0.0
    %3850 = vmatpush2.msra.mxu0 0.0
    %3851 = vmatprep.subr.mxu0 0.0
    %3852 = vmatpush2.msra.mxu0 0.0
    %3853 = vmatprep.subr.mxu0 0.0
    %3854 = vmatpush2.msra.mxu0 0.0
    %3855 = vmatprep.subr.mxu0 0.0
    %3856 = vmatpush2.msra.mxu0 0.0
    %3857 = vmatprep.subr.mxu0 0.0
    %3858 = vmatpush2.msra.mxu0 0.0
    %3859 = vmatprep.subr.mxu0 0.0
    %3860 = vmatpush2.msra.mxu0 0.0
    %3861 = vmatprep.subr.mxu0 0.0
    %3862 = vmatpush2.msra.mxu0 0.0
    %3863 = vmatprep.subr.mxu0 0.0
    %3864 = vmatpush2.msra.mxu0 0.0
    %3865 = vmatprep.subr.mxu0 0.0
    %3866 = vmatpush2.msra.mxu0 0.0
    %3867 = vmatprep.subr.mxu0 0.0
    %3868 = vmatpush2.msra.mxu0 0.0
    %3869 = vmatprep.subr.mxu0 0.0
    %3870 = vmatpush2.msra.mxu0 0.0
    %3871 = vmatprep.mubr.f32.mxu0 0.0
    %v3872 = vand.u32 %v359, 4294901760
    %3873 = vmatmul.mubr.f32.gmra.mxu0 %v3872
    %v3874 = vpop.f32.mrf.mxu0
    %v3875 = vadd.f32 %v3739, %v3874
    %v3876 = vpop.f32.mrf.mxu0
    %v3877 = vadd.f32 %v3741, %v3876
    %3878 = vdwg.mxu0
    %3879 = vmatprep.subr.mxu0 0.0
    %3880 = vmatpush1.msra.mxu0 0.0
    %3881 = vmatprep.subr.mxu0 0.0
    %3882 = vmatpush1.msra.mxu0 0.0
    %3883 = vmatprep.subr.mxu0 0.0
    %3884 = vmatpush1.msra.mxu0 0.0
    %3885 = vmatprep.subr.mxu0 0.0
    %3886 = vmatpush1.msra.mxu0 0.0
    %3887 = vmatprep.subr.mxu0 0.0
    %3888 = vmatpush1.msra.mxu0 0.0
    %3889 = vmatprep.subr.mxu0 0.0
    %3890 = vmatpush1.msra.mxu0 0.0
    %3891 = vmatprep.subr.mxu0 0.0
    %3892 = vmatpush1.msra.mxu0 0.0
    %3893 = vmatprep.subr.mxu0 0.0
    %3894 = vmatpush1.msra.mxu0 0.0
    %v3895 = vsub.f32 %v344, %v344
    %3896 = vmatprep.subr.mxu0 %v3895
    %v3897 = vsub.f32 %v343, %v343
    %3898 = vmatpush1.msra.mxu0 %v3897
    %v3899 = vsub.f32 %v319, %v319
    %3900 = vmatprep.subr.mxu0 %v3899
    %v3901 = vsub.f32 %v318, %v318
    %3902 = vmatpush1.msra.mxu0 %v3901
    %v3903 = vsub.f32 %v294, %v294
    %3904 = vmatprep.subr.mxu0 %v3903
    %v3905 = vsub.f32 %v293, %v293
    %3906 = vmatpush1.msra.mxu0 %v3905
    %v3907 = vsub.f32 %v269, %v269
    %3908 = vmatprep.subr.mxu0 %v3907
    %v3909 = vsub.f32 %v268, %v268
    %3910 = vmatpush1.msra.mxu0 %v3909
    %v3911 = vsub.f32 %v244, %v244
    %3912 = vmatprep.subr.mxu0 %v3911
    %v3913 = vsub.f32 %v243, %v243
    %3914 = vmatpush1.msra.mxu0 %v3913
    %v3915 = vsub.f32 %v219, %v219
    %3916 = vmatprep.subr.mxu0 %v3915
    %v3917 = vsub.f32 %v218, %v218
    %3918 = vmatpush1.msra.mxu0 %v3917
    %v3919 = vsub.f32 %v194, %v194
    %3920 = vmatprep.subr.mxu0 %v3919
    %v3921 = vsub.f32 %v193, %v193
    %3922 = vmatpush1.msra.mxu0 %v3921
    %v3923 = vsub.f32 %v169, %v169
    %3924 = vmatprep.subr.mxu0 %v3923
    %v3925 = vsub.f32 %v168, %v168
    %3926 = vmatpush1.msra.mxu0 %v3925
    %3927 = vmatprep.subr.mxu0 0.0
    %3928 = vmatpush2.msra.mxu0 0.0
    %3929 = vmatprep.subr.mxu0 0.0
    %3930 = vmatpush2.msra.mxu0 0.0
    %3931 = vmatprep.subr.mxu0 0.0
    %3932 = vmatpush2.msra.mxu0 0.0
    %3933 = vmatprep.subr.mxu0 0.0
    %3934 = vmatpush2.msra.mxu0 0.0
    %3935 = vmatprep.subr.mxu0 0.0
    %3936 = vmatpush2.msra.mxu0 0.0
    %3937 = vmatprep.subr.mxu0 0.0
    %3938 = vmatpush2.msra.mxu0 0.0
    %3939 = vmatprep.subr.mxu0 0.0
    %3940 = vmatpush2.msra.mxu0 0.0
    %3941 = vmatprep.subr.mxu0 0.0
    %3942 = vmatpush2.msra.mxu0 0.0
    %3943 = vmatprep.subr.mxu0 0.0
    %3944 = vmatpush2.msra.mxu0 0.0
    %3945 = vmatprep.subr.mxu0 0.0
    %3946 = vmatpush2.msra.mxu0 0.0
    %3947 = vmatprep.subr.mxu0 0.0
    %3948 = vmatpush2.msra.mxu0 0.0
    %3949 = vmatprep.subr.mxu0 0.0
    %3950 = vmatpush2.msra.mxu0 0.0
    %3951 = vmatprep.subr.mxu0 0.0
    %3952 = vmatpush2.msra.mxu0 0.0
    %3953 = vmatprep.subr.mxu0 0.0
    %3954 = vmatpush2.msra.mxu0 0.0
    %3955 = vmatprep.subr.mxu0 0.0
    %3956 = vmatpush2.msra.mxu0 0.0
    %3957 = vmatprep.subr.mxu0 0.0
    %3958 = vmatpush2.msra.mxu0 0.0
    %3959 = vmatprep.mubr.f32.mxu0 0.0
    %v3960 = vand.u32 %v359, 4294901760
    %v3961 = vsub.f32 %v359, %v3960
    %3962 = vmatmul.mubr.f32.gmra.mxu0 %v3961
    %v3963 = vpop.f32.mrf.mxu0
    %v3964 = vadd.f32 %v3875, %v3963
    %v3965 = vpop.f32.mrf.mxu0
    %v3966 = vadd.f32 %v3877, %v3965
    %3967 = vdwg.mxu0
    %3968 = vmatprep.subr.mxu0 0.0
    %3969 = vmatpush1.msra.mxu0 0.0
    %3970 = vmatprep.subr.mxu0 0.0
    %3971 = vmatpush1.msra.mxu0 0.0
    %3972 = vmatprep.subr.mxu0 0.0
    %3973 = vmatpush1.msra.mxu0 0.0
    %3974 = vmatprep.subr.mxu0 0.0
    %3975 = vmatpush1.msra.mxu0 0.0
    %3976 = vmatprep.subr.mxu0 0.0
    %3977 = vmatpush1.msra.mxu0 0.0
    %3978 = vmatprep.subr.mxu0 0.0
    %3979 = vmatpush1.msra.mxu0 0.0
    %3980 = vmatprep.subr.mxu0 0.0
    %3981 = vmatpush1.msra.mxu0 0.0
    %3982 = vmatprep.subr.mxu0 0.0
    %3983 = vmatpush1.msra.mxu0 0.0
    %3984 = vmatprep.subr.mxu0 %v344
    %3985 = vmatpush1.msra.mxu0 %v343
    %3986 = vmatprep.subr.mxu0 %v319
    %3987 = vmatpush1.msra.mxu0 %v318
    %3988 = vmatprep.subr.mxu0 %v294
    %3989 = vmatpush1.msra.mxu0 %v293
    %3990 = vmatprep.subr.mxu0 %v269
    %3991 = vmatpush1.msra.mxu0 %v268
    %3992 = vmatprep.subr.mxu0 %v244
    %3993 = vmatpush1.msra.mxu0 %v243
    %3994 = vmatprep.subr.mxu0 %v219
    %3995 = vmatpush1.msra.mxu0 %v218
    %3996 = vmatprep.subr.mxu0 %v194
    %3997 = vmatpush1.msra.mxu0 %v193
    %3998 = vmatprep.subr.mxu0 %v169
    %3999 = vmatpush1.msra.mxu0 %v168
    %4000 = vmatprep.subr.mxu0 0.0
    %4001 = vmatpush2.msra.mxu0 0.0
    %4002 = vmatprep.subr.mxu0 0.0
    %4003 = vmatpush2.msra.mxu0 0.0
    %4004 = vmatprep.subr.mxu0 0.0
    %4005 = vmatpush2.msra.mxu0 0.0
    %4006 = vmatprep.subr.mxu0 0.0
    %4007 = vmatpush2.msra.mxu0 0.0
    %4008 = vmatprep.subr.mxu0 0.0
    %4009 = vmatpush2.msra.mxu0 0.0
    %4010 = vmatprep.subr.mxu0 0.0
    %4011 = vmatpush2.msra.mxu0 0.0
    %4012 = vmatprep.subr.mxu0 0.0
    %4013 = vmatpush2.msra.mxu0 0.0
    %4014 = vmatprep.subr.mxu0 0.0
    %4015 = vmatpush2.msra.mxu0 0.0
    %4016 = vmatprep.subr.mxu0 0.0
    %4017 = vmatpush2.msra.mxu0 0.0
    %4018 = vmatprep.subr.mxu0 0.0
    %4019 = vmatpush2.msra.mxu0 0.0
    %4020 = vmatprep.subr.mxu0 0.0
    %4021 = vmatpush2.msra.mxu0 0.0
    %4022 = vmatprep.subr.mxu0 0.0
    %4023 = vmatpush2.msra.mxu0 0.0
    %4024 = vmatprep.subr.mxu0 0.0
    %4025 = vmatpush2.msra.mxu0 0.0
    %4026 = vmatprep.subr.mxu0 0.0
    %4027 = vmatpush2.msra.mxu0 0.0
    %4028 = vmatprep.subr.mxu0 0.0
    %4029 = vmatpush2.msra.mxu0 0.0
    %4030 = vmatprep.subr.mxu0 0.0
    %4031 = vmatpush2.msra.mxu0 0.0
    %4032 = vmatprep.mubr.f32.mxu0 0.0
    %v4033 = vand.u32 %v359, 4294901760
    %v4034 = vsub.f32 %v359, %v4033
    %v4035 = vand.u32 %v4034, 4294901760
    %4036 = vmatmul.mubr.f32.gmra.mxu0 %v4035
    %v4037 = vpop.f32.mrf.mxu0
    %v4038 = vadd.f32 %v3964, %v4037
    %v4039 = vpop.f32.mrf.mxu0
    %v4040 = vadd.f32 %v3966, %v4039
    %4041 = vdwg.mxu0
    %4042 = vmatprep.subr.mxu0 0.0
    %4043 = vmatpush1.msra.mxu0 0.0
    %4044 = vmatprep.subr.mxu0 0.0
    %4045 = vmatpush1.msra.mxu0 0.0
    %4046 = vmatprep.subr.mxu0 0.0
    %4047 = vmatpush1.msra.mxu0 0.0
    %4048 = vmatprep.subr.mxu0 0.0
    %4049 = vmatpush1.msra.mxu0 0.0
    %4050 = vmatprep.subr.mxu0 0.0
    %4051 = vmatpush1.msra.mxu0 0.0
    %4052 = vmatprep.subr.mxu0 0.0
    %4053 = vmatpush1.msra.mxu0 0.0
    %4054 = vmatprep.subr.mxu0 0.0
    %4055 = vmatpush1.msra.mxu0 0.0
    %4056 = vmatprep.subr.mxu0 0.0
    %4057 = vmatpush1.msra.mxu0 0.0
    %v4058 = vsub.f32 %v344, %v344
    %v4059 = vand.u32 %v4058, 4294901760
    %4060 = vmatprep.subr.mxu0 %v4059
    %v4061 = vsub.f32 %v343, %v343
    %v4062 = vand.u32 %v4061, 4294901760
    %4063 = vmatpush1.msra.mxu0 %v4062
    %v4064 = vsub.f32 %v319, %v319
    %v4065 = vand.u32 %v4064, 4294901760
    %4066 = vmatprep.subr.mxu0 %v4065
    %v4067 = vsub.f32 %v318, %v318
    %v4068 = vand.u32 %v4067, 4294901760
    %4069 = vmatpush1.msra.mxu0 %v4068
    %v4070 = vsub.f32 %v294, %v294
    %v4071 = vand.u32 %v4070, 4294901760
    %4072 = vmatprep.subr.mxu0 %v4071
    %v4073 = vsub.f32 %v293, %v293
    %v4074 = vand.u32 %v4073, 4294901760
    %4075 = vmatpush1.msra.mxu0 %v4074
    %v4076 = vsub.f32 %v269, %v269
    %v4077 = vand.u32 %v4076, 4294901760
    %4078 = vmatprep.subr.mxu0 %v4077
    %v4079 = vsub.f32 %v268, %v268
    %v4080 = vand.u32 %v4079, 4294901760
    %4081 = vmatpush1.msra.mxu0 %v4080
    %v4082 = vsub.f32 %v244, %v244
    %v4083 = vand.u32 %v4082, 4294901760
    %4084 = vmatprep.subr.mxu0 %v4083
    %v4085 = vsub.f32 %v243, %v243
    %v4086 = vand.u32 %v4085, 4294901760
    %4087 = vmatpush1.msra.mxu0 %v4086
    %v4088 = vsub.f32 %v219, %v219
    %v4089 = vand.u32 %v4088, 4294901760
    %4090 = vmatprep.subr.mxu0 %v4089
    %v4091 = vsub.f32 %v218, %v218
    %v4092 = vand.u32 %v4091, 4294901760
    %4093 = vmatpush1.msra.mxu0 %v4092
    %v4094 = vsub.f32 %v194, %v194
    %v4095 = vand.u32 %v4094, 4294901760
    %4096 = vmatprep.subr.mxu0 %v4095
    %v4097 = vsub.f32 %v193, %v193
    %v4098 = vand.u32 %v4097, 4294901760
    %4099 = vmatpush1.msra.mxu0 %v4098
    %v4100 = vsub.f32 %v169, %v169
    %v4101 = vand.u32 %v4100, 4294901760
    %4102 = vmatprep.subr.mxu0 %v4101
    %v4103 = vsub.f32 %v168, %v168
    %v4104 = vand.u32 %v4103, 4294901760
    %4105 = vmatpush1.msra.mxu0 %v4104
    %4106 = vmatprep.subr.mxu0 0.0
    %4107 = vmatpush2.msra.mxu0 0.0
    %4108 = vmatprep.subr.mxu0 0.0
    %4109 = vmatpush2.msra.mxu0 0.0
    %4110 = vmatprep.subr.mxu0 0.0
    %4111 = vmatpush2.msra.mxu0 0.0
    %4112 = vmatprep.subr.mxu0 0.0
    %4113 = vmatpush2.msra.mxu0 0.0
    %4114 = vmatprep.subr.mxu0 0.0
    %4115 = vmatpush2.msra.mxu0 0.0
    %4116 = vmatprep.subr.mxu0 0.0
    %4117 = vmatpush2.msra.mxu0 0.0
    %4118 = vmatprep.subr.mxu0 0.0
    %4119 = vmatpush2.msra.mxu0 0.0
    %4120 = vmatprep.subr.mxu0 0.0
    %4121 = vmatpush2.msra.mxu0 0.0
    %4122 = vmatprep.subr.mxu0 0.0
    %4123 = vmatpush2.msra.mxu0 0.0
    %4124 = vmatprep.subr.mxu0 0.0
    %4125 = vmatpush2.msra.mxu0 0.0
    %4126 = vmatprep.subr.mxu0 0.0
    %4127 = vmatpush2.msra.mxu0 0.0
    %4128 = vmatprep.subr.mxu0 0.0
    %4129 = vmatpush2.msra.mxu0 0.0
    %4130 = vmatprep.subr.mxu0 0.0
    %4131 = vmatpush2.msra.mxu0 0.0
    %4132 = vmatprep.subr.mxu0 0.0
    %4133 = vmatpush2.msra.mxu0 0.0
    %4134 = vmatprep.subr.mxu0 0.0
    %4135 = vmatpush2.msra.mxu0 0.0
    %4136 = vmatprep.subr.mxu0 0.0
    %4137 = vmatpush2.msra.mxu0 0.0
    %4138 = vmatprep.mubr.f32.mxu0 0.0
    %v4139 = vand.u32 %v359, 4294901760
    %4140 = vmatmul.mubr.f32.gmra.mxu0 %v4139
    %v4141 = vpop.f32.mrf.mxu0
    %v4142 = vadd.f32 %v4038, %v4141
    %v4143 = vpop.f32.mrf.mxu0
    %v4144 = vadd.f32 %v4040, %v4143
    %4145 = vdwg.mxu0
    %4146 = vmatprep.subr.mxu0 0.0
    %4147 = vmatpush1.msra.mxu0 0.0
    %4148 = vmatprep.subr.mxu0 0.0
    %4149 = vmatpush1.msra.mxu0 0.0
    %4150 = vmatprep.subr.mxu0 0.0
    %4151 = vmatpush1.msra.mxu0 0.0
    %4152 = vmatprep.subr.mxu0 0.0
    %4153 = vmatpush1.msra.mxu0 0.0
    %4154 = vmatprep.subr.mxu0 0.0
    %4155 = vmatpush1.msra.mxu0 0.0
    %4156 = vmatprep.subr.mxu0 0.0
    %4157 = vmatpush1.msra.mxu0 0.0
    %4158 = vmatprep.subr.mxu0 0.0
    %4159 = vmatpush1.msra.mxu0 0.0
    %4160 = vmatprep.subr.mxu0 0.0
    %4161 = vmatpush1.msra.mxu0 0.0
    %4162 = vmatprep.subr.mxu0 %v344
    %4163 = vmatpush1.msra.mxu0 %v343
    %4164 = vmatprep.subr.mxu0 %v319
    %4165 = vmatpush1.msra.mxu0 %v318
    %4166 = vmatprep.subr.mxu0 %v294
    %4167 = vmatpush1.msra.mxu0 %v293
    %4168 = vmatprep.subr.mxu0 %v269
    %4169 = vmatpush1.msra.mxu0 %v268
    %4170 = vmatprep.subr.mxu0 %v244
    %4171 = vmatpush1.msra.mxu0 %v243
    %4172 = vmatprep.subr.mxu0 %v219
    %4173 = vmatpush1.msra.mxu0 %v218
    %4174 = vmatprep.subr.mxu0 %v194
    %4175 = vmatpush1.msra.mxu0 %v193
    %4176 = vmatprep.subr.mxu0 %v169
    %4177 = vmatpush1.msra.mxu0 %v168
    %4178 = vmatprep.subr.mxu0 0.0
    %4179 = vmatpush2.msra.mxu0 0.0
    %4180 = vmatprep.subr.mxu0 0.0
    %4181 = vmatpush2.msra.mxu0 0.0
    %4182 = vmatprep.subr.mxu0 0.0
    %4183 = vmatpush2.msra.mxu0 0.0
    %4184 = vmatprep.subr.mxu0 0.0
    %4185 = vmatpush2.msra.mxu0 0.0
    %4186 = vmatprep.subr.mxu0 0.0
    %4187 = vmatpush2.msra.mxu0 0.0
    %4188 = vmatprep.subr.mxu0 0.0
    %4189 = vmatpush2.msra.mxu0 0.0
    %4190 = vmatprep.subr.mxu0 0.0
    %4191 = vmatpush2.msra.mxu0 0.0
    %4192 = vmatprep.subr.mxu0 0.0
    %4193 = vmatpush2.msra.mxu0 0.0
    %4194 = vmatprep.subr.mxu0 0.0
    %4195 = vmatpush2.msra.mxu0 0.0
    %4196 = vmatprep.subr.mxu0 0.0
    %4197 = vmatpush2.msra.mxu0 0.0
    %4198 = vmatprep.subr.mxu0 0.0
    %4199 = vmatpush2.msra.mxu0 0.0
    %4200 = vmatprep.subr.mxu0 0.0
    %4201 = vmatpush2.msra.mxu0 0.0
    %4202 = vmatprep.subr.mxu0 0.0
    %4203 = vmatpush2.msra.mxu0 0.0
    %4204 = vmatprep.subr.mxu0 0.0
    %4205 = vmatpush2.msra.mxu0 0.0
    %4206 = vmatprep.subr.mxu0 0.0
    %4207 = vmatpush2.msra.mxu0 0.0
    %4208 = vmatprep.subr.mxu0 0.0
    %4209 = vmatpush2.msra.mxu0 0.0
    %4210 = vmatprep.mubr.f32.mxu0 0.0
    %v4211 = vand.u32 %v359, 4294901760
    %4212 = vmatmul.mubr.f32.gmra.mxu0 %v4211
    %v4213 = vpop.f32.mrf.mxu0
    %v4214 = vadd.f32 %v4142, %v4213
    %v4215 = vpop.f32.mrf.mxu0
    %v4216 = vadd.f32 %v4144, %v4215
    %4217 = vdwg.mxu0
    %4218 = vmatprep.subr.mxu0 0.0
    %4219 = vmatpush1.msra.mxu0 0.0
    %4220 = vmatprep.subr.mxu0 0.0
    %4221 = vmatpush1.msra.mxu0 0.0
    %4222 = vmatprep.subr.mxu0 0.0
    %4223 = vmatpush1.msra.mxu0 0.0
    %4224 = vmatprep.subr.mxu0 0.0
    %4225 = vmatpush1.msra.mxu0 0.0
    %4226 = vmatprep.subr.mxu0 0.0
    %4227 = vmatpush1.msra.mxu0 0.0
    %4228 = vmatprep.subr.mxu0 0.0
    %4229 = vmatpush1.msra.mxu0 0.0
    %4230 = vmatprep.subr.mxu0 0.0
    %4231 = vmatpush1.msra.mxu0 0.0
    %4232 = vmatprep.subr.mxu0 0.0
    %4233 = vmatpush1.msra.mxu0 0.0
    %4234 = vmatprep.subr.mxu0 %v346
    %4235 = vmatpush1.msra.mxu0 %v345
    %4236 = vmatprep.subr.mxu0 %v321
    %4237 = vmatpush1.msra.mxu0 %v320
    %4238 = vmatprep.subr.mxu0 %v296
    %4239 = vmatpush1.msra.mxu0 %v295
    %4240 = vmatprep.subr.mxu0 %v271
    %4241 = vmatpush1.msra.mxu0 %v270
    %4242 = vmatprep.subr.mxu0 %v246
    %4243 = vmatpush1.msra.mxu0 %v245
    %4244 = vmatprep.subr.mxu0 %v221
    %4245 = vmatpush1.msra.mxu0 %v220
    %4246 = vmatprep.subr.mxu0 %v196
    %4247 = vmatpush1.msra.mxu0 %v195
    %4248 = vmatprep.subr.mxu0 %v171
    %4249 = vmatpush1.msra.mxu0 %v170
    %4250 = vmatprep.subr.mxu0 0.0
    %4251 = vmatpush2.msra.mxu0 0.0
    %4252 = vmatprep.subr.mxu0 0.0
    %4253 = vmatpush2.msra.mxu0 0.0
    %4254 = vmatprep.subr.mxu0 0.0
    %4255 = vmatpush2.msra.mxu0 0.0
    %4256 = vmatprep.subr.mxu0 0.0
    %4257 = vmatpush2.msra.mxu0 0.0
    %4258 = vmatprep.subr.mxu0 0.0
    %4259 = vmatpush2.msra.mxu0 0.0
    %4260 = vmatprep.subr.mxu0 0.0
    %4261 = vmatpush2.msra.mxu0 0.0
    %4262 = vmatprep.subr.mxu0 0.0
    %4263 = vmatpush2.msra.mxu0 0.0
    %4264 = vmatprep.subr.mxu0 0.0
    %4265 = vmatpush2.msra.mxu0 0.0
    %4266 = vmatprep.subr.mxu0 0.0
    %4267 = vmatpush2.msra.mxu0 0.0
    %4268 = vmatprep.subr.mxu0 0.0
    %4269 = vmatpush2.msra.mxu0 0.0
    %4270 = vmatprep.subr.mxu0 0.0
    %4271 = vmatpush2.msra.mxu0 0.0
    %4272 = vmatprep.subr.mxu0 0.0
    %4273 = vmatpush2.msra.mxu0 0.0
    %4274 = vmatprep.subr.mxu0 0.0
    %4275 = vmatpush2.msra.mxu0 0.0
    %4276 = vmatprep.subr.mxu0 0.0
    %4277 = vmatpush2.msra.mxu0 0.0
    %4278 = vmatprep.subr.mxu0 0.0
    %4279 = vmatpush2.msra.mxu0 0.0
    %4280 = vmatprep.subr.mxu0 0.0
    %4281 = vmatpush2.msra.mxu0 0.0
    %4282 = vmatprep.mubr.f32.mxu0 0.0
    %v4283 = vand.u32 %v359, 4294901760
    %v4284 = vsub.f32 %v359, %v4283
    %v4285 = vand.u32 %v4284, 4294901760
    %v4286 = vsub.f32 %v4284, %v4285
    %v4287 = vand.u32 %v4286, 4294901760
    %4288 = vmatmul.mubr.f32.gmra.mxu0 %v4287
    %v4289 = vpop.f32.mrf.mxu0
    %v4290 = vadd.f32 0.0, %v4289
    %v4291 = vpop.f32.mrf.mxu0
    %v4292 = vadd.f32 0.0, %v4291
    %4293 = vdwg.mxu0
    %4294 = vmatprep.subr.mxu0 0.0
    %4295 = vmatpush1.msra.mxu0 0.0
    %4296 = vmatprep.subr.mxu0 0.0
    %4297 = vmatpush1.msra.mxu0 0.0
    %4298 = vmatprep.subr.mxu0 0.0
    %4299 = vmatpush1.msra.mxu0 0.0
    %4300 = vmatprep.subr.mxu0 0.0
    %4301 = vmatpush1.msra.mxu0 0.0
    %4302 = vmatprep.subr.mxu0 0.0
    %4303 = vmatpush1.msra.mxu0 0.0
    %4304 = vmatprep.subr.mxu0 0.0
    %4305 = vmatpush1.msra.mxu0 0.0
    %4306 = vmatprep.subr.mxu0 0.0
    %4307 = vmatpush1.msra.mxu0 0.0
    %4308 = vmatprep.subr.mxu0 0.0
    %4309 = vmatpush1.msra.mxu0 0.0
    %v4310 = vsub.f32 %v346, %v346
    %v4311 = vand.u32 %v4310, 4294901760
    %v4312 = vsub.f32 %v4310, %v4311
    %v4313 = vand.u32 %v4312, 4294901760
    %4314 = vmatprep.subr.mxu0 %v4313
    %v4315 = vsub.f32 %v345, %v345
    %v4316 = vand.u32 %v4315, 4294901760
    %v4317 = vsub.f32 %v4315, %v4316
    %v4318 = vand.u32 %v4317, 4294901760
    %4319 = vmatpush1.msra.mxu0 %v4318
    %v4320 = vsub.f32 %v321, %v321
    %v4321 = vand.u32 %v4320, 4294901760
    %v4322 = vsub.f32 %v4320, %v4321
    %v4323 = vand.u32 %v4322, 4294901760
    %4324 = vmatprep.subr.mxu0 %v4323
    %v4325 = vsub.f32 %v320, %v320
    %v4326 = vand.u32 %v4325, 4294901760
    %v4327 = vsub.f32 %v4325, %v4326
    %v4328 = vand.u32 %v4327, 4294901760
    %4329 = vmatpush1.msra.mxu0 %v4328
    %v4330 = vsub.f32 %v296, %v296
    %v4331 = vand.u32 %v4330, 4294901760
    %v4332 = vsub.f32 %v4330, %v4331
    %v4333 = vand.u32 %v4332, 4294901760
    %4334 = vmatprep.subr.mxu0 %v4333
    %v4335 = vsub.f32 %v295, %v295
    %v4336 = vand.u32 %v4335, 4294901760
    %v4337 = vsub.f32 %v4335, %v4336
    %v4338 = vand.u32 %v4337, 4294901760
    %4339 = vmatpush1.msra.mxu0 %v4338
    %v4340 = vsub.f32 %v271, %v271
    %v4341 = vand.u32 %v4340, 4294901760
    %v4342 = vsub.f32 %v4340, %v4341
    %v4343 = vand.u32 %v4342, 4294901760
    %4344 = vmatprep.subr.mxu0 %v4343
    %v4345 = vsub.f32 %v270, %v270
    %v4346 = vand.u32 %v4345, 4294901760
    %v4347 = vsub.f32 %v4345, %v4346
    %v4348 = vand.u32 %v4347, 4294901760
    %4349 = vmatpush1.msra.mxu0 %v4348
    %v4350 = vsub.f32 %v246, %v246
    %v4351 = vand.u32 %v4350, 4294901760
    %v4352 = vsub.f32 %v4350, %v4351
    %v4353 = vand.u32 %v4352, 4294901760
    %4354 = vmatprep.subr.mxu0 %v4353
    %v4355 = vsub.f32 %v245, %v245
    %v4356 = vand.u32 %v4355, 4294901760
    %v4357 = vsub.f32 %v4355, %v4356
    %v4358 = vand.u32 %v4357, 4294901760
    %4359 = vmatpush1.msra.mxu0 %v4358
    %v4360 = vsub.f32 %v221, %v221
    %v4361 = vand.u32 %v4360, 4294901760
    %v4362 = vsub.f32 %v4360, %v4361
    %v4363 = vand.u32 %v4362, 4294901760
    %4364 = vmatprep.subr.mxu0 %v4363
    %v4365 = vsub.f32 %v220, %v220
    %v4366 = vand.u32 %v4365, 4294901760
    %v4367 = vsub.f32 %v4365, %v4366
    %v4368 = vand.u32 %v4367, 4294901760
    %4369 = vmatpush1.msra.mxu0 %v4368
    %v4370 = vsub.f32 %v196, %v196
    %v4371 = vand.u32 %v4370, 4294901760
    %v4372 = vsub.f32 %v4370, %v4371
    %v4373 = vand.u32 %v4372, 4294901760
    %4374 = vmatprep.subr.mxu0 %v4373
    %v4375 = vsub.f32 %v195, %v195
    %v4376 = vand.u32 %v4375, 4294901760
    %v4377 = vsub.f32 %v4375, %v4376
    %v4378 = vand.u32 %v4377, 4294901760
    %4379 = vmatpush1.msra.mxu0 %v4378
    %v4380 = vsub.f32 %v171, %v171
    %v4381 = vand.u32 %v4380, 4294901760
    %v4382 = vsub.f32 %v4380, %v4381
    %v4383 = vand.u32 %v4382, 4294901760
    %4384 = vmatprep.subr.mxu0 %v4383
    %v4385 = vsub.f32 %v170, %v170
    %v4386 = vand.u32 %v4385, 4294901760
    %v4387 = vsub.f32 %v4385, %v4386
    %v4388 = vand.u32 %v4387, 4294901760
    %4389 = vmatpush1.msra.mxu0 %v4388
    %4390 = vmatprep.subr.mxu0 0.0
    %4391 = vmatpush2.msra.mxu0 0.0
    %4392 = vmatprep.subr.mxu0 0.0
    %4393 = vmatpush2.msra.mxu0 0.0
    %4394 = vmatprep.subr.mxu0 0.0
    %4395 = vmatpush2.msra.mxu0 0.0
    %4396 = vmatprep.subr.mxu0 0.0
    %4397 = vmatpush2.msra.mxu0 0.0
    %4398 = vmatprep.subr.mxu0 0.0
    %4399 = vmatpush2.msra.mxu0 0.0
    %4400 = vmatprep.subr.mxu0 0.0
    %4401 = vmatpush2.msra.mxu0 0.0
    %4402 = vmatprep.subr.mxu0 0.0
    %4403 = vmatpush2.msra.mxu0 0.0
    %4404 = vmatprep.subr.mxu0 0.0
    %4405 = vmatpush2.msra.mxu0 0.0
    %4406 = vmatprep.subr.mxu0 0.0
    %4407 = vmatpush2.msra.mxu0 0.0
    %4408 = vmatprep.subr.mxu0 0.0
    %4409 = vmatpush2.msra.mxu0 0.0
    %4410 = vmatprep.subr.mxu0 0.0
    %4411 = vmatpush2.msra.mxu0 0.0
    %4412 = vmatprep.subr.mxu0 0.0
    %4413 = vmatpush2.msra.mxu0 0.0
    %4414 = vmatprep.subr.mxu0 0.0
    %4415 = vmatpush2.msra.mxu0 0.0
    %4416 = vmatprep.subr.mxu0 0.0
    %4417 = vmatpush2.msra.mxu0 0.0
    %4418 = vmatprep.subr.mxu0 0.0
    %4419 = vmatpush2.msra.mxu0 0.0
    %4420 = vmatprep.subr.mxu0 0.0
    %4421 = vmatpush2.msra.mxu0 0.0
    %4422 = vmatprep.mubr.f32.mxu0 0.0
    %v4423 = vand.u32 %v359, 4294901760
    %4424 = vmatmul.mubr.f32.gmra.mxu0 %v4423
    %v4425 = vpop.f32.mrf.mxu0
    %v4426 = vadd.f32 %v4290, %v4425
    %v4427 = vpop.f32.mrf.mxu0
    %v4428 = vadd.f32 %v4292, %v4427
    %4429 = vdwg.mxu0
    %4430 = vmatprep.subr.mxu0 0.0
    %4431 = vmatpush1.msra.mxu0 0.0
    %4432 = vmatprep.subr.mxu0 0.0
    %4433 = vmatpush1.msra.mxu0 0.0
    %4434 = vmatprep.subr.mxu0 0.0
    %4435 = vmatpush1.msra.mxu0 0.0
    %4436 = vmatprep.subr.mxu0 0.0
    %4437 = vmatpush1.msra.mxu0 0.0
    %4438 = vmatprep.subr.mxu0 0.0
    %4439 = vmatpush1.msra.mxu0 0.0
    %4440 = vmatprep.subr.mxu0 0.0
    %4441 = vmatpush1.msra.mxu0 0.0
    %4442 = vmatprep.subr.mxu0 0.0
    %4443 = vmatpush1.msra.mxu0 0.0
    %4444 = vmatprep.subr.mxu0 0.0
    %4445 = vmatpush1.msra.mxu0 0.0
    %v4446 = vsub.f32 %v346, %v346
    %4447 = vmatprep.subr.mxu0 %v4446
    %v4448 = vsub.f32 %v345, %v345
    %4449 = vmatpush1.msra.mxu0 %v4448
    %v4450 = vsub.f32 %v321, %v321
    %4451 = vmatprep.subr.mxu0 %v4450
    %v4452 = vsub.f32 %v320, %v320
    %4453 = vmatpush1.msra.mxu0 %v4452
    %v4454 = vsub.f32 %v296, %v296
    %4455 = vmatprep.subr.mxu0 %v4454
    %v4456 = vsub.f32 %v295, %v295
    %4457 = vmatpush1.msra.mxu0 %v4456
    %v4458 = vsub.f32 %v271, %v271
    %4459 = vmatprep.subr.mxu0 %v4458
    %v4460 = vsub.f32 %v270, %v270
    %4461 = vmatpush1.msra.mxu0 %v4460
    %v4462 = vsub.f32 %v246, %v246
    %4463 = vmatprep.subr.mxu0 %v4462
    %v4464 = vsub.f32 %v245, %v245
    %4465 = vmatpush1.msra.mxu0 %v4464
    %v4466 = vsub.f32 %v221, %v221
    %4467 = vmatprep.subr.mxu0 %v4466
    %v4468 = vsub.f32 %v220, %v220
    %4469 = vmatpush1.msra.mxu0 %v4468
    %v4470 = vsub.f32 %v196, %v196
    %4471 = vmatprep.subr.mxu0 %v4470
    %v4472 = vsub.f32 %v195, %v195
    %4473 = vmatpush1.msra.mxu0 %v4472
    %v4474 = vsub.f32 %v171, %v171
    %4475 = vmatprep.subr.mxu0 %v4474
    %v4476 = vsub.f32 %v170, %v170
    %4477 = vmatpush1.msra.mxu0 %v4476
    %4478 = vmatprep.subr.mxu0 0.0
    %4479 = vmatpush2.msra.mxu0 0.0
    %4480 = vmatprep.subr.mxu0 0.0
    %4481 = vmatpush2.msra.mxu0 0.0
    %4482 = vmatprep.subr.mxu0 0.0
    %4483 = vmatpush2.msra.mxu0 0.0
    %4484 = vmatprep.subr.mxu0 0.0
    %4485 = vmatpush2.msra.mxu0 0.0
    %4486 = vmatprep.subr.mxu0 0.0
    %4487 = vmatpush2.msra.mxu0 0.0
    %4488 = vmatprep.subr.mxu0 0.0
    %4489 = vmatpush2.msra.mxu0 0.0
    %4490 = vmatprep.subr.mxu0 0.0
    %4491 = vmatpush2.msra.mxu0 0.0
    %4492 = vmatprep.subr.mxu0 0.0
    %4493 = vmatpush2.msra.mxu0 0.0
    %4494 = vmatprep.subr.mxu0 0.0
    %4495 = vmatpush2.msra.mxu0 0.0
    %4496 = vmatprep.subr.mxu0 0.0
    %4497 = vmatpush2.msra.mxu0 0.0
    %4498 = vmatprep.subr.mxu0 0.0
    %4499 = vmatpush2.msra.mxu0 0.0
    %4500 = vmatprep.subr.mxu0 0.0
    %4501 = vmatpush2.msra.mxu0 0.0
    %4502 = vmatprep.subr.mxu0 0.0
    %4503 = vmatpush2.msra.mxu0 0.0
    %4504 = vmatprep.subr.mxu0 0.0
    %4505 = vmatpush2.msra.mxu0 0.0
    %4506 = vmatprep.subr.mxu0 0.0
    %4507 = vmatpush2.msra.mxu0 0.0
    %4508 = vmatprep.subr.mxu0 0.0
    %4509 = vmatpush2.msra.mxu0 0.0
    %4510 = vmatprep.mubr.f32.mxu0 0.0
    %v4511 = vand.u32 %v359, 4294901760
    %v4512 = vsub.f32 %v359, %v4511
    %4513 = vmatmul.mubr.f32.gmra.mxu0 %v4512
    %v4514 = vpop.f32.mrf.mxu0
    %v4515 = vadd.f32 %v4426, %v4514
    %v4516 = vpop.f32.mrf.mxu0
    %v4517 = vadd.f32 %v4428, %v4516
    %4518 = vdwg.mxu0
    %4519 = vmatprep.subr.mxu0 0.0
    %4520 = vmatpush1.msra.mxu0 0.0
    %4521 = vmatprep.subr.mxu0 0.0
    %4522 = vmatpush1.msra.mxu0 0.0
    %4523 = vmatprep.subr.mxu0 0.0
    %4524 = vmatpush1.msra.mxu0 0.0
    %4525 = vmatprep.subr.mxu0 0.0
    %4526 = vmatpush1.msra.mxu0 0.0
    %4527 = vmatprep.subr.mxu0 0.0
    %4528 = vmatpush1.msra.mxu0 0.0
    %4529 = vmatprep.subr.mxu0 0.0
    %4530 = vmatpush1.msra.mxu0 0.0
    %4531 = vmatprep.subr.mxu0 0.0
    %4532 = vmatpush1.msra.mxu0 0.0
    %4533 = vmatprep.subr.mxu0 0.0
    %4534 = vmatpush1.msra.mxu0 0.0
    %4535 = vmatprep.subr.mxu0 %v346
    %4536 = vmatpush1.msra.mxu0 %v345
    %4537 = vmatprep.subr.mxu0 %v321
    %4538 = vmatpush1.msra.mxu0 %v320
    %4539 = vmatprep.subr.mxu0 %v296
    %4540 = vmatpush1.msra.mxu0 %v295
    %4541 = vmatprep.subr.mxu0 %v271
    %4542 = vmatpush1.msra.mxu0 %v270
    %4543 = vmatprep.subr.mxu0 %v246
    %4544 = vmatpush1.msra.mxu0 %v245
    %4545 = vmatprep.subr.mxu0 %v221
    %4546 = vmatpush1.msra.mxu0 %v220
    %4547 = vmatprep.subr.mxu0 %v196
    %4548 = vmatpush1.msra.mxu0 %v195
    %4549 = vmatprep.subr.mxu0 %v171
    %4550 = vmatpush1.msra.mxu0 %v170
    %4551 = vmatprep.subr.mxu0 0.0
    %4552 = vmatpush2.msra.mxu0 0.0
    %4553 = vmatprep.subr.mxu0 0.0
    %4554 = vmatpush2.msra.mxu0 0.0
    %4555 = vmatprep.subr.mxu0 0.0
    %4556 = vmatpush2.msra.mxu0 0.0
    %4557 = vmatprep.subr.mxu0 0.0
    %4558 = vmatpush2.msra.mxu0 0.0
    %4559 = vmatprep.subr.mxu0 0.0
    %4560 = vmatpush2.msra.mxu0 0.0
    %4561 = vmatprep.subr.mxu0 0.0
    %4562 = vmatpush2.msra.mxu0 0.0
    %4563 = vmatprep.subr.mxu0 0.0
    %4564 = vmatpush2.msra.mxu0 0.0
    %4565 = vmatprep.subr.mxu0 0.0
    %4566 = vmatpush2.msra.mxu0 0.0
    %4567 = vmatprep.subr.mxu0 0.0
    %4568 = vmatpush2.msra.mxu0 0.0
    %4569 = vmatprep.subr.mxu0 0.0
    %4570 = vmatpush2.msra.mxu0 0.0
    %4571 = vmatprep.subr.mxu0 0.0
    %4572 = vmatpush2.msra.mxu0 0.0
    %4573 = vmatprep.subr.mxu0 0.0
    %4574 = vmatpush2.msra.mxu0 0.0
    %4575 = vmatprep.subr.mxu0 0.0
    %4576 = vmatpush2.msra.mxu0 0.0
    %4577 = vmatprep.subr.mxu0 0.0
    %4578 = vmatpush2.msra.mxu0 0.0
    %4579 = vmatprep.subr.mxu0 0.0
    %4580 = vmatpush2.msra.mxu0 0.0
    %4581 = vmatprep.subr.mxu0 0.0
    %4582 = vmatpush2.msra.mxu0 0.0
    %4583 = vmatprep.mubr.f32.mxu0 0.0
    %v4584 = vand.u32 %v359, 4294901760
    %v4585 = vsub.f32 %v359, %v4584
    %v4586 = vand.u32 %v4585, 4294901760
    %4587 = vmatmul.mubr.f32.gmra.mxu0 %v4586
    %v4588 = vpop.f32.mrf.mxu0
    %v4589 = vadd.f32 %v4515, %v4588
    %v4590 = vpop.f32.mrf.mxu0
    %v4591 = vadd.f32 %v4517, %v4590
    %4592 = vdwg.mxu0
    %4593 = vmatprep.subr.mxu0 0.0
    %4594 = vmatpush1.msra.mxu0 0.0
    %4595 = vmatprep.subr.mxu0 0.0
    %4596 = vmatpush1.msra.mxu0 0.0
    %4597 = vmatprep.subr.mxu0 0.0
    %4598 = vmatpush1.msra.mxu0 0.0
    %4599 = vmatprep.subr.mxu0 0.0
    %4600 = vmatpush1.msra.mxu0 0.0
    %4601 = vmatprep.subr.mxu0 0.0
    %4602 = vmatpush1.msra.mxu0 0.0
    %4603 = vmatprep.subr.mxu0 0.0
    %4604 = vmatpush1.msra.mxu0 0.0
    %4605 = vmatprep.subr.mxu0 0.0
    %4606 = vmatpush1.msra.mxu0 0.0
    %4607 = vmatprep.subr.mxu0 0.0
    %4608 = vmatpush1.msra.mxu0 0.0
    %v4609 = vsub.f32 %v346, %v346
    %v4610 = vand.u32 %v4609, 4294901760
    %4611 = vmatprep.subr.mxu0 %v4610
    %v4612 = vsub.f32 %v345, %v345
    %v4613 = vand.u32 %v4612, 4294901760
    %4614 = vmatpush1.msra.mxu0 %v4613
    %v4615 = vsub.f32 %v321, %v321
    %v4616 = vand.u32 %v4615, 4294901760
    %4617 = vmatprep.subr.mxu0 %v4616
    %v4618 = vsub.f32 %v320, %v320
    %v4619 = vand.u32 %v4618, 4294901760
    %4620 = vmatpush1.msra.mxu0 %v4619
    %v4621 = vsub.f32 %v296, %v296
    %v4622 = vand.u32 %v4621, 4294901760
    %4623 = vmatprep.subr.mxu0 %v4622
    %v4624 = vsub.f32 %v295, %v295
    %v4625 = vand.u32 %v4624, 4294901760
    %4626 = vmatpush1.msra.mxu0 %v4625
    %v4627 = vsub.f32 %v271, %v271
    %v4628 = vand.u32 %v4627, 4294901760
    %4629 = vmatprep.subr.mxu0 %v4628
    %v4630 = vsub.f32 %v270, %v270
    %v4631 = vand.u32 %v4630, 4294901760
    %4632 = vmatpush1.msra.mxu0 %v4631
    %v4633 = vsub.f32 %v246, %v246
    %v4634 = vand.u32 %v4633, 4294901760
    %4635 = vmatprep.subr.mxu0 %v4634
    %v4636 = vsub.f32 %v245, %v245
    %v4637 = vand.u32 %v4636, 4294901760
    %4638 = vmatpush1.msra.mxu0 %v4637
    %v4639 = vsub.f32 %v221, %v221
    %v4640 = vand.u32 %v4639, 4294901760
    %4641 = vmatprep.subr.mxu0 %v4640
    %v4642 = vsub.f32 %v220, %v220
    %v4643 = vand.u32 %v4642, 4294901760
    %4644 = vmatpush1.msra.mxu0 %v4643
    %v4645 = vsub.f32 %v196, %v196
    %v4646 = vand.u32 %v4645, 4294901760
    %4647 = vmatprep.subr.mxu0 %v4646
    %v4648 = vsub.f32 %v195, %v195
    %v4649 = vand.u32 %v4648, 4294901760
    %4650 = vmatpush1.msra.mxu0 %v4649
    %v4651 = vsub.f32 %v171, %v171
    %v4652 = vand.u32 %v4651, 4294901760
    %4653 = vmatprep.subr.mxu0 %v4652
    %v4654 = vsub.f32 %v170, %v170
    %v4655 = vand.u32 %v4654, 4294901760
    %4656 = vmatpush1.msra.mxu0 %v4655
    %4657 = vmatprep.subr.mxu0 0.0
    %4658 = vmatpush2.msra.mxu0 0.0
    %4659 = vmatprep.subr.mxu0 0.0
    %4660 = vmatpush2.msra.mxu0 0.0
    %4661 = vmatprep.subr.mxu0 0.0
    %4662 = vmatpush2.msra.mxu0 0.0
    %4663 = vmatprep.subr.mxu0 0.0
    %4664 = vmatpush2.msra.mxu0 0.0
    %4665 = vmatprep.subr.mxu0 0.0
    %4666 = vmatpush2.msra.mxu0 0.0
    %4667 = vmatprep.subr.mxu0 0.0
    %4668 = vmatpush2.msra.mxu0 0.0
    %4669 = vmatprep.subr.mxu0 0.0
    %4670 = vmatpush2.msra.mxu0 0.0
    %4671 = vmatprep.subr.mxu0 0.0
    %4672 = vmatpush2.msra.mxu0 0.0
    %4673 = vmatprep.subr.mxu0 0.0
    %4674 = vmatpush2.msra.mxu0 0.0
    %4675 = vmatprep.subr.mxu0 0.0
    %4676 = vmatpush2.msra.mxu0 0.0
    %4677 = vmatprep.subr.mxu0 0.0
    %4678 = vmatpush2.msra.mxu0 0.0
    %4679 = vmatprep.subr.mxu0 0.0
    %4680 = vmatpush2.msra.mxu0 0.0
    %4681 = vmatprep.subr.mxu0 0.0
    %4682 = vmatpush2.msra.mxu0 0.0
    %4683 = vmatprep.subr.mxu0 0.0
    %4684 = vmatpush2.msra.mxu0 0.0
    %4685 = vmatprep.subr.mxu0 0.0
    %4686 = vmatpush2.msra.mxu0 0.0
    %4687 = vmatprep.subr.mxu0 0.0
    %4688 = vmatpush2.msra.mxu0 0.0
    %4689 = vmatprep.mubr.f32.mxu0 0.0
    %v4690 = vand.u32 %v359, 4294901760
    %4691 = vmatmul.mubr.f32.gmra.mxu0 %v4690
    %v4692 = vpop.f32.mrf.mxu0
    %v4693 = vadd.f32 %v4589, %v4692
    %v4694 = vpop.f32.mrf.mxu0
    %v4695 = vadd.f32 %v4591, %v4694
    %4696 = vdwg.mxu0
    %4697 = vmatprep.subr.mxu0 0.0
    %4698 = vmatpush1.msra.mxu0 0.0
    %4699 = vmatprep.subr.mxu0 0.0
    %4700 = vmatpush1.msra.mxu0 0.0
    %4701 = vmatprep.subr.mxu0 0.0
    %4702 = vmatpush1.msra.mxu0 0.0
    %4703 = vmatprep.subr.mxu0 0.0
    %4704 = vmatpush1.msra.mxu0 0.0
    %4705 = vmatprep.subr.mxu0 0.0
    %4706 = vmatpush1.msra.mxu0 0.0
    %4707 = vmatprep.subr.mxu0 0.0
    %4708 = vmatpush1.msra.mxu0 0.0
    %4709 = vmatprep.subr.mxu0 0.0
    %4710 = vmatpush1.msra.mxu0 0.0
    %4711 = vmatprep.subr.mxu0 0.0
    %4712 = vmatpush1.msra.mxu0 0.0
    %4713 = vmatprep.subr.mxu0 %v346
    %4714 = vmatpush1.msra.mxu0 %v345
    %4715 = vmatprep.subr.mxu0 %v321
    %4716 = vmatpush1.msra.mxu0 %v320
    %4717 = vmatprep.subr.mxu0 %v296
    %4718 = vmatpush1.msra.mxu0 %v295
    %4719 = vmatprep.subr.mxu0 %v271
    %4720 = vmatpush1.msra.mxu0 %v270
    %4721 = vmatprep.subr.mxu0 %v246
    %4722 = vmatpush1.msra.mxu0 %v245
    %4723 = vmatprep.subr.mxu0 %v221
    %4724 = vmatpush1.msra.mxu0 %v220
    %4725 = vmatprep.subr.mxu0 %v196
    %4726 = vmatpush1.msra.mxu0 %v195
    %4727 = vmatprep.subr.mxu0 %v171
    %4728 = vmatpush1.msra.mxu0 %v170
    %4729 = vmatprep.subr.mxu0 0.0
    %4730 = vmatpush2.msra.mxu0 0.0
    %4731 = vmatprep.subr.mxu0 0.0
    %4732 = vmatpush2.msra.mxu0 0.0
    %4733 = vmatprep.subr.mxu0 0.0
    %4734 = vmatpush2.msra.mxu0 0.0
    %4735 = vmatprep.subr.mxu0 0.0
    %4736 = vmatpush2.msra.mxu0 0.0
    %4737 = vmatprep.subr.mxu0 0.0
    %4738 = vmatpush2.msra.mxu0 0.0
    %4739 = vmatprep.subr.mxu0 0.0
    %4740 = vmatpush2.msra.mxu0 0.0
    %4741 = vmatprep.subr.mxu0 0.0
    %4742 = vmatpush2.msra.mxu0 0.0
    %4743 = vmatprep.subr.mxu0 0.0
    %4744 = vmatpush2.msra.mxu0 0.0
    %4745 = vmatprep.subr.mxu0 0.0
    %4746 = vmatpush2.msra.mxu0 0.0
    %4747 = vmatprep.subr.mxu0 0.0
    %4748 = vmatpush2.msra.mxu0 0.0
    %4749 = vmatprep.subr.mxu0 0.0
    %4750 = vmatpush2.msra.mxu0 0.0
    %4751 = vmatprep.subr.mxu0 0.0
    %4752 = vmatpush2.msra.mxu0 0.0
    %4753 = vmatprep.subr.mxu0 0.0
    %4754 = vmatpush2.msra.mxu0 0.0
    %4755 = vmatprep.subr.mxu0 0.0
    %4756 = vmatpush2.msra.mxu0 0.0
    %4757 = vmatprep.subr.mxu0 0.0
    %4758 = vmatpush2.msra.mxu0 0.0
    %4759 = vmatprep.subr.mxu0 0.0
    %4760 = vmatpush2.msra.mxu0 0.0
    %4761 = vmatprep.mubr.f32.mxu0 0.0
    %v4762 = vand.u32 %v359, 4294901760
    %4763 = vmatmul.mubr.f32.gmra.mxu0 %v4762
    %v4764 = vpop.f32.mrf.mxu0
    %v4765 = vadd.f32 %v4693, %v4764
    %v4766 = vpop.f32.mrf.mxu0
    %v4767 = vadd.f32 %v4695, %v4766
    %4768 = vdwg.mxu0
    %4769 = vmatprep.subr.mxu0 0.0
    %4770 = vmatpush1.msra.mxu0 0.0
    %4771 = vmatprep.subr.mxu0 0.0
    %4772 = vmatpush1.msra.mxu0 0.0
    %4773 = vmatprep.subr.mxu0 0.0
    %4774 = vmatpush1.msra.mxu0 0.0
    %4775 = vmatprep.subr.mxu0 0.0
    %4776 = vmatpush1.msra.mxu0 0.0
    %4777 = vmatprep.subr.mxu0 0.0
    %4778 = vmatpush1.msra.mxu0 0.0
    %4779 = vmatprep.subr.mxu0 0.0
    %4780 = vmatpush1.msra.mxu0 0.0
    %4781 = vmatprep.subr.mxu0 0.0
    %4782 = vmatpush1.msra.mxu0 0.0
    %4783 = vmatprep.subr.mxu0 0.0
    %4784 = vmatpush1.msra.mxu0 0.0
    %4785 = vmatprep.subr.mxu0 %v348
    %4786 = vmatpush1.msra.mxu0 %v347
    %4787 = vmatprep.subr.mxu0 %v323
    %4788 = vmatpush1.msra.mxu0 %v322
    %4789 = vmatprep.subr.mxu0 %v298
    %4790 = vmatpush1.msra.mxu0 %v297
    %4791 = vmatprep.subr.mxu0 %v273
    %4792 = vmatpush1.msra.mxu0 %v272
    %4793 = vmatprep.subr.mxu0 %v248
    %4794 = vmatpush1.msra.mxu0 %v247
    %4795 = vmatprep.subr.mxu0 %v223
    %4796 = vmatpush1.msra.mxu0 %v222
    %4797 = vmatprep.subr.mxu0 %v198
    %4798 = vmatpush1.msra.mxu0 %v197
    %4799 = vmatprep.subr.mxu0 %v173
    %4800 = vmatpush1.msra.mxu0 %v172
    %4801 = vmatprep.subr.mxu0 0.0
    %4802 = vmatpush2.msra.mxu0 0.0
    %4803 = vmatprep.subr.mxu0 0.0
    %4804 = vmatpush2.msra.mxu0 0.0
    %4805 = vmatprep.subr.mxu0 0.0
    %4806 = vmatpush2.msra.mxu0 0.0
    %4807 = vmatprep.subr.mxu0 0.0
    %4808 = vmatpush2.msra.mxu0 0.0
    %4809 = vmatprep.subr.mxu0 0.0
    %4810 = vmatpush2.msra.mxu0 0.0
    %4811 = vmatprep.subr.mxu0 0.0
    %4812 = vmatpush2.msra.mxu0 0.0
    %4813 = vmatprep.subr.mxu0 0.0
    %4814 = vmatpush2.msra.mxu0 0.0
    %4815 = vmatprep.subr.mxu0 0.0
    %4816 = vmatpush2.msra.mxu0 0.0
    %4817 = vmatprep.subr.mxu0 0.0
    %4818 = vmatpush2.msra.mxu0 0.0
    %4819 = vmatprep.subr.mxu0 0.0
    %4820 = vmatpush2.msra.mxu0 0.0
    %4821 = vmatprep.subr.mxu0 0.0
    %4822 = vmatpush2.msra.mxu0 0.0
    %4823 = vmatprep.subr.mxu0 0.0
    %4824 = vmatpush2.msra.mxu0 0.0
    %4825 = vmatprep.subr.mxu0 0.0
    %4826 = vmatpush2.msra.mxu0 0.0
    %4827 = vmatprep.subr.mxu0 0.0
    %4828 = vmatpush2.msra.mxu0 0.0
    %4829 = vmatprep.subr.mxu0 0.0
    %4830 = vmatpush2.msra.mxu0 0.0
    %4831 = vmatprep.subr.mxu0 0.0
    %4832 = vmatpush2.msra.mxu0 0.0
    %4833 = vmatprep.mubr.f32.mxu0 0.0
    %v4834 = vand.u32 %v359, 4294901760
    %v4835 = vsub.f32 %v359, %v4834
    %v4836 = vand.u32 %v4835, 4294901760
    %v4837 = vsub.f32 %v4835, %v4836
    %v4838 = vand.u32 %v4837, 4294901760
    %4839 = vmatmul.mubr.f32.gmra.mxu0 %v4838
    %v4840 = vpop.f32.mrf.mxu0
    %v4841 = vadd.f32 0.0, %v4840
    %v4842 = vpop.f32.mrf.mxu0
    %v4843 = vadd.f32 0.0, %v4842
    %4844 = vdwg.mxu0
    %4845 = vmatprep.subr.mxu0 0.0
    %4846 = vmatpush1.msra.mxu0 0.0
    %4847 = vmatprep.subr.mxu0 0.0
    %4848 = vmatpush1.msra.mxu0 0.0
    %4849 = vmatprep.subr.mxu0 0.0
    %4850 = vmatpush1.msra.mxu0 0.0
    %4851 = vmatprep.subr.mxu0 0.0
    %4852 = vmatpush1.msra.mxu0 0.0
    %4853 = vmatprep.subr.mxu0 0.0
    %4854 = vmatpush1.msra.mxu0 0.0
    %4855 = vmatprep.subr.mxu0 0.0
    %4856 = vmatpush1.msra.mxu0 0.0
    %4857 = vmatprep.subr.mxu0 0.0
    %4858 = vmatpush1.msra.mxu0 0.0
    %4859 = vmatprep.subr.mxu0 0.0
    %4860 = vmatpush1.msra.mxu0 0.0
    %v4861 = vsub.f32 %v348, %v348
    %v4862 = vand.u32 %v4861, 4294901760
    %v4863 = vsub.f32 %v4861, %v4862
    %v4864 = vand.u32 %v4863, 4294901760
    %4865 = vmatprep.subr.mxu0 %v4864
    %v4866 = vsub.f32 %v347, %v347
    %v4867 = vand.u32 %v4866, 4294901760
    %v4868 = vsub.f32 %v4866, %v4867
    %v4869 = vand.u32 %v4868, 4294901760
    %4870 = vmatpush1.msra.mxu0 %v4869
    %v4871 = vsub.f32 %v323, %v323
    %v4872 = vand.u32 %v4871, 4294901760
    %v4873 = vsub.f32 %v4871, %v4872
    %v4874 = vand.u32 %v4873, 4294901760
    %4875 = vmatprep.subr.mxu0 %v4874
    %v4876 = vsub.f32 %v322, %v322
    %v4877 = vand.u32 %v4876, 4294901760
    %v4878 = vsub.f32 %v4876, %v4877
    %v4879 = vand.u32 %v4878, 4294901760
    %4880 = vmatpush1.msra.mxu0 %v4879
    %v4881 = vsub.f32 %v298, %v298
    %v4882 = vand.u32 %v4881, 4294901760
    %v4883 = vsub.f32 %v4881, %v4882
    %v4884 = vand.u32 %v4883, 4294901760
    %4885 = vmatprep.subr.mxu0 %v4884
    %v4886 = vsub.f32 %v297, %v297
    %v4887 = vand.u32 %v4886, 4294901760
    %v4888 = vsub.f32 %v4886, %v4887
    %v4889 = vand.u32 %v4888, 4294901760
    %4890 = vmatpush1.msra.mxu0 %v4889
    %v4891 = vsub.f32 %v273, %v273
    %v4892 = vand.u32 %v4891, 4294901760
    %v4893 = vsub.f32 %v4891, %v4892
    %v4894 = vand.u32 %v4893, 4294901760
    %4895 = vmatprep.subr.mxu0 %v4894
    %v4896 = vsub.f32 %v272, %v272
    %v4897 = vand.u32 %v4896, 4294901760
    %v4898 = vsub.f32 %v4896, %v4897
    %v4899 = vand.u32 %v4898, 4294901760
    %4900 = vmatpush1.msra.mxu0 %v4899
    %v4901 = vsub.f32 %v248, %v248
    %v4902 = vand.u32 %v4901, 4294901760
    %v4903 = vsub.f32 %v4901, %v4902
    %v4904 = vand.u32 %v4903, 4294901760
    %4905 = vmatprep.subr.mxu0 %v4904
    %v4906 = vsub.f32 %v247, %v247
    %v4907 = vand.u32 %v4906, 4294901760
    %v4908 = vsub.f32 %v4906, %v4907
    %v4909 = vand.u32 %v4908, 4294901760
    %4910 = vmatpush1.msra.mxu0 %v4909
    %v4911 = vsub.f32 %v223, %v223
    %v4912 = vand.u32 %v4911, 4294901760
    %v4913 = vsub.f32 %v4911, %v4912
    %v4914 = vand.u32 %v4913, 4294901760
    %4915 = vmatprep.subr.mxu0 %v4914
    %v4916 = vsub.f32 %v222, %v222
    %v4917 = vand.u32 %v4916, 4294901760
    %v4918 = vsub.f32 %v4916, %v4917
    %v4919 = vand.u32 %v4918, 4294901760
    %4920 = vmatpush1.msra.mxu0 %v4919
    %v4921 = vsub.f32 %v198, %v198
    %v4922 = vand.u32 %v4921, 4294901760
    %v4923 = vsub.f32 %v4921, %v4922
    %v4924 = vand.u32 %v4923, 4294901760
    %4925 = vmatprep.subr.mxu0 %v4924
    %v4926 = vsub.f32 %v197, %v197
    %v4927 = vand.u32 %v4926, 4294901760
    %v4928 = vsub.f32 %v4926, %v4927
    %v4929 = vand.u32 %v4928, 4294901760
    %4930 = vmatpush1.msra.mxu0 %v4929
    %v4931 = vsub.f32 %v173, %v173
    %v4932 = vand.u32 %v4931, 4294901760
    %v4933 = vsub.f32 %v4931, %v4932
    %v4934 = vand.u32 %v4933, 4294901760
    %4935 = vmatprep.subr.mxu0 %v4934
    %v4936 = vsub.f32 %v172, %v172
    %v4937 = vand.u32 %v4936, 4294901760
    %v4938 = vsub.f32 %v4936, %v4937
    %v4939 = vand.u32 %v4938, 4294901760
    %4940 = vmatpush1.msra.mxu0 %v4939
    %4941 = vmatprep.subr.mxu0 0.0
    %4942 = vmatpush2.msra.mxu0 0.0
    %4943 = vmatprep.subr.mxu0 0.0
    %4944 = vmatpush2.msra.mxu0 0.0
    %4945 = vmatprep.subr.mxu0 0.0
    %4946 = vmatpush2.msra.mxu0 0.0
    %4947 = vmatprep.subr.mxu0 0.0
    %4948 = vmatpush2.msra.mxu0 0.0
    %4949 = vmatprep.subr.mxu0 0.0
    %4950 = vmatpush2.msra.mxu0 0.0
    %4951 = vmatprep.subr.mxu0 0.0
    %4952 = vmatpush2.msra.mxu0 0.0
    %4953 = vmatprep.subr.mxu0 0.0
    %4954 = vmatpush2.msra.mxu0 0.0
    %4955 = vmatprep.subr.mxu0 0.0
    %4956 = vmatpush2.msra.mxu0 0.0
    %4957 = vmatprep.subr.mxu0 0.0
    %4958 = vmatpush2.msra.mxu0 0.0
    %4959 = vmatprep.subr.mxu0 0.0
    %4960 = vmatpush2.msra.mxu0 0.0
    %4961 = vmatprep.subr.mxu0 0.0
    %4962 = vmatpush2.msra.mxu0 0.0
    %4963 = vmatprep.subr.mxu0 0.0
    %4964 = vmatpush2.msra.mxu0 0.0
    %4965 = vmatprep.subr.mxu0 0.0
    %4966 = vmatpush2.msra.mxu0 0.0
    %4967 = vmatprep.subr.mxu0 0.0
    %4968 = vmatpush2.msra.mxu0 0.0
    %4969 = vmatprep.subr.mxu0 0.0
    %4970 = vmatpush2.msra.mxu0 0.0
    %4971 = vmatprep.subr.mxu0 0.0
    %4972 = vmatpush2.msra.mxu0 0.0
    %4973 = vmatprep.mubr.f32.mxu0 0.0
    %v4974 = vand.u32 %v359, 4294901760
    %4975 = vmatmul.mubr.f32.gmra.mxu0 %v4974
    %v4976 = vpop.f32.mrf.mxu0
    %v4977 = vadd.f32 %v4841, %v4976
    %v4978 = vpop.f32.mrf.mxu0
    %v4979 = vadd.f32 %v4843, %v4978
    %4980 = vdwg.mxu0
    %4981 = vmatprep.subr.mxu0 0.0
    %4982 = vmatpush1.msra.mxu0 0.0
    %4983 = vmatprep.subr.mxu0 0.0
    %4984 = vmatpush1.msra.mxu0 0.0
    %4985 = vmatprep.subr.mxu0 0.0
    %4986 = vmatpush1.msra.mxu0 0.0
    %4987 = vmatprep.subr.mxu0 0.0
    %4988 = vmatpush1.msra.mxu0 0.0
    %4989 = vmatprep.subr.mxu0 0.0
    %4990 = vmatpush1.msra.mxu0 0.0
    %4991 = vmatprep.subr.mxu0 0.0
    %4992 = vmatpush1.msra.mxu0 0.0
    %4993 = vmatprep.subr.mxu0 0.0
    %4994 = vmatpush1.msra.mxu0 0.0
    %4995 = vmatprep.subr.mxu0 0.0
    %4996 = vmatpush1.msra.mxu0 0.0
    %v4997 = vsub.f32 %v348, %v348
    %4998 = vmatprep.subr.mxu0 %v4997
    %v4999 = vsub.f32 %v347, %v347
    %5000 = vmatpush1.msra.mxu0 %v4999
    %v5001 = vsub.f32 %v323, %v323
    %5002 = vmatprep.subr.mxu0 %v5001
    %v5003 = vsub.f32 %v322, %v322
    %5004 = vmatpush1.msra.mxu0 %v5003
    %v5005 = vsub.f32 %v298, %v298
    %5006 = vmatprep.subr.mxu0 %v5005
    %v5007 = vsub.f32 %v297, %v297
    %5008 = vmatpush1.msra.mxu0 %v5007
    %v5009 = vsub.f32 %v273, %v273
    %5010 = vmatprep.subr.mxu0 %v5009
    %v5011 = vsub.f32 %v272, %v272
    %5012 = vmatpush1.msra.mxu0 %v5011
    %v5013 = vsub.f32 %v248, %v248
    %5014 = vmatprep.subr.mxu0 %v5013
    %v5015 = vsub.f32 %v247, %v247
    %5016 = vmatpush1.msra.mxu0 %v5015
    %v5017 = vsub.f32 %v223, %v223
    %5018 = vmatprep.subr.mxu0 %v5017
    %v5019 = vsub.f32 %v222, %v222
    %5020 = vmatpush1.msra.mxu0 %v5019
    %v5021 = vsub.f32 %v198, %v198
    %5022 = vmatprep.subr.mxu0 %v5021
    %v5023 = vsub.f32 %v197, %v197
    %5024 = vmatpush1.msra.mxu0 %v5023
    %v5025 = vsub.f32 %v173, %v173
    %5026 = vmatprep.subr.mxu0 %v5025
    %v5027 = vsub.f32 %v172, %v172
    %5028 = vmatpush1.msra.mxu0 %v5027
    %5029 = vmatprep.subr.mxu0 0.0
    %5030 = vmatpush2.msra.mxu0 0.0
    %5031 = vmatprep.subr.mxu0 0.0
    %5032 = vmatpush2.msra.mxu0 0.0
    %5033 = vmatprep.subr.mxu0 0.0
    %5034 = vmatpush2.msra.mxu0 0.0
    %5035 = vmatprep.subr.mxu0 0.0
    %5036 = vmatpush2.msra.mxu0 0.0
    %5037 = vmatprep.subr.mxu0 0.0
    %5038 = vmatpush2.msra.mxu0 0.0
    %5039 = vmatprep.subr.mxu0 0.0
    %5040 = vmatpush2.msra.mxu0 0.0
    %5041 = vmatprep.subr.mxu0 0.0
    %5042 = vmatpush2.msra.mxu0 0.0
    %5043 = vmatprep.subr.mxu0 0.0
    %5044 = vmatpush2.msra.mxu0 0.0
    %5045 = vmatprep.subr.mxu0 0.0
    %5046 = vmatpush2.msra.mxu0 0.0
    %5047 = vmatprep.subr.mxu0 0.0
    %5048 = vmatpush2.msra.mxu0 0.0
    %5049 = vmatprep.subr.mxu0 0.0
    %5050 = vmatpush2.msra.mxu0 0.0
    %5051 = vmatprep.subr.mxu0 0.0
    %5052 = vmatpush2.msra.mxu0 0.0
    %5053 = vmatprep.subr.mxu0 0.0
    %5054 = vmatpush2.msra.mxu0 0.0
    %5055 = vmatprep.subr.mxu0 0.0
    %5056 = vmatpush2.msra.mxu0 0.0
    %5057 = vmatprep.subr.mxu0 0.0
    %5058 = vmatpush2.msra.mxu0 0.0
    %5059 = vmatprep.subr.mxu0 0.0
    %5060 = vmatpush2.msra.mxu0 0.0
    %5061 = vmatprep.mubr.f32.mxu0 0.0
    %v5062 = vand.u32 %v359, 4294901760
    %v5063 = vsub.f32 %v359, %v5062
    %5064 = vmatmul.mubr.f32.gmra.mxu0 %v5063
    %v5065 = vpop.f32.mrf.mxu0
    %v5066 = vadd.f32 %v4977, %v5065
    %v5067 = vpop.f32.mrf.mxu0
    %v5068 = vadd.f32 %v4979, %v5067
    %5069 = vdwg.mxu0
    %5070 = vmatprep.subr.mxu0 0.0
    %5071 = vmatpush1.msra.mxu0 0.0
    %5072 = vmatprep.subr.mxu0 0.0
    %5073 = vmatpush1.msra.mxu0 0.0
    %5074 = vmatprep.subr.mxu0 0.0
    %5075 = vmatpush1.msra.mxu0 0.0
    %5076 = vmatprep.subr.mxu0 0.0
    %5077 = vmatpush1.msra.mxu0 0.0
    %5078 = vmatprep.subr.mxu0 0.0
    %5079 = vmatpush1.msra.mxu0 0.0
    %5080 = vmatprep.subr.mxu0 0.0
    %5081 = vmatpush1.msra.mxu0 0.0
    %5082 = vmatprep.subr.mxu0 0.0
    %5083 = vmatpush1.msra.mxu0 0.0
    %5084 = vmatprep.subr.mxu0 0.0
    %5085 = vmatpush1.msra.mxu0 0.0
    %5086 = vmatprep.subr.mxu0 %v348
    %5087 = vmatpush1.msra.mxu0 %v347
    %5088 = vmatprep.subr.mxu0 %v323
    %5089 = vmatpush1.msra.mxu0 %v322
    %5090 = vmatprep.subr.mxu0 %v298
    %5091 = vmatpush1.msra.mxu0 %v297
    %5092 = vmatprep.subr.mxu0 %v273
    %5093 = vmatpush1.msra.mxu0 %v272
    %5094 = vmatprep.subr.mxu0 %v248
    %5095 = vmatpush1.msra.mxu0 %v247
    %5096 = vmatprep.subr.mxu0 %v223
    %5097 = vmatpush1.msra.mxu0 %v222
    %5098 = vmatprep.subr.mxu0 %v198
    %5099 = vmatpush1.msra.mxu0 %v197
    %5100 = vmatprep.subr.mxu0 %v173
    %5101 = vmatpush1.msra.mxu0 %v172
    %5102 = vmatprep.subr.mxu0 0.0
    %5103 = vmatpush2.msra.mxu0 0.0
    %5104 = vmatprep.subr.mxu0 0.0
    %5105 = vmatpush2.msra.mxu0 0.0
    %5106 = vmatprep.subr.mxu0 0.0
    %5107 = vmatpush2.msra.mxu0 0.0
    %5108 = vmatprep.subr.mxu0 0.0
    %5109 = vmatpush2.msra.mxu0 0.0
    %5110 = vmatprep.subr.mxu0 0.0
    %5111 = vmatpush2.msra.mxu0 0.0
    %5112 = vmatprep.subr.mxu0 0.0
    %5113 = vmatpush2.msra.mxu0 0.0
    %5114 = vmatprep.subr.mxu0 0.0
    %5115 = vmatpush2.msra.mxu0 0.0
    %5116 = vmatprep.subr.mxu0 0.0
    %5117 = vmatpush2.msra.mxu0 0.0
    %5118 = vmatprep.subr.mxu0 0.0
    %5119 = vmatpush2.msra.mxu0 0.0
    %5120 = vmatprep.subr.mxu0 0.0
    %5121 = vmatpush2.msra.mxu0 0.0
    %5122 = vmatprep.subr.mxu0 0.0
    %5123 = vmatpush2.msra.mxu0 0.0
    %5124 = vmatprep.subr.mxu0 0.0
    %5125 = vmatpush2.msra.mxu0 0.0
    %5126 = vmatprep.subr.mxu0 0.0
    %5127 = vmatpush2.msra.mxu0 0.0
    %5128 = vmatprep.subr.mxu0 0.0
    %5129 = vmatpush2.msra.mxu0 0.0
    %5130 = vmatprep.subr.mxu0 0.0
    %5131 = vmatpush2.msra.mxu0 0.0
    %5132 = vmatprep.subr.mxu0 0.0
    %5133 = vmatpush2.msra.mxu0 0.0
    %5134 = vmatprep.mubr.f32.mxu0 0.0
    %v5135 = vand.u32 %v359, 4294901760
    %v5136 = vsub.f32 %v359, %v5135
    %v5137 = vand.u32 %v5136, 4294901760
    %5138 = vmatmul.mubr.f32.gmra.mxu0 %v5137
    %v5139 = vpop.f32.mrf.mxu0
    %v5140 = vadd.f32 %v5066, %v5139
    %v5141 = vpop.f32.mrf.mxu0
    %v5142 = vadd.f32 %v5068, %v5141
    %5143 = vdwg.mxu0
    %5144 = vmatprep.subr.mxu0 0.0
    %5145 = vmatpush1.msra.mxu0 0.0
    %5146 = vmatprep.subr.mxu0 0.0
    %5147 = vmatpush1.msra.mxu0 0.0
    %5148 = vmatprep.subr.mxu0 0.0
    %5149 = vmatpush1.msra.mxu0 0.0
    %5150 = vmatprep.subr.mxu0 0.0
    %5151 = vmatpush1.msra.mxu0 0.0
    %5152 = vmatprep.subr.mxu0 0.0
    %5153 = vmatpush1.msra.mxu0 0.0
    %5154 = vmatprep.subr.mxu0 0.0
    %5155 = vmatpush1.msra.mxu0 0.0
    %5156 = vmatprep.subr.mxu0 0.0
    %5157 = vmatpush1.msra.mxu0 0.0
    %5158 = vmatprep.subr.mxu0 0.0
    %5159 = vmatpush1.msra.mxu0 0.0
    %v5160 = vsub.f32 %v348, %v348
    %v5161 = vand.u32 %v5160, 4294901760
    %5162 = vmatprep.subr.mxu0 %v5161
    %v5163 = vsub.f32 %v347, %v347
    %v5164 = vand.u32 %v5163, 4294901760
    %5165 = vmatpush1.msra.mxu0 %v5164
    %v5166 = vsub.f32 %v323, %v323
    %v5167 = vand.u32 %v5166, 4294901760
    %5168 = vmatprep.subr.mxu0 %v5167
    %v5169 = vsub.f32 %v322, %v322
    %v5170 = vand.u32 %v5169, 4294901760
    %5171 = vmatpush1.msra.mxu0 %v5170
    %v5172 = vsub.f32 %v298, %v298
    %v5173 = vand.u32 %v5172, 4294901760
    %5174 = vmatprep.subr.mxu0 %v5173
    %v5175 = vsub.f32 %v297, %v297
    %v5176 = vand.u32 %v5175, 4294901760
    %5177 = vmatpush1.msra.mxu0 %v5176
    %v5178 = vsub.f32 %v273, %v273
    %v5179 = vand.u32 %v5178, 4294901760
    %5180 = vmatprep.subr.mxu0 %v5179
    %v5181 = vsub.f32 %v272, %v272
    %v5182 = vand.u32 %v5181, 4294901760
    %5183 = vmatpush1.msra.mxu0 %v5182
    %v5184 = vsub.f32 %v248, %v248
    %v5185 = vand.u32 %v5184, 4294901760
    %5186 = vmatprep.subr.mxu0 %v5185
    %v5187 = vsub.f32 %v247, %v247
    %v5188 = vand.u32 %v5187, 4294901760
    %5189 = vmatpush1.msra.mxu0 %v5188
    %v5190 = vsub.f32 %v223, %v223
    %v5191 = vand.u32 %v5190, 4294901760
    %5192 = vmatprep.subr.mxu0 %v5191
    %v5193 = vsub.f32 %v222, %v222
    %v5194 = vand.u32 %v5193, 4294901760
    %5195 = vmatpush1.msra.mxu0 %v5194
    %v5196 = vsub.f32 %v198, %v198
    %v5197 = vand.u32 %v5196, 4294901760
    %5198 = vmatprep.subr.mxu0 %v5197
    %v5199 = vsub.f32 %v197, %v197
    %v5200 = vand.u32 %v5199, 4294901760
    %5201 = vmatpush1.msra.mxu0 %v5200
    %v5202 = vsub.f32 %v173, %v173
    %v5203 = vand.u32 %v5202, 4294901760
    %5204 = vmatprep.subr.mxu0 %v5203
    %v5205 = vsub.f32 %v172, %v172
    %v5206 = vand.u32 %v5205, 4294901760
    %5207 = vmatpush1.msra.mxu0 %v5206
    %5208 = vmatprep.subr.mxu0 0.0
    %5209 = vmatpush2.msra.mxu0 0.0
    %5210 = vmatprep.subr.mxu0 0.0
    %5211 = vmatpush2.msra.mxu0 0.0
    %5212 = vmatprep.subr.mxu0 0.0
    %5213 = vmatpush2.msra.mxu0 0.0
    %5214 = vmatprep.subr.mxu0 0.0
    %5215 = vmatpush2.msra.mxu0 0.0
    %5216 = vmatprep.subr.mxu0 0.0
    %5217 = vmatpush2.msra.mxu0 0.0
    %5218 = vmatprep.subr.mxu0 0.0
    %5219 = vmatpush2.msra.mxu0 0.0
    %5220 = vmatprep.subr.mxu0 0.0
    %5221 = vmatpush2.msra.mxu0 0.0
    %5222 = vmatprep.subr.mxu0 0.0
    %5223 = vmatpush2.msra.mxu0 0.0
    %5224 = vmatprep.subr.mxu0 0.0
    %5225 = vmatpush2.msra.mxu0 0.0
    %5226 = vmatprep.subr.mxu0 0.0
    %5227 = vmatpush2.msra.mxu0 0.0
    %5228 = vmatprep.subr.mxu0 0.0
    %5229 = vmatpush2.msra.mxu0 0.0
    %5230 = vmatprep.subr.mxu0 0.0
    %5231 = vmatpush2.msra.mxu0 0.0
    %5232 = vmatprep.subr.mxu0 0.0
    %5233 = vmatpush2.msra.mxu0 0.0
    %5234 = vmatprep.subr.mxu0 0.0
    %5235 = vmatpush2.msra.mxu0 0.0
    %5236 = vmatprep.subr.mxu0 0.0
    %5237 = vmatpush2.msra.mxu0 0.0
    %5238 = vmatprep.subr.mxu0 0.0
    %5239 = vmatpush2.msra.mxu0 0.0
    %5240 = vmatprep.mubr.f32.mxu0 0.0
    %v5241 = vand.u32 %v359, 4294901760
    %5242 = vmatmul.mubr.f32.gmra.mxu0 %v5241
    %v5243 = vpop.f32.mrf.mxu0
    %v5244 = vadd.f32 %v5140, %v5243
    %v5245 = vpop.f32.mrf.mxu0
    %v5246 = vadd.f32 %v5142, %v5245
    %5247 = vdwg.mxu0
    %5248 = vmatprep.subr.mxu0 0.0
    %5249 = vmatpush1.msra.mxu0 0.0
    %5250 = vmatprep.subr.mxu0 0.0
    %5251 = vmatpush1.msra.mxu0 0.0
    %5252 = vmatprep.subr.mxu0 0.0
    %5253 = vmatpush1.msra.mxu0 0.0
    %5254 = vmatprep.subr.mxu0 0.0
    %5255 = vmatpush1.msra.mxu0 0.0
    %5256 = vmatprep.subr.mxu0 0.0
    %5257 = vmatpush1.msra.mxu0 0.0
    %5258 = vmatprep.subr.mxu0 0.0
    %5259 = vmatpush1.msra.mxu0 0.0
    %5260 = vmatprep.subr.mxu0 0.0
    %5261 = vmatpush1.msra.mxu0 0.0
    %5262 = vmatprep.subr.mxu0 0.0
    %5263 = vmatpush1.msra.mxu0 0.0
    %5264 = vmatprep.subr.mxu0 %v348
    %5265 = vmatpush1.msra.mxu0 %v347
    %5266 = vmatprep.subr.mxu0 %v323
    %5267 = vmatpush1.msra.mxu0 %v322
    %5268 = vmatprep.subr.mxu0 %v298
    %5269 = vmatpush1.msra.mxu0 %v297
    %5270 = vmatprep.subr.mxu0 %v273
    %5271 = vmatpush1.msra.mxu0 %v272
    %5272 = vmatprep.subr.mxu0 %v248
    %5273 = vmatpush1.msra.mxu0 %v247
    %5274 = vmatprep.subr.mxu0 %v223
    %5275 = vmatpush1.msra.mxu0 %v222
    %5276 = vmatprep.subr.mxu0 %v198
    %5277 = vmatpush1.msra.mxu0 %v197
    %5278 = vmatprep.subr.mxu0 %v173
    %5279 = vmatpush1.msra.mxu0 %v172
    %5280 = vmatprep.subr.mxu0 0.0
    %5281 = vmatpush2.msra.mxu0 0.0
    %5282 = vmatprep.subr.mxu0 0.0
    %5283 = vmatpush2.msra.mxu0 0.0
    %5284 = vmatprep.subr.mxu0 0.0
    %5285 = vmatpush2.msra.mxu0 0.0
    %5286 = vmatprep.subr.mxu0 0.0
    %5287 = vmatpush2.msra.mxu0 0.0
    %5288 = vmatprep.subr.mxu0 0.0
    %5289 = vmatpush2.msra.mxu0 0.0
    %5290 = vmatprep.subr.mxu0 0.0
    %5291 = vmatpush2.msra.mxu0 0.0
    %5292 = vmatprep.subr.mxu0 0.0
    %5293 = vmatpush2.msra.mxu0 0.0
    %5294 = vmatprep.subr.mxu0 0.0
    %5295 = vmatpush2.msra.mxu0 0.0
    %5296 = vmatprep.subr.mxu0 0.0
    %5297 = vmatpush2.msra.mxu0 0.0
    %5298 = vmatprep.subr.mxu0 0.0
    %5299 = vmatpush2.msra.mxu0 0.0
    %5300 = vmatprep.subr.mxu0 0.0
    %5301 = vmatpush2.msra.mxu0 0.0
    %5302 = vmatprep.subr.mxu0 0.0
    %5303 = vmatpush2.msra.mxu0 0.0
    %5304 = vmatprep.subr.mxu0 0.0
    %5305 = vmatpush2.msra.mxu0 0.0
    %5306 = vmatprep.subr.mxu0 0.0
    %5307 = vmatpush2.msra.mxu0 0.0
    %5308 = vmatprep.subr.mxu0 0.0
    %5309 = vmatpush2.msra.mxu0 0.0
    %5310 = vmatprep.subr.mxu0 0.0
    %5311 = vmatpush2.msra.mxu0 0.0
    %5312 = vmatprep.mubr.f32.mxu0 0.0
    %v5313 = vand.u32 %v359, 4294901760
    %5314 = vmatmul.mubr.f32.gmra.mxu0 %v5313
    %v5315 = vpop.f32.mrf.mxu0
    %v5316 = vadd.f32 %v5244, %v5315
    %v5317 = vpop.f32.mrf.mxu0
    %v5318 = vadd.f32 %v5246, %v5317
    %5319 = vdwg.mxu0
    %5320 = vmatprep.subr.mxu0 0.0
    %5321 = vmatpush1.msra.mxu0 0.0
    %5322 = vmatprep.subr.mxu0 0.0
    %5323 = vmatpush1.msra.mxu0 0.0
    %5324 = vmatprep.subr.mxu0 0.0
    %5325 = vmatpush1.msra.mxu0 0.0
    %5326 = vmatprep.subr.mxu0 0.0
    %5327 = vmatpush1.msra.mxu0 0.0
    %5328 = vmatprep.subr.mxu0 0.0
    %5329 = vmatpush1.msra.mxu0 0.0
    %5330 = vmatprep.subr.mxu0 0.0
    %5331 = vmatpush1.msra.mxu0 0.0
    %5332 = vmatprep.subr.mxu0 0.0
    %5333 = vmatpush1.msra.mxu0 0.0
    %5334 = vmatprep.subr.mxu0 0.0
    %5335 = vmatpush1.msra.mxu0 0.0
    %5336 = vmatprep.subr.mxu0 %v350
    %5337 = vmatpush1.msra.mxu0 %v349
    %5338 = vmatprep.subr.mxu0 %v325
    %5339 = vmatpush1.msra.mxu0 %v324
    %5340 = vmatprep.subr.mxu0 %v300
    %5341 = vmatpush1.msra.mxu0 %v299
    %5342 = vmatprep.subr.mxu0 %v275
    %5343 = vmatpush1.msra.mxu0 %v274
    %5344 = vmatprep.subr.mxu0 %v250
    %5345 = vmatpush1.msra.mxu0 %v249
    %5346 = vmatprep.subr.mxu0 %v225
    %5347 = vmatpush1.msra.mxu0 %v224
    %5348 = vmatprep.subr.mxu0 %v200
    %5349 = vmatpush1.msra.mxu0 %v199
    %5350 = vmatprep.subr.mxu0 %v175
    %5351 = vmatpush1.msra.mxu0 %v174
    %5352 = vmatprep.subr.mxu0 0.0
    %5353 = vmatpush2.msra.mxu0 0.0
    %5354 = vmatprep.subr.mxu0 0.0
    %5355 = vmatpush2.msra.mxu0 0.0
    %5356 = vmatprep.subr.mxu0 0.0
    %5357 = vmatpush2.msra.mxu0 0.0
    %5358 = vmatprep.subr.mxu0 0.0
    %5359 = vmatpush2.msra.mxu0 0.0
    %5360 = vmatprep.subr.mxu0 0.0
    %5361 = vmatpush2.msra.mxu0 0.0
    %5362 = vmatprep.subr.mxu0 0.0
    %5363 = vmatpush2.msra.mxu0 0.0
    %5364 = vmatprep.subr.mxu0 0.0
    %5365 = vmatpush2.msra.mxu0 0.0
    %5366 = vmatprep.subr.mxu0 0.0
    %5367 = vmatpush2.msra.mxu0 0.0
    %5368 = vmatprep.subr.mxu0 0.0
    %5369 = vmatpush2.msra.mxu0 0.0
    %5370 = vmatprep.subr.mxu0 0.0
    %5371 = vmatpush2.msra.mxu0 0.0
    %5372 = vmatprep.subr.mxu0 0.0
    %5373 = vmatpush2.msra.mxu0 0.0
    %5374 = vmatprep.subr.mxu0 0.0
    %5375 = vmatpush2.msra.mxu0 0.0
    %5376 = vmatprep.subr.mxu0 0.0
    %5377 = vmatpush2.msra.mxu0 0.0
    %5378 = vmatprep.subr.mxu0 0.0
    %5379 = vmatpush2.msra.mxu0 0.0
    %5380 = vmatprep.subr.mxu0 0.0
    %5381 = vmatpush2.msra.mxu0 0.0
    %5382 = vmatprep.subr.mxu0 0.0
    %5383 = vmatpush2.msra.mxu0 0.0
    %5384 = vmatprep.mubr.f32.mxu0 0.0
    %v5385 = vand.u32 %v359, 4294901760
    %v5386 = vsub.f32 %v359, %v5385
    %v5387 = vand.u32 %v5386, 4294901760
    %v5388 = vsub.f32 %v5386, %v5387
    %v5389 = vand.u32 %v5388, 4294901760
    %5390 = vmatmul.mubr.f32.gmra.mxu0 %v5389
    %v5391 = vpop.f32.mrf.mxu0
    %v5392 = vadd.f32 0.0, %v5391
    %v5393 = vpop.f32.mrf.mxu0
    %v5394 = vadd.f32 0.0, %v5393
    %5395 = vdwg.mxu0
    %5396 = vmatprep.subr.mxu0 0.0
    %5397 = vmatpush1.msra.mxu0 0.0
    %5398 = vmatprep.subr.mxu0 0.0
    %5399 = vmatpush1.msra.mxu0 0.0
    %5400 = vmatprep.subr.mxu0 0.0
    %5401 = vmatpush1.msra.mxu0 0.0
    %5402 = vmatprep.subr.mxu0 0.0
    %5403 = vmatpush1.msra.mxu0 0.0
    %5404 = vmatprep.subr.mxu0 0.0
    %5405 = vmatpush1.msra.mxu0 0.0
    %5406 = vmatprep.subr.mxu0 0.0
    %5407 = vmatpush1.msra.mxu0 0.0
    %5408 = vmatprep.subr.mxu0 0.0
    %5409 = vmatpush1.msra.mxu0 0.0
    %5410 = vmatprep.subr.mxu0 0.0
    %5411 = vmatpush1.msra.mxu0 0.0
    %v5412 = vsub.f32 %v350, %v350
    %v5413 = vand.u32 %v5412, 4294901760
    %v5414 = vsub.f32 %v5412, %v5413
    %v5415 = vand.u32 %v5414, 4294901760
    %5416 = vmatprep.subr.mxu0 %v5415
    %v5417 = vsub.f32 %v349, %v349
    %v5418 = vand.u32 %v5417, 4294901760
    %v5419 = vsub.f32 %v5417, %v5418
    %v5420 = vand.u32 %v5419, 4294901760
    %5421 = vmatpush1.msra.mxu0 %v5420
    %v5422 = vsub.f32 %v325, %v325
    %v5423 = vand.u32 %v5422, 4294901760
    %v5424 = vsub.f32 %v5422, %v5423
    %v5425 = vand.u32 %v5424, 4294901760
    %5426 = vmatprep.subr.mxu0 %v5425
    %v5427 = vsub.f32 %v324, %v324
    %v5428 = vand.u32 %v5427, 4294901760
    %v5429 = vsub.f32 %v5427, %v5428
    %v5430 = vand.u32 %v5429, 4294901760
    %5431 = vmatpush1.msra.mxu0 %v5430
    %v5432 = vsub.f32 %v300, %v300
    %v5433 = vand.u32 %v5432, 4294901760
    %v5434 = vsub.f32 %v5432, %v5433
    %v5435 = vand.u32 %v5434, 4294901760
    %5436 = vmatprep.subr.mxu0 %v5435
    %v5437 = vsub.f32 %v299, %v299
    %v5438 = vand.u32 %v5437, 4294901760
    %v5439 = vsub.f32 %v5437, %v5438
    %v5440 = vand.u32 %v5439, 4294901760
    %5441 = vmatpush1.msra.mxu0 %v5440
    %v5442 = vsub.f32 %v275, %v275
    %v5443 = vand.u32 %v5442, 4294901760
    %v5444 = vsub.f32 %v5442, %v5443
    %v5445 = vand.u32 %v5444, 4294901760
    %5446 = vmatprep.subr.mxu0 %v5445
    %v5447 = vsub.f32 %v274, %v274
    %v5448 = vand.u32 %v5447, 4294901760
    %v5449 = vsub.f32 %v5447, %v5448
    %v5450 = vand.u32 %v5449, 4294901760
    %5451 = vmatpush1.msra.mxu0 %v5450
    %v5452 = vsub.f32 %v250, %v250
    %v5453 = vand.u32 %v5452, 4294901760
    %v5454 = vsub.f32 %v5452, %v5453
    %v5455 = vand.u32 %v5454, 4294901760
    %5456 = vmatprep.subr.mxu0 %v5455
    %v5457 = vsub.f32 %v249, %v249
    %v5458 = vand.u32 %v5457, 4294901760
    %v5459 = vsub.f32 %v5457, %v5458
    %v5460 = vand.u32 %v5459, 4294901760
    %5461 = vmatpush1.msra.mxu0 %v5460
    %v5462 = vsub.f32 %v225, %v225
    %v5463 = vand.u32 %v5462, 4294901760
    %v5464 = vsub.f32 %v5462, %v5463
    %v5465 = vand.u32 %v5464, 4294901760
    %5466 = vmatprep.subr.mxu0 %v5465
    %v5467 = vsub.f32 %v224, %v224
    %v5468 = vand.u32 %v5467, 4294901760
    %v5469 = vsub.f32 %v5467, %v5468
    %v5470 = vand.u32 %v5469, 4294901760
    %5471 = vmatpush1.msra.mxu0 %v5470
    %v5472 = vsub.f32 %v200, %v200
    %v5473 = vand.u32 %v5472, 4294901760
    %v5474 = vsub.f32 %v5472, %v5473
    %v5475 = vand.u32 %v5474, 4294901760
    %5476 = vmatprep.subr.mxu0 %v5475
    %v5477 = vsub.f32 %v199, %v199
    %v5478 = vand.u32 %v5477, 4294901760
    %v5479 = vsub.f32 %v5477, %v5478
    %v5480 = vand.u32 %v5479, 4294901760
    %5481 = vmatpush1.msra.mxu0 %v5480
    %v5482 = vsub.f32 %v175, %v175
    %v5483 = vand.u32 %v5482, 4294901760
    %v5484 = vsub.f32 %v5482, %v5483
    %v5485 = vand.u32 %v5484, 4294901760
    %5486 = vmatprep.subr.mxu0 %v5485
    %v5487 = vsub.f32 %v174, %v174
    %v5488 = vand.u32 %v5487, 4294901760
    %v5489 = vsub.f32 %v5487, %v5488
    %v5490 = vand.u32 %v5489, 4294901760
    %5491 = vmatpush1.msra.mxu0 %v5490
    %5492 = vmatprep.subr.mxu0 0.0
    %5493 = vmatpush2.msra.mxu0 0.0
    %5494 = vmatprep.subr.mxu0 0.0
    %5495 = vmatpush2.msra.mxu0 0.0
    %5496 = vmatprep.subr.mxu0 0.0
    %5497 = vmatpush2.msra.mxu0 0.0
    %5498 = vmatprep.subr.mxu0 0.0
    %5499 = vmatpush2.msra.mxu0 0.0
    %5500 = vmatprep.subr.mxu0 0.0
    %5501 = vmatpush2.msra.mxu0 0.0
    %5502 = vmatprep.subr.mxu0 0.0
    %5503 = vmatpush2.msra.mxu0 0.0
    %5504 = vmatprep.subr.mxu0 0.0
    %5505 = vmatpush2.msra.mxu0 0.0
    %5506 = vmatprep.subr.mxu0 0.0
    %5507 = vmatpush2.msra.mxu0 0.0
    %5508 = vmatprep.subr.mxu0 0.0
    %5509 = vmatpush2.msra.mxu0 0.0
    %5510 = vmatprep.subr.mxu0 0.0
    %5511 = vmatpush2.msra.mxu0 0.0
    %5512 = vmatprep.subr.mxu0 0.0
    %5513 = vmatpush2.msra.mxu0 0.0
    %5514 = vmatprep.subr.mxu0 0.0
    %5515 = vmatpush2.msra.mxu0 0.0
    %5516 = vmatprep.subr.mxu0 0.0
    %5517 = vmatpush2.msra.mxu0 0.0
    %5518 = vmatprep.subr.mxu0 0.0
    %5519 = vmatpush2.msra.mxu0 0.0
    %5520 = vmatprep.subr.mxu0 0.0
    %5521 = vmatpush2.msra.mxu0 0.0
    %5522 = vmatprep.subr.mxu0 0.0
    %5523 = vmatpush2.msra.mxu0 0.0
    %5524 = vmatprep.mubr.f32.mxu0 0.0
    %v5525 = vand.u32 %v359, 4294901760
    %5526 = vmatmul.mubr.f32.gmra.mxu0 %v5525
    %v5527 = vpop.f32.mrf.mxu0
    %v5528 = vadd.f32 %v5392, %v5527
    %v5529 = vpop.f32.mrf.mxu0
    %v5530 = vadd.f32 %v5394, %v5529
    %5531 = vdwg.mxu0
    %5532 = vmatprep.subr.mxu0 0.0
    %5533 = vmatpush1.msra.mxu0 0.0
    %5534 = vmatprep.subr.mxu0 0.0
    %5535 = vmatpush1.msra.mxu0 0.0
    %5536 = vmatprep.subr.mxu0 0.0
    %5537 = vmatpush1.msra.mxu0 0.0
    %5538 = vmatprep.subr.mxu0 0.0
    %5539 = vmatpush1.msra.mxu0 0.0
    %5540 = vmatprep.subr.mxu0 0.0
    %5541 = vmatpush1.msra.mxu0 0.0
    %5542 = vmatprep.subr.mxu0 0.0
    %5543 = vmatpush1.msra.mxu0 0.0
    %5544 = vmatprep.subr.mxu0 0.0
    %5545 = vmatpush1.msra.mxu0 0.0
    %5546 = vmatprep.subr.mxu0 0.0
    %5547 = vmatpush1.msra.mxu0 0.0
    %v5548 = vsub.f32 %v350, %v350
    %5549 = vmatprep.subr.mxu0 %v5548
    %v5550 = vsub.f32 %v349, %v349
    %5551 = vmatpush1.msra.mxu0 %v5550
    %v5552 = vsub.f32 %v325, %v325
    %5553 = vmatprep.subr.mxu0 %v5552
    %v5554 = vsub.f32 %v324, %v324
    %5555 = vmatpush1.msra.mxu0 %v5554
    %v5556 = vsub.f32 %v300, %v300
    %5557 = vmatprep.subr.mxu0 %v5556
    %v5558 = vsub.f32 %v299, %v299
    %5559 = vmatpush1.msra.mxu0 %v5558
    %v5560 = vsub.f32 %v275, %v275
    %5561 = vmatprep.subr.mxu0 %v5560
    %v5562 = vsub.f32 %v274, %v274
    %5563 = vmatpush1.msra.mxu0 %v5562
    %v5564 = vsub.f32 %v250, %v250
    %5565 = vmatprep.subr.mxu0 %v5564
    %v5566 = vsub.f32 %v249, %v249
    %5567 = vmatpush1.msra.mxu0 %v5566
    %v5568 = vsub.f32 %v225, %v225
    %5569 = vmatprep.subr.mxu0 %v5568
    %v5570 = vsub.f32 %v224, %v224
    %5571 = vmatpush1.msra.mxu0 %v5570
    %v5572 = vsub.f32 %v200, %v200
    %5573 = vmatprep.subr.mxu0 %v5572
    %v5574 = vsub.f32 %v199, %v199
    %5575 = vmatpush1.msra.mxu0 %v5574
    %v5576 = vsub.f32 %v175, %v175
    %5577 = vmatprep.subr.mxu0 %v5576
    %v5578 = vsub.f32 %v174, %v174
    %5579 = vmatpush1.msra.mxu0 %v5578
    %5580 = vmatprep.subr.mxu0 0.0
    %5581 = vmatpush2.msra.mxu0 0.0
    %5582 = vmatprep.subr.mxu0 0.0
    %5583 = vmatpush2.msra.mxu0 0.0
    %5584 = vmatprep.subr.mxu0 0.0
    %5585 = vmatpush2.msra.mxu0 0.0
    %5586 = vmatprep.subr.mxu0 0.0
    %5587 = vmatpush2.msra.mxu0 0.0
    %5588 = vmatprep.subr.mxu0 0.0
    %5589 = vmatpush2.msra.mxu0 0.0
    %5590 = vmatprep.subr.mxu0 0.0
    %5591 = vmatpush2.msra.mxu0 0.0
    %5592 = vmatprep.subr.mxu0 0.0
    %5593 = vmatpush2.msra.mxu0 0.0
    %5594 = vmatprep.subr.mxu0 0.0
    %5595 = vmatpush2.msra.mxu0 0.0
    %5596 = vmatprep.subr.mxu0 0.0
    %5597 = vmatpush2.msra.mxu0 0.0
    %5598 = vmatprep.subr.mxu0 0.0
    %5599 = vmatpush2.msra.mxu0 0.0
    %5600 = vmatprep.subr.mxu0 0.0
    %5601 = vmatpush2.msra.mxu0 0.0
    %5602 = vmatprep.subr.mxu0 0.0
    %5603 = vmatpush2.msra.mxu0 0.0
    %5604 = vmatprep.subr.mxu0 0.0
    %5605 = vmatpush2.msra.mxu0 0.0
    %5606 = vmatprep.subr.mxu0 0.0
    %5607 = vmatpush2.msra.mxu0 0.0
    %5608 = vmatprep.subr.mxu0 0.0
    %5609 = vmatpush2.msra.mxu0 0.0
    %5610 = vmatprep.subr.mxu0 0.0
    %5611 = vmatpush2.msra.mxu0 0.0
    %5612 = vmatprep.mubr.f32.mxu0 0.0
    %v5613 = vand.u32 %v359, 4294901760
    %v5614 = vsub.f32 %v359, %v5613
    %5615 = vmatmul.mubr.f32.gmra.mxu0 %v5614
    %v5616 = vpop.f32.mrf.mxu0
    %v5617 = vadd.f32 %v5528, %v5616
    %v5618 = vpop.f32.mrf.mxu0
    %v5619 = vadd.f32 %v5530, %v5618
    %5620 = vdwg.mxu0
    %5621 = vmatprep.subr.mxu0 0.0
    %5622 = vmatpush1.msra.mxu0 0.0
    %5623 = vmatprep.subr.mxu0 0.0
    %5624 = vmatpush1.msra.mxu0 0.0
    %5625 = vmatprep.subr.mxu0 0.0
    %5626 = vmatpush1.msra.mxu0 0.0
    %5627 = vmatprep.subr.mxu0 0.0
    %5628 = vmatpush1.msra.mxu0 0.0
    %5629 = vmatprep.subr.mxu0 0.0
    %5630 = vmatpush1.msra.mxu0 0.0
    %5631 = vmatprep.subr.mxu0 0.0
    %5632 = vmatpush1.msra.mxu0 0.0
    %5633 = vmatprep.subr.mxu0 0.0
    %5634 = vmatpush1.msra.mxu0 0.0
    %5635 = vmatprep.subr.mxu0 0.0
    %5636 = vmatpush1.msra.mxu0 0.0
    %5637 = vmatprep.subr.mxu0 %v350
    %5638 = vmatpush1.msra.mxu0 %v349
    %5639 = vmatprep.subr.mxu0 %v325
    %5640 = vmatpush1.msra.mxu0 %v324
    %5641 = vmatprep.subr.mxu0 %v300
    %5642 = vmatpush1.msra.mxu0 %v299
    %5643 = vmatprep.subr.mxu0 %v275
    %5644 = vmatpush1.msra.mxu0 %v274
    %5645 = vmatprep.subr.mxu0 %v250
    %5646 = vmatpush1.msra.mxu0 %v249
    %5647 = vmatprep.subr.mxu0 %v225
    %5648 = vmatpush1.msra.mxu0 %v224
    %5649 = vmatprep.subr.mxu0 %v200
    %5650 = vmatpush1.msra.mxu0 %v199
    %5651 = vmatprep.subr.mxu0 %v175
    %5652 = vmatpush1.msra.mxu0 %v174
    %5653 = vmatprep.subr.mxu0 0.0
    %5654 = vmatpush2.msra.mxu0 0.0
    %5655 = vmatprep.subr.mxu0 0.0
    %5656 = vmatpush2.msra.mxu0 0.0
    %5657 = vmatprep.subr.mxu0 0.0
    %5658 = vmatpush2.msra.mxu0 0.0
    %5659 = vmatprep.subr.mxu0 0.0
    %5660 = vmatpush2.msra.mxu0 0.0
    %5661 = vmatprep.subr.mxu0 0.0
    %5662 = vmatpush2.msra.mxu0 0.0
    %5663 = vmatprep.subr.mxu0 0.0
    %5664 = vmatpush2.msra.mxu0 0.0
    %5665 = vmatprep.subr.mxu0 0.0
    %5666 = vmatpush2.msra.mxu0 0.0
    %5667 = vmatprep.subr.mxu0 0.0
    %5668 = vmatpush2.msra.mxu0 0.0
    %5669 = vmatprep.subr.mxu0 0.0
    %5670 = vmatpush2.msra.mxu0 0.0
    %5671 = vmatprep.subr.mxu0 0.0
    %5672 = vmatpush2.msra.mxu0 0.0
    %5673 = vmatprep.subr.mxu0 0.0
    %5674 = vmatpush2.msra.mxu0 0.0
    %5675 = vmatprep.subr.mxu0 0.0
    %5676 = vmatpush2.msra.mxu0 0.0
    %5677 = vmatprep.subr.mxu0 0.0
    %5678 = vmatpush2.msra.mxu0 0.0
    %5679 = vmatprep.subr.mxu0 0.0
    %5680 = vmatpush2.msra.mxu0 0.0
    %5681 = vmatprep.subr.mxu0 0.0
    %5682 = vmatpush2.msra.mxu0 0.0
    %5683 = vmatprep.subr.mxu0 0.0
    %5684 = vmatpush2.msra.mxu0 0.0
    %5685 = vmatprep.mubr.f32.mxu0 0.0
    %v5686 = vand.u32 %v359, 4294901760
    %v5687 = vsub.f32 %v359, %v5686
    %v5688 = vand.u32 %v5687, 4294901760
    %5689 = vmatmul.mubr.f32.gmra.mxu0 %v5688
    %v5690 = vpop.f32.mrf.mxu0
    %v5691 = vadd.f32 %v5617, %v5690
    %v5692 = vpop.f32.mrf.mxu0
    %v5693 = vadd.f32 %v5619, %v5692
    %5694 = vdwg.mxu0
    %5695 = vmatprep.subr.mxu0 0.0
    %5696 = vmatpush1.msra.mxu0 0.0
    %5697 = vmatprep.subr.mxu0 0.0
    %5698 = vmatpush1.msra.mxu0 0.0
    %5699 = vmatprep.subr.mxu0 0.0
    %5700 = vmatpush1.msra.mxu0 0.0
    %5701 = vmatprep.subr.mxu0 0.0
    %5702 = vmatpush1.msra.mxu0 0.0
    %5703 = vmatprep.subr.mxu0 0.0
    %5704 = vmatpush1.msra.mxu0 0.0
    %5705 = vmatprep.subr.mxu0 0.0
    %5706 = vmatpush1.msra.mxu0 0.0
    %5707 = vmatprep.subr.mxu0 0.0
    %5708 = vmatpush1.msra.mxu0 0.0
    %5709 = vmatprep.subr.mxu0 0.0
    %5710 = vmatpush1.msra.mxu0 0.0
    %v5711 = vsub.f32 %v350, %v350
    %v5712 = vand.u32 %v5711, 4294901760
    %5713 = vmatprep.subr.mxu0 %v5712
    %v5714 = vsub.f32 %v349, %v349
    %v5715 = vand.u32 %v5714, 4294901760
    %5716 = vmatpush1.msra.mxu0 %v5715
    %v5717 = vsub.f32 %v325, %v325
    %v5718 = vand.u32 %v5717, 4294901760
    %5719 = vmatprep.subr.mxu0 %v5718
    %v5720 = vsub.f32 %v324, %v324
    %v5721 = vand.u32 %v5720, 4294901760
    %5722 = vmatpush1.msra.mxu0 %v5721
    %v5723 = vsub.f32 %v300, %v300
    %v5724 = vand.u32 %v5723, 4294901760
    %5725 = vmatprep.subr.mxu0 %v5724
    %v5726 = vsub.f32 %v299, %v299
    %v5727 = vand.u32 %v5726, 4294901760
    %5728 = vmatpush1.msra.mxu0 %v5727
    %v5729 = vsub.f32 %v275, %v275
    %v5730 = vand.u32 %v5729, 4294901760
    %5731 = vmatprep.subr.mxu0 %v5730
    %v5732 = vsub.f32 %v274, %v274
    %v5733 = vand.u32 %v5732, 4294901760
    %5734 = vmatpush1.msra.mxu0 %v5733
    %v5735 = vsub.f32 %v250, %v250
    %v5736 = vand.u32 %v5735, 4294901760
    %5737 = vmatprep.subr.mxu0 %v5736
    %v5738 = vsub.f32 %v249, %v249
    %v5739 = vand.u32 %v5738, 4294901760
    %5740 = vmatpush1.msra.mxu0 %v5739
    %v5741 = vsub.f32 %v225, %v225
    %v5742 = vand.u32 %v5741, 4294901760
    %5743 = vmatprep.subr.mxu0 %v5742
    %v5744 = vsub.f32 %v224, %v224
    %v5745 = vand.u32 %v5744, 4294901760
    %5746 = vmatpush1.msra.mxu0 %v5745
    %v5747 = vsub.f32 %v200, %v200
    %v5748 = vand.u32 %v5747, 4294901760
    %5749 = vmatprep.subr.mxu0 %v5748
    %v5750 = vsub.f32 %v199, %v199
    %v5751 = vand.u32 %v5750, 4294901760
    %5752 = vmatpush1.msra.mxu0 %v5751
    %v5753 = vsub.f32 %v175, %v175
    %v5754 = vand.u32 %v5753, 4294901760
    %5755 = vmatprep.subr.mxu0 %v5754
    %v5756 = vsub.f32 %v174, %v174
    %v5757 = vand.u32 %v5756, 4294901760
    %5758 = vmatpush1.msra.mxu0 %v5757
    %5759 = vmatprep.subr.mxu0 0.0
    %5760 = vmatpush2.msra.mxu0 0.0
    %5761 = vmatprep.subr.mxu0 0.0
    %5762 = vmatpush2.msra.mxu0 0.0
    %5763 = vmatprep.subr.mxu0 0.0
    %5764 = vmatpush2.msra.mxu0 0.0
    %5765 = vmatprep.subr.mxu0 0.0
    %5766 = vmatpush2.msra.mxu0 0.0
    %5767 = vmatprep.subr.mxu0 0.0
    %5768 = vmatpush2.msra.mxu0 0.0
    %5769 = vmatprep.subr.mxu0 0.0
    %5770 = vmatpush2.msra.mxu0 0.0
    %5771 = vmatprep.subr.mxu0 0.0
    %5772 = vmatpush2.msra.mxu0 0.0
    %5773 = vmatprep.subr.mxu0 0.0
    %5774 = vmatpush2.msra.mxu0 0.0
    %5775 = vmatprep.subr.mxu0 0.0
    %5776 = vmatpush2.msra.mxu0 0.0
    %5777 = vmatprep.subr.mxu0 0.0
    %5778 = vmatpush2.msra.mxu0 0.0
    %5779 = vmatprep.subr.mxu0 0.0
    %5780 = vmatpush2.msra.mxu0 0.0
    %5781 = vmatprep.subr.mxu0 0.0
    %5782 = vmatpush2.msra.mxu0 0.0
    %5783 = vmatprep.subr.mxu0 0.0
    %5784 = vmatpush2.msra.mxu0 0.0
    %5785 = vmatprep.subr.mxu0 0.0
    %5786 = vmatpush2.msra.mxu0 0.0
    %5787 = vmatprep.subr.mxu0 0.0
    %5788 = vmatpush2.msra.mxu0 0.0
    %5789 = vmatprep.subr.mxu0 0.0
    %5790 = vmatpush2.msra.mxu0 0.0
    %5791 = vmatprep.mubr.f32.mxu0 0.0
    %v5792 = vand.u32 %v359, 4294901760
    %5793 = vmatmul.mubr.f32.gmra.mxu0 %v5792
    %v5794 = vpop.f32.mrf.mxu0
    %v5795 = vadd.f32 %v5691, %v5794
    %v5796 = vpop.f32.mrf.mxu0
    %v5797 = vadd.f32 %v5693, %v5796
    %5798 = vdwg.mxu0
    %5799 = vmatprep.subr.mxu0 0.0
    %5800 = vmatpush1.msra.mxu0 0.0
    %5801 = vmatprep.subr.mxu0 0.0
    %5802 = vmatpush1.msra.mxu0 0.0
    %5803 = vmatprep.subr.mxu0 0.0
    %5804 = vmatpush1.msra.mxu0 0.0
    %5805 = vmatprep.subr.mxu0 0.0
    %5806 = vmatpush1.msra.mxu0 0.0
    %5807 = vmatprep.subr.mxu0 0.0
    %5808 = vmatpush1.msra.mxu0 0.0
    %5809 = vmatprep.subr.mxu0 0.0
    %5810 = vmatpush1.msra.mxu0 0.0
    %5811 = vmatprep.subr.mxu0 0.0
    %5812 = vmatpush1.msra.mxu0 0.0
    %5813 = vmatprep.subr.mxu0 0.0
    %5814 = vmatpush1.msra.mxu0 0.0
    %5815 = vmatprep.subr.mxu0 %v350
    %5816 = vmatpush1.msra.mxu0 %v349
    %5817 = vmatprep.subr.mxu0 %v325
    %5818 = vmatpush1.msra.mxu0 %v324
    %5819 = vmatprep.subr.mxu0 %v300
    %5820 = vmatpush1.msra.mxu0 %v299
    %5821 = vmatprep.subr.mxu0 %v275
    %5822 = vmatpush1.msra.mxu0 %v274
    %5823 = vmatprep.subr.mxu0 %v250
    %5824 = vmatpush1.msra.mxu0 %v249
    %5825 = vmatprep.subr.mxu0 %v225
    %5826 = vmatpush1.msra.mxu0 %v224
    %5827 = vmatprep.subr.mxu0 %v200
    %5828 = vmatpush1.msra.mxu0 %v199
    %5829 = vmatprep.subr.mxu0 %v175
    %5830 = vmatpush1.msra.mxu0 %v174
    %5831 = vmatprep.subr.mxu0 0.0
    %5832 = vmatpush2.msra.mxu0 0.0
    %5833 = vmatprep.subr.mxu0 0.0
    %5834 = vmatpush2.msra.mxu0 0.0
    %5835 = vmatprep.subr.mxu0 0.0
    %5836 = vmatpush2.msra.mxu0 0.0
    %5837 = vmatprep.subr.mxu0 0.0
    %5838 = vmatpush2.msra.mxu0 0.0
    %5839 = vmatprep.subr.mxu0 0.0
    %5840 = vmatpush2.msra.mxu0 0.0
    %5841 = vmatprep.subr.mxu0 0.0
    %5842 = vmatpush2.msra.mxu0 0.0
    %5843 = vmatprep.subr.mxu0 0.0
    %5844 = vmatpush2.msra.mxu0 0.0
    %5845 = vmatprep.subr.mxu0 0.0
    %5846 = vmatpush2.msra.mxu0 0.0
    %5847 = vmatprep.subr.mxu0 0.0
    %5848 = vmatpush2.msra.mxu0 0.0
    %5849 = vmatprep.subr.mxu0 0.0
    %5850 = vmatpush2.msra.mxu0 0.0
    %5851 = vmatprep.subr.mxu0 0.0
    %5852 = vmatpush2.msra.mxu0 0.0
    %5853 = vmatprep.subr.mxu0 0.0
    %5854 = vmatpush2.msra.mxu0 0.0
    %5855 = vmatprep.subr.mxu0 0.0
    %5856 = vmatpush2.msra.mxu0 0.0
    %5857 = vmatprep.subr.mxu0 0.0
    %5858 = vmatpush2.msra.mxu0 0.0
    %5859 = vmatprep.subr.mxu0 0.0
    %5860 = vmatpush2.msra.mxu0 0.0
    %5861 = vmatprep.subr.mxu0 0.0
    %5862 = vmatpush2.msra.mxu0 0.0
    %5863 = vmatprep.mubr.f32.mxu0 0.0
    %v5864 = vand.u32 %v359, 4294901760
    %5865 = vmatmul.mubr.f32.gmra.mxu0 %v5864
    %v5866 = vpop.f32.mrf.mxu0
    %v5867 = vadd.f32 %v5795, %v5866
    %v5868 = vpop.f32.mrf.mxu0
    %v5869 = vadd.f32 %v5797, %v5868
    %5870 = vdwg.mxu0
    %5871 = vmatprep.subr.mxu0 0.0
    %5872 = vmatpush1.msra.mxu0 0.0
    %5873 = vmatprep.subr.mxu0 0.0
    %5874 = vmatpush1.msra.mxu0 0.0
    %5875 = vmatprep.subr.mxu0 0.0
    %5876 = vmatpush1.msra.mxu0 0.0
    %5877 = vmatprep.subr.mxu0 0.0
    %5878 = vmatpush1.msra.mxu0 0.0
    %5879 = vmatprep.subr.mxu0 0.0
    %5880 = vmatpush1.msra.mxu0 0.0
    %5881 = vmatprep.subr.mxu0 0.0
    %5882 = vmatpush1.msra.mxu0 0.0
    %5883 = vmatprep.subr.mxu0 0.0
    %5884 = vmatpush1.msra.mxu0 0.0
    %5885 = vmatprep.subr.mxu0 0.0
    %5886 = vmatpush1.msra.mxu0 0.0
    %5887 = vmatprep.subr.mxu0 %v352
    %5888 = vmatpush1.msra.mxu0 %v351
    %5889 = vmatprep.subr.mxu0 %v327
    %5890 = vmatpush1.msra.mxu0 %v326
    %5891 = vmatprep.subr.mxu0 %v302
    %5892 = vmatpush1.msra.mxu0 %v301
    %5893 = vmatprep.subr.mxu0 %v277
    %5894 = vmatpush1.msra.mxu0 %v276
    %5895 = vmatprep.subr.mxu0 %v252
    %5896 = vmatpush1.msra.mxu0 %v251
    %5897 = vmatprep.subr.mxu0 %v227
    %5898 = vmatpush1.msra.mxu0 %v226
    %5899 = vmatprep.subr.mxu0 %v202
    %5900 = vmatpush1.msra.mxu0 %v201
    %5901 = vmatprep.subr.mxu0 %v177
    %5902 = vmatpush1.msra.mxu0 %v176
    %5903 = vmatprep.subr.mxu0 0.0
    %5904 = vmatpush2.msra.mxu0 0.0
    %5905 = vmatprep.subr.mxu0 0.0
    %5906 = vmatpush2.msra.mxu0 0.0
    %5907 = vmatprep.subr.mxu0 0.0
    %5908 = vmatpush2.msra.mxu0 0.0
    %5909 = vmatprep.subr.mxu0 0.0
    %5910 = vmatpush2.msra.mxu0 0.0
    %5911 = vmatprep.subr.mxu0 0.0
    %5912 = vmatpush2.msra.mxu0 0.0
    %5913 = vmatprep.subr.mxu0 0.0
    %5914 = vmatpush2.msra.mxu0 0.0
    %5915 = vmatprep.subr.mxu0 0.0
    %5916 = vmatpush2.msra.mxu0 0.0
    %5917 = vmatprep.subr.mxu0 0.0
    %5918 = vmatpush2.msra.mxu0 0.0
    %5919 = vmatprep.subr.mxu0 0.0
    %5920 = vmatpush2.msra.mxu0 0.0
    %5921 = vmatprep.subr.mxu0 0.0
    %5922 = vmatpush2.msra.mxu0 0.0
    %5923 = vmatprep.subr.mxu0 0.0
    %5924 = vmatpush2.msra.mxu0 0.0
    %5925 = vmatprep.subr.mxu0 0.0
    %5926 = vmatpush2.msra.mxu0 0.0
    %5927 = vmatprep.subr.mxu0 0.0
    %5928 = vmatpush2.msra.mxu0 0.0
    %5929 = vmatprep.subr.mxu0 0.0
    %5930 = vmatpush2.msra.mxu0 0.0
    %5931 = vmatprep.subr.mxu0 0.0
    %5932 = vmatpush2.msra.mxu0 0.0
    %5933 = vmatprep.subr.mxu0 0.0
    %5934 = vmatpush2.msra.mxu0 0.0
    %5935 = vmatprep.mubr.f32.mxu0 0.0
    %v5936 = vand.u32 %v359, 4294901760
    %v5937 = vsub.f32 %v359, %v5936
    %v5938 = vand.u32 %v5937, 4294901760
    %v5939 = vsub.f32 %v5937, %v5938
    %v5940 = vand.u32 %v5939, 4294901760
    %5941 = vmatmul.mubr.f32.gmra.mxu0 %v5940
    %v5942 = vpop.f32.mrf.mxu0
    %v5943 = vadd.f32 0.0, %v5942
    %v5944 = vpop.f32.mrf.mxu0
    %v5945 = vadd.f32 0.0, %v5944
    %5946 = vdwg.mxu0
    %5947 = vmatprep.subr.mxu0 0.0
    %5948 = vmatpush1.msra.mxu0 0.0
    %5949 = vmatprep.subr.mxu0 0.0
    %5950 = vmatpush1.msra.mxu0 0.0
    %5951 = vmatprep.subr.mxu0 0.0
    %5952 = vmatpush1.msra.mxu0 0.0
    %5953 = vmatprep.subr.mxu0 0.0
    %5954 = vmatpush1.msra.mxu0 0.0
    %5955 = vmatprep.subr.mxu0 0.0
    %5956 = vmatpush1.msra.mxu0 0.0
    %5957 = vmatprep.subr.mxu0 0.0
    %5958 = vmatpush1.msra.mxu0 0.0
    %5959 = vmatprep.subr.mxu0 0.0
    %5960 = vmatpush1.msra.mxu0 0.0
    %5961 = vmatprep.subr.mxu0 0.0
    %5962 = vmatpush1.msra.mxu0 0.0
    %v5963 = vsub.f32 %v352, %v352
    %v5964 = vand.u32 %v5963, 4294901760
    %v5965 = vsub.f32 %v5963, %v5964
    %v5966 = vand.u32 %v5965, 4294901760
    %5967 = vmatprep.subr.mxu0 %v5966
    %v5968 = vsub.f32 %v351, %v351
    %v5969 = vand.u32 %v5968, 4294901760
    %v5970 = vsub.f32 %v5968, %v5969
    %v5971 = vand.u32 %v5970, 4294901760
    %5972 = vmatpush1.msra.mxu0 %v5971
    %v5973 = vsub.f32 %v327, %v327
    %v5974 = vand.u32 %v5973, 4294901760
    %v5975 = vsub.f32 %v5973, %v5974
    %v5976 = vand.u32 %v5975, 4294901760
    %5977 = vmatprep.subr.mxu0 %v5976
    %v5978 = vsub.f32 %v326, %v326
    %v5979 = vand.u32 %v5978, 4294901760
    %v5980 = vsub.f32 %v5978, %v5979
    %v5981 = vand.u32 %v5980, 4294901760
    %5982 = vmatpush1.msra.mxu0 %v5981
    %v5983 = vsub.f32 %v302, %v302
    %v5984 = vand.u32 %v5983, 4294901760
    %v5985 = vsub.f32 %v5983, %v5984
    %v5986 = vand.u32 %v5985, 4294901760
    %5987 = vmatprep.subr.mxu0 %v5986
    %v5988 = vsub.f32 %v301, %v301
    %v5989 = vand.u32 %v5988, 4294901760
    %v5990 = vsub.f32 %v5988, %v5989
    %v5991 = vand.u32 %v5990, 4294901760
    %5992 = vmatpush1.msra.mxu0 %v5991
    %v5993 = vsub.f32 %v277, %v277
    %v5994 = vand.u32 %v5993, 4294901760
    %v5995 = vsub.f32 %v5993, %v5994
    %v5996 = vand.u32 %v5995, 4294901760
    %5997 = vmatprep.subr.mxu0 %v5996
    %v5998 = vsub.f32 %v276, %v276
    %v5999 = vand.u32 %v5998, 4294901760
    %v6000 = vsub.f32 %v5998, %v5999
    %v6001 = vand.u32 %v6000, 4294901760
    %6002 = vmatpush1.msra.mxu0 %v6001
    %v6003 = vsub.f32 %v252, %v252
    %v6004 = vand.u32 %v6003, 4294901760
    %v6005 = vsub.f32 %v6003, %v6004
    %v6006 = vand.u32 %v6005, 4294901760
    %6007 = vmatprep.subr.mxu0 %v6006
    %v6008 = vsub.f32 %v251, %v251
    %v6009 = vand.u32 %v6008, 4294901760
    %v6010 = vsub.f32 %v6008, %v6009
    %v6011 = vand.u32 %v6010, 4294901760
    %6012 = vmatpush1.msra.mxu0 %v6011
    %v6013 = vsub.f32 %v227, %v227
    %v6014 = vand.u32 %v6013, 4294901760
    %v6015 = vsub.f32 %v6013, %v6014
    %v6016 = vand.u32 %v6015, 4294901760
    %6017 = vmatprep.subr.mxu0 %v6016
    %v6018 = vsub.f32 %v226, %v226
    %v6019 = vand.u32 %v6018, 4294901760
    %v6020 = vsub.f32 %v6018, %v6019
    %v6021 = vand.u32 %v6020, 4294901760
    %6022 = vmatpush1.msra.mxu0 %v6021
    %v6023 = vsub.f32 %v202, %v202
    %v6024 = vand.u32 %v6023, 4294901760
    %v6025 = vsub.f32 %v6023, %v6024
    %v6026 = vand.u32 %v6025, 4294901760
    %6027 = vmatprep.subr.mxu0 %v6026
    %v6028 = vsub.f32 %v201, %v201
    %v6029 = vand.u32 %v6028, 4294901760
    %v6030 = vsub.f32 %v6028, %v6029
    %v6031 = vand.u32 %v6030, 4294901760
    %6032 = vmatpush1.msra.mxu0 %v6031
    %v6033 = vsub.f32 %v177, %v177
    %v6034 = vand.u32 %v6033, 4294901760
    %v6035 = vsub.f32 %v6033, %v6034
    %v6036 = vand.u32 %v6035, 4294901760
    %6037 = vmatprep.subr.mxu0 %v6036
    %v6038 = vsub.f32 %v176, %v176
    %v6039 = vand.u32 %v6038, 4294901760
    %v6040 = vsub.f32 %v6038, %v6039
    %v6041 = vand.u32 %v6040, 4294901760
    %6042 = vmatpush1.msra.mxu0 %v6041
    %6043 = vmatprep.subr.mxu0 0.0
    %6044 = vmatpush2.msra.mxu0 0.0
    %6045 = vmatprep.subr.mxu0 0.0
    %6046 = vmatpush2.msra.mxu0 0.0
    %6047 = vmatprep.subr.mxu0 0.0
    %6048 = vmatpush2.msra.mxu0 0.0
    %6049 = vmatprep.subr.mxu0 0.0
    %6050 = vmatpush2.msra.mxu0 0.0
    %6051 = vmatprep.subr.mxu0 0.0
    %6052 = vmatpush2.msra.mxu0 0.0
    %6053 = vmatprep.subr.mxu0 0.0
    %6054 = vmatpush2.msra.mxu0 0.0
    %6055 = vmatprep.subr.mxu0 0.0
    %6056 = vmatpush2.msra.mxu0 0.0
    %6057 = vmatprep.subr.mxu0 0.0
    %6058 = vmatpush2.msra.mxu0 0.0
    %6059 = vmatprep.subr.mxu0 0.0
    %6060 = vmatpush2.msra.mxu0 0.0
    %6061 = vmatprep.subr.mxu0 0.0
    %6062 = vmatpush2.msra.mxu0 0.0
    %6063 = vmatprep.subr.mxu0 0.0
    %6064 = vmatpush2.msra.mxu0 0.0
    %6065 = vmatprep.subr.mxu0 0.0
    %6066 = vmatpush2.msra.mxu0 0.0
    %6067 = vmatprep.subr.mxu0 0.0
    %6068 = vmatpush2.msra.mxu0 0.0
    %6069 = vmatprep.subr.mxu0 0.0
    %6070 = vmatpush2.msra.mxu0 0.0
    %6071 = vmatprep.subr.mxu0 0.0
    %6072 = vmatpush2.msra.mxu0 0.0
    %6073 = vmatprep.subr.mxu0 0.0
    %6074 = vmatpush2.msra.mxu0 0.0
    %6075 = vmatprep.mubr.f32.mxu0 0.0
    %v6076 = vand.u32 %v359, 4294901760
    %6077 = vmatmul.mubr.f32.gmra.mxu0 %v6076
    %v6078 = vpop.f32.mrf.mxu0
    %v6079 = vadd.f32 %v5943, %v6078
    %v6080 = vpop.f32.mrf.mxu0
    %v6081 = vadd.f32 %v5945, %v6080
    %6082 = vdwg.mxu0
    %6083 = vmatprep.subr.mxu0 0.0
    %6084 = vmatpush1.msra.mxu0 0.0
    %6085 = vmatprep.subr.mxu0 0.0
    %6086 = vmatpush1.msra.mxu0 0.0
    %6087 = vmatprep.subr.mxu0 0.0
    %6088 = vmatpush1.msra.mxu0 0.0
    %6089 = vmatprep.subr.mxu0 0.0
    %6090 = vmatpush1.msra.mxu0 0.0
    %6091 = vmatprep.subr.mxu0 0.0
    %6092 = vmatpush1.msra.mxu0 0.0
    %6093 = vmatprep.subr.mxu0 0.0
    %6094 = vmatpush1.msra.mxu0 0.0
    %6095 = vmatprep.subr.mxu0 0.0
    %6096 = vmatpush1.msra.mxu0 0.0
    %6097 = vmatprep.subr.mxu0 0.0
    %6098 = vmatpush1.msra.mxu0 0.0
    %v6099 = vsub.f32 %v352, %v352
    %6100 = vmatprep.subr.mxu0 %v6099
    %v6101 = vsub.f32 %v351, %v351
    %6102 = vmatpush1.msra.mxu0 %v6101
    %v6103 = vsub.f32 %v327, %v327
    %6104 = vmatprep.subr.mxu0 %v6103
    %v6105 = vsub.f32 %v326, %v326
    %6106 = vmatpush1.msra.mxu0 %v6105
    %v6107 = vsub.f32 %v302, %v302
    %6108 = vmatprep.subr.mxu0 %v6107
    %v6109 = vsub.f32 %v301, %v301
    %6110 = vmatpush1.msra.mxu0 %v6109
    %v6111 = vsub.f32 %v277, %v277
    %6112 = vmatprep.subr.mxu0 %v6111
    %v6113 = vsub.f32 %v276, %v276
    %6114 = vmatpush1.msra.mxu0 %v6113
    %v6115 = vsub.f32 %v252, %v252
    %6116 = vmatprep.subr.mxu0 %v6115
    %v6117 = vsub.f32 %v251, %v251
    %6118 = vmatpush1.msra.mxu0 %v6117
    %v6119 = vsub.f32 %v227, %v227
    %6120 = vmatprep.subr.mxu0 %v6119
    %v6121 = vsub.f32 %v226, %v226
    %6122 = vmatpush1.msra.mxu0 %v6121
    %v6123 = vsub.f32 %v202, %v202
    %6124 = vmatprep.subr.mxu0 %v6123
    %v6125 = vsub.f32 %v201, %v201
    %6126 = vmatpush1.msra.mxu0 %v6125
    %v6127 = vsub.f32 %v177, %v177
    %6128 = vmatprep.subr.mxu0 %v6127
    %v6129 = vsub.f32 %v176, %v176
    %6130 = vmatpush1.msra.mxu0 %v6129
    %6131 = vmatprep.subr.mxu0 0.0
    %6132 = vmatpush2.msra.mxu0 0.0
    %6133 = vmatprep.subr.mxu0 0.0
    %6134 = vmatpush2.msra.mxu0 0.0
    %6135 = vmatprep.subr.mxu0 0.0
    %6136 = vmatpush2.msra.mxu0 0.0
    %6137 = vmatprep.subr.mxu0 0.0
    %6138 = vmatpush2.msra.mxu0 0.0
    %6139 = vmatprep.subr.mxu0 0.0
    %6140 = vmatpush2.msra.mxu0 0.0
    %6141 = vmatprep.subr.mxu0 0.0
    %6142 = vmatpush2.msra.mxu0 0.0
    %6143 = vmatprep.subr.mxu0 0.0
    %6144 = vmatpush2.msra.mxu0 0.0
    %6145 = vmatprep.subr.mxu0 0.0
    %6146 = vmatpush2.msra.mxu0 0.0
    %6147 = vmatprep.subr.mxu0 0.0
    %6148 = vmatpush2.msra.mxu0 0.0
    %6149 = vmatprep.subr.mxu0 0.0
    %6150 = vmatpush2.msra.mxu0 0.0
    %6151 = vmatprep.subr.mxu0 0.0
    %6152 = vmatpush2.msra.mxu0 0.0
    %6153 = vmatprep.subr.mxu0 0.0
    %6154 = vmatpush2.msra.mxu0 0.0
    %6155 = vmatprep.subr.mxu0 0.0
    %6156 = vmatpush2.msra.mxu0 0.0
    %6157 = vmatprep.subr.mxu0 0.0
    %6158 = vmatpush2.msra.mxu0 0.0
    %6159 = vmatprep.subr.mxu0 0.0
    %6160 = vmatpush2.msra.mxu0 0.0
    %6161 = vmatprep.subr.mxu0 0.0
    %6162 = vmatpush2.msra.mxu0 0.0
    %6163 = vmatprep.mubr.f32.mxu0 0.0
    %v6164 = vand.u32 %v359, 4294901760
    %v6165 = vsub.f32 %v359, %v6164
    %6166 = vmatmul.mubr.f32.gmra.mxu0 %v6165
    %v6167 = vpop.f32.mrf.mxu0
    %v6168 = vadd.f32 %v6079, %v6167
    %v6169 = vpop.f32.mrf.mxu0
    %v6170 = vadd.f32 %v6081, %v6169
    %6171 = vdwg.mxu0
    %6172 = vmatprep.subr.mxu0 0.0
    %6173 = vmatpush1.msra.mxu0 0.0
    %6174 = vmatprep.subr.mxu0 0.0
    %6175 = vmatpush1.msra.mxu0 0.0
    %6176 = vmatprep.subr.mxu0 0.0
    %6177 = vmatpush1.msra.mxu0 0.0
    %6178 = vmatprep.subr.mxu0 0.0
    %6179 = vmatpush1.msra.mxu0 0.0
    %6180 = vmatprep.subr.mxu0 0.0
    %6181 = vmatpush1.msra.mxu0 0.0
    %6182 = vmatprep.subr.mxu0 0.0
    %6183 = vmatpush1.msra.mxu0 0.0
    %6184 = vmatprep.subr.mxu0 0.0
    %6185 = vmatpush1.msra.mxu0 0.0
    %6186 = vmatprep.subr.mxu0 0.0
    %6187 = vmatpush1.msra.mxu0 0.0
    %6188 = vmatprep.subr.mxu0 %v352
    %6189 = vmatpush1.msra.mxu0 %v351
    %6190 = vmatprep.subr.mxu0 %v327
    %6191 = vmatpush1.msra.mxu0 %v326
    %6192 = vmatprep.subr.mxu0 %v302
    %6193 = vmatpush1.msra.mxu0 %v301
    %6194 = vmatprep.subr.mxu0 %v277
    %6195 = vmatpush1.msra.mxu0 %v276
    %6196 = vmatprep.subr.mxu0 %v252
    %6197 = vmatpush1.msra.mxu0 %v251
    %6198 = vmatprep.subr.mxu0 %v227
    %6199 = vmatpush1.msra.mxu0 %v226
    %6200 = vmatprep.subr.mxu0 %v202
    %6201 = vmatpush1.msra.mxu0 %v201
    %6202 = vmatprep.subr.mxu0 %v177
    %6203 = vmatpush1.msra.mxu0 %v176
    %6204 = vmatprep.subr.mxu0 0.0
    %6205 = vmatpush2.msra.mxu0 0.0
    %6206 = vmatprep.subr.mxu0 0.0
    %6207 = vmatpush2.msra.mxu0 0.0
    %6208 = vmatprep.subr.mxu0 0.0
    %6209 = vmatpush2.msra.mxu0 0.0
    %6210 = vmatprep.subr.mxu0 0.0
    %6211 = vmatpush2.msra.mxu0 0.0
    %6212 = vmatprep.subr.mxu0 0.0
    %6213 = vmatpush2.msra.mxu0 0.0
    %6214 = vmatprep.subr.mxu0 0.0
    %6215 = vmatpush2.msra.mxu0 0.0
    %6216 = vmatprep.subr.mxu0 0.0
    %6217 = vmatpush2.msra.mxu0 0.0
    %6218 = vmatprep.subr.mxu0 0.0
    %6219 = vmatpush2.msra.mxu0 0.0
    %6220 = vmatprep.subr.mxu0 0.0
    %6221 = vmatpush2.msra.mxu0 0.0
    %6222 = vmatprep.subr.mxu0 0.0
    %6223 = vmatpush2.msra.mxu0 0.0
    %6224 = vmatprep.subr.mxu0 0.0
    %6225 = vmatpush2.msra.mxu0 0.0
    %6226 = vmatprep.subr.mxu0 0.0
    %6227 = vmatpush2.msra.mxu0 0.0
    %6228 = vmatprep.subr.mxu0 0.0
    %6229 = vmatpush2.msra.mxu0 0.0
    %6230 = vmatprep.subr.mxu0 0.0
    %6231 = vmatpush2.msra.mxu0 0.0
    %6232 = vmatprep.subr.mxu0 0.0
    %6233 = vmatpush2.msra.mxu0 0.0
    %6234 = vmatprep.subr.mxu0 0.0
    %6235 = vmatpush2.msra.mxu0 0.0
    %6236 = vmatprep.mubr.f32.mxu0 0.0
    %v6237 = vand.u32 %v359, 4294901760
    %v6238 = vsub.f32 %v359, %v6237
    %v6239 = vand.u32 %v6238, 4294901760
    %6240 = vmatmul.mubr.f32.gmra.mxu0 %v6239
    %v6241 = vpop.f32.mrf.mxu0
    %v6242 = vadd.f32 %v6168, %v6241
    %v6243 = vpop.f32.mrf.mxu0
    %v6244 = vadd.f32 %v6170, %v6243
    %6245 = vdwg.mxu0
    %6246 = vmatprep.subr.mxu0 0.0
    %6247 = vmatpush1.msra.mxu0 0.0
    %6248 = vmatprep.subr.mxu0 0.0
    %6249 = vmatpush1.msra.mxu0 0.0
    %6250 = vmatprep.subr.mxu0 0.0
    %6251 = vmatpush1.msra.mxu0 0.0
    %6252 = vmatprep.subr.mxu0 0.0
    %6253 = vmatpush1.msra.mxu0 0.0
    %6254 = vmatprep.subr.mxu0 0.0
    %6255 = vmatpush1.msra.mxu0 0.0
    %6256 = vmatprep.subr.mxu0 0.0
    %6257 = vmatpush1.msra.mxu0 0.0
    %6258 = vmatprep.subr.mxu0 0.0
    %6259 = vmatpush1.msra.mxu0 0.0
    %6260 = vmatprep.subr.mxu0 0.0
    %6261 = vmatpush1.msra.mxu0 0.0
    %v6262 = vsub.f32 %v352, %v352
    %v6263 = vand.u32 %v6262, 4294901760
    %6264 = vmatprep.subr.mxu0 %v6263
    %v6265 = vsub.f32 %v351, %v351
    %v6266 = vand.u32 %v6265, 4294901760
    %6267 = vmatpush1.msra.mxu0 %v6266
    %v6268 = vsub.f32 %v327, %v327
    %v6269 = vand.u32 %v6268, 4294901760
    %6270 = vmatprep.subr.mxu0 %v6269
    %v6271 = vsub.f32 %v326, %v326
    %v6272 = vand.u32 %v6271, 4294901760
    %6273 = vmatpush1.msra.mxu0 %v6272
    %v6274 = vsub.f32 %v302, %v302
    %v6275 = vand.u32 %v6274, 4294901760
    %6276 = vmatprep.subr.mxu0 %v6275
    %v6277 = vsub.f32 %v301, %v301
    %v6278 = vand.u32 %v6277, 4294901760
    %6279 = vmatpush1.msra.mxu0 %v6278
    %v6280 = vsub.f32 %v277, %v277
    %v6281 = vand.u32 %v6280, 4294901760
    %6282 = vmatprep.subr.mxu0 %v6281
    %v6283 = vsub.f32 %v276, %v276
    %v6284 = vand.u32 %v6283, 4294901760
    %6285 = vmatpush1.msra.mxu0 %v6284
    %v6286 = vsub.f32 %v252, %v252
    %v6287 = vand.u32 %v6286, 4294901760
    %6288 = vmatprep.subr.mxu0 %v6287
    %v6289 = vsub.f32 %v251, %v251
    %v6290 = vand.u32 %v6289, 4294901760
    %6291 = vmatpush1.msra.mxu0 %v6290
    %v6292 = vsub.f32 %v227, %v227
    %v6293 = vand.u32 %v6292, 4294901760
    %6294 = vmatprep.subr.mxu0 %v6293
    %v6295 = vsub.f32 %v226, %v226
    %v6296 = vand.u32 %v6295, 4294901760
    %6297 = vmatpush1.msra.mxu0 %v6296
    %v6298 = vsub.f32 %v202, %v202
    %v6299 = vand.u32 %v6298, 4294901760
    %6300 = vmatprep.subr.mxu0 %v6299
    %v6301 = vsub.f32 %v201, %v201
    %v6302 = vand.u32 %v6301, 4294901760
    %6303 = vmatpush1.msra.mxu0 %v6302
    %v6304 = vsub.f32 %v177, %v177
    %v6305 = vand.u32 %v6304, 4294901760
    %6306 = vmatprep.subr.mxu0 %v6305
    %v6307 = vsub.f32 %v176, %v176
    %v6308 = vand.u32 %v6307, 4294901760
    %6309 = vmatpush1.msra.mxu0 %v6308
    %6310 = vmatprep.subr.mxu0 0.0
    %6311 = vmatpush2.msra.mxu0 0.0
    %6312 = vmatprep.subr.mxu0 0.0
    %6313 = vmatpush2.msra.mxu0 0.0
    %6314 = vmatprep.subr.mxu0 0.0
    %6315 = vmatpush2.msra.mxu0 0.0
    %6316 = vmatprep.subr.mxu0 0.0
    %6317 = vmatpush2.msra.mxu0 0.0
    %6318 = vmatprep.subr.mxu0 0.0
    %6319 = vmatpush2.msra.mxu0 0.0
    %6320 = vmatprep.subr.mxu0 0.0
    %6321 = vmatpush2.msra.mxu0 0.0
    %6322 = vmatprep.subr.mxu0 0.0
    %6323 = vmatpush2.msra.mxu0 0.0
    %6324 = vmatprep.subr.mxu0 0.0
    %6325 = vmatpush2.msra.mxu0 0.0
    %6326 = vmatprep.subr.mxu0 0.0
    %6327 = vmatpush2.msra.mxu0 0.0
    %6328 = vmatprep.subr.mxu0 0.0
    %6329 = vmatpush2.msra.mxu0 0.0
    %6330 = vmatprep.subr.mxu0 0.0
    %6331 = vmatpush2.msra.mxu0 0.0
    %6332 = vmatprep.subr.mxu0 0.0
    %6333 = vmatpush2.msra.mxu0 0.0
    %6334 = vmatprep.subr.mxu0 0.0
    %6335 = vmatpush2.msra.mxu0 0.0
    %6336 = vmatprep.subr.mxu0 0.0
    %6337 = vmatpush2.msra.mxu0 0.0
    %6338 = vmatprep.subr.mxu0 0.0
    %6339 = vmatpush2.msra.mxu0 0.0
    %6340 = vmatprep.subr.mxu0 0.0
    %6341 = vmatpush2.msra.mxu0 0.0
    %6342 = vmatprep.mubr.f32.mxu0 0.0
    %v6343 = vand.u32 %v359, 4294901760
    %6344 = vmatmul.mubr.f32.gmra.mxu0 %v6343
    %v6345 = vpop.f32.mrf.mxu0
    %v6346 = vadd.f32 %v6242, %v6345
    %v6347 = vpop.f32.mrf.mxu0
    %v6348 = vadd.f32 %v6244, %v6347
    %6349 = vdwg.mxu0
    %6350 = vmatprep.subr.mxu0 0.0
    %6351 = vmatpush1.msra.mxu0 0.0
    %6352 = vmatprep.subr.mxu0 0.0
    %6353 = vmatpush1.msra.mxu0 0.0
    %6354 = vmatprep.subr.mxu0 0.0
    %6355 = vmatpush1.msra.mxu0 0.0
    %6356 = vmatprep.subr.mxu0 0.0
    %6357 = vmatpush1.msra.mxu0 0.0
    %6358 = vmatprep.subr.mxu0 0.0
    %6359 = vmatpush1.msra.mxu0 0.0
    %6360 = vmatprep.subr.mxu0 0.0
    %6361 = vmatpush1.msra.mxu0 0.0
    %6362 = vmatprep.subr.mxu0 0.0
    %6363 = vmatpush1.msra.mxu0 0.0
    %6364 = vmatprep.subr.mxu0 0.0
    %6365 = vmatpush1.msra.mxu0 0.0
    %6366 = vmatprep.subr.mxu0 %v352
    %6367 = vmatpush1.msra.mxu0 %v351
    %6368 = vmatprep.subr.mxu0 %v327
    %6369 = vmatpush1.msra.mxu0 %v326
    %6370 = vmatprep.subr.mxu0 %v302
    %6371 = vmatpush1.msra.mxu0 %v301
    %6372 = vmatprep.subr.mxu0 %v277
    %6373 = vmatpush1.msra.mxu0 %v276
    %6374 = vmatprep.subr.mxu0 %v252
    %6375 = vmatpush1.msra.mxu0 %v251
    %6376 = vmatprep.subr.mxu0 %v227
    %6377 = vmatpush1.msra.mxu0 %v226
    %6378 = vmatprep.subr.mxu0 %v202
    %6379 = vmatpush1.msra.mxu0 %v201
    %6380 = vmatprep.subr.mxu0 %v177
    %6381 = vmatpush1.msra.mxu0 %v176
    %6382 = vmatprep.subr.mxu0 0.0
    %6383 = vmatpush2.msra.mxu0 0.0
    %6384 = vmatprep.subr.mxu0 0.0
    %6385 = vmatpush2.msra.mxu0 0.0
    %6386 = vmatprep.subr.mxu0 0.0
    %6387 = vmatpush2.msra.mxu0 0.0
    %6388 = vmatprep.subr.mxu0 0.0
    %6389 = vmatpush2.msra.mxu0 0.0
    %6390 = vmatprep.subr.mxu0 0.0
    %6391 = vmatpush2.msra.mxu0 0.0
    %6392 = vmatprep.subr.mxu0 0.0
    %6393 = vmatpush2.msra.mxu0 0.0
    %6394 = vmatprep.subr.mxu0 0.0
    %6395 = vmatpush2.msra.mxu0 0.0
    %6396 = vmatprep.subr.mxu0 0.0
    %6397 = vmatpush2.msra.mxu0 0.0
    %6398 = vmatprep.subr.mxu0 0.0
    %6399 = vmatpush2.msra.mxu0 0.0
    %6400 = vmatprep.subr.mxu0 0.0
    %6401 = vmatpush2.msra.mxu0 0.0
    %6402 = vmatprep.subr.mxu0 0.0
    %6403 = vmatpush2.msra.mxu0 0.0
    %6404 = vmatprep.subr.mxu0 0.0
    %6405 = vmatpush2.msra.mxu0 0.0
    %6406 = vmatprep.subr.mxu0 0.0
    %6407 = vmatpush2.msra.mxu0 0.0
    %6408 = vmatprep.subr.mxu0 0.0
    %6409 = vmatpush2.msra.mxu0 0.0
    %6410 = vmatprep.subr.mxu0 0.0
    %6411 = vmatpush2.msra.mxu0 0.0
    %6412 = vmatprep.subr.mxu0 0.0
    %6413 = vmatpush2.msra.mxu0 0.0
    %6414 = vmatprep.mubr.f32.mxu0 0.0
    %v6415 = vand.u32 %v359, 4294901760
    %6416 = vmatmul.mubr.f32.gmra.mxu0 %v6415
    %v6417 = vpop.f32.mrf.mxu0
    %v6418 = vadd.f32 %v6346, %v6417
    %v6419 = vpop.f32.mrf.mxu0
    %v6420 = vadd.f32 %v6348, %v6419
    %6421 = vdwg.mxu0
    %6422 = vmatprep.subr.mxu0 0.0
    %6423 = vmatpush1.msra.mxu0 0.0
    %6424 = vmatprep.subr.mxu0 0.0
    %6425 = vmatpush1.msra.mxu0 0.0
    %6426 = vmatprep.subr.mxu0 0.0
    %6427 = vmatpush1.msra.mxu0 0.0
    %6428 = vmatprep.subr.mxu0 0.0
    %6429 = vmatpush1.msra.mxu0 0.0
    %6430 = vmatprep.subr.mxu0 0.0
    %6431 = vmatpush1.msra.mxu0 0.0
    %6432 = vmatprep.subr.mxu0 0.0
    %6433 = vmatpush1.msra.mxu0 0.0
    %6434 = vmatprep.subr.mxu0 0.0
    %6435 = vmatpush1.msra.mxu0 0.0
    %6436 = vmatprep.subr.mxu0 0.0
    %6437 = vmatpush1.msra.mxu0 0.0
    %6438 = vmatprep.subr.mxu0 %v354
    %6439 = vmatpush1.msra.mxu0 %v353
    %6440 = vmatprep.subr.mxu0 %v329
    %6441 = vmatpush1.msra.mxu0 %v328
    %6442 = vmatprep.subr.mxu0 %v304
    %6443 = vmatpush1.msra.mxu0 %v303
    %6444 = vmatprep.subr.mxu0 %v279
    %6445 = vmatpush1.msra.mxu0 %v278
    %6446 = vmatprep.subr.mxu0 %v254
    %6447 = vmatpush1.msra.mxu0 %v253
    %6448 = vmatprep.subr.mxu0 %v229
    %6449 = vmatpush1.msra.mxu0 %v228
    %6450 = vmatprep.subr.mxu0 %v204
    %6451 = vmatpush1.msra.mxu0 %v203
    %6452 = vmatprep.subr.mxu0 %v179
    %6453 = vmatpush1.msra.mxu0 %v178
    %6454 = vmatprep.subr.mxu0 0.0
    %6455 = vmatpush2.msra.mxu0 0.0
    %6456 = vmatprep.subr.mxu0 0.0
    %6457 = vmatpush2.msra.mxu0 0.0
    %6458 = vmatprep.subr.mxu0 0.0
    %6459 = vmatpush2.msra.mxu0 0.0
    %6460 = vmatprep.subr.mxu0 0.0
    %6461 = vmatpush2.msra.mxu0 0.0
    %6462 = vmatprep.subr.mxu0 0.0
    %6463 = vmatpush2.msra.mxu0 0.0
    %6464 = vmatprep.subr.mxu0 0.0
    %6465 = vmatpush2.msra.mxu0 0.0
    %6466 = vmatprep.subr.mxu0 0.0
    %6467 = vmatpush2.msra.mxu0 0.0
    %6468 = vmatprep.subr.mxu0 0.0
    %6469 = vmatpush2.msra.mxu0 0.0
    %6470 = vmatprep.subr.mxu0 0.0
    %6471 = vmatpush2.msra.mxu0 0.0
    %6472 = vmatprep.subr.mxu0 0.0
    %6473 = vmatpush2.msra.mxu0 0.0
    %6474 = vmatprep.subr.mxu0 0.0
    %6475 = vmatpush2.msra.mxu0 0.0
    %6476 = vmatprep.subr.mxu0 0.0
    %6477 = vmatpush2.msra.mxu0 0.0
    %6478 = vmatprep.subr.mxu0 0.0
    %6479 = vmatpush2.msra.mxu0 0.0
    %6480 = vmatprep.subr.mxu0 0.0
    %6481 = vmatpush2.msra.mxu0 0.0
    %6482 = vmatprep.subr.mxu0 0.0
    %6483 = vmatpush2.msra.mxu0 0.0
    %6484 = vmatprep.subr.mxu0 0.0
    %6485 = vmatpush2.msra.mxu0 0.0
    %6486 = vmatprep.mubr.f32.mxu0 0.0
    %v6487 = vand.u32 %v359, 4294901760
    %v6488 = vsub.f32 %v359, %v6487
    %v6489 = vand.u32 %v6488, 4294901760
    %v6490 = vsub.f32 %v6488, %v6489
    %v6491 = vand.u32 %v6490, 4294901760
    %6492 = vmatmul.mubr.f32.gmra.mxu0 %v6491
    %v6493 = vpop.f32.mrf.mxu0
    %v6494 = vadd.f32 0.0, %v6493
    %v6495 = vpop.f32.mrf.mxu0
    %v6496 = vadd.f32 0.0, %v6495
    %6497 = vdwg.mxu0
    %6498 = vmatprep.subr.mxu0 0.0
    %6499 = vmatpush1.msra.mxu0 0.0
    %6500 = vmatprep.subr.mxu0 0.0
    %6501 = vmatpush1.msra.mxu0 0.0
    %6502 = vmatprep.subr.mxu0 0.0
    %6503 = vmatpush1.msra.mxu0 0.0
    %6504 = vmatprep.subr.mxu0 0.0
    %6505 = vmatpush1.msra.mxu0 0.0
    %6506 = vmatprep.subr.mxu0 0.0
    %6507 = vmatpush1.msra.mxu0 0.0
    %6508 = vmatprep.subr.mxu0 0.0
    %6509 = vmatpush1.msra.mxu0 0.0
    %6510 = vmatprep.subr.mxu0 0.0
    %6511 = vmatpush1.msra.mxu0 0.0
    %6512 = vmatprep.subr.mxu0 0.0
    %6513 = vmatpush1.msra.mxu0 0.0
    %v6514 = vsub.f32 %v354, %v354
    %v6515 = vand.u32 %v6514, 4294901760
    %v6516 = vsub.f32 %v6514, %v6515
    %v6517 = vand.u32 %v6516, 4294901760
    %6518 = vmatprep.subr.mxu0 %v6517
    %v6519 = vsub.f32 %v353, %v353
    %v6520 = vand.u32 %v6519, 4294901760
    %v6521 = vsub.f32 %v6519, %v6520
    %v6522 = vand.u32 %v6521, 4294901760
    %6523 = vmatpush1.msra.mxu0 %v6522
    %v6524 = vsub.f32 %v329, %v329
    %v6525 = vand.u32 %v6524, 4294901760
    %v6526 = vsub.f32 %v6524, %v6525
    %v6527 = vand.u32 %v6526, 4294901760
    %6528 = vmatprep.subr.mxu0 %v6527
    %v6529 = vsub.f32 %v328, %v328
    %v6530 = vand.u32 %v6529, 4294901760
    %v6531 = vsub.f32 %v6529, %v6530
    %v6532 = vand.u32 %v6531, 4294901760
    %6533 = vmatpush1.msra.mxu0 %v6532
    %v6534 = vsub.f32 %v304, %v304
    %v6535 = vand.u32 %v6534, 4294901760
    %v6536 = vsub.f32 %v6534, %v6535
    %v6537 = vand.u32 %v6536, 4294901760
    %6538 = vmatprep.subr.mxu0 %v6537
    %v6539 = vsub.f32 %v303, %v303
    %v6540 = vand.u32 %v6539, 4294901760
    %v6541 = vsub.f32 %v6539, %v6540
    %v6542 = vand.u32 %v6541, 4294901760
    %6543 = vmatpush1.msra.mxu0 %v6542
    %v6544 = vsub.f32 %v279, %v279
    %v6545 = vand.u32 %v6544, 4294901760
    %v6546 = vsub.f32 %v6544, %v6545
    %v6547 = vand.u32 %v6546, 4294901760
    %6548 = vmatprep.subr.mxu0 %v6547
    %v6549 = vsub.f32 %v278, %v278
    %v6550 = vand.u32 %v6549, 4294901760
    %v6551 = vsub.f32 %v6549, %v6550
    %v6552 = vand.u32 %v6551, 4294901760
    %6553 = vmatpush1.msra.mxu0 %v6552
    %v6554 = vsub.f32 %v254, %v254
    %v6555 = vand.u32 %v6554, 4294901760
    %v6556 = vsub.f32 %v6554, %v6555
    %v6557 = vand.u32 %v6556, 4294901760
    %6558 = vmatprep.subr.mxu0 %v6557
    %v6559 = vsub.f32 %v253, %v253
    %v6560 = vand.u32 %v6559, 4294901760
    %v6561 = vsub.f32 %v6559, %v6560
    %v6562 = vand.u32 %v6561, 4294901760
    %6563 = vmatpush1.msra.mxu0 %v6562
    %v6564 = vsub.f32 %v229, %v229
    %v6565 = vand.u32 %v6564, 4294901760
    %v6566 = vsub.f32 %v6564, %v6565
    %v6567 = vand.u32 %v6566, 4294901760
    %6568 = vmatprep.subr.mxu0 %v6567
    %v6569 = vsub.f32 %v228, %v228
    %v6570 = vand.u32 %v6569, 4294901760
    %v6571 = vsub.f32 %v6569, %v6570
    %v6572 = vand.u32 %v6571, 4294901760
    %6573 = vmatpush1.msra.mxu0 %v6572
    %v6574 = vsub.f32 %v204, %v204
    %v6575 = vand.u32 %v6574, 4294901760
    %v6576 = vsub.f32 %v6574, %v6575
    %v6577 = vand.u32 %v6576, 4294901760
    %6578 = vmatprep.subr.mxu0 %v6577
    %v6579 = vsub.f32 %v203, %v203
    %v6580 = vand.u32 %v6579, 4294901760
    %v6581 = vsub.f32 %v6579, %v6580
    %v6582 = vand.u32 %v6581, 4294901760
    %6583 = vmatpush1.msra.mxu0 %v6582
    %v6584 = vsub.f32 %v179, %v179
    %v6585 = vand.u32 %v6584, 4294901760
    %v6586 = vsub.f32 %v6584, %v6585
    %v6587 = vand.u32 %v6586, 4294901760
    %6588 = vmatprep.subr.mxu0 %v6587
    %v6589 = vsub.f32 %v178, %v178
    %v6590 = vand.u32 %v6589, 4294901760
    %v6591 = vsub.f32 %v6589, %v6590
    %v6592 = vand.u32 %v6591, 4294901760
    %6593 = vmatpush1.msra.mxu0 %v6592
    %6594 = vmatprep.subr.mxu0 0.0
    %6595 = vmatpush2.msra.mxu0 0.0
    %6596 = vmatprep.subr.mxu0 0.0
    %6597 = vmatpush2.msra.mxu0 0.0
    %6598 = vmatprep.subr.mxu0 0.0
    %6599 = vmatpush2.msra.mxu0 0.0
    %6600 = vmatprep.subr.mxu0 0.0
    %6601 = vmatpush2.msra.mxu0 0.0
    %6602 = vmatprep.subr.mxu0 0.0
    %6603 = vmatpush2.msra.mxu0 0.0
    %6604 = vmatprep.subr.mxu0 0.0
    %6605 = vmatpush2.msra.mxu0 0.0
    %6606 = vmatprep.subr.mxu0 0.0
    %6607 = vmatpush2.msra.mxu0 0.0
    %6608 = vmatprep.subr.mxu0 0.0
    %6609 = vmatpush2.msra.mxu0 0.0
    %6610 = vmatprep.subr.mxu0 0.0
    %6611 = vmatpush2.msra.mxu0 0.0
    %6612 = vmatprep.subr.mxu0 0.0
    %6613 = vmatpush2.msra.mxu0 0.0
    %6614 = vmatprep.subr.mxu0 0.0
    %6615 = vmatpush2.msra.mxu0 0.0
    %6616 = vmatprep.subr.mxu0 0.0
    %6617 = vmatpush2.msra.mxu0 0.0
    %6618 = vmatprep.subr.mxu0 0.0
    %6619 = vmatpush2.msra.mxu0 0.0
    %6620 = vmatprep.subr.mxu0 0.0
    %6621 = vmatpush2.msra.mxu0 0.0
    %6622 = vmatprep.subr.mxu0 0.0
    %6623 = vmatpush2.msra.mxu0 0.0
    %6624 = vmatprep.subr.mxu0 0.0
    %6625 = vmatpush2.msra.mxu0 0.0
    %6626 = vmatprep.mubr.f32.mxu0 0.0
    %v6627 = vand.u32 %v359, 4294901760
    %6628 = vmatmul.mubr.f32.gmra.mxu0 %v6627
    %v6629 = vpop.f32.mrf.mxu0
    %v6630 = vadd.f32 %v6494, %v6629
    %v6631 = vpop.f32.mrf.mxu0
    %v6632 = vadd.f32 %v6496, %v6631
    %6633 = vdwg.mxu0
    %6634 = vmatprep.subr.mxu0 0.0
    %6635 = vmatpush1.msra.mxu0 0.0
    %6636 = vmatprep.subr.mxu0 0.0
    %6637 = vmatpush1.msra.mxu0 0.0
    %6638 = vmatprep.subr.mxu0 0.0
    %6639 = vmatpush1.msra.mxu0 0.0
    %6640 = vmatprep.subr.mxu0 0.0
    %6641 = vmatpush1.msra.mxu0 0.0
    %6642 = vmatprep.subr.mxu0 0.0
    %6643 = vmatpush1.msra.mxu0 0.0
    %6644 = vmatprep.subr.mxu0 0.0
    %6645 = vmatpush1.msra.mxu0 0.0
    %6646 = vmatprep.subr.mxu0 0.0
    %6647 = vmatpush1.msra.mxu0 0.0
    %6648 = vmatprep.subr.mxu0 0.0
    %6649 = vmatpush1.msra.mxu0 0.0
    %v6650 = vsub.f32 %v354, %v354
    %6651 = vmatprep.subr.mxu0 %v6650
    %v6652 = vsub.f32 %v353, %v353
    %6653 = vmatpush1.msra.mxu0 %v6652
    %v6654 = vsub.f32 %v329, %v329
    %6655 = vmatprep.subr.mxu0 %v6654
    %v6656 = vsub.f32 %v328, %v328
    %6657 = vmatpush1.msra.mxu0 %v6656
    %v6658 = vsub.f32 %v304, %v304
    %6659 = vmatprep.subr.mxu0 %v6658
    %v6660 = vsub.f32 %v303, %v303
    %6661 = vmatpush1.msra.mxu0 %v6660
    %v6662 = vsub.f32 %v279, %v279
    %6663 = vmatprep.subr.mxu0 %v6662
    %v6664 = vsub.f32 %v278, %v278
    %6665 = vmatpush1.msra.mxu0 %v6664
    %v6666 = vsub.f32 %v254, %v254
    %6667 = vmatprep.subr.mxu0 %v6666
    %v6668 = vsub.f32 %v253, %v253
    %6669 = vmatpush1.msra.mxu0 %v6668
    %v6670 = vsub.f32 %v229, %v229
    %6671 = vmatprep.subr.mxu0 %v6670
    %v6672 = vsub.f32 %v228, %v228
    %6673 = vmatpush1.msra.mxu0 %v6672
    %v6674 = vsub.f32 %v204, %v204
    %6675 = vmatprep.subr.mxu0 %v6674
    %v6676 = vsub.f32 %v203, %v203
    %6677 = vmatpush1.msra.mxu0 %v6676
    %v6678 = vsub.f32 %v179, %v179
    %6679 = vmatprep.subr.mxu0 %v6678
    %v6680 = vsub.f32 %v178, %v178
    %6681 = vmatpush1.msra.mxu0 %v6680
    %6682 = vmatprep.subr.mxu0 0.0
    %6683 = vmatpush2.msra.mxu0 0.0
    %6684 = vmatprep.subr.mxu0 0.0
    %6685 = vmatpush2.msra.mxu0 0.0
    %6686 = vmatprep.subr.mxu0 0.0
    %6687 = vmatpush2.msra.mxu0 0.0
    %6688 = vmatprep.subr.mxu0 0.0
    %6689 = vmatpush2.msra.mxu0 0.0
    %6690 = vmatprep.subr.mxu0 0.0
    %6691 = vmatpush2.msra.mxu0 0.0
    %6692 = vmatprep.subr.mxu0 0.0
    %6693 = vmatpush2.msra.mxu0 0.0
    %6694 = vmatprep.subr.mxu0 0.0
    %6695 = vmatpush2.msra.mxu0 0.0
    %6696 = vmatprep.subr.mxu0 0.0
    %6697 = vmatpush2.msra.mxu0 0.0
    %6698 = vmatprep.subr.mxu0 0.0
    %6699 = vmatpush2.msra.mxu0 0.0
    %6700 = vmatprep.subr.mxu0 0.0
    %6701 = vmatpush2.msra.mxu0 0.0
    %6702 = vmatprep.subr.mxu0 0.0
    %6703 = vmatpush2.msra.mxu0 0.0
    %6704 = vmatprep.subr.mxu0 0.0
    %6705 = vmatpush2.msra.mxu0 0.0
    %6706 = vmatprep.subr.mxu0 0.0
    %6707 = vmatpush2.msra.mxu0 0.0
    %6708 = vmatprep.subr.mxu0 0.0
    %6709 = vmatpush2.msra.mxu0 0.0
    %6710 = vmatprep.subr.mxu0 0.0
    %6711 = vmatpush2.msra.mxu0 0.0
    %6712 = vmatprep.subr.mxu0 0.0
    %6713 = vmatpush2.msra.mxu0 0.0
    %6714 = vmatprep.mubr.f32.mxu0 0.0
    %v6715 = vand.u32 %v359, 4294901760
    %v6716 = vsub.f32 %v359, %v6715
    %6717 = vmatmul.mubr.f32.gmra.mxu0 %v6716
    %v6718 = vpop.f32.mrf.mxu0
    %v6719 = vadd.f32 %v6630, %v6718
    %v6720 = vpop.f32.mrf.mxu0
    %v6721 = vadd.f32 %v6632, %v6720
    %6722 = vdwg.mxu0
    %6723 = vmatprep.subr.mxu0 0.0
    %6724 = vmatpush1.msra.mxu0 0.0
    %6725 = vmatprep.subr.mxu0 0.0
    %6726 = vmatpush1.msra.mxu0 0.0
    %6727 = vmatprep.subr.mxu0 0.0
    %6728 = vmatpush1.msra.mxu0 0.0
    %6729 = vmatprep.subr.mxu0 0.0
    %6730 = vmatpush1.msra.mxu0 0.0
    %6731 = vmatprep.subr.mxu0 0.0
    %6732 = vmatpush1.msra.mxu0 0.0
    %6733 = vmatprep.subr.mxu0 0.0
    %6734 = vmatpush1.msra.mxu0 0.0
    %6735 = vmatprep.subr.mxu0 0.0
    %6736 = vmatpush1.msra.mxu0 0.0
    %6737 = vmatprep.subr.mxu0 0.0
    %6738 = vmatpush1.msra.mxu0 0.0
    %6739 = vmatprep.subr.mxu0 %v354
    %6740 = vmatpush1.msra.mxu0 %v353
    %6741 = vmatprep.subr.mxu0 %v329
    %6742 = vmatpush1.msra.mxu0 %v328
    %6743 = vmatprep.subr.mxu0 %v304
    %6744 = vmatpush1.msra.mxu0 %v303
    %6745 = vmatprep.subr.mxu0 %v279
    %6746 = vmatpush1.msra.mxu0 %v278
    %6747 = vmatprep.subr.mxu0 %v254
    %6748 = vmatpush1.msra.mxu0 %v253
    %6749 = vmatprep.subr.mxu0 %v229
    %6750 = vmatpush1.msra.mxu0 %v228
    %6751 = vmatprep.subr.mxu0 %v204
    %6752 = vmatpush1.msra.mxu0 %v203
    %6753 = vmatprep.subr.mxu0 %v179
    %6754 = vmatpush1.msra.mxu0 %v178
    %6755 = vmatprep.subr.mxu0 0.0
    %6756 = vmatpush2.msra.mxu0 0.0
    %6757 = vmatprep.subr.mxu0 0.0
    %6758 = vmatpush2.msra.mxu0 0.0
    %6759 = vmatprep.subr.mxu0 0.0
    %6760 = vmatpush2.msra.mxu0 0.0
    %6761 = vmatprep.subr.mxu0 0.0
    %6762 = vmatpush2.msra.mxu0 0.0
    %6763 = vmatprep.subr.mxu0 0.0
    %6764 = vmatpush2.msra.mxu0 0.0
    %6765 = vmatprep.subr.mxu0 0.0
    %6766 = vmatpush2.msra.mxu0 0.0
    %6767 = vmatprep.subr.mxu0 0.0
    %6768 = vmatpush2.msra.mxu0 0.0
    %6769 = vmatprep.subr.mxu0 0.0
    %6770 = vmatpush2.msra.mxu0 0.0
    %6771 = vmatprep.subr.mxu0 0.0
    %6772 = vmatpush2.msra.mxu0 0.0
    %6773 = vmatprep.subr.mxu0 0.0
    %6774 = vmatpush2.msra.mxu0 0.0
    %6775 = vmatprep.subr.mxu0 0.0
    %6776 = vmatpush2.msra.mxu0 0.0
    %6777 = vmatprep.subr.mxu0 0.0
    %6778 = vmatpush2.msra.mxu0 0.0
    %6779 = vmatprep.subr.mxu0 0.0
    %6780 = vmatpush2.msra.mxu0 0.0
    %6781 = vmatprep.subr.mxu0 0.0
    %6782 = vmatpush2.msra.mxu0 0.0
    %6783 = vmatprep.subr.mxu0 0.0
    %6784 = vmatpush2.msra.mxu0 0.0
    %6785 = vmatprep.subr.mxu0 0.0
    %6786 = vmatpush2.msra.mxu0 0.0
    %6787 = vmatprep.mubr.f32.mxu0 0.0
    %v6788 = vand.u32 %v359, 4294901760
    %v6789 = vsub.f32 %v359, %v6788
    %v6790 = vand.u32 %v6789, 4294901760
    %6791 = vmatmul.mubr.f32.gmra.mxu0 %v6790
    %v6792 = vpop.f32.mrf.mxu0
    %v6793 = vadd.f32 %v6719, %v6792
    %v6794 = vpop.f32.mrf.mxu0
    %v6795 = vadd.f32 %v6721, %v6794
    %6796 = vdwg.mxu0
    %6797 = vmatprep.subr.mxu0 0.0
    %6798 = vmatpush1.msra.mxu0 0.0
    %6799 = vmatprep.subr.mxu0 0.0
    %6800 = vmatpush1.msra.mxu0 0.0
    %6801 = vmatprep.subr.mxu0 0.0
    %6802 = vmatpush1.msra.mxu0 0.0
    %6803 = vmatprep.subr.mxu0 0.0
    %6804 = vmatpush1.msra.mxu0 0.0
    %6805 = vmatprep.subr.mxu0 0.0
    %6806 = vmatpush1.msra.mxu0 0.0
    %6807 = vmatprep.subr.mxu0 0.0
    %6808 = vmatpush1.msra.mxu0 0.0
    %6809 = vmatprep.subr.mxu0 0.0
    %6810 = vmatpush1.msra.mxu0 0.0
    %6811 = vmatprep.subr.mxu0 0.0
    %6812 = vmatpush1.msra.mxu0 0.0
    %v6813 = vsub.f32 %v354, %v354
    %v6814 = vand.u32 %v6813, 4294901760
    %6815 = vmatprep.subr.mxu0 %v6814
    %v6816 = vsub.f32 %v353, %v353
    %v6817 = vand.u32 %v6816, 4294901760
    %6818 = vmatpush1.msra.mxu0 %v6817
    %v6819 = vsub.f32 %v329, %v329
    %v6820 = vand.u32 %v6819, 4294901760
    %6821 = vmatprep.subr.mxu0 %v6820
    %v6822 = vsub.f32 %v328, %v328
    %v6823 = vand.u32 %v6822, 4294901760
    %6824 = vmatpush1.msra.mxu0 %v6823
    %v6825 = vsub.f32 %v304, %v304
    %v6826 = vand.u32 %v6825, 4294901760
    %6827 = vmatprep.subr.mxu0 %v6826
    %v6828 = vsub.f32 %v303, %v303
    %v6829 = vand.u32 %v6828, 4294901760
    %6830 = vmatpush1.msra.mxu0 %v6829
    %v6831 = vsub.f32 %v279, %v279
    %v6832 = vand.u32 %v6831, 4294901760
    %6833 = vmatprep.subr.mxu0 %v6832
    %v6834 = vsub.f32 %v278, %v278
    %v6835 = vand.u32 %v6834, 4294901760
    %6836 = vmatpush1.msra.mxu0 %v6835
    %v6837 = vsub.f32 %v254, %v254
    %v6838 = vand.u32 %v6837, 4294901760
    %6839 = vmatprep.subr.mxu0 %v6838
    %v6840 = vsub.f32 %v253, %v253
    %v6841 = vand.u32 %v6840, 4294901760
    %6842 = vmatpush1.msra.mxu0 %v6841
    %v6843 = vsub.f32 %v229, %v229
    %v6844 = vand.u32 %v6843, 4294901760
    %6845 = vmatprep.subr.mxu0 %v6844
    %v6846 = vsub.f32 %v228, %v228
    %v6847 = vand.u32 %v6846, 4294901760
    %6848 = vmatpush1.msra.mxu0 %v6847
    %v6849 = vsub.f32 %v204, %v204
    %v6850 = vand.u32 %v6849, 4294901760
    %6851 = vmatprep.subr.mxu0 %v6850
    %v6852 = vsub.f32 %v203, %v203
    %v6853 = vand.u32 %v6852, 4294901760
    %6854 = vmatpush1.msra.mxu0 %v6853
    %v6855 = vsub.f32 %v179, %v179
    %v6856 = vand.u32 %v6855, 4294901760
    %6857 = vmatprep.subr.mxu0 %v6856
    %v6858 = vsub.f32 %v178, %v178
    %v6859 = vand.u32 %v6858, 4294901760
    %6860 = vmatpush1.msra.mxu0 %v6859
    %6861 = vmatprep.subr.mxu0 0.0
    %6862 = vmatpush2.msra.mxu0 0.0
    %6863 = vmatprep.subr.mxu0 0.0
    %6864 = vmatpush2.msra.mxu0 0.0
    %6865 = vmatprep.subr.mxu0 0.0
    %6866 = vmatpush2.msra.mxu0 0.0
    %6867 = vmatprep.subr.mxu0 0.0
    %6868 = vmatpush2.msra.mxu0 0.0
    %6869 = vmatprep.subr.mxu0 0.0
    %6870 = vmatpush2.msra.mxu0 0.0
    %6871 = vmatprep.subr.mxu0 0.0
    %6872 = vmatpush2.msra.mxu0 0.0
    %6873 = vmatprep.subr.mxu0 0.0
    %6874 = vmatpush2.msra.mxu0 0.0
    %6875 = vmatprep.subr.mxu0 0.0
    %6876 = vmatpush2.msra.mxu0 0.0
    %6877 = vmatprep.subr.mxu0 0.0
    %6878 = vmatpush2.msra.mxu0 0.0
    %6879 = vmatprep.subr.mxu0 0.0
    %6880 = vmatpush2.msra.mxu0 0.0
    %6881 = vmatprep.subr.mxu0 0.0
    %6882 = vmatpush2.msra.mxu0 0.0
    %6883 = vmatprep.subr.mxu0 0.0
    %6884 = vmatpush2.msra.mxu0 0.0
    %6885 = vmatprep.subr.mxu0 0.0
    %6886 = vmatpush2.msra.mxu0 0.0
    %6887 = vmatprep.subr.mxu0 0.0
    %6888 = vmatpush2.msra.mxu0 0.0
    %6889 = vmatprep.subr.mxu0 0.0
    %6890 = vmatpush2.msra.mxu0 0.0
    %6891 = vmatprep.subr.mxu0 0.0
    %6892 = vmatpush2.msra.mxu0 0.0
    %6893 = vmatprep.mubr.f32.mxu0 0.0
    %v6894 = vand.u32 %v359, 4294901760
    %6895 = vmatmul.mubr.f32.gmra.mxu0 %v6894
    %v6896 = vpop.f32.mrf.mxu0
    %v6897 = vadd.f32 %v6793, %v6896
    %v6898 = vpop.f32.mrf.mxu0
    %v6899 = vadd.f32 %v6795, %v6898
    %6900 = vdwg.mxu0
    %6901 = vmatprep.subr.mxu0 0.0
    %6902 = vmatpush1.msra.mxu0 0.0
    %6903 = vmatprep.subr.mxu0 0.0
    %6904 = vmatpush1.msra.mxu0 0.0
    %6905 = vmatprep.subr.mxu0 0.0
    %6906 = vmatpush1.msra.mxu0 0.0
    %6907 = vmatprep.subr.mxu0 0.0
    %6908 = vmatpush1.msra.mxu0 0.0
    %6909 = vmatprep.subr.mxu0 0.0
    %6910 = vmatpush1.msra.mxu0 0.0
    %6911 = vmatprep.subr.mxu0 0.0
    %6912 = vmatpush1.msra.mxu0 0.0
    %6913 = vmatprep.subr.mxu0 0.0
    %6914 = vmatpush1.msra.mxu0 0.0
    %6915 = vmatprep.subr.mxu0 0.0
    %6916 = vmatpush1.msra.mxu0 0.0
    %6917 = vmatprep.subr.mxu0 %v354
    %6918 = vmatpush1.msra.mxu0 %v353
    %6919 = vmatprep.subr.mxu0 %v329
    %6920 = vmatpush1.msra.mxu0 %v328
    %6921 = vmatprep.subr.mxu0 %v304
    %6922 = vmatpush1.msra.mxu0 %v303
    %6923 = vmatprep.subr.mxu0 %v279
    %6924 = vmatpush1.msra.mxu0 %v278
    %6925 = vmatprep.subr.mxu0 %v254
    %6926 = vmatpush1.msra.mxu0 %v253
    %6927 = vmatprep.subr.mxu0 %v229
    %6928 = vmatpush1.msra.mxu0 %v228
    %6929 = vmatprep.subr.mxu0 %v204
    %6930 = vmatpush1.msra.mxu0 %v203
    %6931 = vmatprep.subr.mxu0 %v179
    %6932 = vmatpush1.msra.mxu0 %v178
    %6933 = vmatprep.subr.mxu0 0.0
    %6934 = vmatpush2.msra.mxu0 0.0
    %6935 = vmatprep.subr.mxu0 0.0
    %6936 = vmatpush2.msra.mxu0 0.0
    %6937 = vmatprep.subr.mxu0 0.0
    %6938 = vmatpush2.msra.mxu0 0.0
    %6939 = vmatprep.subr.mxu0 0.0
    %6940 = vmatpush2.msra.mxu0 0.0
    %6941 = vmatprep.subr.mxu0 0.0
    %6942 = vmatpush2.msra.mxu0 0.0
    %6943 = vmatprep.subr.mxu0 0.0
    %6944 = vmatpush2.msra.mxu0 0.0
    %6945 = vmatprep.subr.mxu0 0.0
    %6946 = vmatpush2.msra.mxu0 0.0
    %6947 = vmatprep.subr.mxu0 0.0
    %6948 = vmatpush2.msra.mxu0 0.0
    %6949 = vmatprep.subr.mxu0 0.0
    %6950 = vmatpush2.msra.mxu0 0.0
    %6951 = vmatprep.subr.mxu0 0.0
    %6952 = vmatpush2.msra.mxu0 0.0
    %6953 = vmatprep.subr.mxu0 0.0
    %6954 = vmatpush2.msra.mxu0 0.0
    %6955 = vmatprep.subr.mxu0 0.0
    %6956 = vmatpush2.msra.mxu0 0.0
    %6957 = vmatprep.subr.mxu0 0.0
    %6958 = vmatpush2.msra.mxu0 0.0
    %6959 = vmatprep.subr.mxu0 0.0
    %6960 = vmatpush2.msra.mxu0 0.0
    %6961 = vmatprep.subr.mxu0 0.0
    %6962 = vmatpush2.msra.mxu0 0.0
    %6963 = vmatprep.subr.mxu0 0.0
    %6964 = vmatpush2.msra.mxu0 0.0
    %6965 = vmatprep.mubr.f32.mxu0 0.0
    %v6966 = vand.u32 %v359, 4294901760
    %6967 = vmatmul.mubr.f32.gmra.mxu0 %v6966
    %v6968 = vpop.f32.mrf.mxu0
    %v6969 = vadd.f32 %v6897, %v6968
    %v6970 = vpop.f32.mrf.mxu0
    %v6971 = vadd.f32 %v6899, %v6970
    %6972 = vdwg.mxu0
    %6973 = vmatprep.subr.mxu0 0.0
    %6974 = vmatpush1.msra.mxu0 0.0
    %6975 = vmatprep.subr.mxu0 0.0
    %6976 = vmatpush1.msra.mxu0 0.0
    %6977 = vmatprep.subr.mxu0 0.0
    %6978 = vmatpush1.msra.mxu0 0.0
    %6979 = vmatprep.subr.mxu0 0.0
    %6980 = vmatpush1.msra.mxu0 0.0
    %6981 = vmatprep.subr.mxu0 0.0
    %6982 = vmatpush1.msra.mxu0 0.0
    %6983 = vmatprep.subr.mxu0 0.0
    %6984 = vmatpush1.msra.mxu0 0.0
    %6985 = vmatprep.subr.mxu0 0.0
    %6986 = vmatpush1.msra.mxu0 0.0
    %6987 = vmatprep.subr.mxu0 0.0
    %6988 = vmatpush1.msra.mxu0 0.0
    %6989 = vmatprep.subr.mxu0 0.0
    %6990 = vmatpush1.msra.mxu0 %v355
    %6991 = vmatprep.subr.mxu0 0.0
    %6992 = vmatpush1.msra.mxu0 %v330
    %6993 = vmatprep.subr.mxu0 0.0
    %6994 = vmatpush1.msra.mxu0 %v305
    %6995 = vmatprep.subr.mxu0 0.0
    %6996 = vmatpush1.msra.mxu0 %v280
    %6997 = vmatprep.subr.mxu0 0.0
    %6998 = vmatpush1.msra.mxu0 %v255
    %6999 = vmatprep.subr.mxu0 0.0
    %7000 = vmatpush1.msra.mxu0 %v230
    %7001 = vmatprep.subr.mxu0 0.0
    %7002 = vmatpush1.msra.mxu0 %v205
    %7003 = vmatprep.subr.mxu0 0.0
    %7004 = vmatpush1.msra.mxu0 %v180
    %7005 = vmatprep.subr.mxu0 0.0
    %7006 = vmatpush2.msra.mxu0 0.0
    %7007 = vmatprep.subr.mxu0 0.0
    %7008 = vmatpush2.msra.mxu0 0.0
    %7009 = vmatprep.subr.mxu0 0.0
    %7010 = vmatpush2.msra.mxu0 0.0
    %7011 = vmatprep.subr.mxu0 0.0
    %7012 = vmatpush2.msra.mxu0 0.0
    %7013 = vmatprep.subr.mxu0 0.0
    %7014 = vmatpush2.msra.mxu0 0.0
    %7015 = vmatprep.subr.mxu0 0.0
    %7016 = vmatpush2.msra.mxu0 0.0
    %7017 = vmatprep.subr.mxu0 0.0
    %7018 = vmatpush2.msra.mxu0 0.0
    %7019 = vmatprep.subr.mxu0 0.0
    %7020 = vmatpush2.msra.mxu0 0.0
    %7021 = vmatprep.subr.mxu0 0.0
    %7022 = vmatpush2.msra.mxu0 0.0
    %7023 = vmatprep.subr.mxu0 0.0
    %7024 = vmatpush2.msra.mxu0 0.0
    %7025 = vmatprep.subr.mxu0 0.0
    %7026 = vmatpush2.msra.mxu0 0.0
    %7027 = vmatprep.subr.mxu0 0.0
    %7028 = vmatpush2.msra.mxu0 0.0
    %7029 = vmatprep.subr.mxu0 0.0
    %7030 = vmatpush2.msra.mxu0 0.0
    %7031 = vmatprep.subr.mxu0 0.0
    %7032 = vmatpush2.msra.mxu0 0.0
    %7033 = vmatprep.subr.mxu0 0.0
    %7034 = vmatpush2.msra.mxu0 0.0
    %7035 = vmatprep.subr.mxu0 0.0
    %7036 = vmatpush2.msra.mxu0 0.0
    %7037 = vmatprep.mubr.f32.mxu0 0.0
    %v7038 = vand.u32 %v359, 4294901760
    %v7039 = vsub.f32 %v359, %v7038
    %v7040 = vand.u32 %v7039, 4294901760
    %v7041 = vsub.f32 %v7039, %v7040
    %v7042 = vand.u32 %v7041, 4294901760
    %7043 = vmatmul.mubr.f32.gmra.mxu0 %v7042
    %v7044 = vpop.f32.mrf.mxu0
    %v7045 = vadd.f32 0.0, %v7044
    %v7046 = vpop.f32.mrf.mxu0
    %7047 = vdwg.mxu0
    %7048 = vmatprep.subr.mxu0 0.0
    %7049 = vmatpush1.msra.mxu0 0.0
    %7050 = vmatprep.subr.mxu0 0.0
    %7051 = vmatpush1.msra.mxu0 0.0
    %7052 = vmatprep.subr.mxu0 0.0
    %7053 = vmatpush1.msra.mxu0 0.0
    %7054 = vmatprep.subr.mxu0 0.0
    %7055 = vmatpush1.msra.mxu0 0.0
    %7056 = vmatprep.subr.mxu0 0.0
    %7057 = vmatpush1.msra.mxu0 0.0
    %7058 = vmatprep.subr.mxu0 0.0
    %7059 = vmatpush1.msra.mxu0 0.0
    %7060 = vmatprep.subr.mxu0 0.0
    %7061 = vmatpush1.msra.mxu0 0.0
    %7062 = vmatprep.subr.mxu0 0.0
    %7063 = vmatpush1.msra.mxu0 0.0
    %7064 = vmatprep.subr.mxu0 0.0
    %v7065 = vsub.f32 %v355, %v355
    %v7066 = vand.u32 %v7065, 4294901760
    %v7067 = vsub.f32 %v7065, %v7066
    %v7068 = vand.u32 %v7067, 4294901760
    %7069 = vmatpush1.msra.mxu0 %v7068
    %7070 = vmatprep.subr.mxu0 0.0
    %v7071 = vsub.f32 %v330, %v330
    %v7072 = vand.u32 %v7071, 4294901760
    %v7073 = vsub.f32 %v7071, %v7072
    %v7074 = vand.u32 %v7073, 4294901760
    %7075 = vmatpush1.msra.mxu0 %v7074
    %7076 = vmatprep.subr.mxu0 0.0
    %v7077 = vsub.f32 %v305, %v305
    %v7078 = vand.u32 %v7077, 4294901760
    %v7079 = vsub.f32 %v7077, %v7078
    %v7080 = vand.u32 %v7079, 4294901760
    %7081 = vmatpush1.msra.mxu0 %v7080
    %7082 = vmatprep.subr.mxu0 0.0
    %v7083 = vsub.f32 %v280, %v280
    %v7084 = vand.u32 %v7083, 4294901760
    %v7085 = vsub.f32 %v7083, %v7084
    %v7086 = vand.u32 %v7085, 4294901760
    %7087 = vmatpush1.msra.mxu0 %v7086
    %7088 = vmatprep.subr.mxu0 0.0
    %v7089 = vsub.f32 %v255, %v255
    %v7090 = vand.u32 %v7089, 4294901760
    %v7091 = vsub.f32 %v7089, %v7090
    %v7092 = vand.u32 %v7091, 4294901760
    %7093 = vmatpush1.msra.mxu0 %v7092
    %7094 = vmatprep.subr.mxu0 0.0
    %v7095 = vsub.f32 %v230, %v230
    %v7096 = vand.u32 %v7095, 4294901760
    %v7097 = vsub.f32 %v7095, %v7096
    %v7098 = vand.u32 %v7097, 4294901760
    %7099 = vmatpush1.msra.mxu0 %v7098
    %7100 = vmatprep.subr.mxu0 0.0
    %v7101 = vsub.f32 %v205, %v205
    %v7102 = vand.u32 %v7101, 4294901760
    %v7103 = vsub.f32 %v7101, %v7102
    %v7104 = vand.u32 %v7103, 4294901760
    %7105 = vmatpush1.msra.mxu0 %v7104
    %7106 = vmatprep.subr.mxu0 0.0
    %v7107 = vsub.f32 %v180, %v180
    %v7108 = vand.u32 %v7107, 4294901760
    %v7109 = vsub.f32 %v7107, %v7108
    %v7110 = vand.u32 %v7109, 4294901760
    %7111 = vmatpush1.msra.mxu0 %v7110
    %7112 = vmatprep.subr.mxu0 0.0
    %7113 = vmatpush2.msra.mxu0 0.0
    %7114 = vmatprep.subr.mxu0 0.0
    %7115 = vmatpush2.msra.mxu0 0.0
    %7116 = vmatprep.subr.mxu0 0.0
    %7117 = vmatpush2.msra.mxu0 0.0
    %7118 = vmatprep.subr.mxu0 0.0
    %7119 = vmatpush2.msra.mxu0 0.0
    %7120 = vmatprep.subr.mxu0 0.0
    %7121 = vmatpush2.msra.mxu0 0.0
    %7122 = vmatprep.subr.mxu0 0.0
    %7123 = vmatpush2.msra.mxu0 0.0
    %7124 = vmatprep.subr.mxu0 0.0
    %7125 = vmatpush2.msra.mxu0 0.0
    %7126 = vmatprep.subr.mxu0 0.0
    %7127 = vmatpush2.msra.mxu0 0.0
    %7128 = vmatprep.subr.mxu0 0.0
    %7129 = vmatpush2.msra.mxu0 0.0
    %7130 = vmatprep.subr.mxu0 0.0
    %7131 = vmatpush2.msra.mxu0 0.0
    %7132 = vmatprep.subr.mxu0 0.0
    %7133 = vmatpush2.msra.mxu0 0.0
    %7134 = vmatprep.subr.mxu0 0.0
    %7135 = vmatpush2.msra.mxu0 0.0
    %7136 = vmatprep.subr.mxu0 0.0
    %7137 = vmatpush2.msra.mxu0 0.0
    %7138 = vmatprep.subr.mxu0 0.0
    %7139 = vmatpush2.msra.mxu0 0.0
    %7140 = vmatprep.subr.mxu0 0.0
    %7141 = vmatpush2.msra.mxu0 0.0
    %7142 = vmatprep.subr.mxu0 0.0
    %7143 = vmatpush2.msra.mxu0 0.0
    %7144 = vmatprep.mubr.f32.mxu0 0.0
    %v7145 = vand.u32 %v359, 4294901760
    %7146 = vmatmul.mubr.f32.gmra.mxu0 %v7145
    %v7147 = vpop.f32.mrf.mxu0
    %v7148 = vadd.f32 %v7045, %v7147
    %v7149 = vpop.f32.mrf.mxu0
    %7150 = vdwg.mxu0
    %7151 = vmatprep.subr.mxu0 0.0
    %7152 = vmatpush1.msra.mxu0 0.0
    %7153 = vmatprep.subr.mxu0 0.0
    %7154 = vmatpush1.msra.mxu0 0.0
    %7155 = vmatprep.subr.mxu0 0.0
    %7156 = vmatpush1.msra.mxu0 0.0
    %7157 = vmatprep.subr.mxu0 0.0
    %7158 = vmatpush1.msra.mxu0 0.0
    %7159 = vmatprep.subr.mxu0 0.0
    %7160 = vmatpush1.msra.mxu0 0.0
    %7161 = vmatprep.subr.mxu0 0.0
    %7162 = vmatpush1.msra.mxu0 0.0
    %7163 = vmatprep.subr.mxu0 0.0
    %7164 = vmatpush1.msra.mxu0 0.0
    %7165 = vmatprep.subr.mxu0 0.0
    %7166 = vmatpush1.msra.mxu0 0.0
    %7167 = vmatprep.subr.mxu0 0.0
    %v7168 = vsub.f32 %v355, %v355
    %7169 = vmatpush1.msra.mxu0 %v7168
    %7170 = vmatprep.subr.mxu0 0.0
    %v7171 = vsub.f32 %v330, %v330
    %7172 = vmatpush1.msra.mxu0 %v7171
    %7173 = vmatprep.subr.mxu0 0.0
    %v7174 = vsub.f32 %v305, %v305
    %7175 = vmatpush1.msra.mxu0 %v7174
    %7176 = vmatprep.subr.mxu0 0.0
    %v7177 = vsub.f32 %v280, %v280
    %7178 = vmatpush1.msra.mxu0 %v7177
    %7179 = vmatprep.subr.mxu0 0.0
    %v7180 = vsub.f32 %v255, %v255
    %7181 = vmatpush1.msra.mxu0 %v7180
    %7182 = vmatprep.subr.mxu0 0.0
    %v7183 = vsub.f32 %v230, %v230
    %7184 = vmatpush1.msra.mxu0 %v7183
    %7185 = vmatprep.subr.mxu0 0.0
    %v7186 = vsub.f32 %v205, %v205
    %7187 = vmatpush1.msra.mxu0 %v7186
    %7188 = vmatprep.subr.mxu0 0.0
    %v7189 = vsub.f32 %v180, %v180
    %7190 = vmatpush1.msra.mxu0 %v7189
    %7191 = vmatprep.subr.mxu0 0.0
    %7192 = vmatpush2.msra.mxu0 0.0
    %7193 = vmatprep.subr.mxu0 0.0
    %7194 = vmatpush2.msra.mxu0 0.0
    %7195 = vmatprep.subr.mxu0 0.0
    %7196 = vmatpush2.msra.mxu0 0.0
    %7197 = vmatprep.subr.mxu0 0.0
    %7198 = vmatpush2.msra.mxu0 0.0
    %7199 = vmatprep.subr.mxu0 0.0
    %7200 = vmatpush2.msra.mxu0 0.0
    %7201 = vmatprep.subr.mxu0 0.0
    %7202 = vmatpush2.msra.mxu0 0.0
    %7203 = vmatprep.subr.mxu0 0.0
    %7204 = vmatpush2.msra.mxu0 0.0
    %7205 = vmatprep.subr.mxu0 0.0
    %7206 = vmatpush2.msra.mxu0 0.0
    %7207 = vmatprep.subr.mxu0 0.0
    %7208 = vmatpush2.msra.mxu0 0.0
    %7209 = vmatprep.subr.mxu0 0.0
    %7210 = vmatpush2.msra.mxu0 0.0
    %7211 = vmatprep.subr.mxu0 0.0
    %7212 = vmatpush2.msra.mxu0 0.0
    %7213 = vmatprep.subr.mxu0 0.0
    %7214 = vmatpush2.msra.mxu0 0.0
    %7215 = vmatprep.subr.mxu0 0.0
    %7216 = vmatpush2.msra.mxu0 0.0
    %7217 = vmatprep.subr.mxu0 0.0
    %7218 = vmatpush2.msra.mxu0 0.0
    %7219 = vmatprep.subr.mxu0 0.0
    %7220 = vmatpush2.msra.mxu0 0.0
    %7221 = vmatprep.subr.mxu0 0.0
    %7222 = vmatpush2.msra.mxu0 0.0
    %7223 = vmatprep.mubr.f32.mxu0 0.0
    %v7224 = vand.u32 %v359, 4294901760
    %v7225 = vsub.f32 %v359, %v7224
    %7226 = vmatmul.mubr.f32.gmra.mxu0 %v7225
    %v7227 = vpop.f32.mrf.mxu0
    %v7228 = vadd.f32 %v7148, %v7227
    %v7229 = vpop.f32.mrf.mxu0
    %7230 = vdwg.mxu0
    %7231 = vmatprep.subr.mxu0 0.0
    %7232 = vmatpush1.msra.mxu0 0.0
    %7233 = vmatprep.subr.mxu0 0.0
    %7234 = vmatpush1.msra.mxu0 0.0
    %7235 = vmatprep.subr.mxu0 0.0
    %7236 = vmatpush1.msra.mxu0 0.0
    %7237 = vmatprep.subr.mxu0 0.0
    %7238 = vmatpush1.msra.mxu0 0.0
    %7239 = vmatprep.subr.mxu0 0.0
    %7240 = vmatpush1.msra.mxu0 0.0
    %7241 = vmatprep.subr.mxu0 0.0
    %7242 = vmatpush1.msra.mxu0 0.0
    %7243 = vmatprep.subr.mxu0 0.0
    %7244 = vmatpush1.msra.mxu0 0.0
    %7245 = vmatprep.subr.mxu0 0.0
    %7246 = vmatpush1.msra.mxu0 0.0
    %7247 = vmatprep.subr.mxu0 0.0
    %7248 = vmatpush1.msra.mxu0 %v355
    %7249 = vmatprep.subr.mxu0 0.0
    %7250 = vmatpush1.msra.mxu0 %v330
    %7251 = vmatprep.subr.mxu0 0.0
    %7252 = vmatpush1.msra.mxu0 %v305
    %7253 = vmatprep.subr.mxu0 0.0
    %7254 = vmatpush1.msra.mxu0 %v280
    %7255 = vmatprep.subr.mxu0 0.0
    %7256 = vmatpush1.msra.mxu0 %v255
    %7257 = vmatprep.subr.mxu0 0.0
    %7258 = vmatpush1.msra.mxu0 %v230
    %7259 = vmatprep.subr.mxu0 0.0
    %7260 = vmatpush1.msra.mxu0 %v205
    %7261 = vmatprep.subr.mxu0 0.0
    %7262 = vmatpush1.msra.mxu0 %v180
    %7263 = vmatprep.subr.mxu0 0.0
    %7264 = vmatpush2.msra.mxu0 0.0
    %7265 = vmatprep.subr.mxu0 0.0
    %7266 = vmatpush2.msra.mxu0 0.0
    %7267 = vmatprep.subr.mxu0 0.0
    %7268 = vmatpush2.msra.mxu0 0.0
    %7269 = vmatprep.subr.mxu0 0.0
    %7270 = vmatpush2.msra.mxu0 0.0
    %7271 = vmatprep.subr.mxu0 0.0
    %7272 = vmatpush2.msra.mxu0 0.0
    %7273 = vmatprep.subr.mxu0 0.0
    %7274 = vmatpush2.msra.mxu0 0.0
    %7275 = vmatprep.subr.mxu0 0.0
    %7276 = vmatpush2.msra.mxu0 0.0
    %7277 = vmatprep.subr.mxu0 0.0
    %7278 = vmatpush2.msra.mxu0 0.0
    %7279 = vmatprep.subr.mxu0 0.0
    %7280 = vmatpush2.msra.mxu0 0.0
    %7281 = vmatprep.subr.mxu0 0.0
    %7282 = vmatpush2.msra.mxu0 0.0
    %7283 = vmatprep.subr.mxu0 0.0
    %7284 = vmatpush2.msra.mxu0 0.0
    %7285 = vmatprep.subr.mxu0 0.0
    %7286 = vmatpush2.msra.mxu0 0.0
    %7287 = vmatprep.subr.mxu0 0.0
    %7288 = vmatpush2.msra.mxu0 0.0
    %7289 = vmatprep.subr.mxu0 0.0
    %7290 = vmatpush2.msra.mxu0 0.0
    %7291 = vmatprep.subr.mxu0 0.0
    %7292 = vmatpush2.msra.mxu0 0.0
    %7293 = vmatprep.subr.mxu0 0.0
    %7294 = vmatpush2.msra.mxu0 0.0
    %7295 = vmatprep.mubr.f32.mxu0 0.0
    %v7296 = vand.u32 %v359, 4294901760
    %v7297 = vsub.f32 %v359, %v7296
    %v7298 = vand.u32 %v7297, 4294901760
    %7299 = vmatmul.mubr.f32.gmra.mxu0 %v7298
    %v7300 = vpop.f32.mrf.mxu0
    %v7301 = vadd.f32 %v7228, %v7300
    %v7302 = vpop.f32.mrf.mxu0
    %7303 = vdwg.mxu0
    %7304 = vmatprep.subr.mxu0 0.0
    %7305 = vmatpush1.msra.mxu0 0.0
    %7306 = vmatprep.subr.mxu0 0.0
    %7307 = vmatpush1.msra.mxu0 0.0
    %7308 = vmatprep.subr.mxu0 0.0
    %7309 = vmatpush1.msra.mxu0 0.0
    %7310 = vmatprep.subr.mxu0 0.0
    %7311 = vmatpush1.msra.mxu0 0.0
    %7312 = vmatprep.subr.mxu0 0.0
    %7313 = vmatpush1.msra.mxu0 0.0
    %7314 = vmatprep.subr.mxu0 0.0
    %7315 = vmatpush1.msra.mxu0 0.0
    %7316 = vmatprep.subr.mxu0 0.0
    %7317 = vmatpush1.msra.mxu0 0.0
    %7318 = vmatprep.subr.mxu0 0.0
    %7319 = vmatpush1.msra.mxu0 0.0
    %7320 = vmatprep.subr.mxu0 0.0
    %v7321 = vsub.f32 %v355, %v355
    %v7322 = vand.u32 %v7321, 4294901760
    %7323 = vmatpush1.msra.mxu0 %v7322
    %7324 = vmatprep.subr.mxu0 0.0
    %v7325 = vsub.f32 %v330, %v330
    %v7326 = vand.u32 %v7325, 4294901760
    %7327 = vmatpush1.msra.mxu0 %v7326
    %7328 = vmatprep.subr.mxu0 0.0
    %v7329 = vsub.f32 %v305, %v305
    %v7330 = vand.u32 %v7329, 4294901760
    %7331 = vmatpush1.msra.mxu0 %v7330
    %7332 = vmatprep.subr.mxu0 0.0
    %v7333 = vsub.f32 %v280, %v280
    %v7334 = vand.u32 %v7333, 4294901760
    %7335 = vmatpush1.msra.mxu0 %v7334
    %7336 = vmatprep.subr.mxu0 0.0
    %v7337 = vsub.f32 %v255, %v255
    %v7338 = vand.u32 %v7337, 4294901760
    %7339 = vmatpush1.msra.mxu0 %v7338
    %7340 = vmatprep.subr.mxu0 0.0
    %v7341 = vsub.f32 %v230, %v230
    %v7342 = vand.u32 %v7341, 4294901760
    %7343 = vmatpush1.msra.mxu0 %v7342
    %7344 = vmatprep.subr.mxu0 0.0
    %v7345 = vsub.f32 %v205, %v205
    %v7346 = vand.u32 %v7345, 4294901760
    %7347 = vmatpush1.msra.mxu0 %v7346
    %7348 = vmatprep.subr.mxu0 0.0
    %v7349 = vsub.f32 %v180, %v180
    %v7350 = vand.u32 %v7349, 4294901760
    %7351 = vmatpush1.msra.mxu0 %v7350
    %7352 = vmatprep.subr.mxu0 0.0
    %7353 = vmatpush2.msra.mxu0 0.0
    %7354 = vmatprep.subr.mxu0 0.0
    %7355 = vmatpush2.msra.mxu0 0.0
    %7356 = vmatprep.subr.mxu0 0.0
    %7357 = vmatpush2.msra.mxu0 0.0
    %7358 = vmatprep.subr.mxu0 0.0
    %7359 = vmatpush2.msra.mxu0 0.0
    %7360 = vmatprep.subr.mxu0 0.0
    %7361 = vmatpush2.msra.mxu0 0.0
    %7362 = vmatprep.subr.mxu0 0.0
    %7363 = vmatpush2.msra.mxu0 0.0
    %7364 = vmatprep.subr.mxu0 0.0
    %7365 = vmatpush2.msra.mxu0 0.0
    %7366 = vmatprep.subr.mxu0 0.0
    %7367 = vmatpush2.msra.mxu0 0.0
    %7368 = vmatprep.subr.mxu0 0.0
    %7369 = vmatpush2.msra.mxu0 0.0
    %7370 = vmatprep.subr.mxu0 0.0
    %7371 = vmatpush2.msra.mxu0 0.0
    %7372 = vmatprep.subr.mxu0 0.0
    %7373 = vmatpush2.msra.mxu0 0.0
    %7374 = vmatprep.subr.mxu0 0.0
    %7375 = vmatpush2.msra.mxu0 0.0
    %7376 = vmatprep.subr.mxu0 0.0
    %7377 = vmatpush2.msra.mxu0 0.0
    %7378 = vmatprep.subr.mxu0 0.0
    %7379 = vmatpush2.msra.mxu0 0.0
    %7380 = vmatprep.subr.mxu0 0.0
    %7381 = vmatpush2.msra.mxu0 0.0
    %7382 = vmatprep.subr.mxu0 0.0
    %7383 = vmatpush2.msra.mxu0 0.0
    %7384 = vmatprep.mubr.f32.mxu0 0.0
    %v7385 = vand.u32 %v359, 4294901760
    %7386 = vmatmul.mubr.f32.gmra.mxu0 %v7385
    %v7387 = vpop.f32.mrf.mxu0
    %v7388 = vadd.f32 %v7301, %v7387
    %v7389 = vpop.f32.mrf.mxu0
    %7390 = vdwg.mxu0
    %7391 = vmatprep.subr.mxu0 0.0
    %7392 = vmatpush1.msra.mxu0 0.0
    %7393 = vmatprep.subr.mxu0 0.0
    %7394 = vmatpush1.msra.mxu0 0.0
    %7395 = vmatprep.subr.mxu0 0.0
    %7396 = vmatpush1.msra.mxu0 0.0
    %7397 = vmatprep.subr.mxu0 0.0
    %7398 = vmatpush1.msra.mxu0 0.0
    %7399 = vmatprep.subr.mxu0 0.0
    %7400 = vmatpush1.msra.mxu0 0.0
    %7401 = vmatprep.subr.mxu0 0.0
    %7402 = vmatpush1.msra.mxu0 0.0
    %7403 = vmatprep.subr.mxu0 0.0
    %7404 = vmatpush1.msra.mxu0 0.0
    %7405 = vmatprep.subr.mxu0 0.0
    %7406 = vmatpush1.msra.mxu0 0.0
    %7407 = vmatprep.subr.mxu0 0.0
    %7408 = vmatpush1.msra.mxu0 %v355
    %7409 = vmatprep.subr.mxu0 0.0
    %7410 = vmatpush1.msra.mxu0 %v330
    %7411 = vmatprep.subr.mxu0 0.0
    %7412 = vmatpush1.msra.mxu0 %v305
    %7413 = vmatprep.subr.mxu0 0.0
    %7414 = vmatpush1.msra.mxu0 %v280
    %7415 = vmatprep.subr.mxu0 0.0
    %7416 = vmatpush1.msra.mxu0 %v255
    %7417 = vmatprep.subr.mxu0 0.0
    %7418 = vmatpush1.msra.mxu0 %v230
    %7419 = vmatprep.subr.mxu0 0.0
    %7420 = vmatpush1.msra.mxu0 %v205
    %7421 = vmatprep.subr.mxu0 0.0
    %7422 = vmatpush1.msra.mxu0 %v180
    %7423 = vmatprep.subr.mxu0 0.0
    %7424 = vmatpush2.msra.mxu0 0.0
    %7425 = vmatprep.subr.mxu0 0.0
    %7426 = vmatpush2.msra.mxu0 0.0
    %7427 = vmatprep.subr.mxu0 0.0
    %7428 = vmatpush2.msra.mxu0 0.0
    %7429 = vmatprep.subr.mxu0 0.0
    %7430 = vmatpush2.msra.mxu0 0.0
    %7431 = vmatprep.subr.mxu0 0.0
    %7432 = vmatpush2.msra.mxu0 0.0
    %7433 = vmatprep.subr.mxu0 0.0
    %7434 = vmatpush2.msra.mxu0 0.0
    %7435 = vmatprep.subr.mxu0 0.0
    %7436 = vmatpush2.msra.mxu0 0.0
    %7437 = vmatprep.subr.mxu0 0.0
    %7438 = vmatpush2.msra.mxu0 0.0
    %7439 = vmatprep.subr.mxu0 0.0
    %7440 = vmatpush2.msra.mxu0 0.0
    %7441 = vmatprep.subr.mxu0 0.0
    %7442 = vmatpush2.msra.mxu0 0.0
    %7443 = vmatprep.subr.mxu0 0.0
    %7444 = vmatpush2.msra.mxu0 0.0
    %7445 = vmatprep.subr.mxu0 0.0
    %7446 = vmatpush2.msra.mxu0 0.0
    %7447 = vmatprep.subr.mxu0 0.0
    %7448 = vmatpush2.msra.mxu0 0.0
    %7449 = vmatprep.subr.mxu0 0.0
    %7450 = vmatpush2.msra.mxu0 0.0
    %7451 = vmatprep.subr.mxu0 0.0
    %7452 = vmatpush2.msra.mxu0 0.0
    %7453 = vmatprep.subr.mxu0 0.0
    %7454 = vmatpush2.msra.mxu0 0.0
    %7455 = vmatprep.mubr.f32.mxu0 0.0
    %v7456 = vand.u32 %v359, 4294901760
    %7457 = vmatmul.mubr.f32.gmra.mxu0 %v7456
    %v7458 = vpop.f32.mrf.mxu0
    %v7459 = vadd.f32 %v7388, %v7458
    %v7460 = vpop.f32.mrf.mxu0
    %7461 = vdwg.mxu0
    %v7462 = vld [vmem:[#allocation7] sm:$0xff]
    %v7463 = vld [vmem:[#allocation7 + $0x8] sm:$0xff]
    %v7464 = vld [vmem:[#allocation7 + $0x10] sm:$0xff]
    %v7465 = vld [vmem:[#allocation7 + $0x18] sm:$0x1]
    %v7470 = vlaneseq
    %v7471 = vshrl.u32 %v7470, 7
    %v7472 = vsub.s32 0, %v7471
    %v7473 = vrot.slane %v7462, %v7472
    %v7474 = vlaneseq
    %v7475 = vshrl.u32 %v7474, 7
    %v7476 = vsub.s32 1, %v7475
    %v7477 = vrot.slane %v7462, %v7476
    %v7478 = vlaneseq
    %v7479 = vshrl.u32 %v7478, 7
    %v7480 = vsub.s32 2, %v7479
    %v7481 = vrot.slane %v7462, %v7480
    %v7482 = vlaneseq
    %v7483 = vshrl.u32 %v7482, 7
    %v7484 = vsub.s32 3, %v7483
    %v7485 = vrot.slane %v7462, %v7484
    %v7486 = vlaneseq
    %v7487 = vshrl.u32 %v7486, 7
    %v7488 = vsub.s32 4, %v7487
    %v7489 = vrot.slane %v7462, %v7488
    %v7490 = vlaneseq
    %v7491 = vshrl.u32 %v7490, 7
    %v7492 = vsub.s32 5, %v7491
    %v7493 = vrot.slane %v7462, %v7492
    %v7494 = vlaneseq
    %v7495 = vshrl.u32 %v7494, 7
    %v7496 = vsub.s32 6, %v7495
    %v7497 = vrot.slane %v7462, %v7496
    %v7498 = vlaneseq
    %v7499 = vshrl.u32 %v7498, 7
    %v7500 = vsub.s32 7, %v7499
    %v7501 = vrot.slane %v7462, %v7500
    %v7502 = vlaneseq
    %v7503 = vshrl.u32 %v7502, 7
    %v7504 = vsub.s32 0, %v7503
    %v7505 = vrot.slane %v7463, %v7504
    %v7506 = vlaneseq
    %v7507 = vshrl.u32 %v7506, 7
    %v7508 = vsub.s32 1, %v7507
    %v7509 = vrot.slane %v7463, %v7508
    %v7510 = vlaneseq
    %v7511 = vshrl.u32 %v7510, 7
    %v7512 = vsub.s32 2, %v7511
    %v7513 = vrot.slane %v7463, %v7512
    %v7514 = vlaneseq
    %v7515 = vshrl.u32 %v7514, 7
    %v7516 = vsub.s32 3, %v7515
    %v7517 = vrot.slane %v7463, %v7516
    %v7518 = vlaneseq
    %v7519 = vshrl.u32 %v7518, 7
    %v7520 = vsub.s32 4, %v7519
    %v7521 = vrot.slane %v7463, %v7520
    %v7522 = vlaneseq
    %v7523 = vshrl.u32 %v7522, 7
    %v7524 = vsub.s32 5, %v7523
    %v7525 = vrot.slane %v7463, %v7524
    %v7526 = vlaneseq
    %v7527 = vshrl.u32 %v7526, 7
    %v7528 = vsub.s32 6, %v7527
    %v7529 = vrot.slane %v7463, %v7528
    %v7530 = vlaneseq
    %v7531 = vshrl.u32 %v7530, 7
    %v7532 = vsub.s32 7, %v7531
    %v7533 = vrot.slane %v7463, %v7532
    %v7534 = vlaneseq
    %v7535 = vshrl.u32 %v7534, 7
    %v7536 = vsub.s32 0, %v7535
    %v7537 = vrot.slane %v7464, %v7536
    %v7538 = vlaneseq
    %v7539 = vshrl.u32 %v7538, 7
    %v7540 = vsub.s32 1, %v7539
    %v7541 = vrot.slane %v7464, %v7540
    %v7542 = vlaneseq
    %v7543 = vshrl.u32 %v7542, 7
    %v7544 = vsub.s32 2, %v7543
    %v7545 = vrot.slane %v7464, %v7544
    %v7546 = vlaneseq
    %v7547 = vshrl.u32 %v7546, 7
    %v7548 = vsub.s32 3, %v7547
    %v7549 = vrot.slane %v7464, %v7548
    %v7550 = vlaneseq
    %v7551 = vshrl.u32 %v7550, 7
    %v7552 = vsub.s32 4, %v7551
    %v7553 = vrot.slane %v7464, %v7552
    %v7554 = vlaneseq
    %v7555 = vshrl.u32 %v7554, 7
    %v7556 = vsub.s32 5, %v7555
    %v7557 = vrot.slane %v7464, %v7556
    %v7558 = vlaneseq
    %v7559 = vshrl.u32 %v7558, 7
    %v7560 = vsub.s32 6, %v7559
    %v7561 = vrot.slane %v7464, %v7560
    %v7562 = vlaneseq
    %v7563 = vshrl.u32 %v7562, 7
    %v7564 = vsub.s32 7, %v7563
    %v7565 = vrot.slane %v7464, %v7564
    %v7566 = vlaneseq
    %v7567 = vshrl.u32 %v7566, 7
    %v7568 = vsub.s32 0, %v7567
    %v7569 = vrot.slane %v7465, %v7568
    %v7595 = vsub.f32 %v908, %v7473
    %v7596 = vsub.f32 %v910, %v7477
    %v7597 = vsub.f32 %v1459, %v7481
    %v7598 = vsub.f32 %v1461, %v7485
    %v7599 = vsub.f32 %v2010, %v7489
    %v7600 = vsub.f32 %v2012, %v7493
    %v7601 = vsub.f32 %v2561, %v7497
    %v7602 = vsub.f32 %v2563, %v7501
    %v7603 = vsub.f32 %v3112, %v7505
    %v7604 = vsub.f32 %v3114, %v7509
    %v7605 = vsub.f32 %v3663, %v7513
    %v7606 = vsub.f32 %v3665, %v7517
    %v7607 = vsub.f32 %v4214, %v7521
    %v7608 = vsub.f32 %v4216, %v7525
    %v7609 = vsub.f32 %v4765, %v7529
    %v7610 = vsub.f32 %v4767, %v7533
    %v7611 = vsub.f32 %v5316, %v7537
    %v7612 = vsub.f32 %v5318, %v7541
    %v7613 = vsub.f32 %v5867, %v7545
    %v7614 = vsub.f32 %v5869, %v7549
    %v7615 = vsub.f32 %v6418, %v7553
    %v7616 = vsub.f32 %v6420, %v7557
    %v7617 = vsub.f32 %v6969, %v7561
    %v7618 = vsub.f32 %v6971, %v7565
    %v7619 = vsub.f32 %v7459, %v7569
    %v7620 = vmul.f32 %v7595, -12.005001
    %v7621 = vmul.f32 %v7596, -12.005001
    %v7622 = vmul.f32 %v7597, -12.005001
    %v7623 = vmul.f32 %v7598, -12.005001
    %v7624 = vmul.f32 %v7599, -12.005001
    %v7625 = vmul.f32 %v7600, -12.005001
    %v7626 = vmul.f32 %v7601, -12.005001
    %v7627 = vmul.f32 %v7602, -12.005001
    %v7628 = vmul.f32 %v7603, -12.005001
    %v7629 = vmul.f32 %v7604, -12.005001
    %v7630 = vmul.f32 %v7605, -12.005001
    %v7631 = vmul.f32 %v7606, -12.005001
    %v7632 = vmul.f32 %v7607, -12.005001
    %v7633 = vmul.f32 %v7608, -12.005001
    %v7634 = vmul.f32 %v7609, -12.005001
    %v7635 = vmul.f32 %v7610, -12.005001
    %v7636 = vmul.f32 %v7611, -12.005001
    %v7637 = vmul.f32 %v7612, -12.005001
    %v7638 = vmul.f32 %v7613, -12.005001
    %v7639 = vmul.f32 %v7614, -12.005001
    %v7640 = vmul.f32 %v7615, -12.005001
    %v7641 = vmul.f32 %v7616, -12.005001
    %v7642 = vmul.f32 %v7617, -12.005001
    %v7643 = vmul.f32 %v7618, -12.005001
    %v7644 = vmul.f32 %v7619, -12.005001
    %v7645 = vmul.f32 %v7620, %v7595
    %v7646 = vmul.f32 %v7621, %v7596
    %v7647 = vmul.f32 %v7622, %v7597
    %v7648 = vmul.f32 %v7623, %v7598
    %v7649 = vmul.f32 %v7624, %v7599
    %v7650 = vmul.f32 %v7625, %v7600
    %v7651 = vmul.f32 %v7626, %v7601
    %v7652 = vmul.f32 %v7627, %v7602
    %v7653 = vmul.f32 %v7628, %v7603
    %v7654 = vmul.f32 %v7629, %v7604
    %v7655 = vmul.f32 %v7630, %v7605
    %v7656 = vmul.f32 %v7631, %v7606
    %v7657 = vmul.f32 %v7632, %v7607
    %v7658 = vmul.f32 %v7633, %v7608
    %v7659 = vmul.f32 %v7634, %v7609
    %v7660 = vmul.f32 %v7635, %v7610
    %v7661 = vmul.f32 %v7636, %v7611
    %v7662 = vmul.f32 %v7637, %v7612
    %v7663 = vmul.f32 %v7638, %v7613
    %v7664 = vmul.f32 %v7639, %v7614
    %v7665 = vmul.f32 %v7640, %v7615
    %v7666 = vmul.f32 %v7641, %v7616
    %v7667 = vmul.f32 %v7642, %v7617
    %v7668 = vmul.f32 %v7643, %v7618
    %v7669 = vmul.f32 %v7644, %v7619
    %v7670 = vmul.f32 %v7645, 1.442695
    %v7671 = vpow.pop %v7670
    %v7672 = vmul.f32 %v7646, 1.442695
    %v7673 = vpow.pop %v7672
    %v7674 = vmul.f32 %v7647, 1.442695
    %v7675 = vpow.pop %v7674
    %v7676 = vmul.f32 %v7648, 1.442695
    %v7677 = vpow.pop %v7676
    %v7678 = vmul.f32 %v7649, 1.442695
    %v7679 = vpow.pop %v7678
    %v7680 = vmul.f32 %v7650, 1.442695
    %v7681 = vpow.pop %v7680
    %v7682 = vmul.f32 %v7651, 1.442695
    %v7683 = vpow.pop %v7682
    %v7684 = vmul.f32 %v7652, 1.442695
    %v7685 = vpow.pop %v7684
    %v7686 = vmul.f32 %v7653, 1.442695
    %v7687 = vpow.pop %v7686
    %v7688 = vmul.f32 %v7654, 1.442695
    %v7689 = vpow.pop %v7688
    %v7690 = vmul.f32 %v7655, 1.442695
    %v7691 = vpow.pop %v7690
    %v7692 = vmul.f32 %v7656, 1.442695
    %v7693 = vpow.pop %v7692
    %v7694 = vmul.f32 %v7657, 1.442695
    %v7695 = vpow.pop %v7694
    %v7696 = vmul.f32 %v7658, 1.442695
    %v7697 = vpow.pop %v7696
    %v7698 = vmul.f32 %v7659, 1.442695
    %v7699 = vpow.pop %v7698
    %v7700 = vmul.f32 %v7660, 1.442695
    %v7701 = vpow.pop %v7700
    %v7702 = vmul.f32 %v7661, 1.442695
    %v7703 = vpow.pop %v7702
    %v7704 = vmul.f32 %v7662, 1.442695
    %v7705 = vpow.pop %v7704
    %v7706 = vmul.f32 %v7663, 1.442695
    %v7707 = vpow.pop %v7706
    %v7708 = vmul.f32 %v7664, 1.442695
    %v7709 = vpow.pop %v7708
    %v7710 = vmul.f32 %v7665, 1.442695
    %v7711 = vpow.pop %v7710
    %v7712 = vmul.f32 %v7666, 1.442695
    %v7713 = vpow.pop %v7712
    %v7714 = vmul.f32 %v7667, 1.442695
    %v7715 = vpow.pop %v7714
    %v7716 = vmul.f32 %v7668, 1.442695
    %v7717 = vpow.pop %v7716
    %v7718 = vmul.f32 %v7669, 1.442695
    %v7719 = vpow.pop %v7718
    %v7744 = vcombine.low %v7671, %v7673
    %v7745 = vcombine.low %v7675, %v7677
    %v7746 = vcombine.low %v7679, %v7681
    %v7747 = vcombine.low %v7683, %v7685
    %v7748 = vcombine.low %v7687, %v7689
    %v7749 = vcombine.low %v7691, %v7693
    %v7750 = vcombine.low %v7695, %v7697
    %v7751 = vcombine.low %v7699, %v7701
    %v7752 = vcombine.low %v7703, %v7705
    %v7753 = vcombine.low %v7707, %v7709
    %v7754 = vcombine.low %v7711, %v7713
    %v7755 = vcombine.low %v7715, %v7717
    %7768 = vst [vmem:[#allocation8] sm:$0x77] %v7744
    %7769 = vst [vmem:[#allocation8 + $0x8] sm:$0x77] %v7745
    %7770 = vst [vmem:[#allocation8 + $0x10] sm:$0x77] %v7746
    %7771 = vst [vmem:[#allocation8 + $0x18] sm:$0x77] %v7747
    %7772 = vst [vmem:[#allocation8 + $0x20] sm:$0x77] %v7748
    %7773 = vst [vmem:[#allocation8 + $0x28] sm:$0x77] %v7749
    %7774 = vst [vmem:[#allocation8 + $0x30] sm:$0x77] %v7750
    %7775 = vst [vmem:[#allocation8 + $0x38] sm:$0x77] %v7751
    %7776 = vst [vmem:[#allocation8 + $0x40] sm:$0x77] %v7752
    %7777 = vst [vmem:[#allocation8 + $0x48] sm:$0x77] %v7753
    %7778 = vst [vmem:[#allocation8 + $0x50] sm:$0x77] %v7754
    %7779 = vst [vmem:[#allocation8 + $0x58] sm:$0x77] %v7755
    %7780 = vst [vmem:[#allocation8 + $0x60] sm:$0x7] %v7719
    // Predicated region
    $region26: #{tpu_custom_call.1} parent=1 // pred_check
      _
    $region27: #{tpu_custom_call.1} parent=1 // pred_check_branch
      %7782 = sbr.rel (0) target = $region29
    $region28: #{tpu_custom_call.1} parent=1 // pred_region
      %s7784 = ssub.s32 1600, 1600
      %7785 = vsyncadd [#allocation4], %s7784
      %s7787 = sshll.u32 [#allocation8], 4
      %s7788 = int_to_ptr.vmem [resolvable:$true] %s7787
      %7790 = dma.vmem_to_hbm [thread:$0]  %s7788, 1600, %s3, [#allocation4]
    $region29: #{tpu_custom_call.1} parent=1 // pred_fallthru
      _
    // Predicated region
    $region30: #{tpu_custom_call.1} parent=1 // pred_check
      _
    $region31: #{tpu_custom_call.1} parent=1 // pred_check_branch
      %7792 = sbr.rel (0) target = $region33
    $region32: #{tpu_custom_call.1} parent=1 // pred_region
      %7793 = dma.done [#allocation4], 1600
    $region33: #{tpu_custom_call.1} parent=1 // pred_fallthru
      _
    %7794 = vsyncpa [#allocation3], 1
    %7795 = vsyncpa [#allocation6], 1
    %7796 = vsyncpa [#allocation4], 1

</llo_original>
